<compile_context>
chip_gen: v7x
topology: tpu7x:2x2x1
jax: 0.10.0
libtpu: 0.0.40
codegen_flags: <defaults>
</compile_context>

<pallas_src>
import math
import jax
import jax.numpy as jnp
from jax.experimental import pallas as pl
from jax.experimental.pallas import tpu as pltpu

BN_EPS = 1e-5
BF16 = jnp.bfloat16


def _pick_row_tile(ho):
    return 8 if ho % 8 == 0 else ho


# ---------------------------------------------------------------------------
# stride-1 fused kernel: 3x3 conv (pad 1) + BN affine (+residual) (+ReLU)
# ---------------------------------------------------------------------------
def _make_s1_kernel(relu, has_res, TH, R):
    def kernel(*refs):
        if has_res:
            x_ref, w_ref, ss_ref, sh_ref, res_ref, o_ref, xp = refs
        else:
            x_ref, w_ref, ss_ref, sh_ref, o_ref, xp = refs
        _, H, W, Cin = x_ref.shape
        Cout = w_ref.shape[1]
        Wo = W
        r = pl.program_id(1)
        r0 = r * TH

        # ---- fill the zero-padded bf16 input tile (TH+2, W+2, Cin) in VMEM ----
        xp[:, 0:1, :] = jnp.zeros((TH + 2, 1, Cin), BF16)
        xp[:, W + 1:W + 2, :] = jnp.zeros((TH + 2, 1, Cin), BF16)
        if R == 1:
            xp[0:1, :, :] = jnp.zeros((1, W + 2, Cin), BF16)
            xp[TH + 1:TH + 2, :, :] = jnp.zeros((1, W + 2, Cin), BF16)
            xp[1:TH + 1, 1:W + 1, :] = x_ref[0].astype(BF16)
        else:
            @pl.when(r == 0)
            def _():
                xp[0:1, :, :] = jnp.zeros((1, W + 2, Cin), BF16)
                xp[1:TH + 2, 1:W + 1, :] = x_ref[0, 0:TH + 1, :, :].astype(BF16)

            @pl.when(r == R - 1)
            def _():
                xp[TH + 1:TH + 2, :, :] = jnp.zeros((1, W + 2, Cin), BF16)
                xp[0:TH + 1, 1:W + 1, :] = \
                    x_ref[0, pl.ds(r0 - 1, TH + 1), :, :].astype(BF16)

            if R > 2:
                @pl.when(jnp.logical_and(r > 0, r < R - 1))
                def _():
                    xp[0:TH + 2, 1:W + 1, :] = \
                        x_ref[0, pl.ds(r0 - 1, TH + 2), :, :].astype(BF16)

        # ---- in-VMEM im2col: ONE MXU matmul with K = 9*Cin ----
        taps = [xp[di:di + TH, dj:dj + Wo, :] for di in range(3) for dj in range(3)]
        lhs = jnp.concatenate(taps, axis=-1).reshape(TH * Wo, 9 * Cin)
        acc = jnp.dot(lhs, w_ref[...], preferred_element_type=jnp.float32)

        y = acc * ss_ref[...] + sh_ref[...]
        if has_res:
            y = y + res_ref[0].reshape(TH * Wo, Cout).astype(jnp.float32)
        if relu:
            y = jnp.maximum(y, 0.0)
        o_ref[...] = y.reshape(1, TH, Wo, Cout).astype(o_ref.dtype)

    return kernel


def conv3x3_bn_s1(x, wk, ss, sh, *, relu=True, residual=None, out_dtype=BF16):
    """3x3, stride 1, pad 1: y = [relu]( conv(x)*scale + shift [+ residual] )."""
    N, H, W, Cin = x.shape
    Cout = wk.shape[1]
    Ho, Wo = H, W
    TH = _pick_row_tile(Ho)
    R = Ho // TH

    args = [x, wk, ss, sh]
    in_specs = [
        pl.BlockSpec((1, H, W, Cin), lambda n, r: (n, 0, 0, 0)),      # image, resident
        pl.BlockSpec((9 * Cin, Cout), lambda n, r: (0, 0)),            # weights, resident
        pl.BlockSpec((1, Cout), lambda n, r: (0, 0)),
        pl.BlockSpec((1, Cout), lambda n, r: (0, 0)),
    ]
    has_res = residual is not None
    if has_res:
        args.append(residual)
        in_specs.append(pl.BlockSpec((1, TH, Wo, Cout), lambda n, r: (n, r, 0, 0)))

    return pl.pallas_call(
        _make_s1_kernel(relu, has_res, TH, R),
        out_shape=jax.ShapeDtypeStruct((N, Ho, Wo, Cout), out_dtype),
        grid=(N, R),
        in_specs=in_specs,
        out_specs=pl.BlockSpec((1, TH, Wo, Cout), lambda n, r: (n, r, 0, 0)),
        scratch_shapes=[pltpu.VMEM((TH + 2, W + 2, Cin), BF16)],
        compiler_params=pltpu.CompilerParams(
            dimension_semantics=("parallel", "parallel")),
    )(*args)


# ---------------------------------------------------------------------------
# stride-2 fused kernel: 3x3 conv (stride 2, pad 1) + BN + ReLU,
# with the 1x1 stride-2 down-sample + BN fused as a second output.
# ---------------------------------------------------------------------------
def _make_s2_kernel(TH, R):
    def kernel(x_ref, w_ref, ss_ref, sh_ref, wd_ref, ssd_ref, shd_ref,
               o_ref, id_ref, se, so):
        # x_ref: (1, H/2, 2, W/2, 2*Cin) -- rows split even/odd, cols folded into lanes
        _, Hh, _, Wh, C2 = x_ref.shape
        Cin = C2 // 2
        Cout = w_ref.shape[1]
        Wo = Wh
        r = pl.program_id(1)
        r0 = r * TH

        # even input rows (pairs r0 .. r0+TH-1); col slot 0 = left zero pad
        se[:, 0:1, :] = jnp.zeros((TH, 1, C2), BF16)
        se[:, 1:Wo + 1, :] = x_ref[0, pl.ds(r0, TH), 0, :, :].astype(BF16)
        # odd input rows (pairs r0-1 .. r0+TH-1); slot 0 is the row "-1" (top pad)
        so[:, 0:1, :] = jnp.zeros((TH + 1, 1, C2), BF16)
        if R == 1:
            so[0:1, 1:Wo + 1, :] = jnp.zeros((1, Wo, C2), BF16)
            so[1:TH + 1, 1:Wo + 1, :] = x_ref[0, 0:TH, 1, :, :].astype(BF16)
        else:
            @pl.when(r == 0)
            def _():
                so[0:1, 1:Wo + 1, :] = jnp.zeros((1, Wo, C2), BF16)
                so[1:TH + 1, 1:Wo + 1, :] = x_ref[0, 0:TH, 1, :, :].astype(BF16)

            @pl.when(r > 0)
            def _():
                so[0:TH + 1, 1:Wo + 1, :] = \
                    x_ref[0, pl.ds(r0 - 1, TH + 1), 1, :, :].astype(BF16)

        ce = slice(0, Cin)        # even input columns
        co = slice(Cin, 2 * Cin)  # odd input columns
        taps = [
            so[0:TH, 0:Wo, co],          # (di=0, dj=0)
            so[0:TH, 1:Wo + 1, ce],      # (0, 1)
            so[0:TH, 1:Wo + 1, co],      # (0, 2)
            se[0:TH, 0:Wo, co],          # (1, 0)
            se[0:TH, 1:Wo + 1, ce],      # (1, 1)  (centre tap == x[2q, 2c])
            se[0:TH, 1:Wo + 1, co],      # (1, 2)
            so[1:TH + 1, 0:Wo, co],      # (2, 0)
            so[1:TH + 1, 1:Wo + 1, ce],  # (2, 1)
            so[1:TH + 1, 1:Wo + 1, co],  # (2, 2)
        ]
        lhs = jnp.concatenate(taps, axis=-1).reshape(TH * Wo, 9 * Cin)
        acc = jnp.dot(lhs, w_ref[...], preferred_element_type=jnp.float32)
        y = jnp.maximum(acc * ss_ref[...] + sh_ref[...], 0.0)
        o_ref[...] = y.reshape(1, TH, Wo, Cout).astype(o_ref.dtype)

        # fused identity branch: 1x1 stride-2 conv + BN on the centre tap.
        ctr = taps[4].reshape(TH * Wo, Cin)
        idv = jnp.dot(ctr, wd_ref[...], preferred_element_type=jnp.float32)
        idv = idv * ssd_ref[...] + shd_ref[...]
        id_ref[...] = idv.reshape(1, TH, Wo, Cout).astype(id_ref.dtype)

    return kernel


def conv3x3_bn_s2_with_down(x, wk, ss, sh, wdk, ssd, shd, *, out_dtype=BF16):
    """Returns (relu(bn1(conv3x3_s2(x))), bn_d(conv1x1_s2(x))) -- both bf16."""
    N, H, W, Cin = x.shape
    Cout = wk.shape[1]
    assert H % 2 == 0 and W % 2 == 0, "stride-2 path requires even H and W"
    Hh, Wh = H // 2, W // 2
    Ho, Wo = Hh, Wh
    TH = _pick_row_tile(Ho)
    R = Ho // TH

    x4 = x.reshape(N, Hh, 2, Wh, 2 * Cin)  # free, contiguous metadata reshape

    in_specs = [
        pl.BlockSpec((1, Hh, 2, Wh, 2 * Cin), lambda n, r: (n, 0, 0, 0, 0)),
        pl.BlockSpec((9 * Cin, Cout), lambda n, r: (0, 0)),
        pl.BlockSpec((1, Cout), lambda n, r: (0, 0)),
        pl.BlockSpec((1, Cout), lambda n, r: (0, 0)),
        pl.BlockSpec((Cin, Cout), lambda n, r: (0, 0)),
        pl.BlockSpec((1, Cout), lambda n, r: (0, 0)),
        pl.BlockSpec((1, Cout), lambda n, r: (0, 0)),
    ]
    out_spec = pl.BlockSpec((1, TH, Wo, Cout), lambda n, r: (n, r, 0, 0))
    return pl.pallas_call(
        _make_s2_kernel(TH, R),
        out_shape=(jax.ShapeDtypeStruct((N, Ho, Wo, Cout), out_dtype),
                   jax.ShapeDtypeStruct((N, Ho, Wo, Cout), out_dtype)),
        grid=(N, R),
        in_specs=in_specs,
        out_specs=(out_spec, out_spec),
        scratch_shapes=[pltpu.VMEM((TH, Wh + 1, 2 * Cin), BF16),
                        pltpu.VMEM((TH + 1, Wh + 1, 2 * Cin), BF16)],
        compiler_params=pltpu.CompilerParams(
            dimension_semantics=("parallel", "parallel")),
    )(x4, wk, ss, sh, wdk, ssd, shd)


# ---------------------------------------------------------------------------
# BasicBlock forward (matches the PyTorch module, inference mode)
# ---------------------------------------------------------------------------
def basic_block_forward(x, bp, *, stride, out_dtype=jnp.float32):
    """x: (N, H, W, in_planes) NHWC.  Returns (N, H/stride, W/stride, planes)."""
    if stride == 1:
        assert "down_wk" not in bp, "stride-1 down-sample path not implemented"
        identity = x
        out1 = conv3x3_bn_s1(x, bp["conv1_wk"], bp["bn1_s"], bp["bn1_b"],
                             relu=True, residual=None, out_dtype=BF16)
    else:
        out1, identity = conv3x3_bn_s2_with_down(
            x, bp["conv1_wk"], bp["bn1_s"], bp["bn1_b"],
            bp["down_wk"], bp["dbn_s"], bp["dbn_b"], out_dtype=BF16)
    # relu(bn2(conv2(out1)) + identity), fused in one kernel
    return conv3x3_bn_s1(out1, bp["conv2_wk"], bp["bn2_s"], bp["bn2_b"],
                         relu=True, residual=identity, out_dtype=out_dtype)


# ---------------------------------------------------------------------------
# Parameters (deterministic); kernel-format weights precomputed once
# ---------------------------------------------------------------------------
def _bn_fold(key, c):
    kg, kb, km, kv = jax.random.split(key, 4)
    gamma = jax.random.uniform(kg, (c,), jnp.float32, 0.5, 1.5)
    beta = jax.random.normal(kb, (c,), jnp.float32) * 0.1
    mean = jax.random.normal(km, (c,), jnp.float32) * 0.1
    var = jax.random.uniform(kv, (c,), jnp.float32, 0.5, 1.5)
    scale = gamma / jnp.sqrt(var + BN_EPS)
    shift = beta - mean * scale
    return scale.reshape(1, c), shift.reshape(1, c)


def build_block_params(key, in_planes, planes, *, stride):
    k1, k2, k3, k4, k5, k6 = jax.random.split(key, 6)

    def conv_w(k, kh, kw, cin, cout):
        return jax.random.normal(k, (kh, kw, cin, cout), jnp.float32) * \
            math.sqrt(2.0 / (kh * kw * cout))

    bp = {"conv1_w": conv_w(k1, 3, 3, in_planes, planes),
          "conv2_w": conv_w(k2, 3, 3, planes, planes)}
    bp["bn1_s"], bp["bn1_b"] = _bn_fold(k3, planes)
    bp["bn2_s"], bp["bn2_b"] = _bn_fold(k4, planes)
    bp["conv1_wk"] = bp["conv1_w"].reshape(9 * in_planes, planes).astype(BF16)
    bp["conv2_wk"] = bp["conv2_w"].reshape(9 * planes, planes).astype(BF16)
    if stride != 1 or in_planes != planes:
        bp["down_w"] = conv_w(k5, 1, 1, in_planes, planes)
        bp["dbn_s"], bp["dbn_b"] = _bn_fold(k6, planes)
        bp["down_wk"] = bp["down_w"].reshape(in_planes, planes).astype(BF16)
    return bp


# ---------------------------------------------------------------------------
# Pure-JAX f32 reference for a correctness check
# ---------------------------------------------------------------------------
def _conv_ref(x, w, scale, shift, *, stride, pad, relu, residual=None):
    y = jax.lax.conv_general_dilated(
        x, w, window_strides=(stride, stride),
        padding=((pad, pad), (pad, pad)),
        dimension_numbers=("NHWC", "HWIO", "NHWC"))
    y = y * scale + shift
    if residual is not None:
        y = y + residual
    if relu:
        y = jnp.maximum(y, 0.0)
    return y


def _block_ref(x, bp, *, stride):
    identity = x
    out = _conv_ref(x, bp["conv1_w"], bp["bn1_s"], bp["bn1_b"],
                    stride=stride, pad=1, relu=True)
    if "down_w" in bp:
        identity = _conv_ref(x, bp["down_w"], bp["dbn_s"], bp["dbn_b"],
                             stride=stride, pad=0, relu=False)
    return _conv_ref(out, bp["conv2_w"], bp["bn2_s"], bp["bn2_b"],
                     stride=1, pad=1, relu=True, residual=identity)


# ---------------------------------------------------------------------------
if __name__ == "__main__":
    key = jax.random.PRNGKey(0)
    k1, k2, kx = jax.random.split(key, 3)

    in_planes, planes = 64, 128
    p_down = build_block_params(k1, in_planes, planes, stride=2)  # stride-2 + downsample
    p_id = build_block_params(k2, planes, planes, stride=1)       # identity block

    x = jax.random.normal(kx, (2, in_planes, 32, 32), jnp.float32)  # NCHW, like PyTorch

    @jax.jit
    def forward(x_nchw, bp1, bp2):
        h = jnp.transpose(x_nchw, (0, 2, 3, 1))            # NCHW -> NHWC
        h = basic_block_forward(h, bp1, stride=2, out_dtype=BF16)   # feeds next block
        h = basic_block_forward(h, bp2, stride=1, out_dtype=jnp.float32)
        return jnp.transpose(h, (0, 3, 1, 2))              # NHWC -> NCHW

    y = jax.block_until_ready(forward(x, p_down, p_id))
    assert y.shape == (2, planes, 16, 16) and y.dtype == jnp.float32
    assert bool(jnp.isfinite(y).all())

    # reference check (bf16 MXU operands / bf16 inter-block activations vs f32 ref)
    x_nhwc = jnp.transpose(x, (0, 2, 3, 1))
    ref = _block_ref(_block_ref(x_nhwc, p_down, stride=2), p_id, stride=1)
    ref = jnp.transpose(ref, (0, 3, 1, 2))
    err = jnp.sqrt(jnp.sum((y - ref) ** 2))
    rel = float(err / (jnp.sqrt(jnp.sum(ref ** 2)) + 1e-6))
    assert rel < 4e-2, f"relative error too high: {rel}"

    print("KERNEL_OK")
</pallas_src>

<mosaic_0001>
module attributes {stable_mosaic.version = 11 : i64} {
  func.func @kernel(%arg0: i32, %arg1: i32, %arg2: memref<1x16x16x128xbf16, #tpu.memory_space<vmem>>, %arg3: memref<1152x128xbf16, #tpu.memory_space<vmem>>, %arg4: memref<1x128xf32, #tpu.memory_space<vmem>>, %arg5: memref<1x128xf32, #tpu.memory_space<vmem>>, %arg6: memref<1x8x16x128xbf16, #tpu.memory_space<vmem>>, %arg7: memref<1x8x16x128xbf16, #tpu.memory_space<vmem>>, %arg8: memref<10x18x128xbf16, #tpu.memory_space<vmem>>) attributes {dimension_semantics = [#tpu.dimension_semantics<parallel>, #tpu.dimension_semantics<parallel>], iteration_bounds = array<i64: 2, 2>, scalar_prefetch = 0 : i64, scratch_operands = 1 : i64, tpu.core_type = #tpu.core_type<tc>, window_params = [{transform_indices = @transform_0, window_bounds = array<i64: 1, 16, 16, 128>}, {pipeline_mode = #tpu.pipeline_mode<synchronous>, transform_indices = @transform_1, window_bounds = array<i64: 1152, 128>}, {pipeline_mode = #tpu.pipeline_mode<synchronous>, transform_indices = @transform_2, window_bounds = array<i64: 1, 128>}, {pipeline_mode = #tpu.pipeline_mode<synchronous>, transform_indices = @transform_3, window_bounds = array<i64: 1, 128>}, {transform_indices = @transform_4, window_bounds = array<i64: 1, 8, 16, 128>}, {transform_indices = @transform_5, window_bounds = array<i64: 1, 8, 16, 128>}]} {
    %c8_i32 = arith.constant 8 : i32
    %0 = arith.muli %arg1, %c8_i32 : i32
    %cst = arith.constant 0.000000e+00 : bf16
    %1 = vector.broadcast %cst : bf16 to vector<10x1x128xbf16>
    %c0 = arith.constant 0 : index
    %c0_0 = arith.constant 0 : index
    %c0_1 = arith.constant 0 : index
    %2 = vector.load %arg8[%c0, %c0_0, %c0_1] : memref<10x18x128xbf16, #tpu.memory_space<vmem>>, vector<10x1x128xbf16>
    tpu.vector_store %arg8[%c0, %c0_0, %c0_1], %1 {strides = array<i32>} : memref<10x18x128xbf16, #tpu.memory_space<vmem>>, vector<10x1x128xbf16>,
    %cst_2 = arith.constant 0.000000e+00 : bf16
    %3 = vector.broadcast %cst_2 : bf16 to vector<10x1x128xbf16>
    %c0_3 = arith.constant 0 : index
    %c17 = arith.constant 17 : index
    %c0_4 = arith.constant 0 : index
    %4 = vector.load %arg8[%c0_3, %c17, %c0_4] : memref<10x18x128xbf16, #tpu.memory_space<vmem>>, vector<10x1x128xbf16>
    tpu.vector_store %arg8[%c0_3, %c17, %c0_4], %3 {strides = array<i32>} : memref<10x18x128xbf16, #tpu.memory_space<vmem>>, vector<10x1x128xbf16>,
    %c0_i32 = arith.constant 0 : i32
    %5 = arith.cmpi eq, %arg1, %c0_i32 : i32
    %6 = arith.extui %5 : i1 to i32
    %c0_i32_5 = arith.constant 0 : i32
    %7 = arith.cmpi ne, %6, %c0_i32_5 : i32
    scf.if %7 {
      %cst_48 = arith.constant 0.000000e+00 : bf16
      %40 = vector.broadcast %cst_48 : bf16 to vector<1x18x128xbf16>
      %c0_49 = arith.constant 0 : index
      %c0_50 = arith.constant 0 : index
      %c0_51 = arith.constant 0 : index
      %41 = vector.load %arg8[%c0_49, %c0_50, %c0_51] : memref<10x18x128xbf16, #tpu.memory_space<vmem>>, vector<1x18x128xbf16>
      tpu.vector_store %arg8[%c0_49, %c0_50, %c0_51], %40 {strides = array<i32>} : memref<10x18x128xbf16, #tpu.memory_space<vmem>>, vector<1x18x128xbf16>,
      %c0_52 = arith.constant 0 : index
      %c0_53 = arith.constant 0 : index
      %c0_54 = arith.constant 0 : index
      %c0_55 = arith.constant 0 : index
      %42 = vector.load %arg2[%c0_52, %c0_53, %c0_54, %c0_55] : memref<1x16x16x128xbf16, #tpu.memory_space<vmem>>, vector<1x9x16x128xbf16>
      %43 = vector.shape_cast %42 : vector<1x9x16x128xbf16> to vector<9x16x128xbf16>
      %c1_56 = arith.constant 1 : index
      %c1_57 = arith.constant 1 : index
      %c0_58 = arith.constant 0 : index
      %44 = vector.load %arg8[%c1_56, %c1_57, %c0_58] : memref<10x18x128xbf16, #tpu.memory_space<vmem>>, vector<9x16x128xbf16>
      tpu.vector_store %arg8[%c1_56, %c1_57, %c0_58], %43 {strides = array<i32>} : memref<10x18x128xbf16, #tpu.memory_space<vmem>>, vector<9x16x128xbf16>,
    } else {
    }
    %c1_i32 = arith.constant 1 : i32
    %8 = arith.cmpi eq, %arg1, %c1_i32 : i32
    %9 = arith.extui %8 : i1 to i32
    %c0_i32_6 = arith.constant 0 : i32
    %10 = arith.cmpi ne, %9, %c0_i32_6 : i32
    scf.if %10 {
      %cst_48 = arith.constant 0.000000e+00 : bf16
      %40 = vector.broadcast %cst_48 : bf16 to vector<1x18x128xbf16>
      %c9 = arith.constant 9 : index
      %c0_49 = arith.constant 0 : index
      %c0_50 = arith.constant 0 : index
      %41 = vector.load %arg8[%c9, %c0_49, %c0_50] : memref<10x18x128xbf16, #tpu.memory_space<vmem>>, vector<1x18x128xbf16>
      tpu.vector_store %arg8[%c9, %c0_49, %c0_50], %40 {strides = array<i32>} : memref<10x18x128xbf16, #tpu.memory_space<vmem>>, vector<1x18x128xbf16>,
      %c1_i32_51 = arith.constant 1 : i32
      %42 = arith.subi %0, %c1_i32_51 : i32
      %c0_52 = arith.constant 0 : index
      %43 = arith.index_cast %42 : i32 to index
      %c0_53 = arith.constant 0 : index
      %c0_54 = arith.constant 0 : index
      %44 = vector.load %arg2[%c0_52, %43, %c0_53, %c0_54] : memref<1x16x16x128xbf16, #tpu.memory_space<vmem>>, vector<1x9x16x128xbf16>
      %45 = vector.shape_cast %44 : vector<1x9x16x128xbf16> to vector<9x16x128xbf16>
      %c0_55 = arith.constant 0 : index
      %c1_56 = arith.constant 1 : index
      %c0_57 = arith.constant 0 : index
      %46 = vector.load %arg8[%c0_55, %c1_56, %c0_57] : memref<10x18x128xbf16, #tpu.memory_space<vmem>>, vector<9x16x128xbf16>
      tpu.vector_store %arg8[%c0_55, %c1_56, %c0_57], %45 {strides = array<i32>} : memref<10x18x128xbf16, #tpu.memory_space<vmem>>, vector<9x16x128xbf16>,
    } else {
    }
    %c0_7 = arith.constant 0 : index
    %c0_8 = arith.constant 0 : index
    %c0_9 = arith.constant 0 : index
    %11 = vector.load %arg8[%c0_7, %c0_8, %c0_9] : memref<10x18x128xbf16, #tpu.memory_space<vmem>>, vector<8x16x128xbf16>
    %c0_10 = arith.constant 0 : index
    %c1 = arith.constant 1 : index
    %c0_11 = arith.constant 0 : index
    %12 = vector.load %arg8[%c0_10, %c1, %c0_11] : memref<10x18x128xbf16, #tpu.memory_space<vmem>>, vector<8x16x128xbf16>
    %c0_12 = arith.constant 0 : index
    %c2 = arith.constant 2 : index
    %c0_13 = arith.constant 0 : index
    %13 = vector.load %arg8[%c0_12, %c2, %c0_13] : memref<10x18x128xbf16, #tpu.memory_space<vmem>>, vector<8x16x128xbf16>
    %c1_14 = arith.constant 1 : index
    %c0_15 = arith.constant 0 : index
    %c0_16 = arith.constant 0 : index
    %14 = vector.load %arg8[%c1_14, %c0_15, %c0_16] : memref<10x18x128xbf16, #tpu.memory_space<vmem>>, vector<8x16x128xbf16>
    %c1_17 = arith.constant 1 : index
    %c1_18 = arith.constant 1 : index
    %c0_19 = arith.constant 0 : index
    %15 = vector.load %arg8[%c1_17, %c1_18, %c0_19] : memref<10x18x128xbf16, #tpu.memory_space<vmem>>, vector<8x16x128xbf16>
    %c1_20 = arith.constant 1 : index
    %c2_21 = arith.constant 2 : index
    %c0_22 = arith.constant 0 : index
    %16 = vector.load %arg8[%c1_20, %c2_21, %c0_22] : memref<10x18x128xbf16, #tpu.memory_space<vmem>>, vector<8x16x128xbf16>
    %c2_23 = arith.constant 2 : index
    %c0_24 = arith.constant 0 : index
    %c0_25 = arith.constant 0 : index
    %17 = vector.load %arg8[%c2_23, %c0_24, %c0_25] : memref<10x18x128xbf16, #tpu.memory_space<vmem>>, vector<8x16x128xbf16>
    %c2_26 = arith.constant 2 : index
    %c1_27 = arith.constant 1 : index
    %c0_28 = arith.constant 0 : index
    %18 = vector.load %arg8[%c2_26, %c1_27, %c0_28] : memref<10x18x128xbf16, #tpu.memory_space<vmem>>, vector<8x16x128xbf16>
    %c2_29 = arith.constant 2 : index
    %c2_30 = arith.constant 2 : index
    %c0_31 = arith.constant 0 : index
    %19 = vector.load %arg8[%c2_29, %c2_30, %c0_31] : memref<10x18x128xbf16, #tpu.memory_space<vmem>>, vector<8x16x128xbf16>
    %20 = tpu.concatenate %11, %12, %13, %14, %15, %16, %17, %18, %19 in 2 : vector<8x16x128xbf16>, vector<8x16x128xbf16>, vector<8x16x128xbf16>, vector<8x16x128xbf16>, vector<8x16x128xbf16>, vector<8x16x128xbf16>, vector<8x16x128xbf16>, vector<8x16x128xbf16>, vector<8x16x128xbf16> -> vector<8x16x1152xbf16>
    %21 = vector.shape_cast %20 : vector<8x16x1152xbf16> to vector<128x1152xbf16>
    %c0_32 = arith.constant 0 : index
    %c0_33 = arith.constant 0 : index
    %22 = vector.load %arg3[%c0_32, %c0_33] : memref<1152x128xbf16, #tpu.memory_space<vmem>>, vector<1152x128xbf16>
    %cst_34 = arith.constant dense<0.000000e+00> : vector<128x128xf32>
    %23 = tpu.matmul %21, %22, %cst_34 {dimension_numbers = #tpu.dot_dimension_numbers<[1], [0], [0], [1], [0, 0, 1, 1], [], []>} : vector<128x1152xbf16>, vector<1152x128xbf16>, vector<128x128xf32> -> vector<128x128xf32>
    %c0_35 = arith.constant 0 : index
    %c0_36 = arith.constant 0 : index
    %24 = vector.load %arg4[%c0_35, %c0_36] : memref<1x128xf32, #tpu.memory_space<vmem>>, vector<1x128xf32>
    %25 = vector.broadcast %24 : vector<1x128xf32> to vector<128x128xf32>
    %26 = arith.mulf %23, %25 : vector<128x128xf32>
    %c0_37 = arith.constant 0 : index
    %c0_38 = arith.constant 0 : index
    %27 = vector.load %arg5[%c0_37, %c0_38] : memref<1x128xf32, #tpu.memory_space<vmem>>, vector<1x128xf32>
    %28 = vector.broadcast %27 : vector<1x128xf32> to vector<128x128xf32>
    %29 = arith.addf %26, %28 : vector<128x128xf32>
    %c0_39 = arith.constant 0 : index
    %c0_40 = arith.constant 0 : index
    %c0_41 = arith.constant 0 : index
    %c0_42 = arith.constant 0 : index
    %30 = vector.load %arg6[%c0_39, %c0_40, %c0_41, %c0_42] : memref<1x8x16x128xbf16, #tpu.memory_space<vmem>>, vector<1x8x16x128xbf16>
    %31 = vector.shape_cast %30 : vector<1x8x16x128xbf16> to vector<8x16x128xbf16>
    %32 = vector.shape_cast %31 : vector<8x16x128xbf16> to vector<128x128xbf16>
    %33 = arith.extf %32 : vector<128x128xbf16> to vector<128x128xf32>
    %34 = arith.addf %29, %33 : vector<128x128xf32>
    %cst_43 = arith.constant 0.000000e+00 : f32
    %35 = vector.broadcast %cst_43 : f32 to vector<128x128xf32>
    %36 = arith.maximumf %34, %35 : vector<128x128xf32>
    %37 = vector.shape_cast %36 : vector<128x128xf32> to vector<1x8x16x128xf32>
    %38 = arith.truncf %37 : vector<1x8x16x128xf32> to vector<1x8x16x128xbf16>
    %c0_44 = arith.constant 0 : index
    %c0_45 = arith.constant 0 : index
    %c0_46 = arith.constant 0 : index
    %c0_47 = arith.constant 0 : index
    %39 = vector.load %arg7[%c0_44, %c0_45, %c0_46, %c0_47] : memref<1x8x16x128xbf16, #tpu.memory_space<vmem>>, vector<1x8x16x128xbf16>
    tpu.vector_store %arg7[%c0_44, %c0_45, %c0_46, %c0_47], %38 {strides = array<i32>} : memref<1x8x16x128xbf16, #tpu.memory_space<vmem>>, vector<1x8x16x128xbf16>,
    return
  }
  func.func @transform_0(%arg0: i32, %arg1: i32) -> (i32, i32, i32, i32) {
    %c0_i32 = arith.constant 0 : i32
    %c0_i32_0 = arith.constant 0 : i32
    %c0_i32_1 = arith.constant 0 : i32
    %c0_i32_2 = arith.constant 0 : i32
    return %arg0, %c0_i32, %c0_i32_0, %c0_i32_1 : i32, i32, i32, i32
  }
  func.func @transform_1(%arg0: i32, %arg1: i32) -> (i32, i32) {
    %c0_i32 = arith.constant 0 : i32
    %c0_i32_0 = arith.constant 0 : i32
    %c0_i32_1 = arith.constant 0 : i32
    return %c0_i32, %c0_i32_0 : i32, i32
  }
  func.func @transform_2(%arg0: i32, %arg1: i32) -> (i32, i32) {
    %c0_i32 = arith.constant 0 : i32
    %c0_i32_0 = arith.constant 0 : i32
    %c0_i32_1 = arith.constant 0 : i32
    return %c0_i32, %c0_i32_0 : i32, i32
  }
  func.func @transform_3(%arg0: i32, %arg1: i32) -> (i32, i32) {
    %c0_i32 = arith.constant 0 : i32
    %c0_i32_0 = arith.constant 0 : i32
    %c0_i32_1 = arith.constant 0 : i32
    return %c0_i32, %c0_i32_0 : i32, i32
  }
  func.func @transform_4(%arg0: i32, %arg1: i32) -> (i32, i32, i32, i32) {
    %c0_i32 = arith.constant 0 : i32
    %c0_i32_0 = arith.constant 0 : i32
    %c0_i32_1 = arith.constant 0 : i32
    return %arg0, %arg1, %c0_i32, %c0_i32_0 : i32, i32, i32, i32
  }
  func.func @transform_5(%arg0: i32, %arg1: i32) -> (i32, i32, i32, i32) {
    %c0_i32 = arith.constant 0 : i32
    %c0_i32_0 = arith.constant 0 : i32
    %c0_i32_1 = arith.constant 0 : i32
    return %arg0, %arg1, %c0_i32, %c0_i32_0 : i32, i32, i32, i32
  }
}

module attributes {stable_mosaic.version = 11 : i64} {
  func.func @kernel(%arg0: i32, %arg1: i32, %arg2: memref<1x16x16x128xbf16, #tpu.memory_space<vmem>>, %arg3: memref<1152x128xbf16, #tpu.memory_space<vmem>>, %arg4: memref<1x128xf32, #tpu.memory_space<vmem>>, %arg5: memref<1x128xf32, #tpu.memory_space<vmem>>, %arg6: memref<1x8x16x128xbf16, #tpu.memory_space<vmem>>, %arg7: memref<10x18x128xbf16, #tpu.memory_space<vmem>>) attributes {dimension_semantics = [#tpu.dimension_semantics<parallel>, #tpu.dimension_semantics<parallel>], iteration_bounds = array<i64: 2, 2>, scalar_prefetch = 0 : i64, scratch_operands = 1 : i64, tpu.core_type = #tpu.core_type<tc>, window_params = [{transform_indices = @transform_0, window_bounds = array<i64: 1, 16, 16, 128>}, {pipeline_mode = #tpu.pipeline_mode<synchronous>, transform_indices = @transform_1, window_bounds = array<i64: 1152, 128>}, {pipeline_mode = #tpu.pipeline_mode<synchronous>, transform_indices = @transform_2, window_bounds = array<i64: 1, 128>}, {pipeline_mode = #tpu.pipeline_mode<synchronous>, transform_indices = @transform_3, window_bounds = array<i64: 1, 128>}, {transform_indices = @transform_4, window_bounds = array<i64: 1, 8, 16, 128>}]} {
    %c8_i32 = arith.constant 8 : i32
    %0 = arith.muli %arg1, %c8_i32 : i32
    %cst = arith.constant 0.000000e+00 : bf16
    %1 = vector.broadcast %cst : bf16 to vector<10x1x128xbf16>
    %c0 = arith.constant 0 : index
    %c0_0 = arith.constant 0 : index
    %c0_1 = arith.constant 0 : index
    %2 = vector.load %arg7[%c0, %c0_0, %c0_1] : memref<10x18x128xbf16, #tpu.memory_space<vmem>>, vector<10x1x128xbf16>
    tpu.vector_store %arg7[%c0, %c0_0, %c0_1], %1 {strides = array<i32>} : memref<10x18x128xbf16, #tpu.memory_space<vmem>>, vector<10x1x128xbf16>,
    %cst_2 = arith.constant 0.000000e+00 : bf16
    %3 = vector.broadcast %cst_2 : bf16 to vector<10x1x128xbf16>
    %c0_3 = arith.constant 0 : index
    %c17 = arith.constant 17 : index
    %c0_4 = arith.constant 0 : index
    %4 = vector.load %arg7[%c0_3, %c17, %c0_4] : memref<10x18x128xbf16, #tpu.memory_space<vmem>>, vector<10x1x128xbf16>
    tpu.vector_store %arg7[%c0_3, %c17, %c0_4], %3 {strides = array<i32>} : memref<10x18x128xbf16, #tpu.memory_space<vmem>>, vector<10x1x128xbf16>,
    %c0_i32 = arith.constant 0 : i32
    %5 = arith.cmpi eq, %arg1, %c0_i32 : i32
    %6 = arith.extui %5 : i1 to i32
    %c0_i32_5 = arith.constant 0 : i32
    %7 = arith.cmpi ne, %6, %c0_i32_5 : i32
    scf.if %7 {
      %cst_44 = arith.constant 0.000000e+00 : bf16
      %35 = vector.broadcast %cst_44 : bf16 to vector<1x18x128xbf16>
      %c0_45 = arith.constant 0 : index
      %c0_46 = arith.constant 0 : index
      %c0_47 = arith.constant 0 : index
      %36 = vector.load %arg7[%c0_45, %c0_46, %c0_47] : memref<10x18x128xbf16, #tpu.memory_space<vmem>>, vector<1x18x128xbf16>
      tpu.vector_store %arg7[%c0_45, %c0_46, %c0_47], %35 {strides = array<i32>} : memref<10x18x128xbf16, #tpu.memory_space<vmem>>, vector<1x18x128xbf16>,
      %c0_48 = arith.constant 0 : index
      %c0_49 = arith.constant 0 : index
      %c0_50 = arith.constant 0 : index
      %c0_51 = arith.constant 0 : index
      %37 = vector.load %arg2[%c0_48, %c0_49, %c0_50, %c0_51] : memref<1x16x16x128xbf16, #tpu.memory_space<vmem>>, vector<1x9x16x128xbf16>
      %38 = vector.shape_cast %37 : vector<1x9x16x128xbf16> to vector<9x16x128xbf16>
      %c1_52 = arith.constant 1 : index
      %c1_53 = arith.constant 1 : index
      %c0_54 = arith.constant 0 : index
      %39 = vector.load %arg7[%c1_52, %c1_53, %c0_54] : memref<10x18x128xbf16, #tpu.memory_space<vmem>>, vector<9x16x128xbf16>
      tpu.vector_store %arg7[%c1_52, %c1_53, %c0_54], %38 {strides = array<i32>} : memref<10x18x128xbf16, #tpu.memory_space<vmem>>, vector<9x16x128xbf16>,
    } else {
    }
    %c1_i32 = arith.constant 1 : i32
    %8 = arith.cmpi eq, %arg1, %c1_i32 : i32
    %9 = arith.extui %8 : i1 to i32
    %c0_i32_6 = arith.constant 0 : i32
    %10 = arith.cmpi ne, %9, %c0_i32_6 : i32
    scf.if %10 {
      %cst_44 = arith.constant 0.000000e+00 : bf16
      %35 = vector.broadcast %cst_44 : bf16 to vector<1x18x128xbf16>
      %c9 = arith.constant 9 : index
      %c0_45 = arith.constant 0 : index
      %c0_46 = arith.constant 0 : index
      %36 = vector.load %arg7[%c9, %c0_45, %c0_46] : memref<10x18x128xbf16, #tpu.memory_space<vmem>>, vector<1x18x128xbf16>
      tpu.vector_store %arg7[%c9, %c0_45, %c0_46], %35 {strides = array<i32>} : memref<10x18x128xbf16, #tpu.memory_space<vmem>>, vector<1x18x128xbf16>,
      %c1_i32_47 = arith.constant 1 : i32
      %37 = arith.subi %0, %c1_i32_47 : i32
      %c0_48 = arith.constant 0 : index
      %38 = arith.index_cast %37 : i32 to index
      %c0_49 = arith.constant 0 : index
      %c0_50 = arith.constant 0 : index
      %39 = vector.load %arg2[%c0_48, %38, %c0_49, %c0_50] : memref<1x16x16x128xbf16, #tpu.memory_space<vmem>>, vector<1x9x16x128xbf16>
      %40 = vector.shape_cast %39 : vector<1x9x16x128xbf16> to vector<9x16x128xbf16>
      %c0_51 = arith.constant 0 : index
      %c1_52 = arith.constant 1 : index
      %c0_53 = arith.constant 0 : index
      %41 = vector.load %arg7[%c0_51, %c1_52, %c0_53] : memref<10x18x128xbf16, #tpu.memory_space<vmem>>, vector<9x16x128xbf16>
      tpu.vector_store %arg7[%c0_51, %c1_52, %c0_53], %40 {strides = array<i32>} : memref<10x18x128xbf16, #tpu.memory_space<vmem>>, vector<9x16x128xbf16>,
    } else {
    }
    %c0_7 = arith.constant 0 : index
    %c0_8 = arith.constant 0 : index
    %c0_9 = arith.constant 0 : index
    %11 = vector.load %arg7[%c0_7, %c0_8, %c0_9] : memref<10x18x128xbf16, #tpu.memory_space<vmem>>, vector<8x16x128xbf16>
    %c0_10 = arith.constant 0 : index
    %c1 = arith.constant 1 : index
    %c0_11 = arith.constant 0 : index
    %12 = vector.load %arg7[%c0_10, %c1, %c0_11] : memref<10x18x128xbf16, #tpu.memory_space<vmem>>, vector<8x16x128xbf16>
    %c0_12 = arith.constant 0 : index
    %c2 = arith.constant 2 : index
    %c0_13 = arith.constant 0 : index
    %13 = vector.load %arg7[%c0_12, %c2, %c0_13] : memref<10x18x128xbf16, #tpu.memory_space<vmem>>, vector<8x16x128xbf16>
    %c1_14 = arith.constant 1 : index
    %c0_15 = arith.constant 0 : index
    %c0_16 = arith.constant 0 : index
    %14 = vector.load %arg7[%c1_14, %c0_15, %c0_16] : memref<10x18x128xbf16, #tpu.memory_space<vmem>>, vector<8x16x128xbf16>
    %c1_17 = arith.constant 1 : index
    %c1_18 = arith.constant 1 : index
    %c0_19 = arith.constant 0 : index
    %15 = vector.load %arg7[%c1_17, %c1_18, %c0_19] : memref<10x18x128xbf16, #tpu.memory_space<vmem>>, vector<8x16x128xbf16>
    %c1_20 = arith.constant 1 : index
    %c2_21 = arith.constant 2 : index
    %c0_22 = arith.constant 0 : index
    %16 = vector.load %arg7[%c1_20, %c2_21, %c0_22] : memref<10x18x128xbf16, #tpu.memory_space<vmem>>, vector<8x16x128xbf16>
    %c2_23 = arith.constant 2 : index
    %c0_24 = arith.constant 0 : index
    %c0_25 = arith.constant 0 : index
    %17 = vector.load %arg7[%c2_23, %c0_24, %c0_25] : memref<10x18x128xbf16, #tpu.memory_space<vmem>>, vector<8x16x128xbf16>
    %c2_26 = arith.constant 2 : index
    %c1_27 = arith.constant 1 : index
    %c0_28 = arith.constant 0 : index
    %18 = vector.load %arg7[%c2_26, %c1_27, %c0_28] : memref<10x18x128xbf16, #tpu.memory_space<vmem>>, vector<8x16x128xbf16>
    %c2_29 = arith.constant 2 : index
    %c2_30 = arith.constant 2 : index
    %c0_31 = arith.constant 0 : index
    %19 = vector.load %arg7[%c2_29, %c2_30, %c0_31] : memref<10x18x128xbf16, #tpu.memory_space<vmem>>, vector<8x16x128xbf16>
    %20 = tpu.concatenate %11, %12, %13, %14, %15, %16, %17, %18, %19 in 2 : vector<8x16x128xbf16>, vector<8x16x128xbf16>, vector<8x16x128xbf16>, vector<8x16x128xbf16>, vector<8x16x128xbf16>, vector<8x16x128xbf16>, vector<8x16x128xbf16>, vector<8x16x128xbf16>, vector<8x16x128xbf16> -> vector<8x16x1152xbf16>
    %21 = vector.shape_cast %20 : vector<8x16x1152xbf16> to vector<128x1152xbf16>
    %c0_32 = arith.constant 0 : index
    %c0_33 = arith.constant 0 : index
    %22 = vector.load %arg3[%c0_32, %c0_33] : memref<1152x128xbf16, #tpu.memory_space<vmem>>, vector<1152x128xbf16>
    %cst_34 = arith.constant dense<0.000000e+00> : vector<128x128xf32>
    %23 = tpu.matmul %21, %22, %cst_34 {dimension_numbers = #tpu.dot_dimension_numbers<[1], [0], [0], [1], [0, 0, 1, 1], [], []>} : vector<128x1152xbf16>, vector<1152x128xbf16>, vector<128x128xf32> -> vector<128x128xf32>
    %c0_35 = arith.constant 0 : index
    %c0_36 = arith.constant 0 : index
    %24 = vector.load %arg4[%c0_35, %c0_36] : memref<1x128xf32, #tpu.memory_space<vmem>>, vector<1x128xf32>
    %25 = vector.broadcast %24 : vector<1x128xf32> to vector<128x128xf32>
    %26 = arith.mulf %23, %25 : vector<128x128xf32>
    %c0_37 = arith.constant 0 : index
    %c0_38 = arith.constant 0 : index
    %27 = vector.load %arg5[%c0_37, %c0_38] : memref<1x128xf32, #tpu.memory_space<vmem>>, vector<1x128xf32>
    %28 = vector.broadcast %27 : vector<1x128xf32> to vector<128x128xf32>
    %29 = arith.addf %26, %28 : vector<128x128xf32>
    %cst_39 = arith.constant 0.000000e+00 : f32
    %30 = vector.broadcast %cst_39 : f32 to vector<128x128xf32>
    %31 = arith.maximumf %29, %30 : vector<128x128xf32>
    %32 = vector.shape_cast %31 : vector<128x128xf32> to vector<1x8x16x128xf32>
    %33 = arith.truncf %32 : vector<1x8x16x128xf32> to vector<1x8x16x128xbf16>
    %c0_40 = arith.constant 0 : index
    %c0_41 = arith.constant 0 : index
    %c0_42 = arith.constant 0 : index
    %c0_43 = arith.constant 0 : index
    %34 = vector.load %arg6[%c0_40, %c0_41, %c0_42, %c0_43] : memref<1x8x16x128xbf16, #tpu.memory_space<vmem>>, vector<1x8x16x128xbf16>
    tpu.vector_store %arg6[%c0_40, %c0_41, %c0_42, %c0_43], %33 {strides = array<i32>} : memref<1x8x16x128xbf16, #tpu.memory_space<vmem>>, vector<1x8x16x128xbf16>,
    return
  }
  func.func @transform_0(%arg0: i32, %arg1: i32) -> (i32, i32, i32, i32) {
    %c0_i32 = arith.constant 0 : i32
    %c0_i32_0 = arith.constant 0 : i32
    %c0_i32_1 = arith.constant 0 : i32
    %c0_i32_2 = arith.constant 0 : i32
    return %arg0, %c0_i32, %c0_i32_0, %c0_i32_1 : i32, i32, i32, i32
  }
  func.func @transform_1(%arg0: i32, %arg1: i32) -> (i32, i32) {
    %c0_i32 = arith.constant 0 : i32
    %c0_i32_0 = arith.constant 0 : i32
    %c0_i32_1 = arith.constant 0 : i32
    return %c0_i32, %c0_i32_0 : i32, i32
  }
  func.func @transform_2(%arg0: i32, %arg1: i32) -> (i32, i32) {
    %c0_i32 = arith.constant 0 : i32
    %c0_i32_0 = arith.constant 0 : i32
    %c0_i32_1 = arith.constant 0 : i32
    return %c0_i32, %c0_i32_0 : i32, i32
  }
  func.func @transform_3(%arg0: i32, %arg1: i32) -> (i32, i32) {
    %c0_i32 = arith.constant 0 : i32
    %c0_i32_0 = arith.constant 0 : i32
    %c0_i32_1 = arith.constant 0 : i32
    return %c0_i32, %c0_i32_0 : i32, i32
  }
  func.func @transform_4(%arg0: i32, %arg1: i32) -> (i32, i32, i32, i32) {
    %c0_i32 = arith.constant 0 : i32
    %c0_i32_0 = arith.constant 0 : i32
    %c0_i32_1 = arith.constant 0 : i32
    return %arg0, %arg1, %c0_i32, %c0_i32_0 : i32, i32, i32, i32
  }
}

module attributes {stable_mosaic.version = 11 : i64} {
  func.func @kernel(%arg0: i32, %arg1: i32, %arg2: memref<1x16x2x16x128xf32, #tpu.memory_space<vmem>>, %arg3: memref<576x128xbf16, #tpu.memory_space<vmem>>, %arg4: memref<1x128xf32, #tpu.memory_space<vmem>>, %arg5: memref<1x128xf32, #tpu.memory_space<vmem>>, %arg6: memref<64x128xbf16, #tpu.memory_space<vmem>>, %arg7: memref<1x128xf32, #tpu.memory_space<vmem>>, %arg8: memref<1x128xf32, #tpu.memory_space<vmem>>, %arg9: memref<1x8x16x128xbf16, #tpu.memory_space<vmem>>, %arg10: memref<1x8x16x128xbf16, #tpu.memory_space<vmem>>, %arg11: memref<8x17x128xbf16, #tpu.memory_space<vmem>>, %arg12: memref<9x17x128xbf16, #tpu.memory_space<vmem>>) attributes {dimension_semantics = [#tpu.dimension_semantics<parallel>, #tpu.dimension_semantics<parallel>], iteration_bounds = array<i64: 2, 2>, scalar_prefetch = 0 : i64, scratch_operands = 2 : i64, tpu.core_type = #tpu.core_type<tc>, window_params = [{transform_indices = @transform_0, window_bounds = array<i64: 1, 16, 2, 16, 128>}, {pipeline_mode = #tpu.pipeline_mode<synchronous>, transform_indices = @transform_1, window_bounds = array<i64: 576, 128>}, {pipeline_mode = #tpu.pipeline_mode<synchronous>, transform_indices = @transform_2, window_bounds = array<i64: 1, 128>}, {pipeline_mode = #tpu.pipeline_mode<synchronous>, transform_indices = @transform_3, window_bounds = array<i64: 1, 128>}, {pipeline_mode = #tpu.pipeline_mode<synchronous>, transform_indices = @transform_4, window_bounds = array<i64: 64, 128>}, {pipeline_mode = #tpu.pipeline_mode<synchronous>, transform_indices = @transform_5, window_bounds = array<i64: 1, 128>}, {pipeline_mode = #tpu.pipeline_mode<synchronous>, transform_indices = @transform_6, window_bounds = array<i64: 1, 128>}, {transform_indices = @transform_7, window_bounds = array<i64: 1, 8, 16, 128>}, {transform_indices = @transform_8, window_bounds = array<i64: 1, 8, 16, 128>}]} {
    %c8_i32 = arith.constant 8 : i32
    %0 = arith.muli %arg1, %c8_i32 : i32
    %cst = arith.constant 0.000000e+00 : bf16
    %1 = vector.broadcast %cst : bf16 to vector<8x1x128xbf16>
    %c0 = arith.constant 0 : index
    %c0_0 = arith.constant 0 : index
    %c0_1 = arith.constant 0 : index
    %2 = vector.load %arg11[%c0, %c0_0, %c0_1] : memref<8x17x128xbf16, #tpu.memory_space<vmem>>, vector<8x1x128xbf16>
    tpu.vector_store %arg11[%c0, %c0_0, %c0_1], %1 {strides = array<i32>} : memref<8x17x128xbf16, #tpu.memory_space<vmem>>, vector<8x1x128xbf16>,
    %c0_2 = arith.constant 0 : index
    %3 = arith.index_cast %0 : i32 to index
    %c0_3 = arith.constant 0 : index
    %c0_4 = arith.constant 0 : index
    %c0_5 = arith.constant 0 : index
    %4 = vector.load %arg2[%c0_2, %3, %c0_3, %c0_4, %c0_5] : memref<1x16x2x16x128xf32, #tpu.memory_space<vmem>>, vector<1x8x1x16x128xf32>
    %5 = vector.shape_cast %4 : vector<1x8x1x16x128xf32> to vector<8x16x128xf32>
    %6 = arith.truncf %5 : vector<8x16x128xf32> to vector<8x16x128xbf16>
    %c0_6 = arith.constant 0 : index
    %c1 = arith.constant 1 : index
    %c0_7 = arith.constant 0 : index
    %7 = vector.load %arg11[%c0_6, %c1, %c0_7] : memref<8x17x128xbf16, #tpu.memory_space<vmem>>, vector<8x16x128xbf16>
    tpu.vector_store %arg11[%c0_6, %c1, %c0_7], %6 {strides = array<i32>} : memref<8x17x128xbf16, #tpu.memory_space<vmem>>, vector<8x16x128xbf16>,
    %cst_8 = arith.constant 0.000000e+00 : bf16
    %8 = vector.broadcast %cst_8 : bf16 to vector<9x1x128xbf16>
    %c0_9 = arith.constant 0 : index
    %c0_10 = arith.constant 0 : index
    %c0_11 = arith.constant 0 : index
    %9 = vector.load %arg12[%c0_9, %c0_10, %c0_11] : memref<9x17x128xbf16, #tpu.memory_space<vmem>>, vector<9x1x128xbf16>
    tpu.vector_store %arg12[%c0_9, %c0_10, %c0_11], %8 {strides = array<i32>} : memref<9x17x128xbf16, #tpu.memory_space<vmem>>, vector<9x1x128xbf16>,
    %c0_i32 = arith.constant 0 : i32
    %10 = arith.cmpi eq, %arg1, %c0_i32 : i32
    %11 = arith.extui %10 : i1 to i32
    %c0_i32_12 = arith.constant 0 : i32
    %12 = arith.cmpi ne, %11, %c0_i32_12 : i32
    scf.if %12 {
      %cst_64 = arith.constant 0.000000e+00 : bf16
      %52 = vector.broadcast %cst_64 : bf16 to vector<1x16x128xbf16>
      %c0_65 = arith.constant 0 : index
      %c1_66 = arith.constant 1 : index
      %c0_67 = arith.constant 0 : index
      %53 = vector.load %arg12[%c0_65, %c1_66, %c0_67] : memref<9x17x128xbf16, #tpu.memory_space<vmem>>, vector<1x16x128xbf16>
      tpu.vector_store %arg12[%c0_65, %c1_66, %c0_67], %52 {strides = array<i32>} : memref<9x17x128xbf16, #tpu.memory_space<vmem>>, vector<1x16x128xbf16>,
      %c0_68 = arith.constant 0 : index
      %c0_69 = arith.constant 0 : index
      %c1_70 = arith.constant 1 : index
      %c0_71 = arith.constant 0 : index
      %c0_72 = arith.constant 0 : index
      %54 = vector.load %arg2[%c0_68, %c0_69, %c1_70, %c0_71, %c0_72] : memref<1x16x2x16x128xf32, #tpu.memory_space<vmem>>, vector<1x8x1x16x128xf32>
      %55 = vector.shape_cast %54 : vector<1x8x1x16x128xf32> to vector<8x16x128xf32>
      %56 = arith.truncf %55 : vector<8x16x128xf32> to vector<8x16x128xbf16>
      %c1_73 = arith.constant 1 : index
      %c1_74 = arith.constant 1 : index
      %c0_75 = arith.constant 0 : index
      %57 = vector.load %arg12[%c1_73, %c1_74, %c0_75] : memref<9x17x128xbf16, #tpu.memory_space<vmem>>, vector<8x16x128xbf16>
      tpu.vector_store %arg12[%c1_73, %c1_74, %c0_75], %56 {strides = array<i32>} : memref<9x17x128xbf16, #tpu.memory_space<vmem>>, vector<8x16x128xbf16>,
    } else {
    }
    %c0_i32_13 = arith.constant 0 : i32
    %13 = arith.cmpi sgt, %arg1, %c0_i32_13 : i32
    %14 = arith.extui %13 : i1 to i32
    %c0_i32_14 = arith.constant 0 : i32
    %15 = arith.cmpi ne, %14, %c0_i32_14 : i32
    scf.if %15 {
      %c1_i32 = arith.constant 1 : i32
      %52 = arith.subi %0, %c1_i32 : i32
      %c0_64 = arith.constant 0 : index
      %53 = arith.index_cast %52 : i32 to index
      %c1_65 = arith.constant 1 : index
      %c0_66 = arith.constant 0 : index
      %c0_67 = arith.constant 0 : index
      %54 = vector.load %arg2[%c0_64, %53, %c1_65, %c0_66, %c0_67] : memref<1x16x2x16x128xf32, #tpu.memory_space<vmem>>, vector<1x9x1x16x128xf32>
      %55 = vector.shape_cast %54 : vector<1x9x1x16x128xf32> to vector<9x16x128xf32>
      %56 = arith.truncf %55 : vector<9x16x128xf32> to vector<9x16x128xbf16>
      %c0_68 = arith.constant 0 : index
      %c1_69 = arith.constant 1 : index
      %c0_70 = arith.constant 0 : index
      %57 = vector.load %arg12[%c0_68, %c1_69, %c0_70] : memref<9x17x128xbf16, #tpu.memory_space<vmem>>, vector<9x16x128xbf16>
      tpu.vector_store %arg12[%c0_68, %c1_69, %c0_70], %56 {strides = array<i32>} : memref<9x17x128xbf16, #tpu.memory_space<vmem>>, vector<9x16x128xbf16>,
    } else {
    }
    %c0_15 = arith.constant 0 : index
    %c0_16 = arith.constant 0 : index
    %c64 = arith.constant 64 : index
    %16 = vector.load %arg12[%c0_15, %c0_16, %c64] : memref<9x17x128xbf16, #tpu.memory_space<vmem>>, vector<8x16x64xbf16>
    %c0_17 = arith.constant 0 : index
    %c1_18 = arith.constant 1 : index
    %c0_19 = arith.constant 0 : index
    %17 = vector.load %arg12[%c0_17, %c1_18, %c0_19] : memref<9x17x128xbf16, #tpu.memory_space<vmem>>, vector<8x16x64xbf16>
    %c0_20 = arith.constant 0 : index
    %c1_21 = arith.constant 1 : index
    %c64_22 = arith.constant 64 : index
    %18 = vector.load %arg12[%c0_20, %c1_21, %c64_22] : memref<9x17x128xbf16, #tpu.memory_space<vmem>>, vector<8x16x64xbf16>
    %c0_23 = arith.constant 0 : index
    %c0_24 = arith.constant 0 : index
    %c64_25 = arith.constant 64 : index
    %19 = vector.load %arg11[%c0_23, %c0_24, %c64_25] : memref<8x17x128xbf16, #tpu.memory_space<vmem>>, vector<8x16x64xbf16>
    %c0_26 = arith.constant 0 : index
    %c1_27 = arith.constant 1 : index
    %c0_28 = arith.constant 0 : index
    %20 = vector.load %arg11[%c0_26, %c1_27, %c0_28] : memref<8x17x128xbf16, #tpu.memory_space<vmem>>, vector<8x16x64xbf16>
    %c0_29 = arith.constant 0 : index
    %c1_30 = arith.constant 1 : index
    %c64_31 = arith.constant 64 : index
    %21 = vector.load %arg11[%c0_29, %c1_30, %c64_31] : memref<8x17x128xbf16, #tpu.memory_space<vmem>>, vector<8x16x64xbf16>
    %c1_32 = arith.constant 1 : index
    %c0_33 = arith.constant 0 : index
    %c64_34 = arith.constant 64 : index
    %22 = vector.load %arg12[%c1_32, %c0_33, %c64_34] : memref<9x17x128xbf16, #tpu.memory_space<vmem>>, vector<8x16x64xbf16>
    %c1_35 = arith.constant 1 : index
    %c1_36 = arith.constant 1 : index
    %c0_37 = arith.constant 0 : index
    %23 = vector.load %arg12[%c1_35, %c1_36, %c0_37] : memref<9x17x128xbf16, #tpu.memory_space<vmem>>, vector<8x16x64xbf16>
    %c1_38 = arith.constant 1 : index
    %c1_39 = arith.constant 1 : index
    %c64_40 = arith.constant 64 : index
    %24 = vector.load %arg12[%c1_38, %c1_39, %c64_40] : memref<9x17x128xbf16, #tpu.memory_space<vmem>>, vector<8x16x64xbf16>
    %25 = tpu.concatenate %16, %17, %18, %19, %20, %21, %22, %23, %24 in 2 : vector<8x16x64xbf16>, vector<8x16x64xbf16>, vector<8x16x64xbf16>, vector<8x16x64xbf16>, vector<8x16x64xbf16>, vector<8x16x64xbf16>, vector<8x16x64xbf16>, vector<8x16x64xbf16>, vector<8x16x64xbf16> -> vector<8x16x576xbf16>
    %26 = vector.shape_cast %25 : vector<8x16x576xbf16> to vector<128x576xbf16>
    %c0_41 = arith.constant 0 : index
    %c0_42 = arith.constant 0 : index
    %27 = vector.load %arg3[%c0_41, %c0_42] : memref<576x128xbf16, #tpu.memory_space<vmem>>, vector<576x128xbf16>
    %cst_43 = arith.constant dense<0.000000e+00> : vector<128x128xf32>
    %28 = tpu.matmul %26, %27, %cst_43 {dimension_numbers = #tpu.dot_dimension_numbers<[1], [0], [0], [1], [0, 0, 1, 1], [], []>} : vector<128x576xbf16>, vector<576x128xbf16>, vector<128x128xf32> -> vector<128x128xf32>
    %c0_44 = arith.constant 0 : index
    %c0_45 = arith.constant 0 : index
    %29 = vector.load %arg4[%c0_44, %c0_45] : memref<1x128xf32, #tpu.memory_space<vmem>>, vector<1x128xf32>
    %30 = vector.broadcast %29 : vector<1x128xf32> to vector<128x128xf32>
    %31 = arith.mulf %28, %30 : vector<128x128xf32>
    %c0_46 = arith.constant 0 : index
    %c0_47 = arith.constant 0 : index
    %32 = vector.load %arg5[%c0_46, %c0_47] : memref<1x128xf32, #tpu.memory_space<vmem>>, vector<1x128xf32>
    %33 = vector.broadcast %32 : vector<1x128xf32> to vector<128x128xf32>
    %34 = arith.addf %31, %33 : vector<128x128xf32>
    %cst_48 = arith.constant 0.000000e+00 : f32
    %35 = vector.broadcast %cst_48 : f32 to vector<128x128xf32>
    %36 = arith.maximumf %34, %35 : vector<128x128xf32>
    %37 = vector.shape_cast %36 : vector<128x128xf32> to vector<1x8x16x128xf32>
    %38 = arith.truncf %37 : vector<1x8x16x128xf32> to vector<1x8x16x128xbf16>
    %c0_49 = arith.constant 0 : index
    %c0_50 = arith.constant 0 : index
    %c0_51 = arith.constant 0 : index
    %c0_52 = arith.constant 0 : index
    %39 = vector.load %arg9[%c0_49, %c0_50, %c0_51, %c0_52] : memref<1x8x16x128xbf16, #tpu.memory_space<vmem>>, vector<1x8x16x128xbf16>
    tpu.vector_store %arg9[%c0_49, %c0_50, %c0_51, %c0_52], %38 {strides = array<i32>} : memref<1x8x16x128xbf16, #tpu.memory_space<vmem>>, vector<1x8x16x128xbf16>,
    %40 = vector.shape_cast %20 : vector<8x16x64xbf16> to vector<128x64xbf16>
    %c0_53 = arith.constant 0 : index
    %c0_54 = arith.constant 0 : index
    %41 = vector.load %arg6[%c0_53, %c0_54] : memref<64x128xbf16, #tpu.memory_space<vmem>>, vector<64x128xbf16>
    %cst_55 = arith.constant dense<0.000000e+00> : vector<128x128xf32>
    %42 = tpu.matmul %40, %41, %cst_55 {dimension_numbers = #tpu.dot_dimension_numbers<[1], [0], [0], [1], [0, 0, 1, 1], [], []>} : vector<128x64xbf16>, vector<64x128xbf16>, vector<128x128xf32> -> vector<128x128xf32>
    %c0_56 = arith.constant 0 : index
    %c0_57 = arith.constant 0 : index
    %43 = vector.load %arg7[%c0_56, %c0_57] : memref<1x128xf32, #tpu.memory_space<vmem>>, vector<1x128xf32>
    %44 = vector.broadcast %43 : vector<1x128xf32> to vector<128x128xf32>
    %45 = arith.mulf %42, %44 : vector<128x128xf32>
    %c0_58 = arith.constant 0 : index
    %c0_59 = arith.constant 0 : index
    %46 = vector.load %arg8[%c0_58, %c0_59] : memref<1x128xf32, #tpu.memory_space<vmem>>, vector<1x128xf32>
    %47 = vector.broadcast %46 : vector<1x128xf32> to vector<128x128xf32>
    %48 = arith.addf %45, %47 : vector<128x128xf32>
    %49 = vector.shape_cast %48 : vector<128x128xf32> to vector<1x8x16x128xf32>
    %50 = arith.truncf %49 : vector<1x8x16x128xf32> to vector<1x8x16x128xbf16>
    %c0_60 = arith.constant 0 : index
    %c0_61 = arith.constant 0 : index
    %c0_62 = arith.constant 0 : index
    %c0_63 = arith.constant 0 : index
    %51 = vector.load %arg10[%c0_60, %c0_61, %c0_62, %c0_63] : memref<1x8x16x128xbf16, #tpu.memory_space<vmem>>, vector<1x8x16x128xbf16>
    tpu.vector_store %arg10[%c0_60, %c0_61, %c0_62, %c0_63], %50 {strides = array<i32>} : memref<1x8x16x128xbf16, #tpu.memory_space<vmem>>, vector<1x8x16x128xbf16>,
    return
  }
  func.func @transform_0(%arg0: i32, %arg1: i32) -> (i32, i32, i32, i32, i32) {
    %c0_i32 = arith.constant 0 : i32
    %c0_i32_0 = arith.constant 0 : i32
    %c0_i32_1 = arith.constant 0 : i32
    %c0_i32_2 = arith.constant 0 : i32
    %c0_i32_3 = arith.constant 0 : i32
    return %arg0, %c0_i32, %c0_i32_0, %c0_i32_1, %c0_i32_2 : i32, i32, i32, i32, i32
  }
  func.func @transform_1(%arg0: i32, %arg1: i32) -> (i32, i32) {
    %c0_i32 = arith.constant 0 : i32
    %c0_i32_0 = arith.constant 0 : i32
    %c0_i32_1 = arith.constant 0 : i32
    return %c0_i32, %c0_i32_0 : i32, i32
  }
  func.func @transform_2(%arg0: i32, %arg1: i32) -> (i32, i32) {
    %c0_i32 = arith.constant 0 : i32
    %c0_i32_0 = arith.constant 0 : i32
    %c0_i32_1 = arith.constant 0 : i32
    return %c0_i32, %c0_i32_0 : i32, i32
  }
  func.func @transform_3(%arg0: i32, %arg1: i32) -> (i32, i32) {
    %c0_i32 = arith.constant 0 : i32
    %c0_i32_0 = arith.constant 0 : i32
    %c0_i32_1 = arith.constant 0 : i32
    return %c0_i32, %c0_i32_0 : i32, i32
  }
  func.func @transform_4(%arg0: i32, %arg1: i32) -> (i32, i32) {
    %c0_i32 = arith.constant 0 : i32
    %c0_i32_0 = arith.constant 0 : i32
    %c0_i32_1 = arith.constant 0 : i32
    return %c0_i32, %c0_i32_0 : i32, i32
  }
  func.func @transform_5(%arg0: i32, %arg1: i32) -> (i32, i32) {
    %c0_i32 = arith.constant 0 : i32
    %c0_i32_0 = arith.constant 0 : i32
    %c0_i32_1 = arith.constant 0 : i32
    return %c0_i32, %c0_i32_0 : i32, i32
  }
  func.func @transform_6(%arg0: i32, %arg1: i32) -> (i32, i32) {
    %c0_i32 = arith.constant 0 : i32
    %c0_i32_0 = arith.constant 0 : i32
    %c0_i32_1 = arith.constant 0 : i32
    return %c0_i32, %c0_i32_0 : i32, i32
  }
  func.func @transform_7(%arg0: i32, %arg1: i32) -> (i32, i32, i32, i32) {
    %c0_i32 = arith.constant 0 : i32
    %c0_i32_0 = arith.constant 0 : i32
    %c0_i32_1 = arith.constant 0 : i32
    return %arg0, %arg1, %c0_i32, %c0_i32_0 : i32, i32, i32, i32
  }
  func.func @transform_8(%arg0: i32, %arg1: i32) -> (i32, i32, i32, i32) {
    %c0_i32 = arith.constant 0 : i32
    %c0_i32_0 = arith.constant 0 : i32
    %c0_i32_1 = arith.constant 0 : i32
    return %arg0, %arg1, %c0_i32, %c0_i32_0 : i32, i32, i32, i32
  }
}

module attributes {stable_mosaic.version = 11 : i64} {
  func.func @kernel(%arg0: i32, %arg1: i32, %arg2: memref<1x16x16x128xbf16, #tpu.memory_space<vmem>>, %arg3: memref<1152x128xbf16, #tpu.memory_space<vmem>>, %arg4: memref<1x128xf32, #tpu.memory_space<vmem>>, %arg5: memref<1x128xf32, #tpu.memory_space<vmem>>, %arg6: memref<1x8x16x128xbf16, #tpu.memory_space<vmem>>, %arg7: memref<1x8x16x128xf32, #tpu.memory_space<vmem>>, %arg8: memref<10x18x128xbf16, #tpu.memory_space<vmem>>) attributes {dimension_semantics = [#tpu.dimension_semantics<parallel>, #tpu.dimension_semantics<parallel>], iteration_bounds = array<i64: 2, 2>, scalar_prefetch = 0 : i64, scratch_operands = 1 : i64, tpu.core_type = #tpu.core_type<tc>, window_params = [{transform_indices = @transform_0, window_bounds = array<i64: 1, 16, 16, 128>}, {pipeline_mode = #tpu.pipeline_mode<synchronous>, transform_indices = @transform_1, window_bounds = array<i64: 1152, 128>}, {pipeline_mode = #tpu.pipeline_mode<synchronous>, transform_indices = @transform_2, window_bounds = array<i64: 1, 128>}, {pipeline_mode = #tpu.pipeline_mode<synchronous>, transform_indices = @transform_3, window_bounds = array<i64: 1, 128>}, {transform_indices = @transform_4, window_bounds = array<i64: 1, 8, 16, 128>}, {transform_indices = @transform_5, window_bounds = array<i64: 1, 8, 16, 128>}]} {
    %c8_i32 = arith.constant 8 : i32
    %0 = arith.muli %arg1, %c8_i32 : i32
    %cst = arith.constant 0.000000e+00 : bf16
    %1 = vector.broadcast %cst : bf16 to vector<10x1x128xbf16>
    %c0 = arith.constant 0 : index
    %c0_0 = arith.constant 0 : index
    %c0_1 = arith.constant 0 : index
    %2 = vector.load %arg8[%c0, %c0_0, %c0_1] : memref<10x18x128xbf16, #tpu.memory_space<vmem>>, vector<10x1x128xbf16>
    tpu.vector_store %arg8[%c0, %c0_0, %c0_1], %1 {strides = array<i32>} : memref<10x18x128xbf16, #tpu.memory_space<vmem>>, vector<10x1x128xbf16>,
    %cst_2 = arith.constant 0.000000e+00 : bf16
    %3 = vector.broadcast %cst_2 : bf16 to vector<10x1x128xbf16>
    %c0_3 = arith.constant 0 : index
    %c17 = arith.constant 17 : index
    %c0_4 = arith.constant 0 : index
    %4 = vector.load %arg8[%c0_3, %c17, %c0_4] : memref<10x18x128xbf16, #tpu.memory_space<vmem>>, vector<10x1x128xbf16>
    tpu.vector_store %arg8[%c0_3, %c17, %c0_4], %3 {strides = array<i32>} : memref<10x18x128xbf16, #tpu.memory_space<vmem>>, vector<10x1x128xbf16>,
    %c0_i32 = arith.constant 0 : i32
    %5 = arith.cmpi eq, %arg1, %c0_i32 : i32
    %6 = arith.extui %5 : i1 to i32
    %c0_i32_5 = arith.constant 0 : i32
    %7 = arith.cmpi ne, %6, %c0_i32_5 : i32
    scf.if %7 {
      %cst_48 = arith.constant 0.000000e+00 : bf16
      %39 = vector.broadcast %cst_48 : bf16 to vector<1x18x128xbf16>
      %c0_49 = arith.constant 0 : index
      %c0_50 = arith.constant 0 : index
      %c0_51 = arith.constant 0 : index
      %40 = vector.load %arg8[%c0_49, %c0_50, %c0_51] : memref<10x18x128xbf16, #tpu.memory_space<vmem>>, vector<1x18x128xbf16>
      tpu.vector_store %arg8[%c0_49, %c0_50, %c0_51], %39 {strides = array<i32>} : memref<10x18x128xbf16, #tpu.memory_space<vmem>>, vector<1x18x128xbf16>,
      %c0_52 = arith.constant 0 : index
      %c0_53 = arith.constant 0 : index
      %c0_54 = arith.constant 0 : index
      %c0_55 = arith.constant 0 : index
      %41 = vector.load %arg2[%c0_52, %c0_53, %c0_54, %c0_55] : memref<1x16x16x128xbf16, #tpu.memory_space<vmem>>, vector<1x9x16x128xbf16>
      %42 = vector.shape_cast %41 : vector<1x9x16x128xbf16> to vector<9x16x128xbf16>
      %c1_56 = arith.constant 1 : index
      %c1_57 = arith.constant 1 : index
      %c0_58 = arith.constant 0 : index
      %43 = vector.load %arg8[%c1_56, %c1_57, %c0_58] : memref<10x18x128xbf16, #tpu.memory_space<vmem>>, vector<9x16x128xbf16>
      tpu.vector_store %arg8[%c1_56, %c1_57, %c0_58], %42 {strides = array<i32>} : memref<10x18x128xbf16, #tpu.memory_space<vmem>>, vector<9x16x128xbf16>,
    } else {
    }
    %c1_i32 = arith.constant 1 : i32
    %8 = arith.cmpi eq, %arg1, %c1_i32 : i32
    %9 = arith.extui %8 : i1 to i32
    %c0_i32_6 = arith.constant 0 : i32
    %10 = arith.cmpi ne, %9, %c0_i32_6 : i32
    scf.if %10 {
      %cst_48 = arith.constant 0.000000e+00 : bf16
      %39 = vector.broadcast %cst_48 : bf16 to vector<1x18x128xbf16>
      %c9 = arith.constant 9 : index
      %c0_49 = arith.constant 0 : index
      %c0_50 = arith.constant 0 : index
      %40 = vector.load %arg8[%c9, %c0_49, %c0_50] : memref<10x18x128xbf16, #tpu.memory_space<vmem>>, vector<1x18x128xbf16>
      tpu.vector_store %arg8[%c9, %c0_49, %c0_50], %39 {strides = array<i32>} : memref<10x18x128xbf16, #tpu.memory_space<vmem>>, vector<1x18x128xbf16>,
      %c1_i32_51 = arith.constant 1 : i32
      %41 = arith.subi %0, %c1_i32_51 : i32
      %c0_52 = arith.constant 0 : index
      %42 = arith.index_cast %41 : i32 to index
      %c0_53 = arith.constant 0 : index
      %c0_54 = arith.constant 0 : index
      %43 = vector.load %arg2[%c0_52, %42, %c0_53, %c0_54] : memref<1x16x16x128xbf16, #tpu.memory_space<vmem>>, vector<1x9x16x128xbf16>
      %44 = vector.shape_cast %43 : vector<1x9x16x128xbf16> to vector<9x16x128xbf16>
      %c0_55 = arith.constant 0 : index
      %c1_56 = arith.constant 1 : index
      %c0_57 = arith.constant 0 : index
      %45 = vector.load %arg8[%c0_55, %c1_56, %c0_57] : memref<10x18x128xbf16, #tpu.memory_space<vmem>>, vector<9x16x128xbf16>
      tpu.vector_store %arg8[%c0_55, %c1_56, %c0_57], %44 {strides = array<i32>} : memref<10x18x128xbf16, #tpu.memory_space<vmem>>, vector<9x16x128xbf16>,
    } else {
    }
    %c0_7 = arith.constant 0 : index
    %c0_8 = arith.constant 0 : index
    %c0_9 = arith.constant 0 : index
    %11 = vector.load %arg8[%c0_7, %c0_8, %c0_9] : memref<10x18x128xbf16, #tpu.memory_space<vmem>>, vector<8x16x128xbf16>
    %c0_10 = arith.constant 0 : index
    %c1 = arith.constant 1 : index
    %c0_11 = arith.constant 0 : index
    %12 = vector.load %arg8[%c0_10, %c1, %c0_11] : memref<10x18x128xbf16, #tpu.memory_space<vmem>>, vector<8x16x128xbf16>
    %c0_12 = arith.constant 0 : index
    %c2 = arith.constant 2 : index
    %c0_13 = arith.constant 0 : index
    %13 = vector.load %arg8[%c0_12, %c2, %c0_13] : memref<10x18x128xbf16, #tpu.memory_space<vmem>>, vector<8x16x128xbf16>
    %c1_14 = arith.constant 1 : index
    %c0_15 = arith.constant 0 : index
    %c0_16 = arith.constant 0 : index
    %14 = vector.load %arg8[%c1_14, %c0_15, %c0_16] : memref<10x18x128xbf16, #tpu.memory_space<vmem>>, vector<8x16x128xbf16>
    %c1_17 = arith.constant 1 : index
    %c1_18 = arith.constant 1 : index
    %c0_19 = arith.constant 0 : index
    %15 = vector.load %arg8[%c1_17, %c1_18, %c0_19] : memref<10x18x128xbf16, #tpu.memory_space<vmem>>, vector<8x16x128xbf16>
    %c1_20 = arith.constant 1 : index
    %c2_21 = arith.constant 2 : index
    %c0_22 = arith.constant 0 : index
    %16 = vector.load %arg8[%c1_20, %c2_21, %c0_22] : memref<10x18x128xbf16, #tpu.memory_space<vmem>>, vector<8x16x128xbf16>
    %c2_23 = arith.constant 2 : index
    %c0_24 = arith.constant 0 : index
    %c0_25 = arith.constant 0 : index
    %17 = vector.load %arg8[%c2_23, %c0_24, %c0_25] : memref<10x18x128xbf16, #tpu.memory_space<vmem>>, vector<8x16x128xbf16>
    %c2_26 = arith.constant 2 : index
    %c1_27 = arith.constant 1 : index
    %c0_28 = arith.constant 0 : index
    %18 = vector.load %arg8[%c2_26, %c1_27, %c0_28] : memref<10x18x128xbf16, #tpu.memory_space<vmem>>, vector<8x16x128xbf16>
    %c2_29 = arith.constant 2 : index
    %c2_30 = arith.constant 2 : index
    %c0_31 = arith.constant 0 : index
    %19 = vector.load %arg8[%c2_29, %c2_30, %c0_31] : memref<10x18x128xbf16, #tpu.memory_space<vmem>>, vector<8x16x128xbf16>
    %20 = tpu.concatenate %11, %12, %13, %14, %15, %16, %17, %18, %19 in 2 : vector<8x16x128xbf16>, vector<8x16x128xbf16>, vector<8x16x128xbf16>, vector<8x16x128xbf16>, vector<8x16x128xbf16>, vector<8x16x128xbf16>, vector<8x16x128xbf16>, vector<8x16x128xbf16>, vector<8x16x128xbf16> -> vector<8x16x1152xbf16>
    %21 = vector.shape_cast %20 : vector<8x16x1152xbf16> to vector<128x1152xbf16>
    %c0_32 = arith.constant 0 : index
    %c0_33 = arith.constant 0 : index
    %22 = vector.load %arg3[%c0_32, %c0_33] : memref<1152x128xbf16, #tpu.memory_space<vmem>>, vector<1152x128xbf16>
    %cst_34 = arith.constant dense<0.000000e+00> : vector<128x128xf32>
    %23 = tpu.matmul %21, %22, %cst_34 {dimension_numbers = #tpu.dot_dimension_numbers<[1], [0], [0], [1], [0, 0, 1, 1], [], []>} : vector<128x1152xbf16>, vector<1152x128xbf16>, vector<128x128xf32> -> vector<128x128xf32>
    %c0_35 = arith.constant 0 : index
    %c0_36 = arith.constant 0 : index
    %24 = vector.load %arg4[%c0_35, %c0_36] : memref<1x128xf32, #tpu.memory_space<vmem>>, vector<1x128xf32>
    %25 = vector.broadcast %24 : vector<1x128xf32> to vector<128x128xf32>
    %26 = arith.mulf %23, %25 : vector<128x128xf32>
    %c0_37 = arith.constant 0 : index
    %c0_38 = arith.constant 0 : index
    %27 = vector.load %arg5[%c0_37, %c0_38] : memref<1x128xf32, #tpu.memory_space<vmem>>, vector<1x128xf32>
    %28 = vector.broadcast %27 : vector<1x128xf32> to vector<128x128xf32>
    %29 = arith.addf %26, %28 : vector<128x128xf32>
    %c0_39 = arith.constant 0 : index
    %c0_40 = arith.constant 0 : index
    %c0_41 = arith.constant 0 : index
    %c0_42 = arith.constant 0 : index
    %30 = vector.load %arg6[%c0_39, %c0_40, %c0_41, %c0_42] : memref<1x8x16x128xbf16, #tpu.memory_space<vmem>>, vector<1x8x16x128xbf16>
    %31 = vector.shape_cast %30 : vector<1x8x16x128xbf16> to vector<8x16x128xbf16>
    %32 = vector.shape_cast %31 : vector<8x16x128xbf16> to vector<128x128xbf16>
    %33 = arith.extf %32 : vector<128x128xbf16> to vector<128x128xf32>
    %34 = arith.addf %29, %33 : vector<128x128xf32>
    %cst_43 = arith.constant 0.000000e+00 : f32
    %35 = vector.broadcast %cst_43 : f32 to vector<128x128xf32>
    %36 = arith.maximumf %34, %35 : vector<128x128xf32>
    %37 = vector.shape_cast %36 : vector<128x128xf32> to vector<1x8x16x128xf32>
    %c0_44 = arith.constant 0 : index
    %c0_45 = arith.constant 0 : index
    %c0_46 = arith.constant 0 : index
    %c0_47 = arith.constant 0 : index
    %38 = vector.load %arg7[%c0_44, %c0_45, %c0_46, %c0_47] : memref<1x8x16x128xf32, #tpu.memory_space<vmem>>, vector<1x8x16x128xf32>
    tpu.vector_store %arg7[%c0_44, %c0_45, %c0_46, %c0_47], %37 {strides = array<i32>} : memref<1x8x16x128xf32, #tpu.memory_space<vmem>>, vector<1x8x16x128xf32>,
    return
  }
  func.func @transform_0(%arg0: i32, %arg1: i32) -> (i32, i32, i32, i32) {
    %c0_i32 = arith.constant 0 : i32
    %c0_i32_0 = arith.constant 0 : i32
    %c0_i32_1 = arith.constant 0 : i32
    %c0_i32_2 = arith.constant 0 : i32
    return %arg0, %c0_i32, %c0_i32_0, %c0_i32_1 : i32, i32, i32, i32
  }
  func.func @transform_1(%arg0: i32, %arg1: i32) -> (i32, i32) {
    %c0_i32 = arith.constant 0 : i32
    %c0_i32_0 = arith.constant 0 : i32
    %c0_i32_1 = arith.constant 0 : i32
    return %c0_i32, %c0_i32_0 : i32, i32
  }
  func.func @transform_2(%arg0: i32, %arg1: i32) -> (i32, i32) {
    %c0_i32 = arith.constant 0 : i32
    %c0_i32_0 = arith.constant 0 : i32
    %c0_i32_1 = arith.constant 0 : i32
    return %c0_i32, %c0_i32_0 : i32, i32
  }
  func.func @transform_3(%arg0: i32, %arg1: i32) -> (i32, i32) {
    %c0_i32 = arith.constant 0 : i32
    %c0_i32_0 = arith.constant 0 : i32
    %c0_i32_1 = arith.constant 0 : i32
    return %c0_i32, %c0_i32_0 : i32, i32
  }
  func.func @transform_4(%arg0: i32, %arg1: i32) -> (i32, i32, i32, i32) {
    %c0_i32 = arith.constant 0 : i32
    %c0_i32_0 = arith.constant 0 : i32
    %c0_i32_1 = arith.constant 0 : i32
    return %arg0, %arg1, %c0_i32, %c0_i32_0 : i32, i32, i32, i32
  }
  func.func @transform_5(%arg0: i32, %arg1: i32) -> (i32, i32, i32, i32) {
    %c0_i32 = arith.constant 0 : i32
    %c0_i32_0 = arith.constant 0 : i32
    %c0_i32_1 = arith.constant 0 : i32
    return %arg0, %arg1, %c0_i32, %c0_i32_0 : i32, i32, i32, i32
  }
}

</mosaic_0001>

<llo_original>
// kernel: forward.6
$region0: #{forward.6}
  #allocation0 [shape = 'u32[]', space=smem, size = 0x4, offset = 0x4, fixed_abs, tag = 'smem constant byte address 0x4 - core index']
  #allocation1 [shape = 'u32[144,128]{1,0:T(1,128)}', space=vmem, size = 0x12000, scoped, tag = 'internal scratch']
  #allocation2 [shape = 'bf16[10,18,128]{2,1,0:T(8,128)(2,1)}', space=vmem, size = 0xf000, scoped, tag = 'scratch operand']
  %s0 = inlined_call_operand.vmem [shape: bf16[2,16,16,128], index: 0, kind: input, shape index: {}]
  %s1 = inlined_call_operand.vmem [shape: bf16[1152,128], index: 1, kind: input, shape index: {}]
  %s2 = inlined_call_operand.vmem [shape: f32[1,128], index: 2, kind: input, shape index: {}]
  %s3 = inlined_call_operand.vmem [shape: f32[1,128], index: 3, kind: input, shape index: {}]
  %s4 = inlined_call_operand.vmem [shape: bf16[2,16,16,128], index: 4, kind: output, shape index: {}]
  %s5 = sld [smem:[#allocation0]]
  $region57: #{forward.6} parent=0
    _
  %s7 = ssub.s32 1, %s5
  %s8 = scalar_select 0, %s7, %s5
  loop: start=0, step=1, limit=6
  $region2: #{forward.6} parent=0 // loop_pre_header
    _
  $region3: #{forward.6} parent=0 // loop_header
    %s10 = sphi 0, %s14
    %p11 = scmp.ge.s32.totalorder %s10, 6
    %s17 = sphi 0, %s29
    %s18 = sphi 0, %s25
    %s19 = sphi 0, %s17
    %s20 = sphi 0, %s18
    %s21 = sphi 0, %s19
    %s22 = sphi 0, %s20
    %s32 = sphi 0, %s34
    %s35 = sphi 0, %s32
    %s36 = sphi 0, %s35
    %s52 = sphi 0, %s36
    %s56 = sphi 0, %s56
    %s58 = sphi 0, %s56
    %s59 = sphi 0, %s58
    %s73 = sphi 0, %s59
    %s77 = sphi 0, %s77
    %s79 = sphi 0, %s77
    %s80 = sphi 0, %s79
    %s94 = sphi 0, %s80
    %s98 = sphi 0, %s98
    %s100 = sphi 0, %s98
    %s101 = sphi 0, %s100
    %s115 = sphi 0, %s101
    %s123 = sphi 0, %s125
    %s126 = sphi 0, %s123
    %s127 = sphi 0, %s126
    %s143 = sphi 0, %s127
  $region4: #{forward.6} parent=0 // loop_header_branch
    %13 = sbr.rel (%p11) target = $region8
  $region5: #{forward.6} parent=0 // loop_body
    %s15 = ssub.s32 %s10, 1
    %s16 = ssub.s32 %s10, 2
    %s23 = sadd.s32 1, %s18
    %p24 = scmp.ge.s32.totalorder %s23, 2
    %s25 = scalar_select %p24, 0, %s23
    %s26 = sadd.s32 1, %s17
    %s27 = scalar_select %p24, %s26, %s17
    %p28 = scmp.ge.s32.totalorder %s27, 2
    %s29 = scalar_select %p28, 0, %s27
    %s30 = ssub.s32 %s17, %s29
    %p31 = scmp.eq.s32.totalorder %s30, 0
    %s33 = sadd.s32 %s32, 1
    %s34 = scalar_select %p31, %s32, %s33
    %p37 = pneg %p31
    %p38 = scmp.eq.s32.totalorder %s10, 3
    %p39 = por %p37, %p38
    %p40 = scmp.ne.s32.totalorder %s32, %s35
    %p41 = scmp.eq.s32.totalorder %s10, 0
    %p42 = por %p40, %p41
    %p43 = scmp.ne.s32.totalorder %s32, %s35
    %p44 = scmp.eq.s32.totalorder %s15, 3
    %p45 = por %p43, %p44
    %p46 = scmp.ne.s32.totalorder %s35, %s36
    %p47 = scmp.eq.s32.totalorder %s15, 0
    %p48 = por %p46, %p47
    %p49 = scmp.ne.s32.totalorder %s35, %s36
    %p50 = scmp.eq.s32.totalorder %s16, 3
    %p51 = por %p49, %p50
    %p53 = scmp.ne.s32.totalorder %s36, %s52
    %p54 = scmp.eq.s32.totalorder %s16, 0
    %p55 = por %p53, %p54
    %s57 = sadd.s32 %s56, 1
    %p60 = scmp.eq.s32.totalorder %s10, 3
    %p61 = scmp.ne.s32.totalorder %s56, %s58
    %p62 = scmp.eq.s32.totalorder %s10, 0
    %p63 = por %p61, %p62
    %p64 = scmp.ne.s32.totalorder %s56, %s58
    %p65 = scmp.eq.s32.totalorder %s15, 3
    %p66 = por %p64, %p65
    %p67 = scmp.ne.s32.totalorder %s58, %s59
    %p68 = scmp.eq.s32.totalorder %s15, 0
    %p69 = por %p67, %p68
    %p70 = scmp.ne.s32.totalorder %s58, %s59
    %p71 = scmp.eq.s32.totalorder %s16, 3
    %p72 = por %p70, %p71
    %p74 = scmp.ne.s32.totalorder %s59, %s73
    %p75 = scmp.eq.s32.totalorder %s16, 0
    %p76 = por %p74, %p75
    %s78 = sadd.s32 %s77, 1
    %p81 = scmp.eq.s32.totalorder %s10, 3
    %p82 = scmp.ne.s32.totalorder %s77, %s79
    %p83 = scmp.eq.s32.totalorder %s10, 0
    %p84 = por %p82, %p83
    %p85 = scmp.ne.s32.totalorder %s77, %s79
    %p86 = scmp.eq.s32.totalorder %s15, 3
    %p87 = por %p85, %p86
    %p88 = scmp.ne.s32.totalorder %s79, %s80
    %p89 = scmp.eq.s32.totalorder %s15, 0
    %p90 = por %p88, %p89
    %p91 = scmp.ne.s32.totalorder %s79, %s80
    %p92 = scmp.eq.s32.totalorder %s16, 3
    %p93 = por %p91, %p92
    %p95 = scmp.ne.s32.totalorder %s80, %s94
    %p96 = scmp.eq.s32.totalorder %s16, 0
    %p97 = por %p95, %p96
    %s99 = sadd.s32 %s98, 1
    %p102 = scmp.eq.s32.totalorder %s10, 3
    %p103 = scmp.ne.s32.totalorder %s98, %s100
    %p104 = scmp.eq.s32.totalorder %s10, 0
    %p105 = por %p103, %p104
    %p106 = scmp.ne.s32.totalorder %s98, %s100
    %p107 = scmp.eq.s32.totalorder %s15, 3
    %p108 = por %p106, %p107
    %p109 = scmp.ne.s32.totalorder %s100, %s101
    %p110 = scmp.eq.s32.totalorder %s15, 0
    %p111 = por %p109, %p110
    %p112 = scmp.ne.s32.totalorder %s100, %s101
    %p113 = scmp.eq.s32.totalorder %s16, 3
    %p114 = por %p112, %p113
    %p116 = scmp.ne.s32.totalorder %s101, %s115
    %p117 = scmp.eq.s32.totalorder %s16, 0
    %p118 = por %p116, %p117
    %s119 = ssub.s32 %s17, %s29
    %s120 = ssub.s32 %s18, %s25
    %s121 = sor.u32 %s119, %s120
    %p122 = scmp.eq.s32.totalorder %s121, 0
    %s124 = sadd.s32 %s123, 1
    %s125 = scalar_select %p122, %s123, %s124
    %p128 = pneg %p122
    %p129 = scmp.eq.s32.totalorder %s10, 3
    %p130 = por %p128, %p129
    %p131 = scmp.ne.s32.totalorder %s123, %s126
    %p132 = scmp.eq.s32.totalorder %s10, 0
    %p133 = por %p131, %p132
    %p134 = scmp.ne.s32.totalorder %s123, %s126
    %p135 = scmp.eq.s32.totalorder %s15, 3
    %p136 = por %p134, %p135
    %p137 = scmp.ne.s32.totalorder %s126, %s127
    %p138 = scmp.eq.s32.totalorder %s15, 0
    %p139 = por %p137, %p138
    %p140 = scmp.ne.s32.totalorder %s126, %s127
    %p141 = scmp.eq.s32.totalorder %s16, 3
    %p142 = por %p140, %p141
    %p144 = scmp.ne.s32.totalorder %s127, %s143
    %p145 = scmp.eq.s32.totalorder %s16, 0
    %p146 = por %p144, %p145
    %p147 = scmp.le.s32.totalorder 1, %s10
    %p148 = scmp.lt.s32.totalorder %s10, 5
    %p149 = pnand %p147, %p148
    %p150 = pneg %p149
    // Predicated region
    $region9: #{forward.6} parent=5 // pred_check
      _
    $region10: #{forward.6} parent=5 // pred_check_branch
      %152 = sbr.rel (%p149) target = $region12
    $region11: #{forward.6} parent=5 // pred_region
      %s153 = ssub.s32 %s10, 1
      // Predicated region
      $region13: #{forward.6} parent=11 // pred_check
        %p154 = pneg %p69
      $region14: #{forward.6} parent=11 // pred_check_branch
        %156 = sbr.rel (%p154) target = $region16
      $region15: #{forward.6} parent=11 // pred_region
        _
      $region16: #{forward.6} parent=11 // pred_fallthru
        _
      // Predicated region
      $region17: #{forward.6} parent=11 // pred_check
        %p157 = pneg %p90
      $region18: #{forward.6} parent=11 // pred_check_branch
        %159 = sbr.rel (%p157) target = $region20
      $region19: #{forward.6} parent=11 // pred_region
        _
      $region20: #{forward.6} parent=11 // pred_fallthru
        _
      // Predicated region
      $region21: #{forward.6} parent=11 // pred_check
        %p160 = pneg %p111
      $region22: #{forward.6} parent=11 // pred_check_branch
        %162 = sbr.rel (%p160) target = $region24
      $region23: #{forward.6} parent=11 // pred_region
        _
      $region24: #{forward.6} parent=11 // pred_fallthru
        _
    $region12: #{forward.6} parent=5 // pred_fallthru
      _
    %p163 = scmp.lt.s32.totalorder %s10, 4
    // Predicated region
    $region25: #{forward.6} parent=5 // pred_check
      %p164 = pneg %p163
    $region26: #{forward.6} parent=5 // pred_check_branch
      %166 = sbr.rel (%p164) target = $region28
    $region27: #{forward.6} parent=5 // pred_region
      // Predicated region
      $region29: #{forward.6} parent=27 // pred_check
        %p167 = pneg %p42
      $region30: #{forward.6} parent=27 // pred_check_branch
        %169 = sbr.rel (%p167) target = $region32
      $region31: #{forward.6} parent=27 // pred_region
        %p170 = scmp.lt.s32.totalorder %s17, 1
        %s171 = scalar_select %p170, %s17, 1
        %s172 = smul.addr %s171, 32
        %s173 = smul.addr %s172, 4
        %s174 = scalar_lea.vmem %s0, %s173
      $region32: #{forward.6} parent=27 // pred_fallthru
        _
    $region28: #{forward.6} parent=5 // pred_fallthru
      _
    %p175 = scmp.le.s32.totalorder 1, %s10
    %p176 = scmp.lt.s32.totalorder %s10, 5
    %p177 = pnand %p175, %p176
    %p178 = pneg %p177
    // Predicated region
    $region33: #{forward.6} parent=5 // pred_check
      _
    $region34: #{forward.6} parent=5 // pred_check_branch
      %180 = sbr.rel (%p177) target = $region36
    $region35: #{forward.6} parent=5 // pred_region
      %s181 = ssub.s32 %s10, 1
      %p182 = scmp.lt.s32.totalorder %s19, 1
      %s183 = scalar_select %p182, %s19, 1
      %s184 = smul.addr %s183, 32
      %s185 = smul.addr %s184, 4
      %s186 = scalar_lea.vmem %s0, %s185
      %p187 = pneg %p48
      %p188 = pneg %p45
      %p189 = pneg %p69
      %p190 = pneg %p66
      %p191 = pneg %p90
      %p192 = pneg %p87
      %p193 = pneg %p111
      %p194 = pneg %p108
      %p195 = pneg %p139
      %p196 = pneg %p136
      %s197 = smul.u32 8, %s20
      %p198 = scmp.lt.s32.totalorder %s19, 1
      %s199 = scalar_select %p198, %s19, 1
      %p200 = scmp.lt.s32.totalorder %s197, 15
      %s201 = scalar_select %p200, %s197, 15
      %s202 = smul.addr %s201, 2
      %s203 = smul.addr %s199, 32
      %s204 = sadd.s32 %s202, %s203
      %s205 = smul.addr %s204, 4
      %s206 = scalar_lea.vmem %s4, %s205
      %p207 = scmp.lt.s32.totalorder %s19, 1
      %s208 = scalar_select %p207, %s19, 1
      %s209 = smul.addr %s208, 32
      %s210 = smul.addr %s209, 4
      %s211 = scalar_lea.vmem %s0, %s210
      %s212 = smul.u32 8, %s20
      %p213 = scmp.lt.s32.totalorder %s19, 1
      %s214 = scalar_select %p213, %s19, 1
      %p215 = scmp.lt.s32.totalorder %s212, 15
      %s216 = scalar_select %p215, %s212, 15
      %s217 = smul.addr %s216, 2
      %s218 = smul.addr %s214, 32
      %s219 = sadd.s32 %s217, %s218
      %s220 = smul.addr %s219, 4
      %s221 = scalar_lea.vmem %s4, %s220
      %s222 = smul.u32 8, %s20
      %s224 = smul.u32 %s20, 8
      %vm225 = vcmask 1040384
      %vm226 = vsmask.f32 256
      %vm227 = vmand %vm225, %vm226
      %v228 = vld [vmem:[#allocation2] sm:$0x1]
      %v229 = vsel %vm227, 0, %v228
      %230 = vst [vmem:[#allocation2] sm:$0x1] %v229
      %v231 = vld [vmem:[#allocation2 + $0xc] sm:$0x1]
      %v232 = vsel %vm227, 0, %v231
      %233 = vst [vmem:[#allocation2 + $0xc] sm:$0x1] %v232
      %v234 = vld [vmem:[#allocation2 + $0x18] sm:$0x1]
      %v235 = vsel %vm227, 0, %v234
      %236 = vst [vmem:[#allocation2 + $0x18] sm:$0x1] %v235
      %v237 = vld [vmem:[#allocation2 + $0x24] sm:$0x1]
      %v238 = vsel %vm227, 0, %v237
      %239 = vst [vmem:[#allocation2 + $0x24] sm:$0x1] %v238
      %v240 = vld [vmem:[#allocation2 + $0x30] sm:$0x1]
      %v241 = vsel %vm227, 0, %v240
      %242 = vst [vmem:[#allocation2 + $0x30] sm:$0x1] %v241
      %v243 = vld [vmem:[#allocation2 + $0x3c] sm:$0x1]
      %v244 = vsel %vm227, 0, %v243
      %245 = vst [vmem:[#allocation2 + $0x3c] sm:$0x1] %v244
      %v246 = vld [vmem:[#allocation2 + $0x48] sm:$0x1]
      %v247 = vsel %vm227, 0, %v246
      %248 = vst [vmem:[#allocation2 + $0x48] sm:$0x1] %v247
      %v249 = vld [vmem:[#allocation2 + $0x54] sm:$0x1]
      %v250 = vsel %vm227, 0, %v249
      %251 = vst [vmem:[#allocation2 + $0x54] sm:$0x1] %v250
      %v252 = vld [vmem:[#allocation2 + $0x60] sm:$0x1]
      %v253 = vsel %vm227, 0, %v252
      %254 = vst [vmem:[#allocation2 + $0x60] sm:$0x1] %v253
      %v255 = vld [vmem:[#allocation2 + $0x6c] sm:$0x1]
      %v256 = vsel %vm227, 0, %v255
      %257 = vst [vmem:[#allocation2 + $0x6c] sm:$0x1] %v256
      %vm258 = vsmask.f32 7938
      %vm259 = vmand %vm225, %vm258
      %v260 = vld [vmem:[#allocation2 + $0x8] sm:$0x1]
      %v261 = vsel %vm259, 0, %v260
      %262 = vst [vmem:[#allocation2 + $0x8] sm:$0x1] %v261
      %v263 = vld [vmem:[#allocation2 + $0x14] sm:$0x1]
      %v264 = vsel %vm259, 0, %v263
      %265 = vst [vmem:[#allocation2 + $0x14] sm:$0x1] %v264
      %v266 = vld [vmem:[#allocation2 + $0x20] sm:$0x1]
      %v267 = vsel %vm259, 0, %v266
      %268 = vst [vmem:[#allocation2 + $0x20] sm:$0x1] %v267
      %v269 = vld [vmem:[#allocation2 + $0x2c] sm:$0x1]
      %v270 = vsel %vm259, 0, %v269
      %271 = vst [vmem:[#allocation2 + $0x2c] sm:$0x1] %v270
      %v272 = vld [vmem:[#allocation2 + $0x38] sm:$0x1]
      %v273 = vsel %vm259, 0, %v272
      %274 = vst [vmem:[#allocation2 + $0x38] sm:$0x1] %v273
      %v275 = vld [vmem:[#allocation2 + $0x44] sm:$0x1]
      %v276 = vsel %vm259, 0, %v275
      %277 = vst [vmem:[#allocation2 + $0x44] sm:$0x1] %v276
      %v278 = vld [vmem:[#allocation2 + $0x50] sm:$0x1]
      %v279 = vsel %vm259, 0, %v278
      %280 = vst [vmem:[#allocation2 + $0x50] sm:$0x1] %v279
      %v281 = vld [vmem:[#allocation2 + $0x5c] sm:$0x1]
      %v282 = vsel %vm259, 0, %v281
      %283 = vst [vmem:[#allocation2 + $0x5c] sm:$0x1] %v282
      %v284 = vld [vmem:[#allocation2 + $0x68] sm:$0x1]
      %v285 = vsel %vm259, 0, %v284
      %286 = vst [vmem:[#allocation2 + $0x68] sm:$0x1] %v285
      %v287 = vld [vmem:[#allocation2 + $0x74] sm:$0x1]
      %v288 = vsel %vm259, 0, %v287
      %289 = vst [vmem:[#allocation2 + $0x74] sm:$0x1] %v288
      %p290 = scmp.eq.s32.totalorder %s20, 0
      // Predicated region
      $region37: #{forward.6} parent=35 // pred_check
        %p291 = pneg %p290
      $region38: #{forward.6} parent=35 // pred_check_branch
        %293 = sbr.rel (%p291) target = $region40
      $region39: #{forward.6} parent=35 // pred_region
        %294 = vst [vmem:[#allocation2] sm:$0xf] 0
        %295 = vst [vmem:[#allocation2 + $0x4] sm:$0xf] 0
        %296 = vst [vmem:[#allocation2 + $0x8] sm:$0x1] 0
        %v297 = vld [vmem:[%s211] sm:$0xf]
        %v298 = vld [vmem:[%s211 + $0x4] sm:$0xf]
        %v299 = vld [vmem:[%s211 + $0x8] sm:$0xf]
        %v300 = vld [vmem:[%s211 + $0xc] sm:$0xf]
        %v301 = vld [vmem:[%s211 + $0x10] sm:$0xf]
        %v302 = vld [vmem:[%s211 + $0x14] sm:$0xf]
        %v303 = vld [vmem:[%s211 + $0x18] sm:$0xf]
        %v304 = vld [vmem:[%s211 + $0x1c] sm:$0xf]
        %v305 = vld [vmem:[%s211 + $0x20] sm:$0xf]
        %v306 = vld [vmem:[%s211 + $0x24] sm:$0xf]
        %v307 = vld [vmem:[%s211 + $0x28] sm:$0xf]
        %v308 = vld [vmem:[%s211 + $0x2c] sm:$0xf]
        %v309 = vld [vmem:[%s211 + $0x30] sm:$0xf]
        %v310 = vld [vmem:[%s211 + $0x34] sm:$0xf]
        %v311 = vld [vmem:[%s211 + $0x38] sm:$0xf]
        %v312 = vld [vmem:[%s211 + $0x3c] sm:$0xf]
        %v313 = vld [vmem:[%s211 + $0x40] sm:$0xf]
        %v314 = vld [vmem:[%s211 + $0x44] sm:$0xf]
        %vm315 = vsmask.f32 4368
        %vm316 = vmor %vm226, %vm315
        %v318 = vshrl.u32 %v297, 16
        %v320 = vrot.slane %v318, 7
        %v321 = vshll.u32 %v297, 16
        %v323 = vor.u32 %v320, %v321
        %v324 = vrot.slane %v320, 4
        %v326 = vshrl.u32 %v298, 16
        %v328 = vrot.slane %v326, 7
        %v329 = vshll.u32 %v298, 16
        %v331 = vor.u32 %v328, %v329
        %v332 = vsel %vm316, %v324, %v331
        %v333 = vrot.slane %v328, 4
        %v335 = vshrl.u32 %v299, 16
        %v337 = vrot.slane %v335, 7
        %v338 = vshll.u32 %v299, 16
        %v340 = vor.u32 %v337, %v338
        %v341 = vrot.slane %v337, 4
        %v343 = vshrl.u32 %v300, 16
        %v345 = vrot.slane %v343, 7
        %v346 = vshll.u32 %v300, 16
        %v348 = vor.u32 %v345, %v346
        %v349 = vsel %vm316, %v341, %v348
        %v350 = vrot.slane %v345, 4
        %v352 = vshrl.u32 %v301, 16
        %v354 = vrot.slane %v352, 7
        %v355 = vshll.u32 %v301, 16
        %v357 = vor.u32 %v354, %v355
        %v358 = vrot.slane %v354, 4
        %v360 = vshrl.u32 %v302, 16
        %v362 = vrot.slane %v360, 7
        %v363 = vshll.u32 %v302, 16
        %v365 = vor.u32 %v362, %v363
        %v366 = vsel %vm316, %v358, %v365
        %v367 = vrot.slane %v362, 4
        %v369 = vshrl.u32 %v303, 16
        %v371 = vrot.slane %v369, 7
        %v372 = vshll.u32 %v303, 16
        %v374 = vor.u32 %v371, %v372
        %v375 = vrot.slane %v371, 4
        %v377 = vshrl.u32 %v304, 16
        %v379 = vrot.slane %v377, 7
        %v380 = vshll.u32 %v304, 16
        %v382 = vor.u32 %v379, %v380
        %v383 = vsel %vm316, %v375, %v382
        %v384 = vrot.slane %v379, 4
        %v386 = vshrl.u32 %v305, 16
        %v388 = vrot.slane %v386, 7
        %v389 = vshll.u32 %v305, 16
        %v391 = vor.u32 %v388, %v389
        %v392 = vrot.slane %v388, 4
        %v394 = vshrl.u32 %v306, 16
        %v396 = vrot.slane %v394, 7
        %v397 = vshll.u32 %v306, 16
        %v399 = vor.u32 %v396, %v397
        %v400 = vsel %vm316, %v392, %v399
        %v401 = vrot.slane %v396, 4
        %v403 = vshrl.u32 %v307, 16
        %v405 = vrot.slane %v403, 7
        %v406 = vshll.u32 %v307, 16
        %v408 = vor.u32 %v405, %v406
        %v409 = vrot.slane %v405, 4
        %v411 = vshrl.u32 %v308, 16
        %v413 = vrot.slane %v411, 7
        %v414 = vshll.u32 %v308, 16
        %v416 = vor.u32 %v413, %v414
        %v417 = vsel %vm316, %v409, %v416
        %v418 = vrot.slane %v413, 4
        %v420 = vshrl.u32 %v309, 16
        %v422 = vrot.slane %v420, 7
        %v423 = vshll.u32 %v309, 16
        %v425 = vor.u32 %v422, %v423
        %v426 = vrot.slane %v422, 4
        %v428 = vshrl.u32 %v310, 16
        %v430 = vrot.slane %v428, 7
        %v431 = vshll.u32 %v310, 16
        %v433 = vor.u32 %v430, %v431
        %v434 = vsel %vm316, %v426, %v433
        %v435 = vrot.slane %v430, 4
        %v437 = vshrl.u32 %v311, 16
        %v439 = vrot.slane %v437, 7
        %v440 = vshll.u32 %v311, 16
        %v442 = vor.u32 %v439, %v440
        %v443 = vrot.slane %v439, 4
        %v445 = vshrl.u32 %v312, 16
        %v447 = vrot.slane %v445, 7
        %v448 = vshll.u32 %v312, 16
        %v450 = vor.u32 %v447, %v448
        %v451 = vsel %vm316, %v443, %v450
        %v452 = vrot.slane %v447, 4
        %v454 = vshrl.u32 %v313, 16
        %v456 = vrot.slane %v454, 7
        %v457 = vshll.u32 %v313, 16
        %v459 = vor.u32 %v456, %v457
        %v460 = vrot.slane %v456, 4
        %v462 = vshrl.u32 %v314, 16
        %v464 = vrot.slane %v462, 7
        %v465 = vshll.u32 %v314, 16
        %v467 = vor.u32 %v464, %v465
        %v468 = vsel %vm316, %v460, %v467
        %v469 = vrot.slane %v464, 4
        %s497 = scalar_lea.vmem [#allocation2], 12
        %vm498 = vcmask 1043456
        %vm499 = vmand %vm498, %vm258
        %v500 = vld [vmem:[%s497] sm:$0xf]
        %v501 = vsel %vm499, %v323, %v500
        %502 = vst [vmem:[%s497] sm:$0xf] %v501
        %503 = vst [vmem:[%s497 + $0x4] sm:$0xf] %v332
        %v504 = vld [vmem:[%s497 + $0x8] sm:$0x1]
        %v505 = vsel %vm227, %v333, %v504
        %506 = vst [vmem:[%s497 + $0x8] sm:$0x1] %v505
        %v507 = vld [vmem:[%s497 + $0xc] sm:$0xf]
        %v508 = vsel %vm499, %v340, %v507
        %509 = vst [vmem:[%s497 + $0xc] sm:$0xf] %v508
        %510 = vst [vmem:[%s497 + $0x10] sm:$0xf] %v349
        %v511 = vld [vmem:[%s497 + $0x14] sm:$0x1]
        %v512 = vsel %vm227, %v350, %v511
        %513 = vst [vmem:[%s497 + $0x14] sm:$0x1] %v512
        %v514 = vld [vmem:[%s497 + $0x18] sm:$0xf]
        %v515 = vsel %vm499, %v357, %v514
        %516 = vst [vmem:[%s497 + $0x18] sm:$0xf] %v515
        %517 = vst [vmem:[%s497 + $0x1c] sm:$0xf] %v366
        %v518 = vld [vmem:[%s497 + $0x20] sm:$0x1]
        %v519 = vsel %vm227, %v367, %v518
        %520 = vst [vmem:[%s497 + $0x20] sm:$0x1] %v519
        %v521 = vld [vmem:[%s497 + $0x24] sm:$0xf]
        %v522 = vsel %vm499, %v374, %v521
        %523 = vst [vmem:[%s497 + $0x24] sm:$0xf] %v522
        %524 = vst [vmem:[%s497 + $0x28] sm:$0xf] %v383
        %v525 = vld [vmem:[%s497 + $0x2c] sm:$0x1]
        %v526 = vsel %vm227, %v384, %v525
        %527 = vst [vmem:[%s497 + $0x2c] sm:$0x1] %v526
        %v528 = vld [vmem:[%s497 + $0x30] sm:$0xf]
        %v529 = vsel %vm499, %v391, %v528
        %530 = vst [vmem:[%s497 + $0x30] sm:$0xf] %v529
        %531 = vst [vmem:[%s497 + $0x34] sm:$0xf] %v400
        %v532 = vld [vmem:[%s497 + $0x38] sm:$0x1]
        %v533 = vsel %vm227, %v401, %v532
        %534 = vst [vmem:[%s497 + $0x38] sm:$0x1] %v533
        %v535 = vld [vmem:[%s497 + $0x3c] sm:$0xf]
        %v536 = vsel %vm499, %v408, %v535
        %537 = vst [vmem:[%s497 + $0x3c] sm:$0xf] %v536
        %538 = vst [vmem:[%s497 + $0x40] sm:$0xf] %v417
        %v539 = vld [vmem:[%s497 + $0x44] sm:$0x1]
        %v540 = vsel %vm227, %v418, %v539
        %541 = vst [vmem:[%s497 + $0x44] sm:$0x1] %v540
        %v542 = vld [vmem:[%s497 + $0x48] sm:$0xf]
        %v543 = vsel %vm499, %v425, %v542
        %544 = vst [vmem:[%s497 + $0x48] sm:$0xf] %v543
        %545 = vst [vmem:[%s497 + $0x4c] sm:$0xf] %v434
        %v546 = vld [vmem:[%s497 + $0x50] sm:$0x1]
        %v547 = vsel %vm227, %v435, %v546
        %548 = vst [vmem:[%s497 + $0x50] sm:$0x1] %v547
        %v549 = vld [vmem:[%s497 + $0x54] sm:$0xf]
        %v550 = vsel %vm499, %v442, %v549
        %551 = vst [vmem:[%s497 + $0x54] sm:$0xf] %v550
        %552 = vst [vmem:[%s497 + $0x58] sm:$0xf] %v451
        %v553 = vld [vmem:[%s497 + $0x5c] sm:$0x1]
        %v554 = vsel %vm227, %v452, %v553
        %555 = vst [vmem:[%s497 + $0x5c] sm:$0x1] %v554
        %v556 = vld [vmem:[%s497 + $0x60] sm:$0xf]
        %v557 = vsel %vm499, %v459, %v556
        %558 = vst [vmem:[%s497 + $0x60] sm:$0xf] %v557
        %559 = vst [vmem:[%s497 + $0x64] sm:$0xf] %v468
        %v560 = vld [vmem:[%s497 + $0x68] sm:$0x1]
        %v561 = vsel %vm227, %v469, %v560
        %562 = vst [vmem:[%s497 + $0x68] sm:$0x1] %v561
      $region40: #{forward.6} parent=35 // pred_fallthru
        _
      %p563 = scmp.eq.s32.totalorder %s20, 1
      // Predicated region
      $region41: #{forward.6} parent=35 // pred_check
        %p564 = pneg %p563
      $region42: #{forward.6} parent=35 // pred_check_branch
        %566 = sbr.rel (%p564) target = $region44
      $region43: #{forward.6} parent=35 // pred_region
        %s567 = scalar_lea.vmem [#allocation2], 108
        %568 = vst [vmem:[%s567] sm:$0xf] 0
        %569 = vst [vmem:[%s567 + $0x4] sm:$0xf] 0
        %570 = vst [vmem:[%s567 + $0x8] sm:$0x1] 0
        %s571 = ssub.s32 %s224, 1
        %s572 = smul.u32 %s571, 2
        %s573 = smul.addr %s572, 4
        %s574 = scalar_lea.vmem %s211, %s573
        %v575 = vld [vmem:[%s574] sm:$0xf]
        %v576 = vld [vmem:[%s574 + $0x4] sm:$0xf]
        %v577 = vld [vmem:[%s574 + $0x8] sm:$0xf]
        %v578 = vld [vmem:[%s574 + $0xc] sm:$0xf]
        %v579 = vld [vmem:[%s574 + $0x10] sm:$0xf]
        %v580 = vld [vmem:[%s574 + $0x14] sm:$0xf]
        %v581 = vld [vmem:[%s574 + $0x18] sm:$0xf]
        %v582 = vld [vmem:[%s574 + $0x1c] sm:$0xf]
        %v583 = vld [vmem:[%s574 + $0x20] sm:$0xf]
        %v584 = vld [vmem:[%s574 + $0x24] sm:$0xf]
        %v585 = vld [vmem:[%s574 + $0x28] sm:$0xf]
        %v586 = vld [vmem:[%s574 + $0x2c] sm:$0xf]
        %v587 = vld [vmem:[%s574 + $0x30] sm:$0xf]
        %v588 = vld [vmem:[%s574 + $0x34] sm:$0xf]
        %v589 = vld [vmem:[%s574 + $0x38] sm:$0xf]
        %v590 = vld [vmem:[%s574 + $0x3c] sm:$0xf]
        %v591 = vld [vmem:[%s574 + $0x40] sm:$0xf]
        %v592 = vld [vmem:[%s574 + $0x44] sm:$0xf]
        %vm593 = vsmask.f32 4368
        %vm594 = vmor %vm226, %vm593
        %v596 = vshrl.u32 %v575, 16
        %v598 = vrot.slane %v596, 7
        %v599 = vshll.u32 %v575, 16
        %v601 = vor.u32 %v598, %v599
        %v602 = vrot.slane %v598, 4
        %v604 = vshrl.u32 %v576, 16
        %v606 = vrot.slane %v604, 7
        %v607 = vshll.u32 %v576, 16
        %v609 = vor.u32 %v606, %v607
        %v610 = vsel %vm594, %v602, %v609
        %v611 = vrot.slane %v606, 4
        %v613 = vshrl.u32 %v577, 16
        %v615 = vrot.slane %v613, 7
        %v616 = vshll.u32 %v577, 16
        %v618 = vor.u32 %v615, %v616
        %v619 = vrot.slane %v615, 4
        %v621 = vshrl.u32 %v578, 16
        %v623 = vrot.slane %v621, 7
        %v624 = vshll.u32 %v578, 16
        %v626 = vor.u32 %v623, %v624
        %v627 = vsel %vm594, %v619, %v626
        %v628 = vrot.slane %v623, 4
        %v630 = vshrl.u32 %v579, 16
        %v632 = vrot.slane %v630, 7
        %v633 = vshll.u32 %v579, 16
        %v635 = vor.u32 %v632, %v633
        %v636 = vrot.slane %v632, 4
        %v638 = vshrl.u32 %v580, 16
        %v640 = vrot.slane %v638, 7
        %v641 = vshll.u32 %v580, 16
        %v643 = vor.u32 %v640, %v641
        %v644 = vsel %vm594, %v636, %v643
        %v645 = vrot.slane %v640, 4
        %v647 = vshrl.u32 %v581, 16
        %v649 = vrot.slane %v647, 7
        %v650 = vshll.u32 %v581, 16
        %v652 = vor.u32 %v649, %v650
        %v653 = vrot.slane %v649, 4
        %v655 = vshrl.u32 %v582, 16
        %v657 = vrot.slane %v655, 7
        %v658 = vshll.u32 %v582, 16
        %v660 = vor.u32 %v657, %v658
        %v661 = vsel %vm594, %v653, %v660
        %v662 = vrot.slane %v657, 4
        %v664 = vshrl.u32 %v583, 16
        %v666 = vrot.slane %v664, 7
        %v667 = vshll.u32 %v583, 16
        %v669 = vor.u32 %v666, %v667
        %v670 = vrot.slane %v666, 4
        %v672 = vshrl.u32 %v584, 16
        %v674 = vrot.slane %v672, 7
        %v675 = vshll.u32 %v584, 16
        %v677 = vor.u32 %v674, %v675
        %v678 = vsel %vm594, %v670, %v677
        %v679 = vrot.slane %v674, 4
        %v681 = vshrl.u32 %v585, 16
        %v683 = vrot.slane %v681, 7
        %v684 = vshll.u32 %v585, 16
        %v686 = vor.u32 %v683, %v684
        %v687 = vrot.slane %v683, 4
        %v689 = vshrl.u32 %v586, 16
        %v691 = vrot.slane %v689, 7
        %v692 = vshll.u32 %v586, 16
        %v694 = vor.u32 %v691, %v692
        %v695 = vsel %vm594, %v687, %v694
        %v696 = vrot.slane %v691, 4
        %v698 = vshrl.u32 %v587, 16
        %v700 = vrot.slane %v698, 7
        %v701 = vshll.u32 %v587, 16
        %v703 = vor.u32 %v700, %v701
        %v704 = vrot.slane %v700, 4
        %v706 = vshrl.u32 %v588, 16
        %v708 = vrot.slane %v706, 7
        %v709 = vshll.u32 %v588, 16
        %v711 = vor.u32 %v708, %v709
        %v712 = vsel %vm594, %v704, %v711
        %v713 = vrot.slane %v708, 4
        %v715 = vshrl.u32 %v589, 16
        %v717 = vrot.slane %v715, 7
        %v718 = vshll.u32 %v589, 16
        %v720 = vor.u32 %v717, %v718
        %v721 = vrot.slane %v717, 4
        %v723 = vshrl.u32 %v590, 16
        %v725 = vrot.slane %v723, 7
        %v726 = vshll.u32 %v590, 16
        %v728 = vor.u32 %v725, %v726
        %v729 = vsel %vm594, %v721, %v728
        %v730 = vrot.slane %v725, 4
        %v732 = vshrl.u32 %v591, 16
        %v734 = vrot.slane %v732, 7
        %v735 = vshll.u32 %v591, 16
        %v737 = vor.u32 %v734, %v735
        %v738 = vrot.slane %v734, 4
        %v740 = vshrl.u32 %v592, 16
        %v742 = vrot.slane %v740, 7
        %v743 = vshll.u32 %v592, 16
        %v745 = vor.u32 %v742, %v743
        %v746 = vsel %vm594, %v738, %v745
        %v747 = vrot.slane %v742, 4
        %vm775 = vcmask 1043456
        %vm776 = vmand %vm775, %vm258
        %v777 = vld [vmem:[#allocation2] sm:$0xf]
        %v778 = vsel %vm776, %v601, %v777
        %779 = vst [vmem:[#allocation2] sm:$0xf] %v778
        %780 = vst [vmem:[#allocation2 + $0x4] sm:$0xf] %v610
        %v781 = vld [vmem:[#allocation2 + $0x8] sm:$0x1]
        %v782 = vsel %vm227, %v611, %v781
        %783 = vst [vmem:[#allocation2 + $0x8] sm:$0x1] %v782
        %v784 = vld [vmem:[#allocation2 + $0xc] sm:$0xf]
        %v785 = vsel %vm776, %v618, %v784
        %786 = vst [vmem:[#allocation2 + $0xc] sm:$0xf] %v785
        %787 = vst [vmem:[#allocation2 + $0x10] sm:$0xf] %v627
        %v788 = vld [vmem:[#allocation2 + $0x14] sm:$0x1]
        %v789 = vsel %vm227, %v628, %v788
        %790 = vst [vmem:[#allocation2 + $0x14] sm:$0x1] %v789
        %v791 = vld [vmem:[#allocation2 + $0x18] sm:$0xf]
        %v792 = vsel %vm776, %v635, %v791
        %793 = vst [vmem:[#allocation2 + $0x18] sm:$0xf] %v792
        %794 = vst [vmem:[#allocation2 + $0x1c] sm:$0xf] %v644
        %v795 = vld [vmem:[#allocation2 + $0x20] sm:$0x1]
        %v796 = vsel %vm227, %v645, %v795
        %797 = vst [vmem:[#allocation2 + $0x20] sm:$0x1] %v796
        %v798 = vld [vmem:[#allocation2 + $0x24] sm:$0xf]
        %v799 = vsel %vm776, %v652, %v798
        %800 = vst [vmem:[#allocation2 + $0x24] sm:$0xf] %v799
        %801 = vst [vmem:[#allocation2 + $0x28] sm:$0xf] %v661
        %v802 = vld [vmem:[#allocation2 + $0x2c] sm:$0x1]
        %v803 = vsel %vm227, %v662, %v802
        %804 = vst [vmem:[#allocation2 + $0x2c] sm:$0x1] %v803
        %v805 = vld [vmem:[#allocation2 + $0x30] sm:$0xf]
        %v806 = vsel %vm776, %v669, %v805
        %807 = vst [vmem:[#allocation2 + $0x30] sm:$0xf] %v806
        %808 = vst [vmem:[#allocation2 + $0x34] sm:$0xf] %v678
        %v809 = vld [vmem:[#allocation2 + $0x38] sm:$0x1]
        %v810 = vsel %vm227, %v679, %v809
        %811 = vst [vmem:[#allocation2 + $0x38] sm:$0x1] %v810
        %v812 = vld [vmem:[#allocation2 + $0x3c] sm:$0xf]
        %v813 = vsel %vm776, %v686, %v812
        %814 = vst [vmem:[#allocation2 + $0x3c] sm:$0xf] %v813
        %815 = vst [vmem:[#allocation2 + $0x40] sm:$0xf] %v695
        %v816 = vld [vmem:[#allocation2 + $0x44] sm:$0x1]
        %v817 = vsel %vm227, %v696, %v816
        %818 = vst [vmem:[#allocation2 + $0x44] sm:$0x1] %v817
        %v819 = vld [vmem:[#allocation2 + $0x48] sm:$0xf]
        %v820 = vsel %vm776, %v703, %v819
        %821 = vst [vmem:[#allocation2 + $0x48] sm:$0xf] %v820
        %822 = vst [vmem:[#allocation2 + $0x4c] sm:$0xf] %v712
        %v823 = vld [vmem:[#allocation2 + $0x50] sm:$0x1]
        %v824 = vsel %vm227, %v713, %v823
        %825 = vst [vmem:[#allocation2 + $0x50] sm:$0x1] %v824
        %v826 = vld [vmem:[#allocation2 + $0x54] sm:$0xf]
        %v827 = vsel %vm776, %v720, %v826
        %828 = vst [vmem:[#allocation2 + $0x54] sm:$0xf] %v827
        %829 = vst [vmem:[#allocation2 + $0x58] sm:$0xf] %v729
        %v830 = vld [vmem:[#allocation2 + $0x5c] sm:$0x1]
        %v831 = vsel %vm227, %v730, %v830
        %832 = vst [vmem:[#allocation2 + $0x5c] sm:$0x1] %v831
        %v833 = vld [vmem:[#allocation2 + $0x60] sm:$0xf]
        %v834 = vsel %vm776, %v737, %v833
        %835 = vst [vmem:[#allocation2 + $0x60] sm:$0xf] %v834
        %836 = vst [vmem:[#allocation2 + $0x64] sm:$0xf] %v746
        %v837 = vld [vmem:[#allocation2 + $0x68] sm:$0x1]
        %v838 = vsel %vm227, %v747, %v837
        %839 = vst [vmem:[#allocation2 + $0x68] sm:$0x1] %v838
      $region44: #{forward.6} parent=35 // pred_fallthru
        _
      %v840 = vld [vmem:[#allocation2] sm:$0xf]
      %v841 = vld [vmem:[#allocation2 + $0x4] sm:$0xf]
      %v842 = vld [vmem:[#allocation2 + $0xc] sm:$0xf]
      %v843 = vld [vmem:[#allocation2 + $0x10] sm:$0xf]
      %v844 = vld [vmem:[#allocation2 + $0x18] sm:$0xf]
      %v845 = vld [vmem:[#allocation2 + $0x1c] sm:$0xf]
      %v846 = vld [vmem:[#allocation2 + $0x24] sm:$0xf]
      %v847 = vld [vmem:[#allocation2 + $0x28] sm:$0xf]
      %v848 = vld [vmem:[#allocation2 + $0x30] sm:$0xf]
      %v849 = vld [vmem:[#allocation2 + $0x34] sm:$0xf]
      %v850 = vld [vmem:[#allocation2 + $0x3c] sm:$0xf]
      %v851 = vld [vmem:[#allocation2 + $0x40] sm:$0xf]
      %v852 = vld [vmem:[#allocation2 + $0x48] sm:$0xf]
      %v853 = vld [vmem:[#allocation2 + $0x4c] sm:$0xf]
      %v854 = vld [vmem:[#allocation2 + $0x54] sm:$0xf]
      %v855 = vld [vmem:[#allocation2 + $0x58] sm:$0xf]
      %v856 = vld [vmem:[#allocation2 + $0x8] sm:$0x1]
      %v857 = vld [vmem:[#allocation2 + $0x14] sm:$0x1]
      %v858 = vld [vmem:[#allocation2 + $0x20] sm:$0x1]
      %v859 = vld [vmem:[#allocation2 + $0x2c] sm:$0x1]
      %v860 = vld [vmem:[#allocation2 + $0x38] sm:$0x1]
      %v861 = vld [vmem:[#allocation2 + $0x44] sm:$0x1]
      %v862 = vld [vmem:[#allocation2 + $0x50] sm:$0x1]
      %v863 = vld [vmem:[#allocation2 + $0x5c] sm:$0x1]
      %v864 = vld [vmem:[#allocation2] sm:$0xe]
      %v865 = vld [vmem:[#allocation2 + $0xc] sm:$0xe]
      %v866 = vld [vmem:[#allocation2 + $0x18] sm:$0xe]
      %v867 = vld [vmem:[#allocation2 + $0x24] sm:$0xe]
      %v868 = vld [vmem:[#allocation2 + $0x30] sm:$0xe]
      %v869 = vld [vmem:[#allocation2 + $0x3c] sm:$0xe]
      %v870 = vld [vmem:[#allocation2 + $0x48] sm:$0xe]
      %v871 = vld [vmem:[#allocation2 + $0x54] sm:$0xe]
      %s872 = scalar_lea.vmem [#allocation2], 12
      %v873 = vld [vmem:[%s872] sm:$0xf]
      %v874 = vld [vmem:[%s872 + $0x4] sm:$0xf]
      %v875 = vld [vmem:[%s872 + $0xc] sm:$0xf]
      %v876 = vld [vmem:[%s872 + $0x10] sm:$0xf]
      %v877 = vld [vmem:[%s872 + $0x18] sm:$0xf]
      %v878 = vld [vmem:[%s872 + $0x1c] sm:$0xf]
      %v879 = vld [vmem:[%s872 + $0x24] sm:$0xf]
      %v880 = vld [vmem:[%s872 + $0x28] sm:$0xf]
      %v881 = vld [vmem:[%s872 + $0x30] sm:$0xf]
      %v882 = vld [vmem:[%s872 + $0x34] sm:$0xf]
      %v883 = vld [vmem:[%s872 + $0x3c] sm:$0xf]
      %v884 = vld [vmem:[%s872 + $0x40] sm:$0xf]
      %v885 = vld [vmem:[%s872 + $0x48] sm:$0xf]
      %v886 = vld [vmem:[%s872 + $0x4c] sm:$0xf]
      %v887 = vld [vmem:[%s872 + $0x54] sm:$0xf]
      %v888 = vld [vmem:[%s872 + $0x58] sm:$0xf]
      %v889 = vld [vmem:[%s872 + $0x8] sm:$0x1]
      %v890 = vld [vmem:[%s872 + $0x14] sm:$0x1]
      %v891 = vld [vmem:[%s872 + $0x20] sm:$0x1]
      %v892 = vld [vmem:[%s872 + $0x2c] sm:$0x1]
      %v893 = vld [vmem:[%s872 + $0x38] sm:$0x1]
      %v894 = vld [vmem:[%s872 + $0x44] sm:$0x1]
      %v895 = vld [vmem:[%s872 + $0x50] sm:$0x1]
      %v896 = vld [vmem:[%s872 + $0x5c] sm:$0x1]
      %v897 = vld [vmem:[%s872] sm:$0xe]
      %v898 = vld [vmem:[%s872 + $0xc] sm:$0xe]
      %v899 = vld [vmem:[%s872 + $0x18] sm:$0xe]
      %v900 = vld [vmem:[%s872 + $0x24] sm:$0xe]
      %v901 = vld [vmem:[%s872 + $0x30] sm:$0xe]
      %v902 = vld [vmem:[%s872 + $0x3c] sm:$0xe]
      %v903 = vld [vmem:[%s872 + $0x48] sm:$0xe]
      %v904 = vld [vmem:[%s872 + $0x54] sm:$0xe]
      %s905 = scalar_lea.vmem [#allocation2], 24
      %v906 = vld [vmem:[%s905] sm:$0xf]
      %v907 = vld [vmem:[%s905 + $0x4] sm:$0xf]
      %v908 = vld [vmem:[%s905 + $0xc] sm:$0xf]
      %v909 = vld [vmem:[%s905 + $0x10] sm:$0xf]
      %v910 = vld [vmem:[%s905 + $0x18] sm:$0xf]
      %v911 = vld [vmem:[%s905 + $0x1c] sm:$0xf]
      %v912 = vld [vmem:[%s905 + $0x24] sm:$0xf]
      %v913 = vld [vmem:[%s905 + $0x28] sm:$0xf]
      %v914 = vld [vmem:[%s905 + $0x30] sm:$0xf]
      %v915 = vld [vmem:[%s905 + $0x34] sm:$0xf]
      %v916 = vld [vmem:[%s905 + $0x3c] sm:$0xf]
      %v917 = vld [vmem:[%s905 + $0x40] sm:$0xf]
      %v918 = vld [vmem:[%s905 + $0x48] sm:$0xf]
      %v919 = vld [vmem:[%s905 + $0x4c] sm:$0xf]
      %v920 = vld [vmem:[%s905 + $0x54] sm:$0xf]
      %v921 = vld [vmem:[%s905 + $0x58] sm:$0xf]
      %v922 = vld [vmem:[%s905 + $0x8] sm:$0x1]
      %v923 = vld [vmem:[%s905 + $0x14] sm:$0x1]
      %v924 = vld [vmem:[%s905 + $0x20] sm:$0x1]
      %v925 = vld [vmem:[%s905 + $0x2c] sm:$0x1]
      %v926 = vld [vmem:[%s905 + $0x38] sm:$0x1]
      %v927 = vld [vmem:[%s905 + $0x44] sm:$0x1]
      %v928 = vld [vmem:[%s905 + $0x50] sm:$0x1]
      %v929 = vld [vmem:[%s905 + $0x5c] sm:$0x1]
      %v930 = vld [vmem:[%s905] sm:$0xe]
      %v931 = vld [vmem:[%s905 + $0xc] sm:$0xe]
      %v932 = vld [vmem:[%s905 + $0x18] sm:$0xe]
      %v933 = vld [vmem:[%s905 + $0x24] sm:$0xe]
      %v934 = vld [vmem:[%s905 + $0x30] sm:$0xe]
      %v935 = vld [vmem:[%s905 + $0x3c] sm:$0xe]
      %v936 = vld [vmem:[%s905 + $0x48] sm:$0xe]
      %v937 = vld [vmem:[%s905 + $0x54] sm:$0xe]
      %v954 = vunpack.c.l.b16 %v840
      %v955 = vunpack.c.l.b16 %v841
      %v956 = vunpack.c.l.b16 %v842
      %v957 = vunpack.c.l.b16 %v843
      %v958 = vunpack.c.l.b16 %v844
      %v959 = vunpack.c.l.b16 %v845
      %v960 = vunpack.c.l.b16 %v846
      %v961 = vunpack.c.l.b16 %v847
      %v962 = vunpack.c.l.b16 %v848
      %v963 = vunpack.c.l.b16 %v849
      %v964 = vunpack.c.l.b16 %v850
      %v965 = vunpack.c.l.b16 %v851
      %v966 = vunpack.c.l.b16 %v852
      %v967 = vunpack.c.l.b16 %v853
      %v968 = vunpack.c.l.b16 %v854
      %v969 = vunpack.c.l.b16 %v855
      %v970 = vpack.c.b16 %v955, %v954
      %v971 = vpack.c.b16 %v957, %v956
      %v972 = vpack.c.b16 %v959, %v958
      %v973 = vpack.c.b16 %v961, %v960
      %v974 = vpack.c.b16 %v963, %v962
      %v975 = vpack.c.b16 %v965, %v964
      %v976 = vpack.c.b16 %v967, %v966
      %v977 = vpack.c.b16 %v969, %v968
      %v994 = vunpack.c.l.b16 %v856
      %v995 = vunpack.c.l.b16 %v857
      %v996 = vunpack.c.l.b16 %v858
      %v997 = vunpack.c.l.b16 %v859
      %v998 = vunpack.c.l.b16 %v860
      %v999 = vunpack.c.l.b16 %v861
      %v1000 = vunpack.c.l.b16 %v862
      %v1001 = vunpack.c.l.b16 %v863
      %v1002 = vpack.c.b16 %v994, %v994
      %v1003 = vpack.c.b16 %v995, %v995
      %v1004 = vpack.c.b16 %v996, %v996
      %v1005 = vpack.c.b16 %v997, %v997
      %v1006 = vpack.c.b16 %v998, %v998
      %v1007 = vpack.c.b16 %v999, %v999
      %v1008 = vpack.c.b16 %v1000, %v1000
      %v1009 = vpack.c.b16 %v1001, %v1001
      %vm1010 = vsmask.f32 7424
      %v1012 = vshrl.u32 %v970, 16
      %v1014 = vshll.u32 %v970, 16
      %v1016 = vrot.slane %v1014, 1
      %v1017 = vor.u32 %v1012, %v1016
      %v1019 = vshll.u32 %v1002, 16
      %v1021 = vrot.slane %v1019, 1
      %v1022 = vsel %vm1010, %v1017, %v1021
      %v1024 = vshrl.u32 %v971, 16
      %v1026 = vshll.u32 %v971, 16
      %v1028 = vrot.slane %v1026, 1
      %v1029 = vor.u32 %v1024, %v1028
      %v1031 = vshll.u32 %v1003, 16
      %v1033 = vrot.slane %v1031, 1
      %v1034 = vsel %vm1010, %v1029, %v1033
      %v1036 = vshrl.u32 %v972, 16
      %v1038 = vshll.u32 %v972, 16
      %v1040 = vrot.slane %v1038, 1
      %v1041 = vor.u32 %v1036, %v1040
      %v1043 = vshll.u32 %v1004, 16
      %v1045 = vrot.slane %v1043, 1
      %v1046 = vsel %vm1010, %v1041, %v1045
      %v1048 = vshrl.u32 %v973, 16
      %v1050 = vshll.u32 %v973, 16
      %v1052 = vrot.slane %v1050, 1
      %v1053 = vor.u32 %v1048, %v1052
      %v1055 = vshll.u32 %v1005, 16
      %v1057 = vrot.slane %v1055, 1
      %v1058 = vsel %vm1010, %v1053, %v1057
      %v1060 = vshrl.u32 %v974, 16
      %v1062 = vshll.u32 %v974, 16
      %v1064 = vrot.slane %v1062, 1
      %v1065 = vor.u32 %v1060, %v1064
      %v1067 = vshll.u32 %v1006, 16
      %v1069 = vrot.slane %v1067, 1
      %v1070 = vsel %vm1010, %v1065, %v1069
      %v1072 = vshrl.u32 %v975, 16
      %v1074 = vshll.u32 %v975, 16
      %v1076 = vrot.slane %v1074, 1
      %v1077 = vor.u32 %v1072, %v1076
      %v1079 = vshll.u32 %v1007, 16
      %v1081 = vrot.slane %v1079, 1
      %v1082 = vsel %vm1010, %v1077, %v1081
      %v1084 = vshrl.u32 %v976, 16
      %v1086 = vshll.u32 %v976, 16
      %v1088 = vrot.slane %v1086, 1
      %v1089 = vor.u32 %v1084, %v1088
      %v1091 = vshll.u32 %v1008, 16
      %v1093 = vrot.slane %v1091, 1
      %v1094 = vsel %vm1010, %v1089, %v1093
      %v1096 = vshrl.u32 %v977, 16
      %v1098 = vshll.u32 %v977, 16
      %v1100 = vrot.slane %v1098, 1
      %v1101 = vor.u32 %v1096, %v1100
      %v1103 = vshll.u32 %v1009, 16
      %v1105 = vrot.slane %v1103, 1
      %v1106 = vsel %vm1010, %v1101, %v1105
      %v1123 = vunpack.c.l.b16 %v864
      %v1124 = vunpack.c.l.b16 %v865
      %v1125 = vunpack.c.l.b16 %v866
      %v1126 = vunpack.c.l.b16 %v867
      %v1127 = vunpack.c.l.b16 %v868
      %v1128 = vunpack.c.l.b16 %v869
      %v1129 = vunpack.c.l.b16 %v870
      %v1130 = vunpack.c.l.b16 %v871
      %v1131 = vpack.c.b16 %v955, %v1123
      %v1132 = vpack.c.b16 %v957, %v1124
      %v1133 = vpack.c.b16 %v959, %v1125
      %v1134 = vpack.c.b16 %v961, %v1126
      %v1135 = vpack.c.b16 %v963, %v1127
      %v1136 = vpack.c.b16 %v965, %v1128
      %v1137 = vpack.c.b16 %v967, %v1129
      %v1138 = vpack.c.b16 %v969, %v1130
      %vm1139 = vcmask 1046528
      %v1140 = vrot.slane %v1131, 1
      %v1141 = vrot.slane %v1002, 1
      %v1142 = vsel %vm1139, %v1140, %v1141
      %v1143 = vrot.slane %v1132, 1
      %v1144 = vrot.slane %v1003, 1
      %v1145 = vsel %vm1139, %v1143, %v1144
      %v1146 = vrot.slane %v1133, 1
      %v1147 = vrot.slane %v1004, 1
      %v1148 = vsel %vm1139, %v1146, %v1147
      %v1149 = vrot.slane %v1134, 1
      %v1150 = vrot.slane %v1005, 1
      %v1151 = vsel %vm1139, %v1149, %v1150
      %v1152 = vrot.slane %v1135, 1
      %v1153 = vrot.slane %v1006, 1
      %v1154 = vsel %vm1139, %v1152, %v1153
      %v1155 = vrot.slane %v1136, 1
      %v1156 = vrot.slane %v1007, 1
      %v1157 = vsel %vm1139, %v1155, %v1156
      %v1158 = vrot.slane %v1137, 1
      %v1159 = vrot.slane %v1008, 1
      %v1160 = vsel %vm1139, %v1158, %v1159
      %v1161 = vrot.slane %v1138, 1
      %v1162 = vrot.slane %v1009, 1
      %v1163 = vsel %vm1139, %v1161, %v1162
      %v1188 = vunpack.c.l.b16 %v873
      %v1189 = vunpack.c.l.b16 %v874
      %v1190 = vunpack.c.l.b16 %v875
      %v1191 = vunpack.c.l.b16 %v876
      %v1192 = vunpack.c.l.b16 %v877
      %v1193 = vunpack.c.l.b16 %v878
      %v1194 = vunpack.c.l.b16 %v879
      %v1195 = vunpack.c.l.b16 %v880
      %v1196 = vunpack.c.l.b16 %v881
      %v1197 = vunpack.c.l.b16 %v882
      %v1198 = vunpack.c.l.b16 %v883
      %v1199 = vunpack.c.l.b16 %v884
      %v1200 = vunpack.c.l.b16 %v885
      %v1201 = vunpack.c.l.b16 %v886
      %v1202 = vunpack.c.l.b16 %v887
      %v1203 = vunpack.c.l.b16 %v888
      %v1204 = vpack.c.b16 %v1189, %v1188
      %v1205 = vpack.c.b16 %v1191, %v1190
      %v1206 = vpack.c.b16 %v1193, %v1192
      %v1207 = vpack.c.b16 %v1195, %v1194
      %v1208 = vpack.c.b16 %v1197, %v1196
      %v1209 = vpack.c.b16 %v1199, %v1198
      %v1210 = vpack.c.b16 %v1201, %v1200
      %v1211 = vpack.c.b16 %v1203, %v1202
      %v1228 = vunpack.c.l.b16 %v889
      %v1229 = vunpack.c.l.b16 %v890
      %v1230 = vunpack.c.l.b16 %v891
      %v1231 = vunpack.c.l.b16 %v892
      %v1232 = vunpack.c.l.b16 %v893
      %v1233 = vunpack.c.l.b16 %v894
      %v1234 = vunpack.c.l.b16 %v895
      %v1235 = vunpack.c.l.b16 %v896
      %v1236 = vpack.c.b16 %v1228, %v1228
      %v1237 = vpack.c.b16 %v1229, %v1229
      %v1238 = vpack.c.b16 %v1230, %v1230
      %v1239 = vpack.c.b16 %v1231, %v1231
      %v1240 = vpack.c.b16 %v1232, %v1232
      %v1241 = vpack.c.b16 %v1233, %v1233
      %v1242 = vpack.c.b16 %v1234, %v1234
      %v1243 = vpack.c.b16 %v1235, %v1235
      %v1245 = vshrl.u32 %v1204, 16
      %v1247 = vshll.u32 %v1204, 16
      %v1249 = vrot.slane %v1247, 1
      %v1250 = vor.u32 %v1245, %v1249
      %v1252 = vshll.u32 %v1236, 16
      %v1254 = vrot.slane %v1252, 1
      %v1255 = vsel %vm1010, %v1250, %v1254
      %v1257 = vshrl.u32 %v1205, 16
      %v1259 = vshll.u32 %v1205, 16
      %v1261 = vrot.slane %v1259, 1
      %v1262 = vor.u32 %v1257, %v1261
      %v1264 = vshll.u32 %v1237, 16
      %v1266 = vrot.slane %v1264, 1
      %v1267 = vsel %vm1010, %v1262, %v1266
      %v1269 = vshrl.u32 %v1206, 16
      %v1271 = vshll.u32 %v1206, 16
      %v1273 = vrot.slane %v1271, 1
      %v1274 = vor.u32 %v1269, %v1273
      %v1276 = vshll.u32 %v1238, 16
      %v1278 = vrot.slane %v1276, 1
      %v1279 = vsel %vm1010, %v1274, %v1278
      %v1281 = vshrl.u32 %v1207, 16
      %v1283 = vshll.u32 %v1207, 16
      %v1285 = vrot.slane %v1283, 1
      %v1286 = vor.u32 %v1281, %v1285
      %v1288 = vshll.u32 %v1239, 16
      %v1290 = vrot.slane %v1288, 1
      %v1291 = vsel %vm1010, %v1286, %v1290
      %v1293 = vshrl.u32 %v1208, 16
      %v1295 = vshll.u32 %v1208, 16
      %v1297 = vrot.slane %v1295, 1
      %v1298 = vor.u32 %v1293, %v1297
      %v1300 = vshll.u32 %v1240, 16
      %v1302 = vrot.slane %v1300, 1
      %v1303 = vsel %vm1010, %v1298, %v1302
      %v1305 = vshrl.u32 %v1209, 16
      %v1307 = vshll.u32 %v1209, 16
      %v1309 = vrot.slane %v1307, 1
      %v1310 = vor.u32 %v1305, %v1309
      %v1312 = vshll.u32 %v1241, 16
      %v1314 = vrot.slane %v1312, 1
      %v1315 = vsel %vm1010, %v1310, %v1314
      %v1317 = vshrl.u32 %v1210, 16
      %v1319 = vshll.u32 %v1210, 16
      %v1321 = vrot.slane %v1319, 1
      %v1322 = vor.u32 %v1317, %v1321
      %v1324 = vshll.u32 %v1242, 16
      %v1326 = vrot.slane %v1324, 1
      %v1327 = vsel %vm1010, %v1322, %v1326
      %v1329 = vshrl.u32 %v1211, 16
      %v1331 = vshll.u32 %v1211, 16
      %v1333 = vrot.slane %v1331, 1
      %v1334 = vor.u32 %v1329, %v1333
      %v1336 = vshll.u32 %v1243, 16
      %v1338 = vrot.slane %v1336, 1
      %v1339 = vsel %vm1010, %v1334, %v1338
      %v1356 = vunpack.c.l.b16 %v897
      %v1357 = vunpack.c.l.b16 %v898
      %v1358 = vunpack.c.l.b16 %v899
      %v1359 = vunpack.c.l.b16 %v900
      %v1360 = vunpack.c.l.b16 %v901
      %v1361 = vunpack.c.l.b16 %v902
      %v1362 = vunpack.c.l.b16 %v903
      %v1363 = vunpack.c.l.b16 %v904
      %v1364 = vpack.c.b16 %v1189, %v1356
      %v1365 = vpack.c.b16 %v1191, %v1357
      %v1366 = vpack.c.b16 %v1193, %v1358
      %v1367 = vpack.c.b16 %v1195, %v1359
      %v1368 = vpack.c.b16 %v1197, %v1360
      %v1369 = vpack.c.b16 %v1199, %v1361
      %v1370 = vpack.c.b16 %v1201, %v1362
      %v1371 = vpack.c.b16 %v1203, %v1363
      %v1372 = vrot.slane %v1364, 1
      %v1373 = vrot.slane %v1236, 1
      %v1374 = vsel %vm1139, %v1372, %v1373
      %v1375 = vrot.slane %v1365, 1
      %v1376 = vrot.slane %v1237, 1
      %v1377 = vsel %vm1139, %v1375, %v1376
      %v1378 = vrot.slane %v1366, 1
      %v1379 = vrot.slane %v1238, 1
      %v1380 = vsel %vm1139, %v1378, %v1379
      %v1381 = vrot.slane %v1367, 1
      %v1382 = vrot.slane %v1239, 1
      %v1383 = vsel %vm1139, %v1381, %v1382
      %v1384 = vrot.slane %v1368, 1
      %v1385 = vrot.slane %v1240, 1
      %v1386 = vsel %vm1139, %v1384, %v1385
      %v1387 = vrot.slane %v1369, 1
      %v1388 = vrot.slane %v1241, 1
      %v1389 = vsel %vm1139, %v1387, %v1388
      %v1390 = vrot.slane %v1370, 1
      %v1391 = vrot.slane %v1242, 1
      %v1392 = vsel %vm1139, %v1390, %v1391
      %v1393 = vrot.slane %v1371, 1
      %v1394 = vrot.slane %v1243, 1
      %v1395 = vsel %vm1139, %v1393, %v1394
      %v1420 = vunpack.c.l.b16 %v906
      %v1421 = vunpack.c.l.b16 %v907
      %v1422 = vunpack.c.l.b16 %v908
      %v1423 = vunpack.c.l.b16 %v909
      %v1424 = vunpack.c.l.b16 %v910
      %v1425 = vunpack.c.l.b16 %v911
      %v1426 = vunpack.c.l.b16 %v912
      %v1427 = vunpack.c.l.b16 %v913
      %v1428 = vunpack.c.l.b16 %v914
      %v1429 = vunpack.c.l.b16 %v915
      %v1430 = vunpack.c.l.b16 %v916
      %v1431 = vunpack.c.l.b16 %v917
      %v1432 = vunpack.c.l.b16 %v918
      %v1433 = vunpack.c.l.b16 %v919
      %v1434 = vunpack.c.l.b16 %v920
      %v1435 = vunpack.c.l.b16 %v921
      %v1436 = vpack.c.b16 %v1421, %v1420
      %v1437 = vpack.c.b16 %v1423, %v1422
      %v1438 = vpack.c.b16 %v1425, %v1424
      %v1439 = vpack.c.b16 %v1427, %v1426
      %v1440 = vpack.c.b16 %v1429, %v1428
      %v1441 = vpack.c.b16 %v1431, %v1430
      %v1442 = vpack.c.b16 %v1433, %v1432
      %v1443 = vpack.c.b16 %v1435, %v1434
      %v1460 = vunpack.c.l.b16 %v922
      %v1461 = vunpack.c.l.b16 %v923
      %v1462 = vunpack.c.l.b16 %v924
      %v1463 = vunpack.c.l.b16 %v925
      %v1464 = vunpack.c.l.b16 %v926
      %v1465 = vunpack.c.l.b16 %v927
      %v1466 = vunpack.c.l.b16 %v928
      %v1467 = vunpack.c.l.b16 %v929
      %v1468 = vpack.c.b16 %v1460, %v1460
      %v1469 = vpack.c.b16 %v1461, %v1461
      %v1470 = vpack.c.b16 %v1462, %v1462
      %v1471 = vpack.c.b16 %v1463, %v1463
      %v1472 = vpack.c.b16 %v1464, %v1464
      %v1473 = vpack.c.b16 %v1465, %v1465
      %v1474 = vpack.c.b16 %v1466, %v1466
      %v1475 = vpack.c.b16 %v1467, %v1467
      %v1477 = vshrl.u32 %v1436, 16
      %v1479 = vshll.u32 %v1436, 16
      %v1481 = vrot.slane %v1479, 1
      %v1482 = vor.u32 %v1477, %v1481
      %v1484 = vshll.u32 %v1468, 16
      %v1486 = vrot.slane %v1484, 1
      %v1487 = vsel %vm1010, %v1482, %v1486
      %v1489 = vshrl.u32 %v1437, 16
      %v1491 = vshll.u32 %v1437, 16
      %v1493 = vrot.slane %v1491, 1
      %v1494 = vor.u32 %v1489, %v1493
      %v1496 = vshll.u32 %v1469, 16
      %v1498 = vrot.slane %v1496, 1
      %v1499 = vsel %vm1010, %v1494, %v1498
      %v1501 = vshrl.u32 %v1438, 16
      %v1503 = vshll.u32 %v1438, 16
      %v1505 = vrot.slane %v1503, 1
      %v1506 = vor.u32 %v1501, %v1505
      %v1508 = vshll.u32 %v1470, 16
      %v1510 = vrot.slane %v1508, 1
      %v1511 = vsel %vm1010, %v1506, %v1510
      %v1513 = vshrl.u32 %v1439, 16
      %v1515 = vshll.u32 %v1439, 16
      %v1517 = vrot.slane %v1515, 1
      %v1518 = vor.u32 %v1513, %v1517
      %v1520 = vshll.u32 %v1471, 16
      %v1522 = vrot.slane %v1520, 1
      %v1523 = vsel %vm1010, %v1518, %v1522
      %v1525 = vshrl.u32 %v1440, 16
      %v1527 = vshll.u32 %v1440, 16
      %v1529 = vrot.slane %v1527, 1
      %v1530 = vor.u32 %v1525, %v1529
      %v1532 = vshll.u32 %v1472, 16
      %v1534 = vrot.slane %v1532, 1
      %v1535 = vsel %vm1010, %v1530, %v1534
      %v1537 = vshrl.u32 %v1441, 16
      %v1539 = vshll.u32 %v1441, 16
      %v1541 = vrot.slane %v1539, 1
      %v1542 = vor.u32 %v1537, %v1541
      %v1544 = vshll.u32 %v1473, 16
      %v1546 = vrot.slane %v1544, 1
      %v1547 = vsel %vm1010, %v1542, %v1546
      %v1549 = vshrl.u32 %v1442, 16
      %v1551 = vshll.u32 %v1442, 16
      %v1553 = vrot.slane %v1551, 1
      %v1554 = vor.u32 %v1549, %v1553
      %v1556 = vshll.u32 %v1474, 16
      %v1558 = vrot.slane %v1556, 1
      %v1559 = vsel %vm1010, %v1554, %v1558
      %v1561 = vshrl.u32 %v1443, 16
      %v1563 = vshll.u32 %v1443, 16
      %v1565 = vrot.slane %v1563, 1
      %v1566 = vor.u32 %v1561, %v1565
      %v1568 = vshll.u32 %v1475, 16
      %v1570 = vrot.slane %v1568, 1
      %v1571 = vsel %vm1010, %v1566, %v1570
      %v1588 = vunpack.c.l.b16 %v930
      %v1589 = vunpack.c.l.b16 %v931
      %v1590 = vunpack.c.l.b16 %v932
      %v1591 = vunpack.c.l.b16 %v933
      %v1592 = vunpack.c.l.b16 %v934
      %v1593 = vunpack.c.l.b16 %v935
      %v1594 = vunpack.c.l.b16 %v936
      %v1595 = vunpack.c.l.b16 %v937
      %v1596 = vpack.c.b16 %v1421, %v1588
      %v1597 = vpack.c.b16 %v1423, %v1589
      %v1598 = vpack.c.b16 %v1425, %v1590
      %v1599 = vpack.c.b16 %v1427, %v1591
      %v1600 = vpack.c.b16 %v1429, %v1592
      %v1601 = vpack.c.b16 %v1431, %v1593
      %v1602 = vpack.c.b16 %v1433, %v1594
      %v1603 = vpack.c.b16 %v1435, %v1595
      %v1604 = vrot.slane %v1596, 1
      %v1605 = vrot.slane %v1468, 1
      %v1606 = vsel %vm1139, %v1604, %v1605
      %v1607 = vrot.slane %v1597, 1
      %v1608 = vrot.slane %v1469, 1
      %v1609 = vsel %vm1139, %v1607, %v1608
      %v1610 = vrot.slane %v1598, 1
      %v1611 = vrot.slane %v1470, 1
      %v1612 = vsel %vm1139, %v1610, %v1611
      %v1613 = vrot.slane %v1599, 1
      %v1614 = vrot.slane %v1471, 1
      %v1615 = vsel %vm1139, %v1613, %v1614
      %v1616 = vrot.slane %v1600, 1
      %v1617 = vrot.slane %v1472, 1
      %v1618 = vsel %vm1139, %v1616, %v1617
      %v1619 = vrot.slane %v1601, 1
      %v1620 = vrot.slane %v1473, 1
      %v1621 = vsel %vm1139, %v1619, %v1620
      %v1622 = vrot.slane %v1602, 1
      %v1623 = vrot.slane %v1474, 1
      %v1624 = vsel %vm1139, %v1622, %v1623
      %v1625 = vrot.slane %v1603, 1
      %v1626 = vrot.slane %v1475, 1
      %v1627 = vsel %vm1139, %v1625, %v1626
      %v1636 = vld [vmem:[%s1] sm:$0xf]
      %v1637 = vld [vmem:[%s1 + $0x4] sm:$0xf]
      %v1638 = vld [vmem:[%s1 + $0x8] sm:$0xf]
      %v1639 = vld [vmem:[%s1 + $0xc] sm:$0xf]
      %v1640 = vld [vmem:[%s1 + $0x10] sm:$0xf]
      %v1641 = vld [vmem:[%s1 + $0x14] sm:$0xf]
      %v1642 = vld [vmem:[%s1 + $0x18] sm:$0xf]
      %v1643 = vld [vmem:[%s1 + $0x1c] sm:$0xf]
      %v1644 = vld [vmem:[%s1 + $0x20] sm:$0xf]
      %v1645 = vld [vmem:[%s1 + $0x24] sm:$0xf]
      %v1646 = vld [vmem:[%s1 + $0x28] sm:$0xf]
      %v1647 = vld [vmem:[%s1 + $0x2c] sm:$0xf]
      %v1648 = vld [vmem:[%s1 + $0x30] sm:$0xf]
      %v1649 = vld [vmem:[%s1 + $0x34] sm:$0xf]
      %v1650 = vld [vmem:[%s1 + $0x38] sm:$0xf]
      %v1651 = vld [vmem:[%s1 + $0x3c] sm:$0xf]
      %v1652 = vld [vmem:[%s1 + $0x40] sm:$0xf]
      %v1653 = vld [vmem:[%s1 + $0x44] sm:$0xf]
      %v1654 = vld [vmem:[%s1 + $0x48] sm:$0xf]
      %v1655 = vld [vmem:[%s1 + $0x4c] sm:$0xf]
      %v1656 = vld [vmem:[%s1 + $0x50] sm:$0xf]
      %v1657 = vld [vmem:[%s1 + $0x54] sm:$0xf]
      %v1658 = vld [vmem:[%s1 + $0x58] sm:$0xf]
      %v1659 = vld [vmem:[%s1 + $0x5c] sm:$0xf]
      %v1660 = vld [vmem:[%s1 + $0x60] sm:$0xf]
      %v1661 = vld [vmem:[%s1 + $0x64] sm:$0xf]
      %v1662 = vld [vmem:[%s1 + $0x68] sm:$0xf]
      %v1663 = vld [vmem:[%s1 + $0x6c] sm:$0xf]
      %v1664 = vld [vmem:[%s1 + $0x70] sm:$0xf]
      %v1665 = vld [vmem:[%s1 + $0x74] sm:$0xf]
      %v1666 = vld [vmem:[%s1 + $0x78] sm:$0xf]
      %v1667 = vld [vmem:[%s1 + $0x7c] sm:$0xf]
      %v1668 = vld [vmem:[%s1 + $0x80] sm:$0xf]
      %v1669 = vld [vmem:[%s1 + $0x84] sm:$0xf]
      %v1670 = vld [vmem:[%s1 + $0x88] sm:$0xf]
      %v1671 = vld [vmem:[%s1 + $0x8c] sm:$0xf]
      %v1672 = vld [vmem:[%s1 + $0x90] sm:$0xf]
      %v1673 = vld [vmem:[%s1 + $0x94] sm:$0xf]
      %v1674 = vld [vmem:[%s1 + $0x98] sm:$0xf]
      %v1675 = vld [vmem:[%s1 + $0x9c] sm:$0xf]
      %v1676 = vld [vmem:[%s1 + $0xa0] sm:$0xf]
      %v1677 = vld [vmem:[%s1 + $0xa4] sm:$0xf]
      %v1678 = vld [vmem:[%s1 + $0xa8] sm:$0xf]
      %v1679 = vld [vmem:[%s1 + $0xac] sm:$0xf]
      %v1680 = vld [vmem:[%s1 + $0xb0] sm:$0xf]
      %v1681 = vld [vmem:[%s1 + $0xb4] sm:$0xf]
      %v1682 = vld [vmem:[%s1 + $0xb8] sm:$0xf]
      %v1683 = vld [vmem:[%s1 + $0xbc] sm:$0xf]
      %v1684 = vld [vmem:[%s1 + $0xc0] sm:$0xf]
      %v1685 = vld [vmem:[%s1 + $0xc4] sm:$0xf]
      %v1686 = vld [vmem:[%s1 + $0xc8] sm:$0xf]
      %v1687 = vld [vmem:[%s1 + $0xcc] sm:$0xf]
      %v1688 = vld [vmem:[%s1 + $0xd0] sm:$0xf]
      %v1689 = vld [vmem:[%s1 + $0xd4] sm:$0xf]
      %v1690 = vld [vmem:[%s1 + $0xd8] sm:$0xf]
      %v1691 = vld [vmem:[%s1 + $0xdc] sm:$0xf]
      %v1692 = vld [vmem:[%s1 + $0xe0] sm:$0xf]
      %v1693 = vld [vmem:[%s1 + $0xe4] sm:$0xf]
      %v1694 = vld [vmem:[%s1 + $0xe8] sm:$0xf]
      %v1695 = vld [vmem:[%s1 + $0xec] sm:$0xf]
      %v1696 = vld [vmem:[%s1 + $0xf0] sm:$0xf]
      %v1697 = vld [vmem:[%s1 + $0xf4] sm:$0xf]
      %v1698 = vld [vmem:[%s1 + $0xf8] sm:$0xf]
      %v1699 = vld [vmem:[%s1 + $0xfc] sm:$0xf]
      %v1700 = vld [vmem:[%s1 + $0x100] sm:$0xf]
      %v1701 = vld [vmem:[%s1 + $0x104] sm:$0xf]
      %v1702 = vld [vmem:[%s1 + $0x108] sm:$0xf]
      %v1703 = vld [vmem:[%s1 + $0x10c] sm:$0xf]
      %v1704 = vld [vmem:[%s1 + $0x110] sm:$0xf]
      %v1705 = vld [vmem:[%s1 + $0x114] sm:$0xf]
      %v1706 = vld [vmem:[%s1 + $0x118] sm:$0xf]
      %v1707 = vld [vmem:[%s1 + $0x11c] sm:$0xf]
      %v1708 = vld [vmem:[%s1 + $0x120] sm:$0xf]
      %v1709 = vld [vmem:[%s1 + $0x124] sm:$0xf]
      %v1710 = vld [vmem:[%s1 + $0x128] sm:$0xf]
      %v1711 = vld [vmem:[%s1 + $0x12c] sm:$0xf]
      %v1712 = vld [vmem:[%s1 + $0x130] sm:$0xf]
      %v1713 = vld [vmem:[%s1 + $0x134] sm:$0xf]
      %v1714 = vld [vmem:[%s1 + $0x138] sm:$0xf]
      %v1715 = vld [vmem:[%s1 + $0x13c] sm:$0xf]
      %v1716 = vld [vmem:[%s1 + $0x140] sm:$0xf]
      %v1717 = vld [vmem:[%s1 + $0x144] sm:$0xf]
      %v1718 = vld [vmem:[%s1 + $0x148] sm:$0xf]
      %v1719 = vld [vmem:[%s1 + $0x14c] sm:$0xf]
      %v1720 = vld [vmem:[%s1 + $0x150] sm:$0xf]
      %v1721 = vld [vmem:[%s1 + $0x154] sm:$0xf]
      %v1722 = vld [vmem:[%s1 + $0x158] sm:$0xf]
      %v1723 = vld [vmem:[%s1 + $0x15c] sm:$0xf]
      %v1724 = vld [vmem:[%s1 + $0x160] sm:$0xf]
      %v1725 = vld [vmem:[%s1 + $0x164] sm:$0xf]
      %v1726 = vld [vmem:[%s1 + $0x168] sm:$0xf]
      %v1727 = vld [vmem:[%s1 + $0x16c] sm:$0xf]
      %v1728 = vld [vmem:[%s1 + $0x170] sm:$0xf]
      %v1729 = vld [vmem:[%s1 + $0x174] sm:$0xf]
      %v1730 = vld [vmem:[%s1 + $0x178] sm:$0xf]
      %v1731 = vld [vmem:[%s1 + $0x17c] sm:$0xf]
      %v1732 = vld [vmem:[%s1 + $0x180] sm:$0xf]
      %v1733 = vld [vmem:[%s1 + $0x184] sm:$0xf]
      %v1734 = vld [vmem:[%s1 + $0x188] sm:$0xf]
      %v1735 = vld [vmem:[%s1 + $0x18c] sm:$0xf]
      %v1736 = vld [vmem:[%s1 + $0x190] sm:$0xf]
      %v1737 = vld [vmem:[%s1 + $0x194] sm:$0xf]
      %v1738 = vld [vmem:[%s1 + $0x198] sm:$0xf]
      %v1739 = vld [vmem:[%s1 + $0x19c] sm:$0xf]
      %v1740 = vld [vmem:[%s1 + $0x1a0] sm:$0xf]
      %v1741 = vld [vmem:[%s1 + $0x1a4] sm:$0xf]
      %v1742 = vld [vmem:[%s1 + $0x1a8] sm:$0xf]
      %v1743 = vld [vmem:[%s1 + $0x1ac] sm:$0xf]
      %v1744 = vld [vmem:[%s1 + $0x1b0] sm:$0xf]
      %v1745 = vld [vmem:[%s1 + $0x1b4] sm:$0xf]
      %v1746 = vld [vmem:[%s1 + $0x1b8] sm:$0xf]
      %v1747 = vld [vmem:[%s1 + $0x1bc] sm:$0xf]
      %v1748 = vld [vmem:[%s1 + $0x1c0] sm:$0xf]
      %v1749 = vld [vmem:[%s1 + $0x1c4] sm:$0xf]
      %v1750 = vld [vmem:[%s1 + $0x1c8] sm:$0xf]
      %v1751 = vld [vmem:[%s1 + $0x1cc] sm:$0xf]
      %v1752 = vld [vmem:[%s1 + $0x1d0] sm:$0xf]
      %v1753 = vld [vmem:[%s1 + $0x1d4] sm:$0xf]
      %v1754 = vld [vmem:[%s1 + $0x1d8] sm:$0xf]
      %v1755 = vld [vmem:[%s1 + $0x1dc] sm:$0xf]
      %v1756 = vld [vmem:[%s1 + $0x1e0] sm:$0xf]
      %v1757 = vld [vmem:[%s1 + $0x1e4] sm:$0xf]
      %v1758 = vld [vmem:[%s1 + $0x1e8] sm:$0xf]
      %v1759 = vld [vmem:[%s1 + $0x1ec] sm:$0xf]
      %v1760 = vld [vmem:[%s1 + $0x1f0] sm:$0xf]
      %v1761 = vld [vmem:[%s1 + $0x1f4] sm:$0xf]
      %v1762 = vld [vmem:[%s1 + $0x1f8] sm:$0xf]
      %v1763 = vld [vmem:[%s1 + $0x1fc] sm:$0xf]
      %v1764 = vld [vmem:[%s1 + $0x200] sm:$0xf]
      %v1765 = vld [vmem:[%s1 + $0x204] sm:$0xf]
      %v1766 = vld [vmem:[%s1 + $0x208] sm:$0xf]
      %v1767 = vld [vmem:[%s1 + $0x20c] sm:$0xf]
      %v1768 = vld [vmem:[%s1 + $0x210] sm:$0xf]
      %v1769 = vld [vmem:[%s1 + $0x214] sm:$0xf]
      %v1770 = vld [vmem:[%s1 + $0x218] sm:$0xf]
      %v1771 = vld [vmem:[%s1 + $0x21c] sm:$0xf]
      %v1772 = vld [vmem:[%s1 + $0x220] sm:$0xf]
      %v1773 = vld [vmem:[%s1 + $0x224] sm:$0xf]
      %v1774 = vld [vmem:[%s1 + $0x228] sm:$0xf]
      %v1775 = vld [vmem:[%s1 + $0x22c] sm:$0xf]
      %v1776 = vld [vmem:[%s1 + $0x230] sm:$0xf]
      %v1777 = vld [vmem:[%s1 + $0x234] sm:$0xf]
      %v1778 = vld [vmem:[%s1 + $0x238] sm:$0xf]
      %v1779 = vld [vmem:[%s1 + $0x23c] sm:$0xf]
      %v1924 = vunpack.c.l.b16 %v1636
      %v1925 = vunpack.c.l.b16 %v1637
      %v1926 = vunpack.c.l.b16 %v1638
      %v1927 = vunpack.c.l.b16 %v1639
      %v1928 = vunpack.c.l.b16 %v1640
      %v1929 = vunpack.c.l.b16 %v1641
      %v1930 = vunpack.c.l.b16 %v1642
      %v1931 = vunpack.c.l.b16 %v1643
      %v1932 = vunpack.c.l.b16 %v1644
      %v1933 = vunpack.c.l.b16 %v1645
      %v1934 = vunpack.c.l.b16 %v1646
      %v1935 = vunpack.c.l.b16 %v1647
      %v1936 = vunpack.c.l.b16 %v1648
      %v1937 = vunpack.c.l.b16 %v1649
      %v1938 = vunpack.c.l.b16 %v1650
      %v1939 = vunpack.c.l.b16 %v1651
      %v1940 = vunpack.c.l.b16 %v1652
      %v1941 = vunpack.c.l.b16 %v1653
      %v1942 = vunpack.c.l.b16 %v1654
      %v1943 = vunpack.c.l.b16 %v1655
      %v1944 = vunpack.c.l.b16 %v1656
      %v1945 = vunpack.c.l.b16 %v1657
      %v1946 = vunpack.c.l.b16 %v1658
      %v1947 = vunpack.c.l.b16 %v1659
      %v1948 = vunpack.c.l.b16 %v1660
      %v1949 = vunpack.c.l.b16 %v1661
      %v1950 = vunpack.c.l.b16 %v1662
      %v1951 = vunpack.c.l.b16 %v1663
      %v1952 = vunpack.c.l.b16 %v1664
      %v1953 = vunpack.c.l.b16 %v1665
      %v1954 = vunpack.c.l.b16 %v1666
      %v1955 = vunpack.c.l.b16 %v1667
      %v1956 = vunpack.c.l.b16 %v1668
      %v1957 = vunpack.c.l.b16 %v1669
      %v1958 = vunpack.c.l.b16 %v1670
      %v1959 = vunpack.c.l.b16 %v1671
      %v1960 = vunpack.c.l.b16 %v1672
      %v1961 = vunpack.c.l.b16 %v1673
      %v1962 = vunpack.c.l.b16 %v1674
      %v1963 = vunpack.c.l.b16 %v1675
      %v1964 = vunpack.c.l.b16 %v1676
      %v1965 = vunpack.c.l.b16 %v1677
      %v1966 = vunpack.c.l.b16 %v1678
      %v1967 = vunpack.c.l.b16 %v1679
      %v1968 = vunpack.c.l.b16 %v1680
      %v1969 = vunpack.c.l.b16 %v1681
      %v1970 = vunpack.c.l.b16 %v1682
      %v1971 = vunpack.c.l.b16 %v1683
      %v1972 = vunpack.c.l.b16 %v1684
      %v1973 = vunpack.c.l.b16 %v1685
      %v1974 = vunpack.c.l.b16 %v1686
      %v1975 = vunpack.c.l.b16 %v1687
      %v1976 = vunpack.c.l.b16 %v1688
      %v1977 = vunpack.c.l.b16 %v1689
      %v1978 = vunpack.c.l.b16 %v1690
      %v1979 = vunpack.c.l.b16 %v1691
      %v1980 = vunpack.c.l.b16 %v1692
      %v1981 = vunpack.c.l.b16 %v1693
      %v1982 = vunpack.c.l.b16 %v1694
      %v1983 = vunpack.c.l.b16 %v1695
      %v1984 = vunpack.c.l.b16 %v1696
      %v1985 = vunpack.c.l.b16 %v1697
      %v1986 = vunpack.c.l.b16 %v1698
      %v1987 = vunpack.c.l.b16 %v1699
      %v1988 = vunpack.c.l.b16 %v1700
      %v1989 = vunpack.c.l.b16 %v1701
      %v1990 = vunpack.c.l.b16 %v1702
      %v1991 = vunpack.c.l.b16 %v1703
      %v1992 = vunpack.c.l.b16 %v1704
      %v1993 = vunpack.c.l.b16 %v1705
      %v1994 = vunpack.c.l.b16 %v1706
      %v1995 = vunpack.c.l.b16 %v1707
      %v1996 = vunpack.c.l.b16 %v1708
      %v1997 = vunpack.c.l.b16 %v1709
      %v1998 = vunpack.c.l.b16 %v1710
      %v1999 = vunpack.c.l.b16 %v1711
      %v2000 = vunpack.c.l.b16 %v1712
      %v2001 = vunpack.c.l.b16 %v1713
      %v2002 = vunpack.c.l.b16 %v1714
      %v2003 = vunpack.c.l.b16 %v1715
      %v2004 = vunpack.c.l.b16 %v1716
      %v2005 = vunpack.c.l.b16 %v1717
      %v2006 = vunpack.c.l.b16 %v1718
      %v2007 = vunpack.c.l.b16 %v1719
      %v2008 = vunpack.c.l.b16 %v1720
      %v2009 = vunpack.c.l.b16 %v1721
      %v2010 = vunpack.c.l.b16 %v1722
      %v2011 = vunpack.c.l.b16 %v1723
      %v2012 = vunpack.c.l.b16 %v1724
      %v2013 = vunpack.c.l.b16 %v1725
      %v2014 = vunpack.c.l.b16 %v1726
      %v2015 = vunpack.c.l.b16 %v1727
      %v2016 = vunpack.c.l.b16 %v1728
      %v2017 = vunpack.c.l.b16 %v1729
      %v2018 = vunpack.c.l.b16 %v1730
      %v2019 = vunpack.c.l.b16 %v1731
      %v2020 = vunpack.c.l.b16 %v1732
      %v2021 = vunpack.c.l.b16 %v1733
      %v2022 = vunpack.c.l.b16 %v1734
      %v2023 = vunpack.c.l.b16 %v1735
      %v2024 = vunpack.c.l.b16 %v1736
      %v2025 = vunpack.c.l.b16 %v1737
      %v2026 = vunpack.c.l.b16 %v1738
      %v2027 = vunpack.c.l.b16 %v1739
      %v2028 = vunpack.c.l.b16 %v1740
      %v2029 = vunpack.c.l.b16 %v1741
      %v2030 = vunpack.c.l.b16 %v1742
      %v2031 = vunpack.c.l.b16 %v1743
      %v2032 = vunpack.c.l.b16 %v1744
      %v2033 = vunpack.c.l.b16 %v1745
      %v2034 = vunpack.c.l.b16 %v1746
      %v2035 = vunpack.c.l.b16 %v1747
      %v2036 = vunpack.c.l.b16 %v1748
      %v2037 = vunpack.c.l.b16 %v1749
      %v2038 = vunpack.c.l.b16 %v1750
      %v2039 = vunpack.c.l.b16 %v1751
      %v2040 = vunpack.c.l.b16 %v1752
      %v2041 = vunpack.c.l.b16 %v1753
      %v2042 = vunpack.c.l.b16 %v1754
      %v2043 = vunpack.c.l.b16 %v1755
      %v2044 = vunpack.c.l.b16 %v1756
      %v2045 = vunpack.c.l.b16 %v1757
      %v2046 = vunpack.c.l.b16 %v1758
      %v2047 = vunpack.c.l.b16 %v1759
      %v2048 = vunpack.c.l.b16 %v1760
      %v2049 = vunpack.c.l.b16 %v1761
      %v2050 = vunpack.c.l.b16 %v1762
      %v2051 = vunpack.c.l.b16 %v1763
      %v2052 = vunpack.c.l.b16 %v1764
      %v2053 = vunpack.c.l.b16 %v1765
      %v2054 = vunpack.c.l.b16 %v1766
      %v2055 = vunpack.c.l.b16 %v1767
      %v2056 = vunpack.c.l.b16 %v1768
      %v2057 = vunpack.c.l.b16 %v1769
      %v2058 = vunpack.c.l.b16 %v1770
      %v2059 = vunpack.c.l.b16 %v1771
      %v2060 = vunpack.c.l.b16 %v1772
      %v2061 = vunpack.c.l.b16 %v1773
      %v2062 = vunpack.c.l.b16 %v1774
      %v2063 = vunpack.c.l.b16 %v1775
      %v2064 = vunpack.c.l.b16 %v1776
      %v2065 = vunpack.c.l.b16 %v1777
      %v2066 = vunpack.c.l.b16 %v1778
      %v2067 = vunpack.c.l.b16 %v1779
      %v2068 = vpack.c.b16 %v1925, %v1924
      %v2069 = vpack.c.b16 %v1927, %v1926
      %v2070 = vpack.c.b16 %v1929, %v1928
      %v2071 = vpack.c.b16 %v1931, %v1930
      %v2072 = vpack.c.b16 %v1933, %v1932
      %v2073 = vpack.c.b16 %v1935, %v1934
      %v2074 = vpack.c.b16 %v1937, %v1936
      %v2075 = vpack.c.b16 %v1939, %v1938
      %v2076 = vpack.c.b16 %v1941, %v1940
      %v2077 = vpack.c.b16 %v1943, %v1942
      %v2078 = vpack.c.b16 %v1945, %v1944
      %v2079 = vpack.c.b16 %v1947, %v1946
      %v2080 = vpack.c.b16 %v1949, %v1948
      %v2081 = vpack.c.b16 %v1951, %v1950
      %v2082 = vpack.c.b16 %v1953, %v1952
      %v2083 = vpack.c.b16 %v1955, %v1954
      %v2084 = vpack.c.b16 %v1957, %v1956
      %v2085 = vpack.c.b16 %v1959, %v1958
      %v2086 = vpack.c.b16 %v1961, %v1960
      %v2087 = vpack.c.b16 %v1963, %v1962
      %v2088 = vpack.c.b16 %v1965, %v1964
      %v2089 = vpack.c.b16 %v1967, %v1966
      %v2090 = vpack.c.b16 %v1969, %v1968
      %v2091 = vpack.c.b16 %v1971, %v1970
      %v2092 = vpack.c.b16 %v1973, %v1972
      %v2093 = vpack.c.b16 %v1975, %v1974
      %v2094 = vpack.c.b16 %v1977, %v1976
      %v2095 = vpack.c.b16 %v1979, %v1978
      %v2096 = vpack.c.b16 %v1981, %v1980
      %v2097 = vpack.c.b16 %v1983, %v1982
      %v2098 = vpack.c.b16 %v1985, %v1984
      %v2099 = vpack.c.b16 %v1987, %v1986
      %v2100 = vpack.c.b16 %v1989, %v1988
      %v2101 = vpack.c.b16 %v1991, %v1990
      %v2102 = vpack.c.b16 %v1993, %v1992
      %v2103 = vpack.c.b16 %v1995, %v1994
      %v2104 = vpack.c.b16 %v1997, %v1996
      %v2105 = vpack.c.b16 %v1999, %v1998
      %v2106 = vpack.c.b16 %v2001, %v2000
      %v2107 = vpack.c.b16 %v2003, %v2002
      %v2108 = vpack.c.b16 %v2005, %v2004
      %v2109 = vpack.c.b16 %v2007, %v2006
      %v2110 = vpack.c.b16 %v2009, %v2008
      %v2111 = vpack.c.b16 %v2011, %v2010
      %v2112 = vpack.c.b16 %v2013, %v2012
      %v2113 = vpack.c.b16 %v2015, %v2014
      %v2114 = vpack.c.b16 %v2017, %v2016
      %v2115 = vpack.c.b16 %v2019, %v2018
      %v2116 = vpack.c.b16 %v2021, %v2020
      %v2117 = vpack.c.b16 %v2023, %v2022
      %v2118 = vpack.c.b16 %v2025, %v2024
      %v2119 = vpack.c.b16 %v2027, %v2026
      %v2120 = vpack.c.b16 %v2029, %v2028
      %v2121 = vpack.c.b16 %v2031, %v2030
      %v2122 = vpack.c.b16 %v2033, %v2032
      %v2123 = vpack.c.b16 %v2035, %v2034
      %v2124 = vpack.c.b16 %v2037, %v2036
      %v2125 = vpack.c.b16 %v2039, %v2038
      %v2126 = vpack.c.b16 %v2041, %v2040
      %v2127 = vpack.c.b16 %v2043, %v2042
      %v2128 = vpack.c.b16 %v2045, %v2044
      %v2129 = vpack.c.b16 %v2047, %v2046
      %v2130 = vpack.c.b16 %v2049, %v2048
      %v2131 = vpack.c.b16 %v2051, %v2050
      %v2132 = vpack.c.b16 %v2053, %v2052
      %v2133 = vpack.c.b16 %v2055, %v2054
      %v2134 = vpack.c.b16 %v2057, %v2056
      %v2135 = vpack.c.b16 %v2059, %v2058
      %v2136 = vpack.c.b16 %v2061, %v2060
      %v2137 = vpack.c.b16 %v2063, %v2062
      %v2138 = vpack.c.b16 %v2065, %v2064
      %v2139 = vpack.c.b16 %v2067, %v2066
      %2212 = vmatprep.subr.bf16.mxu0 0
      %2213 = vmatpush1.bf16.msra.mxu0 %v2068
      %2214 = vmatprep.subr.bf16.mxu0 0
      %2215 = vmatpush1.bf16.msra.mxu0 %v2069
      %2216 = vmatprep.subr.bf16.mxu0 0
      %2217 = vmatpush1.bf16.msra.mxu0 %v2070
      %2218 = vmatprep.subr.bf16.mxu0 0
      %2219 = vmatpush1.bf16.msra.mxu0 %v2071
      %2220 = vmatprep.subr.bf16.mxu0 0
      %2221 = vmatpush1.bf16.msra.mxu0 %v2072
      %2222 = vmatprep.subr.bf16.mxu0 0
      %2223 = vmatpush1.bf16.msra.mxu0 %v2073
      %2224 = vmatprep.subr.bf16.mxu0 0
      %2225 = vmatpush1.bf16.msra.mxu0 %v2074
      %2226 = vmatprep.subr.bf16.mxu0 0
      %2227 = vmatpush1.bf16.msra.mxu0 %v2075
      %2228 = vmatprep.subr.bf16.mxu0 0
      %2229 = vmatpush1.bf16.msra.mxu0 %v2076
      %2230 = vmatprep.subr.bf16.mxu0 0
      %2231 = vmatpush1.bf16.msra.mxu0 %v2077
      %2232 = vmatprep.subr.bf16.mxu0 0
      %2233 = vmatpush1.bf16.msra.mxu0 %v2078
      %2234 = vmatprep.subr.bf16.mxu0 0
      %2235 = vmatpush1.bf16.msra.mxu0 %v2079
      %2236 = vmatprep.subr.bf16.mxu0 0
      %2237 = vmatpush1.bf16.msra.mxu0 %v2080
      %2238 = vmatprep.subr.bf16.mxu0 0
      %2239 = vmatpush1.bf16.msra.mxu0 %v2081
      %2240 = vmatprep.subr.bf16.mxu0 0
      %2241 = vmatpush1.bf16.msra.mxu0 %v2082
      %2242 = vmatprep.subr.bf16.mxu0 0
      %2243 = vmatpush1.bf16.msra.mxu0 %v2083
      %2244 = vmatprep.mubr.bf16.mxu0 %v1022
      %2245 = vmatmul.mubr.bf16.gmra.mrb[0].mxu0 %v970
      %v2246 = vpop.f32.mrb[0].mxu0
      %v2247 = vadd.f32 0.0, %v2246
      %v2248 = vpop.f32.mrb[0].mxu0
      %v2249 = vpop.f32.mrb[0].mxu0
      %v2250 = vadd.f32 0.0, %v2249
      %v2251 = vpop.f32.mrb[0].mxu0
      %2252 = vmatprep.mubr.bf16.mxu0 %v1034
      %2253 = vmatmul.mubr.bf16.gmra.mrb[0].mxu0 %v971
      %v2254 = vpop.f32.mrb[0].mxu0
      %v2255 = vadd.f32 0.0, %v2254
      %v2256 = vpop.f32.mrb[0].mxu0
      %v2257 = vpop.f32.mrb[0].mxu0
      %v2258 = vadd.f32 0.0, %v2257
      %v2259 = vpop.f32.mrb[0].mxu0
      %2260 = vmatprep.mubr.bf16.mxu0 %v1046
      %2261 = vmatmul.mubr.bf16.gmra.mrb[0].mxu0 %v972
      %v2262 = vpop.f32.mrb[0].mxu0
      %v2263 = vadd.f32 0.0, %v2262
      %v2264 = vpop.f32.mrb[0].mxu0
      %v2265 = vpop.f32.mrb[0].mxu0
      %v2266 = vadd.f32 0.0, %v2265
      %v2267 = vpop.f32.mrb[0].mxu0
      %2268 = vmatprep.mubr.bf16.mxu0 %v1058
      %2269 = vmatmul.mubr.bf16.gmra.mrb[0].mxu0 %v973
      %v2270 = vpop.f32.mrb[0].mxu0
      %v2271 = vadd.f32 0.0, %v2270
      %v2272 = vpop.f32.mrb[0].mxu0
      %v2273 = vpop.f32.mrb[0].mxu0
      %v2274 = vadd.f32 0.0, %v2273
      %v2275 = vpop.f32.mrb[0].mxu0
      %2276 = vmatprep.mubr.bf16.mxu0 %v1070
      %2277 = vmatmul.mubr.bf16.gmra.mrb[0].mxu0 %v974
      %v2278 = vpop.f32.mrb[0].mxu0
      %v2279 = vadd.f32 0.0, %v2278
      %v2280 = vpop.f32.mrb[0].mxu0
      %v2281 = vpop.f32.mrb[0].mxu0
      %v2282 = vadd.f32 0.0, %v2281
      %v2283 = vpop.f32.mrb[0].mxu0
      %2284 = vmatprep.mubr.bf16.mxu0 %v1082
      %2285 = vmatmul.mubr.bf16.gmra.mrb[0].mxu0 %v975
      %v2286 = vpop.f32.mrb[0].mxu0
      %v2287 = vadd.f32 0.0, %v2286
      %v2288 = vpop.f32.mrb[0].mxu0
      %v2289 = vpop.f32.mrb[0].mxu0
      %v2290 = vadd.f32 0.0, %v2289
      %v2291 = vpop.f32.mrb[0].mxu0
      %2292 = vmatprep.mubr.bf16.mxu0 %v1094
      %2293 = vmatmul.mubr.bf16.gmra.mrb[0].mxu0 %v976
      %v2294 = vpop.f32.mrb[0].mxu0
      %v2295 = vadd.f32 0.0, %v2294
      %v2296 = vpop.f32.mrb[0].mxu0
      %v2297 = vpop.f32.mrb[0].mxu0
      %v2298 = vadd.f32 0.0, %v2297
      %v2299 = vpop.f32.mrb[0].mxu0
      %2300 = vmatprep.mubr.bf16.mxu0 %v1106
      %2301 = vmatmul.mubr.bf16.gmra.mrb[0].mxu0 %v977
      %v2302 = vpop.f32.mrb[0].mxu0
      %v2303 = vadd.f32 0.0, %v2302
      %v2304 = vpop.f32.mrb[0].mxu0
      %v2305 = vpop.f32.mrb[0].mxu0
      %v2306 = vadd.f32 0.0, %v2305
      %v2307 = vpop.f32.mrb[0].mxu0
      %2308 = vdwg.mxu0
      %2309 = vmatprep.subr.bf16.mxu0 0
      %2310 = vmatpush1.bf16.msra.mxu0 %v2084
      %2311 = vmatprep.subr.bf16.mxu0 0
      %2312 = vmatpush1.bf16.msra.mxu0 %v2085
      %2313 = vmatprep.subr.bf16.mxu0 0
      %2314 = vmatpush1.bf16.msra.mxu0 %v2086
      %2315 = vmatprep.subr.bf16.mxu0 0
      %2316 = vmatpush1.bf16.msra.mxu0 %v2087
      %2317 = vmatprep.subr.bf16.mxu0 0
      %2318 = vmatpush1.bf16.msra.mxu0 %v2088
      %2319 = vmatprep.subr.bf16.mxu0 0
      %2320 = vmatpush1.bf16.msra.mxu0 %v2089
      %2321 = vmatprep.subr.bf16.mxu0 0
      %2322 = vmatpush1.bf16.msra.mxu0 %v2090
      %2323 = vmatprep.subr.bf16.mxu0 0
      %2324 = vmatpush1.bf16.msra.mxu0 %v2091
      %2325 = vmatprep.subr.bf16.mxu0 0
      %2326 = vmatpush1.bf16.msra.mxu0 %v2092
      %2327 = vmatprep.subr.bf16.mxu0 0
      %2328 = vmatpush1.bf16.msra.mxu0 %v2093
      %2329 = vmatprep.subr.bf16.mxu0 0
      %2330 = vmatpush1.bf16.msra.mxu0 %v2094
      %2331 = vmatprep.subr.bf16.mxu0 0
      %2332 = vmatpush1.bf16.msra.mxu0 %v2095
      %2333 = vmatprep.subr.bf16.mxu0 0
      %2334 = vmatpush1.bf16.msra.mxu0 %v2096
      %2335 = vmatprep.subr.bf16.mxu0 0
      %2336 = vmatpush1.bf16.msra.mxu0 %v2097
      %2337 = vmatprep.subr.bf16.mxu0 0
      %2338 = vmatpush1.bf16.msra.mxu0 %v2098
      %2339 = vmatprep.subr.bf16.mxu0 0
      %2340 = vmatpush1.bf16.msra.mxu0 %v2099
      %2341 = vmatprep.mubr.bf16.mxu0 %v1204
      %2342 = vmatmul.mubr.bf16.gmra.mrb[0].mxu0 %v1142
      %v2343 = vpop.f32.mrb[0].mxu0
      %v2344 = vadd.f32 %v2247, %v2343
      %v2345 = vpop.f32.mrb[0].mxu0
      %v2346 = vpop.f32.mrb[0].mxu0
      %v2347 = vadd.f32 %v2250, %v2346
      %v2348 = vpop.f32.mrb[0].mxu0
      %2349 = vmatprep.mubr.bf16.mxu0 %v1205
      %2350 = vmatmul.mubr.bf16.gmra.mrb[0].mxu0 %v1145
      %v2351 = vpop.f32.mrb[0].mxu0
      %v2352 = vadd.f32 %v2255, %v2351
      %v2353 = vpop.f32.mrb[0].mxu0
      %v2354 = vpop.f32.mrb[0].mxu0
      %v2355 = vadd.f32 %v2258, %v2354
      %v2356 = vpop.f32.mrb[0].mxu0
      %2357 = vmatprep.mubr.bf16.mxu0 %v1206
      %2358 = vmatmul.mubr.bf16.gmra.mrb[0].mxu0 %v1148
      %v2359 = vpop.f32.mrb[0].mxu0
      %v2360 = vadd.f32 %v2263, %v2359
      %v2361 = vpop.f32.mrb[0].mxu0
      %v2362 = vpop.f32.mrb[0].mxu0
      %v2363 = vadd.f32 %v2266, %v2362
      %v2364 = vpop.f32.mrb[0].mxu0
      %2365 = vmatprep.mubr.bf16.mxu0 %v1207
      %2366 = vmatmul.mubr.bf16.gmra.mrb[0].mxu0 %v1151
      %v2367 = vpop.f32.mrb[0].mxu0
      %v2368 = vadd.f32 %v2271, %v2367
      %v2369 = vpop.f32.mrb[0].mxu0
      %v2370 = vpop.f32.mrb[0].mxu0
      %v2371 = vadd.f32 %v2274, %v2370
      %v2372 = vpop.f32.mrb[0].mxu0
      %2373 = vmatprep.mubr.bf16.mxu0 %v1208
      %2374 = vmatmul.mubr.bf16.gmra.mrb[0].mxu0 %v1154
      %v2375 = vpop.f32.mrb[0].mxu0
      %v2376 = vadd.f32 %v2279, %v2375
      %v2377 = vpop.f32.mrb[0].mxu0
      %v2378 = vpop.f32.mrb[0].mxu0
      %v2379 = vadd.f32 %v2282, %v2378
      %v2380 = vpop.f32.mrb[0].mxu0
      %2381 = vmatprep.mubr.bf16.mxu0 %v1209
      %2382 = vmatmul.mubr.bf16.gmra.mrb[0].mxu0 %v1157
      %v2383 = vpop.f32.mrb[0].mxu0
      %v2384 = vadd.f32 %v2287, %v2383
      %v2385 = vpop.f32.mrb[0].mxu0
      %v2386 = vpop.f32.mrb[0].mxu0
      %v2387 = vadd.f32 %v2290, %v2386
      %v2388 = vpop.f32.mrb[0].mxu0
      %2389 = vmatprep.mubr.bf16.mxu0 %v1210
      %2390 = vmatmul.mubr.bf16.gmra.mrb[0].mxu0 %v1160
      %v2391 = vpop.f32.mrb[0].mxu0
      %v2392 = vadd.f32 %v2295, %v2391
      %v2393 = vpop.f32.mrb[0].mxu0
      %v2394 = vpop.f32.mrb[0].mxu0
      %v2395 = vadd.f32 %v2298, %v2394
      %v2396 = vpop.f32.mrb[0].mxu0
      %2397 = vmatprep.mubr.bf16.mxu0 %v1211
      %2398 = vmatmul.mubr.bf16.gmra.mrb[0].mxu0 %v1163
      %v2399 = vpop.f32.mrb[0].mxu0
      %v2400 = vadd.f32 %v2303, %v2399
      %v2401 = vpop.f32.mrb[0].mxu0
      %v2402 = vpop.f32.mrb[0].mxu0
      %v2403 = vadd.f32 %v2306, %v2402
      %v2404 = vpop.f32.mrb[0].mxu0
      %2405 = vdwg.mxu0
      %2406 = vmatprep.subr.bf16.mxu0 0
      %2407 = vmatpush1.bf16.msra.mxu0 %v2100
      %2408 = vmatprep.subr.bf16.mxu0 0
      %2409 = vmatpush1.bf16.msra.mxu0 %v2101
      %2410 = vmatprep.subr.bf16.mxu0 0
      %2411 = vmatpush1.bf16.msra.mxu0 %v2102
      %2412 = vmatprep.subr.bf16.mxu0 0
      %2413 = vmatpush1.bf16.msra.mxu0 %v2103
      %2414 = vmatprep.subr.bf16.mxu0 0
      %2415 = vmatpush1.bf16.msra.mxu0 %v2104
      %2416 = vmatprep.subr.bf16.mxu0 0
      %2417 = vmatpush1.bf16.msra.mxu0 %v2105
      %2418 = vmatprep.subr.bf16.mxu0 0
      %2419 = vmatpush1.bf16.msra.mxu0 %v2106
      %2420 = vmatprep.subr.bf16.mxu0 0
      %2421 = vmatpush1.bf16.msra.mxu0 %v2107
      %2422 = vmatprep.subr.bf16.mxu0 0
      %2423 = vmatpush1.bf16.msra.mxu0 %v2108
      %2424 = vmatprep.subr.bf16.mxu0 0
      %2425 = vmatpush1.bf16.msra.mxu0 %v2109
      %2426 = vmatprep.subr.bf16.mxu0 0
      %2427 = vmatpush1.bf16.msra.mxu0 %v2110
      %2428 = vmatprep.subr.bf16.mxu0 0
      %2429 = vmatpush1.bf16.msra.mxu0 %v2111
      %2430 = vmatprep.subr.bf16.mxu0 0
      %2431 = vmatpush1.bf16.msra.mxu0 %v2112
      %2432 = vmatprep.subr.bf16.mxu0 0
      %2433 = vmatpush1.bf16.msra.mxu0 %v2113
      %2434 = vmatprep.subr.bf16.mxu0 0
      %2435 = vmatpush1.bf16.msra.mxu0 %v2114
      %2436 = vmatprep.subr.bf16.mxu0 0
      %2437 = vmatpush1.bf16.msra.mxu0 %v2115
      %2438 = vmatprep.mubr.bf16.mxu0 %v1374
      %2439 = vmatmul.mubr.bf16.gmra.mrb[0].mxu0 %v1255
      %v2440 = vpop.f32.mrb[0].mxu0
      %v2441 = vadd.f32 %v2344, %v2440
      %v2442 = vpop.f32.mrb[0].mxu0
      %v2443 = vpop.f32.mrb[0].mxu0
      %v2444 = vadd.f32 %v2347, %v2443
      %v2445 = vpop.f32.mrb[0].mxu0
      %2446 = vmatprep.mubr.bf16.mxu0 %v1377
      %2447 = vmatmul.mubr.bf16.gmra.mrb[0].mxu0 %v1267
      %v2448 = vpop.f32.mrb[0].mxu0
      %v2449 = vadd.f32 %v2352, %v2448
      %v2450 = vpop.f32.mrb[0].mxu0
      %v2451 = vpop.f32.mrb[0].mxu0
      %v2452 = vadd.f32 %v2355, %v2451
      %v2453 = vpop.f32.mrb[0].mxu0
      %2454 = vmatprep.mubr.bf16.mxu0 %v1380
      %2455 = vmatmul.mubr.bf16.gmra.mrb[0].mxu0 %v1279
      %v2456 = vpop.f32.mrb[0].mxu0
      %v2457 = vadd.f32 %v2360, %v2456
      %v2458 = vpop.f32.mrb[0].mxu0
      %v2459 = vpop.f32.mrb[0].mxu0
      %v2460 = vadd.f32 %v2363, %v2459
      %v2461 = vpop.f32.mrb[0].mxu0
      %2462 = vmatprep.mubr.bf16.mxu0 %v1383
      %2463 = vmatmul.mubr.bf16.gmra.mrb[0].mxu0 %v1291
      %v2464 = vpop.f32.mrb[0].mxu0
      %v2465 = vadd.f32 %v2368, %v2464
      %v2466 = vpop.f32.mrb[0].mxu0
      %v2467 = vpop.f32.mrb[0].mxu0
      %v2468 = vadd.f32 %v2371, %v2467
      %v2469 = vpop.f32.mrb[0].mxu0
      %2470 = vmatprep.mubr.bf16.mxu0 %v1386
      %2471 = vmatmul.mubr.bf16.gmra.mrb[0].mxu0 %v1303
      %v2472 = vpop.f32.mrb[0].mxu0
      %v2473 = vadd.f32 %v2376, %v2472
      %v2474 = vpop.f32.mrb[0].mxu0
      %v2475 = vpop.f32.mrb[0].mxu0
      %v2476 = vadd.f32 %v2379, %v2475
      %v2477 = vpop.f32.mrb[0].mxu0
      %2478 = vmatprep.mubr.bf16.mxu0 %v1389
      %2479 = vmatmul.mubr.bf16.gmra.mrb[0].mxu0 %v1315
      %v2480 = vpop.f32.mrb[0].mxu0
      %v2481 = vadd.f32 %v2384, %v2480
      %v2482 = vpop.f32.mrb[0].mxu0
      %v2483 = vpop.f32.mrb[0].mxu0
      %v2484 = vadd.f32 %v2387, %v2483
      %v2485 = vpop.f32.mrb[0].mxu0
      %2486 = vmatprep.mubr.bf16.mxu0 %v1392
      %2487 = vmatmul.mubr.bf16.gmra.mrb[0].mxu0 %v1327
      %v2488 = vpop.f32.mrb[0].mxu0
      %v2489 = vadd.f32 %v2392, %v2488
      %v2490 = vpop.f32.mrb[0].mxu0
      %v2491 = vpop.f32.mrb[0].mxu0
      %v2492 = vadd.f32 %v2395, %v2491
      %v2493 = vpop.f32.mrb[0].mxu0
      %2494 = vmatprep.mubr.bf16.mxu0 %v1395
      %2495 = vmatmul.mubr.bf16.gmra.mrb[0].mxu0 %v1339
      %v2496 = vpop.f32.mrb[0].mxu0
      %v2497 = vadd.f32 %v2400, %v2496
      %v2498 = vpop.f32.mrb[0].mxu0
      %v2499 = vpop.f32.mrb[0].mxu0
      %v2500 = vadd.f32 %v2403, %v2499
      %v2501 = vpop.f32.mrb[0].mxu0
      %2502 = vdwg.mxu0
      %2503 = vmatprep.subr.bf16.mxu0 0
      %2504 = vmatpush1.bf16.msra.mxu0 %v2116
      %2505 = vmatprep.subr.bf16.mxu0 0
      %2506 = vmatpush1.bf16.msra.mxu0 %v2117
      %2507 = vmatprep.subr.bf16.mxu0 0
      %2508 = vmatpush1.bf16.msra.mxu0 %v2118
      %2509 = vmatprep.subr.bf16.mxu0 0
      %2510 = vmatpush1.bf16.msra.mxu0 %v2119
      %2511 = vmatprep.subr.bf16.mxu0 0
      %2512 = vmatpush1.bf16.msra.mxu0 %v2120
      %2513 = vmatprep.subr.bf16.mxu0 0
      %2514 = vmatpush1.bf16.msra.mxu0 %v2121
      %2515 = vmatprep.subr.bf16.mxu0 0
      %2516 = vmatpush1.bf16.msra.mxu0 %v2122
      %2517 = vmatprep.subr.bf16.mxu0 0
      %2518 = vmatpush1.bf16.msra.mxu0 %v2123
      %2519 = vmatprep.subr.bf16.mxu0 0
      %2520 = vmatpush1.bf16.msra.mxu0 %v2124
      %2521 = vmatprep.subr.bf16.mxu0 0
      %2522 = vmatpush1.bf16.msra.mxu0 %v2125
      %2523 = vmatprep.subr.bf16.mxu0 0
      %2524 = vmatpush1.bf16.msra.mxu0 %v2126
      %2525 = vmatprep.subr.bf16.mxu0 0
      %2526 = vmatpush1.bf16.msra.mxu0 %v2127
      %2527 = vmatprep.subr.bf16.mxu0 0
      %2528 = vmatpush1.bf16.msra.mxu0 %v2128
      %2529 = vmatprep.subr.bf16.mxu0 0
      %2530 = vmatpush1.bf16.msra.mxu0 %v2129
      %2531 = vmatprep.subr.bf16.mxu0 0
      %2532 = vmatpush1.bf16.msra.mxu0 %v2130
      %2533 = vmatprep.subr.bf16.mxu0 0
      %2534 = vmatpush1.bf16.msra.mxu0 %v2131
      %2535 = vmatprep.mubr.bf16.mxu0 %v1487
      %2536 = vmatmul.mubr.bf16.gmra.mrb[0].mxu0 %v1436
      %v2537 = vpop.f32.mrb[0].mxu0
      %v2538 = vadd.f32 %v2441, %v2537
      %v2539 = vpop.f32.mrb[0].mxu0
      %v2540 = vpop.f32.mrb[0].mxu0
      %v2541 = vadd.f32 %v2444, %v2540
      %v2542 = vpop.f32.mrb[0].mxu0
      %2543 = vmatprep.mubr.bf16.mxu0 %v1499
      %2544 = vmatmul.mubr.bf16.gmra.mrb[0].mxu0 %v1437
      %v2545 = vpop.f32.mrb[0].mxu0
      %v2546 = vadd.f32 %v2449, %v2545
      %v2547 = vpop.f32.mrb[0].mxu0
      %v2548 = vpop.f32.mrb[0].mxu0
      %v2549 = vadd.f32 %v2452, %v2548
      %v2550 = vpop.f32.mrb[0].mxu0
      %2551 = vmatprep.mubr.bf16.mxu0 %v1511
      %2552 = vmatmul.mubr.bf16.gmra.mrb[0].mxu0 %v1438
      %v2553 = vpop.f32.mrb[0].mxu0
      %v2554 = vadd.f32 %v2457, %v2553
      %v2555 = vpop.f32.mrb[0].mxu0
      %v2556 = vpop.f32.mrb[0].mxu0
      %v2557 = vadd.f32 %v2460, %v2556
      %v2558 = vpop.f32.mrb[0].mxu0
      %2559 = vmatprep.mubr.bf16.mxu0 %v1523
      %2560 = vmatmul.mubr.bf16.gmra.mrb[0].mxu0 %v1439
      %v2561 = vpop.f32.mrb[0].mxu0
      %v2562 = vadd.f32 %v2465, %v2561
      %v2563 = vpop.f32.mrb[0].mxu0
      %v2564 = vpop.f32.mrb[0].mxu0
      %v2565 = vadd.f32 %v2468, %v2564
      %v2566 = vpop.f32.mrb[0].mxu0
      %2567 = vmatprep.mubr.bf16.mxu0 %v1535
      %2568 = vmatmul.mubr.bf16.gmra.mrb[0].mxu0 %v1440
      %v2569 = vpop.f32.mrb[0].mxu0
      %v2570 = vadd.f32 %v2473, %v2569
      %v2571 = vpop.f32.mrb[0].mxu0
      %v2572 = vpop.f32.mrb[0].mxu0
      %v2573 = vadd.f32 %v2476, %v2572
      %v2574 = vpop.f32.mrb[0].mxu0
      %2575 = vmatprep.mubr.bf16.mxu0 %v1547
      %2576 = vmatmul.mubr.bf16.gmra.mrb[0].mxu0 %v1441
      %v2577 = vpop.f32.mrb[0].mxu0
      %v2578 = vadd.f32 %v2481, %v2577
      %v2579 = vpop.f32.mrb[0].mxu0
      %v2580 = vpop.f32.mrb[0].mxu0
      %v2581 = vadd.f32 %v2484, %v2580
      %v2582 = vpop.f32.mrb[0].mxu0
      %2583 = vmatprep.mubr.bf16.mxu0 %v1559
      %2584 = vmatmul.mubr.bf16.gmra.mrb[0].mxu0 %v1442
      %v2585 = vpop.f32.mrb[0].mxu0
      %v2586 = vadd.f32 %v2489, %v2585
      %v2587 = vpop.f32.mrb[0].mxu0
      %v2588 = vpop.f32.mrb[0].mxu0
      %v2589 = vadd.f32 %v2492, %v2588
      %v2590 = vpop.f32.mrb[0].mxu0
      %2591 = vmatprep.mubr.bf16.mxu0 %v1571
      %2592 = vmatmul.mubr.bf16.gmra.mrb[0].mxu0 %v1443
      %v2593 = vpop.f32.mrb[0].mxu0
      %v2594 = vadd.f32 %v2497, %v2593
      %v2595 = vpop.f32.mrb[0].mxu0
      %v2596 = vpop.f32.mrb[0].mxu0
      %v2597 = vadd.f32 %v2500, %v2596
      %v2598 = vpop.f32.mrb[0].mxu0
      %2599 = vdwg.mxu0
      %2600 = vmatprep.subr.bf16.mxu0 0
      %2601 = vmatpush1.bf16.msra.mxu0 %v2132
      %2602 = vmatprep.subr.bf16.mxu0 0
      %2603 = vmatpush1.bf16.msra.mxu0 %v2133
      %2604 = vmatprep.subr.bf16.mxu0 0
      %2605 = vmatpush1.bf16.msra.mxu0 %v2134
      %2606 = vmatprep.subr.bf16.mxu0 0
      %2607 = vmatpush1.bf16.msra.mxu0 %v2135
      %2608 = vmatprep.subr.bf16.mxu0 0
      %2609 = vmatpush1.bf16.msra.mxu0 %v2136
      %2610 = vmatprep.subr.bf16.mxu0 0
      %2611 = vmatpush1.bf16.msra.mxu0 %v2137
      %2612 = vmatprep.subr.bf16.mxu0 0
      %2613 = vmatpush1.bf16.msra.mxu0 %v2138
      %2614 = vmatprep.subr.bf16.mxu0 0
      %2615 = vmatpush1.bf16.msra.mxu0 %v2139
      %2616 = vmatprep.subr.bf16.mxu0 0
      %2617 = vmatpush1.bf16.msra.mxu0 0
      %2618 = vmatprep.subr.bf16.mxu0 0
      %2619 = vmatpush1.bf16.msra.mxu0 0
      %2620 = vmatprep.subr.bf16.mxu0 0
      %2621 = vmatpush1.bf16.msra.mxu0 0
      %2622 = vmatprep.subr.bf16.mxu0 0
      %2623 = vmatpush1.bf16.msra.mxu0 0
      %2624 = vmatprep.subr.bf16.mxu0 0
      %2625 = vmatpush1.bf16.msra.mxu0 0
      %2626 = vmatprep.subr.bf16.mxu0 0
      %2627 = vmatpush1.bf16.msra.mxu0 0
      %2628 = vmatprep.subr.bf16.mxu0 0
      %2629 = vmatpush1.bf16.msra.mxu0 0
      %2630 = vmatprep.subr.bf16.mxu0 0
      %2631 = vmatpush1.bf16.msra.mxu0 0
      %2632 = vmatprep.mubr.bf16.mxu0 0
      %2633 = vmatmul.mubr.bf16.gmra.mrb[0].mxu0 %v1606
      %v2634 = vpop.f32.mrb[0].mxu0
      %v2635 = vadd.f32 %v2538, %v2634
      %v2636 = vpop.f32.mrb[0].mxu0
      %v2637 = vpop.f32.mrb[0].mxu0
      %v2638 = vadd.f32 %v2541, %v2637
      %v2639 = vpop.f32.mrb[0].mxu0
      %2640 = vmatprep.mubr.bf16.mxu0 0
      %2641 = vmatmul.mubr.bf16.gmra.mrb[0].mxu0 %v1609
      %v2642 = vpop.f32.mrb[0].mxu0
      %v2643 = vadd.f32 %v2546, %v2642
      %v2644 = vpop.f32.mrb[0].mxu0
      %v2645 = vpop.f32.mrb[0].mxu0
      %v2646 = vadd.f32 %v2549, %v2645
      %v2647 = vpop.f32.mrb[0].mxu0
      %2648 = vmatprep.mubr.bf16.mxu0 0
      %2649 = vmatmul.mubr.bf16.gmra.mrb[0].mxu0 %v1612
      %v2650 = vpop.f32.mrb[0].mxu0
      %v2651 = vadd.f32 %v2554, %v2650
      %v2652 = vpop.f32.mrb[0].mxu0
      %v2653 = vpop.f32.mrb[0].mxu0
      %v2654 = vadd.f32 %v2557, %v2653
      %v2655 = vpop.f32.mrb[0].mxu0
      %2656 = vmatprep.mubr.bf16.mxu0 0
      %2657 = vmatmul.mubr.bf16.gmra.mrb[0].mxu0 %v1615
      %v2658 = vpop.f32.mrb[0].mxu0
      %v2659 = vadd.f32 %v2562, %v2658
      %v2660 = vpop.f32.mrb[0].mxu0
      %v2661 = vpop.f32.mrb[0].mxu0
      %v2662 = vadd.f32 %v2565, %v2661
      %v2663 = vpop.f32.mrb[0].mxu0
      %2664 = vmatprep.mubr.bf16.mxu0 0
      %2665 = vmatmul.mubr.bf16.gmra.mrb[0].mxu0 %v1618
      %v2666 = vpop.f32.mrb[0].mxu0
      %v2667 = vadd.f32 %v2570, %v2666
      %v2668 = vpop.f32.mrb[0].mxu0
      %v2669 = vpop.f32.mrb[0].mxu0
      %v2670 = vadd.f32 %v2573, %v2669
      %v2671 = vpop.f32.mrb[0].mxu0
      %2672 = vmatprep.mubr.bf16.mxu0 0
      %2673 = vmatmul.mubr.bf16.gmra.mrb[0].mxu0 %v1621
      %v2674 = vpop.f32.mrb[0].mxu0
      %v2675 = vadd.f32 %v2578, %v2674
      %v2676 = vpop.f32.mrb[0].mxu0
      %v2677 = vpop.f32.mrb[0].mxu0
      %v2678 = vadd.f32 %v2581, %v2677
      %v2679 = vpop.f32.mrb[0].mxu0
      %2680 = vmatprep.mubr.bf16.mxu0 0
      %2681 = vmatmul.mubr.bf16.gmra.mrb[0].mxu0 %v1624
      %v2682 = vpop.f32.mrb[0].mxu0
      %v2683 = vadd.f32 %v2586, %v2682
      %v2684 = vpop.f32.mrb[0].mxu0
      %v2685 = vpop.f32.mrb[0].mxu0
      %v2686 = vadd.f32 %v2589, %v2685
      %v2687 = vpop.f32.mrb[0].mxu0
      %2688 = vmatprep.mubr.bf16.mxu0 0
      %2689 = vmatmul.mubr.bf16.gmra.mrb[0].mxu0 %v1627
      %v2690 = vpop.f32.mrb[0].mxu0
      %v2691 = vadd.f32 %v2594, %v2690
      %v2692 = vpop.f32.mrb[0].mxu0
      %v2693 = vpop.f32.mrb[0].mxu0
      %v2694 = vadd.f32 %v2597, %v2693
      %v2695 = vpop.f32.mrb[0].mxu0
      %2696 = vdwg.mxu0
      %v2697 = vld [vmem:[%s2] sm:$0x1]
      %v2699 = vlaneseq
      %v2700 = vshrl.u32 %v2699, 7
      %v2701 = vsub.s32 0, %v2700
      %v2702 = vrot.slane %v2697, %v2701
      %v2704 = vmul.f32 %v2635, %v2702
      %v2705 = vmul.f32 %v2638, %v2702
      %v2706 = vmul.f32 %v2643, %v2702
      %v2707 = vmul.f32 %v2646, %v2702
      %v2708 = vmul.f32 %v2651, %v2702
      %v2709 = vmul.f32 %v2654, %v2702
      %v2710 = vmul.f32 %v2659, %v2702
      %v2711 = vmul.f32 %v2662, %v2702
      %v2712 = vmul.f32 %v2667, %v2702
      %v2713 = vmul.f32 %v2670, %v2702
      %v2714 = vmul.f32 %v2675, %v2702
      %v2715 = vmul.f32 %v2678, %v2702
      %v2716 = vmul.f32 %v2683, %v2702
      %v2717 = vmul.f32 %v2686, %v2702
      %v2718 = vmul.f32 %v2691, %v2702
      %v2719 = vmul.f32 %v2694, %v2702
      %v2720 = vld [vmem:[%s3] sm:$0x1]
      %v2722 = vlaneseq
      %v2723 = vshrl.u32 %v2722, 7
      %v2724 = vsub.s32 0, %v2723
      %v2725 = vrot.slane %v2720, %v2724
      %v2727 = vadd.f32 %v2704, %v2725
      %v2728 = vadd.f32 %v2705, %v2725
      %v2729 = vadd.f32 %v2706, %v2725
      %v2730 = vadd.f32 %v2707, %v2725
      %v2731 = vadd.f32 %v2708, %v2725
      %v2732 = vadd.f32 %v2709, %v2725
      %v2733 = vadd.f32 %v2710, %v2725
      %v2734 = vadd.f32 %v2711, %v2725
      %v2735 = vadd.f32 %v2712, %v2725
      %v2736 = vadd.f32 %v2713, %v2725
      %v2737 = vadd.f32 %v2714, %v2725
      %v2738 = vadd.f32 %v2715, %v2725
      %v2739 = vadd.f32 %v2716, %v2725
      %v2740 = vadd.f32 %v2717, %v2725
      %v2741 = vadd.f32 %v2718, %v2725
      %v2742 = vadd.f32 %v2719, %v2725
      %v2743 = vmax.f32 %v2727, 0.0
      %v2744 = vmax.f32 %v2728, 0.0
      %v2745 = vmax.f32 %v2729, 0.0
      %v2746 = vmax.f32 %v2730, 0.0
      %v2747 = vmax.f32 %v2731, 0.0
      %v2748 = vmax.f32 %v2732, 0.0
      %v2749 = vmax.f32 %v2733, 0.0
      %v2750 = vmax.f32 %v2734, 0.0
      %v2751 = vmax.f32 %v2735, 0.0
      %v2752 = vmax.f32 %v2736, 0.0
      %v2753 = vmax.f32 %v2737, 0.0
      %v2754 = vmax.f32 %v2738, 0.0
      %v2755 = vmax.f32 %v2739, 0.0
      %v2756 = vmax.f32 %v2740, 0.0
      %v2757 = vmax.f32 %v2741, 0.0
      %v2758 = vmax.f32 %v2742, 0.0
      %v2759 = vpack.c.bf16 %v2744, %v2743
      %v2760 = vpack.c.bf16 %v2746, %v2745
      %v2761 = vpack.c.bf16 %v2748, %v2747
      %v2762 = vpack.c.bf16 %v2750, %v2749
      %v2763 = vpack.c.bf16 %v2752, %v2751
      %v2764 = vpack.c.bf16 %v2754, %v2753
      %v2765 = vpack.c.bf16 %v2756, %v2755
      %v2766 = vpack.c.bf16 %v2758, %v2757
      %v2775 = vunpack.c.l.b16 %v2759
      %v2776 = vunpack.c.h.b16 %v2759
      %v2777 = vunpack.c.l.b16 %v2760
      %v2778 = vunpack.c.h.b16 %v2760
      %v2779 = vunpack.c.l.b16 %v2761
      %v2780 = vunpack.c.h.b16 %v2761
      %v2781 = vunpack.c.l.b16 %v2762
      %v2782 = vunpack.c.h.b16 %v2762
      %v2783 = vunpack.c.l.b16 %v2763
      %v2784 = vunpack.c.h.b16 %v2763
      %v2785 = vunpack.c.l.b16 %v2764
      %v2786 = vunpack.c.h.b16 %v2764
      %v2787 = vunpack.c.l.b16 %v2765
      %v2788 = vunpack.c.h.b16 %v2765
      %v2789 = vunpack.c.l.b16 %v2766
      %v2790 = vunpack.c.h.b16 %v2766
      %v2791 = vpack.c.b16 %v2775, %v2775
      %v2792 = vpack.c.b16 %v2776, %v2776
      %v2793 = vpack.c.b16 %v2777, %v2777
      %v2794 = vpack.c.b16 %v2778, %v2778
      %v2795 = vpack.c.b16 %v2779, %v2779
      %v2796 = vpack.c.b16 %v2780, %v2780
      %v2797 = vpack.c.b16 %v2781, %v2781
      %v2798 = vpack.c.b16 %v2782, %v2782
      %v2799 = vpack.c.b16 %v2783, %v2783
      %v2800 = vpack.c.b16 %v2784, %v2784
      %v2801 = vpack.c.b16 %v2785, %v2785
      %v2802 = vpack.c.b16 %v2786, %v2786
      %v2803 = vpack.c.b16 %v2787, %v2787
      %v2804 = vpack.c.b16 %v2788, %v2788
      %v2805 = vpack.c.b16 %v2789, %v2789
      %v2806 = vpack.c.b16 %v2790, %v2790
      %2823 = vst [vmem:[%s221] sm:$0xf] %v2791
      %2824 = vst [vmem:[%s221 + $0x4] sm:$0xf] %v2792
      %2825 = vst [vmem:[%s221 + $0x8] sm:$0xf] %v2793
      %2826 = vst [vmem:[%s221 + $0xc] sm:$0xf] %v2794
      %2827 = vst [vmem:[%s221 + $0x10] sm:$0xf] %v2795
      %2828 = vst [vmem:[%s221 + $0x14] sm:$0xf] %v2796
      %2829 = vst [vmem:[%s221 + $0x18] sm:$0xf] %v2797
      %2830 = vst [vmem:[%s221 + $0x1c] sm:$0xf] %v2798
      %2831 = vst [vmem:[%s221 + $0x20] sm:$0xf] %v2799
      %2832 = vst [vmem:[%s221 + $0x24] sm:$0xf] %v2800
      %2833 = vst [vmem:[%s221 + $0x28] sm:$0xf] %v2801
      %2834 = vst [vmem:[%s221 + $0x2c] sm:$0xf] %v2802
      %2835 = vst [vmem:[%s221 + $0x30] sm:$0xf] %v2803
      %2836 = vst [vmem:[%s221 + $0x34] sm:$0xf] %v2804
      %2837 = vst [vmem:[%s221 + $0x38] sm:$0xf] %v2805
      %2838 = vst [vmem:[%s221 + $0x3c] sm:$0xf] %v2806
      %s2839 = smul.u32 8, %s20
      %p2840 = scmp.lt.s32.totalorder %s19, 1
      %s2841 = scalar_select %p2840, %s19, 1
      %p2842 = scmp.lt.s32.totalorder %s2839, 15
      %s2843 = scalar_select %p2842, %s2839, 15
      %s2844 = smul.addr %s2843, 2
      %s2845 = smul.addr %s2841, 32
      %s2846 = sadd.s32 %s2844, %s2845
      %s2847 = smul.addr %s2846, 4
      %s2848 = scalar_lea.vmem %s4, %s2847
      // Predicated region
      $region45: #{forward.6} parent=35 // pred_check
        %p2849 = pneg %p136
      $region46: #{forward.6} parent=35 // pred_check_branch
        %2851 = sbr.rel (%p2849) target = $region48
      $region47: #{forward.6} parent=35 // pred_region
        %s2852 = smul.u32 8, %s20
      $region48: #{forward.6} parent=35 // pred_fallthru
        _
    $region36: #{forward.6} parent=5 // pred_fallthru
      _
    %p2853 = scmp.le.s32.totalorder 2, %s10
    // Predicated region
    $region49: #{forward.6} parent=5 // pred_check
      %p2854 = pneg %p2853
    $region50: #{forward.6} parent=5 // pred_check_branch
      %2856 = sbr.rel (%p2854) target = $region52
    $region51: #{forward.6} parent=5 // pred_region
      %s2857 = ssub.s32 %s10, 2
      // Predicated region
      $region53: #{forward.6} parent=51 // pred_check
        %p2858 = pneg %p142
      $region54: #{forward.6} parent=51 // pred_check_branch
        %2860 = sbr.rel (%p2858) target = $region56
      $region55: #{forward.6} parent=51 // pred_region
        %s2861 = smul.u32 8, %s22
        %p2862 = scmp.lt.s32.totalorder %s21, 1
        %s2863 = scalar_select %p2862, %s21, 1
        %p2864 = scmp.lt.s32.totalorder %s2861, 15
        %s2865 = scalar_select %p2864, %s2861, 15
        %s2866 = smul.addr %s2865, 2
        %s2867 = smul.addr %s2863, 32
        %s2868 = sadd.s32 %s2866, %s2867
        %s2869 = smul.addr %s2868, 4
        %s2870 = scalar_lea.vmem %s4, %s2869
      $region56: #{forward.6} parent=51 // pred_fallthru
        _
    $region52: #{forward.6} parent=5 // pred_fallthru
      _
  $region6: #{forward.6} parent=0 // loop_footer
    %s14 = sadd.s32 1, %s10
  $region7: #{forward.6} parent=0 // loop_footer_branch
    %9 = sbr.rel target = $region3
  $region8: #{forward.6} parent=0 // loop_exit
    _

// kernel: forward.5
$region0: #{forward.5}
  #allocation0 [shape = 'u32[]', space=smem, size = 0x4, offset = 0x4, fixed_abs, tag = 'smem constant byte address 0x4 - core index']
  #allocation1 [shape = 'u32[144,128]{1,0:T(1,128)}', space=vmem, size = 0x12000, scoped, tag = 'internal scratch']
  #allocation2 [shape = 'bf16[10,18,128]{2,1,0:T(8,128)(2,1)}', space=vmem, size = 0xf000, scoped, tag = 'scratch operand']
  %s0 = inlined_call_operand.vmem [shape: bf16[2,16,16,128], index: 0, kind: input, shape index: {}]
  %s1 = inlined_call_operand.vmem [shape: bf16[1152,128], index: 1, kind: input, shape index: {}]
  %s2 = inlined_call_operand.vmem [shape: f32[1,128], index: 2, kind: input, shape index: {}]
  %s3 = inlined_call_operand.vmem [shape: f32[1,128], index: 3, kind: input, shape index: {}]
  %s4 = inlined_call_operand.vmem [shape: bf16[2,16,16,128], index: 4, kind: input, shape index: {}]
  %s5 = inlined_call_operand.vmem [shape: bf16[2,16,16,128], index: 5, kind: output, shape index: {}]
  %s6 = sld [smem:[#allocation0]]
  $region61: #{forward.5} parent=0
    _
  %s8 = ssub.s32 1, %s6
  %s9 = scalar_select 0, %s8, %s6
  loop: start=0, step=1, limit=6
  $region2: #{forward.5} parent=0 // loop_pre_header
    _
  $region3: #{forward.5} parent=0 // loop_header
    %s11 = sphi 0, %s15
    %p12 = scmp.ge.s32.totalorder %s11, 6
    %s18 = sphi 0, %s30
    %s19 = sphi 0, %s26
    %s20 = sphi 0, %s18
    %s21 = sphi 0, %s19
    %s22 = sphi 0, %s20
    %s23 = sphi 0, %s21
    %s33 = sphi 0, %s35
    %s36 = sphi 0, %s33
    %s37 = sphi 0, %s36
    %s53 = sphi 0, %s37
    %s57 = sphi 0, %s57
    %s59 = sphi 0, %s57
    %s60 = sphi 0, %s59
    %s74 = sphi 0, %s60
    %s78 = sphi 0, %s78
    %s80 = sphi 0, %s78
    %s81 = sphi 0, %s80
    %s95 = sphi 0, %s81
    %s99 = sphi 0, %s99
    %s101 = sphi 0, %s99
    %s102 = sphi 0, %s101
    %s116 = sphi 0, %s102
    %s124 = sphi 0, %s126
    %s127 = sphi 0, %s124
    %s128 = sphi 0, %s127
    %s144 = sphi 0, %s128
    %s152 = sphi 0, %s154
    %s155 = sphi 0, %s152
    %s156 = sphi 0, %s155
    %s172 = sphi 0, %s156
  $region4: #{forward.5} parent=0 // loop_header_branch
    %14 = sbr.rel (%p12) target = $region8
  $region5: #{forward.5} parent=0 // loop_body
    %s16 = ssub.s32 %s11, 1
    %s17 = ssub.s32 %s11, 2
    %s24 = sadd.s32 1, %s19
    %p25 = scmp.ge.s32.totalorder %s24, 2
    %s26 = scalar_select %p25, 0, %s24
    %s27 = sadd.s32 1, %s18
    %s28 = scalar_select %p25, %s27, %s18
    %p29 = scmp.ge.s32.totalorder %s28, 2
    %s30 = scalar_select %p29, 0, %s28
    %s31 = ssub.s32 %s18, %s30
    %p32 = scmp.eq.s32.totalorder %s31, 0
    %s34 = sadd.s32 %s33, 1
    %s35 = scalar_select %p32, %s33, %s34
    %p38 = pneg %p32
    %p39 = scmp.eq.s32.totalorder %s11, 3
    %p40 = por %p38, %p39
    %p41 = scmp.ne.s32.totalorder %s33, %s36
    %p42 = scmp.eq.s32.totalorder %s11, 0
    %p43 = por %p41, %p42
    %p44 = scmp.ne.s32.totalorder %s33, %s36
    %p45 = scmp.eq.s32.totalorder %s16, 3
    %p46 = por %p44, %p45
    %p47 = scmp.ne.s32.totalorder %s36, %s37
    %p48 = scmp.eq.s32.totalorder %s16, 0
    %p49 = por %p47, %p48
    %p50 = scmp.ne.s32.totalorder %s36, %s37
    %p51 = scmp.eq.s32.totalorder %s17, 3
    %p52 = por %p50, %p51
    %p54 = scmp.ne.s32.totalorder %s37, %s53
    %p55 = scmp.eq.s32.totalorder %s17, 0
    %p56 = por %p54, %p55
    %s58 = sadd.s32 %s57, 1
    %p61 = scmp.eq.s32.totalorder %s11, 3
    %p62 = scmp.ne.s32.totalorder %s57, %s59
    %p63 = scmp.eq.s32.totalorder %s11, 0
    %p64 = por %p62, %p63
    %p65 = scmp.ne.s32.totalorder %s57, %s59
    %p66 = scmp.eq.s32.totalorder %s16, 3
    %p67 = por %p65, %p66
    %p68 = scmp.ne.s32.totalorder %s59, %s60
    %p69 = scmp.eq.s32.totalorder %s16, 0
    %p70 = por %p68, %p69
    %p71 = scmp.ne.s32.totalorder %s59, %s60
    %p72 = scmp.eq.s32.totalorder %s17, 3
    %p73 = por %p71, %p72
    %p75 = scmp.ne.s32.totalorder %s60, %s74
    %p76 = scmp.eq.s32.totalorder %s17, 0
    %p77 = por %p75, %p76
    %s79 = sadd.s32 %s78, 1
    %p82 = scmp.eq.s32.totalorder %s11, 3
    %p83 = scmp.ne.s32.totalorder %s78, %s80
    %p84 = scmp.eq.s32.totalorder %s11, 0
    %p85 = por %p83, %p84
    %p86 = scmp.ne.s32.totalorder %s78, %s80
    %p87 = scmp.eq.s32.totalorder %s16, 3
    %p88 = por %p86, %p87
    %p89 = scmp.ne.s32.totalorder %s80, %s81
    %p90 = scmp.eq.s32.totalorder %s16, 0
    %p91 = por %p89, %p90
    %p92 = scmp.ne.s32.totalorder %s80, %s81
    %p93 = scmp.eq.s32.totalorder %s17, 3
    %p94 = por %p92, %p93
    %p96 = scmp.ne.s32.totalorder %s81, %s95
    %p97 = scmp.eq.s32.totalorder %s17, 0
    %p98 = por %p96, %p97
    %s100 = sadd.s32 %s99, 1
    %p103 = scmp.eq.s32.totalorder %s11, 3
    %p104 = scmp.ne.s32.totalorder %s99, %s101
    %p105 = scmp.eq.s32.totalorder %s11, 0
    %p106 = por %p104, %p105
    %p107 = scmp.ne.s32.totalorder %s99, %s101
    %p108 = scmp.eq.s32.totalorder %s16, 3
    %p109 = por %p107, %p108
    %p110 = scmp.ne.s32.totalorder %s101, %s102
    %p111 = scmp.eq.s32.totalorder %s16, 0
    %p112 = por %p110, %p111
    %p113 = scmp.ne.s32.totalorder %s101, %s102
    %p114 = scmp.eq.s32.totalorder %s17, 3
    %p115 = por %p113, %p114
    %p117 = scmp.ne.s32.totalorder %s102, %s116
    %p118 = scmp.eq.s32.totalorder %s17, 0
    %p119 = por %p117, %p118
    %s120 = ssub.s32 %s18, %s30
    %s121 = ssub.s32 %s19, %s26
    %s122 = sor.u32 %s120, %s121
    %p123 = scmp.eq.s32.totalorder %s122, 0
    %s125 = sadd.s32 %s124, 1
    %s126 = scalar_select %p123, %s124, %s125
    %p129 = pneg %p123
    %p130 = scmp.eq.s32.totalorder %s11, 3
    %p131 = por %p129, %p130
    %p132 = scmp.ne.s32.totalorder %s124, %s127
    %p133 = scmp.eq.s32.totalorder %s11, 0
    %p134 = por %p132, %p133
    %p135 = scmp.ne.s32.totalorder %s124, %s127
    %p136 = scmp.eq.s32.totalorder %s16, 3
    %p137 = por %p135, %p136
    %p138 = scmp.ne.s32.totalorder %s127, %s128
    %p139 = scmp.eq.s32.totalorder %s16, 0
    %p140 = por %p138, %p139
    %p141 = scmp.ne.s32.totalorder %s127, %s128
    %p142 = scmp.eq.s32.totalorder %s17, 3
    %p143 = por %p141, %p142
    %p145 = scmp.ne.s32.totalorder %s128, %s144
    %p146 = scmp.eq.s32.totalorder %s17, 0
    %p147 = por %p145, %p146
    %s148 = ssub.s32 %s18, %s30
    %s149 = ssub.s32 %s19, %s26
    %s150 = sor.u32 %s148, %s149
    %p151 = scmp.eq.s32.totalorder %s150, 0
    %s153 = sadd.s32 %s152, 1
    %s154 = scalar_select %p151, %s152, %s153
    %p157 = pneg %p151
    %p158 = scmp.eq.s32.totalorder %s11, 3
    %p159 = por %p157, %p158
    %p160 = scmp.ne.s32.totalorder %s152, %s155
    %p161 = scmp.eq.s32.totalorder %s11, 0
    %p162 = por %p160, %p161
    %p163 = scmp.ne.s32.totalorder %s152, %s155
    %p164 = scmp.eq.s32.totalorder %s16, 3
    %p165 = por %p163, %p164
    %p166 = scmp.ne.s32.totalorder %s155, %s156
    %p167 = scmp.eq.s32.totalorder %s16, 0
    %p168 = por %p166, %p167
    %p169 = scmp.ne.s32.totalorder %s155, %s156
    %p170 = scmp.eq.s32.totalorder %s17, 3
    %p171 = por %p169, %p170
    %p173 = scmp.ne.s32.totalorder %s156, %s172
    %p174 = scmp.eq.s32.totalorder %s17, 0
    %p175 = por %p173, %p174
    %p176 = scmp.le.s32.totalorder 1, %s11
    %p177 = scmp.lt.s32.totalorder %s11, 5
    %p178 = pnand %p176, %p177
    %p179 = pneg %p178
    // Predicated region
    $region9: #{forward.5} parent=5 // pred_check
      _
    $region10: #{forward.5} parent=5 // pred_check_branch
      %181 = sbr.rel (%p178) target = $region12
    $region11: #{forward.5} parent=5 // pred_region
      %s182 = ssub.s32 %s11, 1
      // Predicated region
      $region13: #{forward.5} parent=11 // pred_check
        %p183 = pneg %p70
      $region14: #{forward.5} parent=11 // pred_check_branch
        %185 = sbr.rel (%p183) target = $region16
      $region15: #{forward.5} parent=11 // pred_region
        _
      $region16: #{forward.5} parent=11 // pred_fallthru
        _
      // Predicated region
      $region17: #{forward.5} parent=11 // pred_check
        %p186 = pneg %p91
      $region18: #{forward.5} parent=11 // pred_check_branch
        %188 = sbr.rel (%p186) target = $region20
      $region19: #{forward.5} parent=11 // pred_region
        _
      $region20: #{forward.5} parent=11 // pred_fallthru
        _
      // Predicated region
      $region21: #{forward.5} parent=11 // pred_check
        %p189 = pneg %p112
      $region22: #{forward.5} parent=11 // pred_check_branch
        %191 = sbr.rel (%p189) target = $region24
      $region23: #{forward.5} parent=11 // pred_region
        _
      $region24: #{forward.5} parent=11 // pred_fallthru
        _
    $region12: #{forward.5} parent=5 // pred_fallthru
      _
    %p192 = scmp.lt.s32.totalorder %s11, 4
    // Predicated region
    $region25: #{forward.5} parent=5 // pred_check
      %p193 = pneg %p192
    $region26: #{forward.5} parent=5 // pred_check_branch
      %195 = sbr.rel (%p193) target = $region28
    $region27: #{forward.5} parent=5 // pred_region
      // Predicated region
      $region29: #{forward.5} parent=27 // pred_check
        %p196 = pneg %p43
      $region30: #{forward.5} parent=27 // pred_check_branch
        %198 = sbr.rel (%p196) target = $region32
      $region31: #{forward.5} parent=27 // pred_region
        %p199 = scmp.lt.s32.totalorder %s18, 1
        %s200 = scalar_select %p199, %s18, 1
        %s201 = smul.addr %s200, 32
        %s202 = smul.addr %s201, 4
        %s203 = scalar_lea.vmem %s0, %s202
      $region32: #{forward.5} parent=27 // pred_fallthru
        _
      // Predicated region
      $region33: #{forward.5} parent=27 // pred_check
        %p204 = pneg %p134
      $region34: #{forward.5} parent=27 // pred_check_branch
        %206 = sbr.rel (%p204) target = $region36
      $region35: #{forward.5} parent=27 // pred_region
        %s207 = smul.u32 8, %s19
        %p208 = scmp.lt.s32.totalorder %s18, 1
        %s209 = scalar_select %p208, %s18, 1
        %p210 = scmp.lt.s32.totalorder %s207, 15
        %s211 = scalar_select %p210, %s207, 15
        %s212 = smul.addr %s211, 2
        %s213 = smul.addr %s209, 32
        %s214 = sadd.s32 %s212, %s213
        %s215 = smul.addr %s214, 4
        %s216 = scalar_lea.vmem %s4, %s215
        %s217 = smul.u32 8, %s19
      $region36: #{forward.5} parent=27 // pred_fallthru
        _
    $region28: #{forward.5} parent=5 // pred_fallthru
      _
    %p218 = scmp.le.s32.totalorder 1, %s11
    %p219 = scmp.lt.s32.totalorder %s11, 5
    %p220 = pnand %p218, %p219
    %p221 = pneg %p220
    // Predicated region
    $region37: #{forward.5} parent=5 // pred_check
      _
    $region38: #{forward.5} parent=5 // pred_check_branch
      %223 = sbr.rel (%p220) target = $region40
    $region39: #{forward.5} parent=5 // pred_region
      %s224 = ssub.s32 %s11, 1
      %p225 = scmp.lt.s32.totalorder %s20, 1
      %s226 = scalar_select %p225, %s20, 1
      %s227 = smul.addr %s226, 32
      %s228 = smul.addr %s227, 4
      %s229 = scalar_lea.vmem %s0, %s228
      %p230 = pneg %p49
      %p231 = pneg %p46
      %p232 = pneg %p70
      %p233 = pneg %p67
      %p234 = pneg %p91
      %p235 = pneg %p88
      %p236 = pneg %p112
      %p237 = pneg %p109
      %s238 = smul.u32 8, %s21
      %p239 = scmp.lt.s32.totalorder %s20, 1
      %s240 = scalar_select %p239, %s20, 1
      %p241 = scmp.lt.s32.totalorder %s238, 15
      %s242 = scalar_select %p241, %s238, 15
      %s243 = smul.addr %s242, 2
      %s244 = smul.addr %s240, 32
      %s245 = sadd.s32 %s243, %s244
      %s246 = smul.addr %s245, 4
      %s247 = scalar_lea.vmem %s4, %s246
      %p248 = pneg %p140
      %p249 = pneg %p137
      %p250 = pneg %p168
      %p251 = pneg %p165
      %s252 = smul.u32 8, %s21
      %p253 = scmp.lt.s32.totalorder %s20, 1
      %s254 = scalar_select %p253, %s20, 1
      %p255 = scmp.lt.s32.totalorder %s252, 15
      %s256 = scalar_select %p255, %s252, 15
      %s257 = smul.addr %s256, 2
      %s258 = smul.addr %s254, 32
      %s259 = sadd.s32 %s257, %s258
      %s260 = smul.addr %s259, 4
      %s261 = scalar_lea.vmem %s5, %s260
      %p262 = scmp.lt.s32.totalorder %s20, 1
      %s263 = scalar_select %p262, %s20, 1
      %s264 = smul.addr %s263, 32
      %s265 = smul.addr %s264, 4
      %s266 = scalar_lea.vmem %s0, %s265
      %s267 = smul.u32 8, %s21
      %p268 = scmp.lt.s32.totalorder %s20, 1
      %s269 = scalar_select %p268, %s20, 1
      %p270 = scmp.lt.s32.totalorder %s267, 15
      %s271 = scalar_select %p270, %s267, 15
      %s272 = smul.addr %s271, 2
      %s273 = smul.addr %s269, 32
      %s274 = sadd.s32 %s272, %s273
      %s275 = smul.addr %s274, 4
      %s276 = scalar_lea.vmem %s4, %s275
      %s277 = smul.u32 8, %s21
      %s278 = smul.u32 8, %s21
      %p279 = scmp.lt.s32.totalorder %s20, 1
      %s280 = scalar_select %p279, %s20, 1
      %p281 = scmp.lt.s32.totalorder %s278, 15
      %s282 = scalar_select %p281, %s278, 15
      %s283 = smul.addr %s282, 2
      %s284 = smul.addr %s280, 32
      %s285 = sadd.s32 %s283, %s284
      %s286 = smul.addr %s285, 4
      %s287 = scalar_lea.vmem %s5, %s286
      %s288 = smul.u32 8, %s21
      %s290 = smul.u32 %s21, 8
      %vm291 = vcmask 1040384
      %vm292 = vsmask.f32 256
      %vm293 = vmand %vm291, %vm292
      %v294 = vld [vmem:[#allocation2] sm:$0x1]
      %v295 = vsel %vm293, 0, %v294
      %296 = vst [vmem:[#allocation2] sm:$0x1] %v295
      %v297 = vld [vmem:[#allocation2 + $0xc] sm:$0x1]
      %v298 = vsel %vm293, 0, %v297
      %299 = vst [vmem:[#allocation2 + $0xc] sm:$0x1] %v298
      %v300 = vld [vmem:[#allocation2 + $0x18] sm:$0x1]
      %v301 = vsel %vm293, 0, %v300
      %302 = vst [vmem:[#allocation2 + $0x18] sm:$0x1] %v301
      %v303 = vld [vmem:[#allocation2 + $0x24] sm:$0x1]
      %v304 = vsel %vm293, 0, %v303
      %305 = vst [vmem:[#allocation2 + $0x24] sm:$0x1] %v304
      %v306 = vld [vmem:[#allocation2 + $0x30] sm:$0x1]
      %v307 = vsel %vm293, 0, %v306
      %308 = vst [vmem:[#allocation2 + $0x30] sm:$0x1] %v307
      %v309 = vld [vmem:[#allocation2 + $0x3c] sm:$0x1]
      %v310 = vsel %vm293, 0, %v309
      %311 = vst [vmem:[#allocation2 + $0x3c] sm:$0x1] %v310
      %v312 = vld [vmem:[#allocation2 + $0x48] sm:$0x1]
      %v313 = vsel %vm293, 0, %v312
      %314 = vst [vmem:[#allocation2 + $0x48] sm:$0x1] %v313
      %v315 = vld [vmem:[#allocation2 + $0x54] sm:$0x1]
      %v316 = vsel %vm293, 0, %v315
      %317 = vst [vmem:[#allocation2 + $0x54] sm:$0x1] %v316
      %v318 = vld [vmem:[#allocation2 + $0x60] sm:$0x1]
      %v319 = vsel %vm293, 0, %v318
      %320 = vst [vmem:[#allocation2 + $0x60] sm:$0x1] %v319
      %v321 = vld [vmem:[#allocation2 + $0x6c] sm:$0x1]
      %v322 = vsel %vm293, 0, %v321
      %323 = vst [vmem:[#allocation2 + $0x6c] sm:$0x1] %v322
      %vm324 = vsmask.f32 7938
      %vm325 = vmand %vm291, %vm324
      %v326 = vld [vmem:[#allocation2 + $0x8] sm:$0x1]
      %v327 = vsel %vm325, 0, %v326
      %328 = vst [vmem:[#allocation2 + $0x8] sm:$0x1] %v327
      %v329 = vld [vmem:[#allocation2 + $0x14] sm:$0x1]
      %v330 = vsel %vm325, 0, %v329
      %331 = vst [vmem:[#allocation2 + $0x14] sm:$0x1] %v330
      %v332 = vld [vmem:[#allocation2 + $0x20] sm:$0x1]
      %v333 = vsel %vm325, 0, %v332
      %334 = vst [vmem:[#allocation2 + $0x20] sm:$0x1] %v333
      %v335 = vld [vmem:[#allocation2 + $0x2c] sm:$0x1]
      %v336 = vsel %vm325, 0, %v335
      %337 = vst [vmem:[#allocation2 + $0x2c] sm:$0x1] %v336
      %v338 = vld [vmem:[#allocation2 + $0x38] sm:$0x1]
      %v339 = vsel %vm325, 0, %v338
      %340 = vst [vmem:[#allocation2 + $0x38] sm:$0x1] %v339
      %v341 = vld [vmem:[#allocation2 + $0x44] sm:$0x1]
      %v342 = vsel %vm325, 0, %v341
      %343 = vst [vmem:[#allocation2 + $0x44] sm:$0x1] %v342
      %v344 = vld [vmem:[#allocation2 + $0x50] sm:$0x1]
      %v345 = vsel %vm325, 0, %v344
      %346 = vst [vmem:[#allocation2 + $0x50] sm:$0x1] %v345
      %v347 = vld [vmem:[#allocation2 + $0x5c] sm:$0x1]
      %v348 = vsel %vm325, 0, %v347
      %349 = vst [vmem:[#allocation2 + $0x5c] sm:$0x1] %v348
      %v350 = vld [vmem:[#allocation2 + $0x68] sm:$0x1]
      %v351 = vsel %vm325, 0, %v350
      %352 = vst [vmem:[#allocation2 + $0x68] sm:$0x1] %v351
      %v353 = vld [vmem:[#allocation2 + $0x74] sm:$0x1]
      %v354 = vsel %vm325, 0, %v353
      %355 = vst [vmem:[#allocation2 + $0x74] sm:$0x1] %v354
      %p356 = scmp.eq.s32.totalorder %s21, 0
      // Predicated region
      $region41: #{forward.5} parent=39 // pred_check
        %p357 = pneg %p356
      $region42: #{forward.5} parent=39 // pred_check_branch
        %359 = sbr.rel (%p357) target = $region44
      $region43: #{forward.5} parent=39 // pred_region
        %360 = vst [vmem:[#allocation2] sm:$0xf] 0
        %361 = vst [vmem:[#allocation2 + $0x4] sm:$0xf] 0
        %362 = vst [vmem:[#allocation2 + $0x8] sm:$0x1] 0
        %v363 = vld [vmem:[%s266] sm:$0xf]
        %v364 = vld [vmem:[%s266 + $0x4] sm:$0xf]
        %v365 = vld [vmem:[%s266 + $0x8] sm:$0xf]
        %v366 = vld [vmem:[%s266 + $0xc] sm:$0xf]
        %v367 = vld [vmem:[%s266 + $0x10] sm:$0xf]
        %v368 = vld [vmem:[%s266 + $0x14] sm:$0xf]
        %v369 = vld [vmem:[%s266 + $0x18] sm:$0xf]
        %v370 = vld [vmem:[%s266 + $0x1c] sm:$0xf]
        %v371 = vld [vmem:[%s266 + $0x20] sm:$0xf]
        %v372 = vld [vmem:[%s266 + $0x24] sm:$0xf]
        %v373 = vld [vmem:[%s266 + $0x28] sm:$0xf]
        %v374 = vld [vmem:[%s266 + $0x2c] sm:$0xf]
        %v375 = vld [vmem:[%s266 + $0x30] sm:$0xf]
        %v376 = vld [vmem:[%s266 + $0x34] sm:$0xf]
        %v377 = vld [vmem:[%s266 + $0x38] sm:$0xf]
        %v378 = vld [vmem:[%s266 + $0x3c] sm:$0xf]
        %v379 = vld [vmem:[%s266 + $0x40] sm:$0xf]
        %v380 = vld [vmem:[%s266 + $0x44] sm:$0xf]
        %vm381 = vsmask.f32 4368
        %vm382 = vmor %vm292, %vm381
        %v384 = vshrl.u32 %v363, 16
        %v386 = vrot.slane %v384, 7
        %v387 = vshll.u32 %v363, 16
        %v389 = vor.u32 %v386, %v387
        %v390 = vrot.slane %v386, 4
        %v392 = vshrl.u32 %v364, 16
        %v394 = vrot.slane %v392, 7
        %v395 = vshll.u32 %v364, 16
        %v397 = vor.u32 %v394, %v395
        %v398 = vsel %vm382, %v390, %v397
        %v399 = vrot.slane %v394, 4
        %v401 = vshrl.u32 %v365, 16
        %v403 = vrot.slane %v401, 7
        %v404 = vshll.u32 %v365, 16
        %v406 = vor.u32 %v403, %v404
        %v407 = vrot.slane %v403, 4
        %v409 = vshrl.u32 %v366, 16
        %v411 = vrot.slane %v409, 7
        %v412 = vshll.u32 %v366, 16
        %v414 = vor.u32 %v411, %v412
        %v415 = vsel %vm382, %v407, %v414
        %v416 = vrot.slane %v411, 4
        %v418 = vshrl.u32 %v367, 16
        %v420 = vrot.slane %v418, 7
        %v421 = vshll.u32 %v367, 16
        %v423 = vor.u32 %v420, %v421
        %v424 = vrot.slane %v420, 4
        %v426 = vshrl.u32 %v368, 16
        %v428 = vrot.slane %v426, 7
        %v429 = vshll.u32 %v368, 16
        %v431 = vor.u32 %v428, %v429
        %v432 = vsel %vm382, %v424, %v431
        %v433 = vrot.slane %v428, 4
        %v435 = vshrl.u32 %v369, 16
        %v437 = vrot.slane %v435, 7
        %v438 = vshll.u32 %v369, 16
        %v440 = vor.u32 %v437, %v438
        %v441 = vrot.slane %v437, 4
        %v443 = vshrl.u32 %v370, 16
        %v445 = vrot.slane %v443, 7
        %v446 = vshll.u32 %v370, 16
        %v448 = vor.u32 %v445, %v446
        %v449 = vsel %vm382, %v441, %v448
        %v450 = vrot.slane %v445, 4
        %v452 = vshrl.u32 %v371, 16
        %v454 = vrot.slane %v452, 7
        %v455 = vshll.u32 %v371, 16
        %v457 = vor.u32 %v454, %v455
        %v458 = vrot.slane %v454, 4
        %v460 = vshrl.u32 %v372, 16
        %v462 = vrot.slane %v460, 7
        %v463 = vshll.u32 %v372, 16
        %v465 = vor.u32 %v462, %v463
        %v466 = vsel %vm382, %v458, %v465
        %v467 = vrot.slane %v462, 4
        %v469 = vshrl.u32 %v373, 16
        %v471 = vrot.slane %v469, 7
        %v472 = vshll.u32 %v373, 16
        %v474 = vor.u32 %v471, %v472
        %v475 = vrot.slane %v471, 4
        %v477 = vshrl.u32 %v374, 16
        %v479 = vrot.slane %v477, 7
        %v480 = vshll.u32 %v374, 16
        %v482 = vor.u32 %v479, %v480
        %v483 = vsel %vm382, %v475, %v482
        %v484 = vrot.slane %v479, 4
        %v486 = vshrl.u32 %v375, 16
        %v488 = vrot.slane %v486, 7
        %v489 = vshll.u32 %v375, 16
        %v491 = vor.u32 %v488, %v489
        %v492 = vrot.slane %v488, 4
        %v494 = vshrl.u32 %v376, 16
        %v496 = vrot.slane %v494, 7
        %v497 = vshll.u32 %v376, 16
        %v499 = vor.u32 %v496, %v497
        %v500 = vsel %vm382, %v492, %v499
        %v501 = vrot.slane %v496, 4
        %v503 = vshrl.u32 %v377, 16
        %v505 = vrot.slane %v503, 7
        %v506 = vshll.u32 %v377, 16
        %v508 = vor.u32 %v505, %v506
        %v509 = vrot.slane %v505, 4
        %v511 = vshrl.u32 %v378, 16
        %v513 = vrot.slane %v511, 7
        %v514 = vshll.u32 %v378, 16
        %v516 = vor.u32 %v513, %v514
        %v517 = vsel %vm382, %v509, %v516
        %v518 = vrot.slane %v513, 4
        %v520 = vshrl.u32 %v379, 16
        %v522 = vrot.slane %v520, 7
        %v523 = vshll.u32 %v379, 16
        %v525 = vor.u32 %v522, %v523
        %v526 = vrot.slane %v522, 4
        %v528 = vshrl.u32 %v380, 16
        %v530 = vrot.slane %v528, 7
        %v531 = vshll.u32 %v380, 16
        %v533 = vor.u32 %v530, %v531
        %v534 = vsel %vm382, %v526, %v533
        %v535 = vrot.slane %v530, 4
        %s563 = scalar_lea.vmem [#allocation2], 12
        %vm564 = vcmask 1043456
        %vm565 = vmand %vm564, %vm324
        %v566 = vld [vmem:[%s563] sm:$0xf]
        %v567 = vsel %vm565, %v389, %v566
        %568 = vst [vmem:[%s563] sm:$0xf] %v567
        %569 = vst [vmem:[%s563 + $0x4] sm:$0xf] %v398
        %v570 = vld [vmem:[%s563 + $0x8] sm:$0x1]
        %v571 = vsel %vm293, %v399, %v570
        %572 = vst [vmem:[%s563 + $0x8] sm:$0x1] %v571
        %v573 = vld [vmem:[%s563 + $0xc] sm:$0xf]
        %v574 = vsel %vm565, %v406, %v573
        %575 = vst [vmem:[%s563 + $0xc] sm:$0xf] %v574
        %576 = vst [vmem:[%s563 + $0x10] sm:$0xf] %v415
        %v577 = vld [vmem:[%s563 + $0x14] sm:$0x1]
        %v578 = vsel %vm293, %v416, %v577
        %579 = vst [vmem:[%s563 + $0x14] sm:$0x1] %v578
        %v580 = vld [vmem:[%s563 + $0x18] sm:$0xf]
        %v581 = vsel %vm565, %v423, %v580
        %582 = vst [vmem:[%s563 + $0x18] sm:$0xf] %v581
        %583 = vst [vmem:[%s563 + $0x1c] sm:$0xf] %v432
        %v584 = vld [vmem:[%s563 + $0x20] sm:$0x1]
        %v585 = vsel %vm293, %v433, %v584
        %586 = vst [vmem:[%s563 + $0x20] sm:$0x1] %v585
        %v587 = vld [vmem:[%s563 + $0x24] sm:$0xf]
        %v588 = vsel %vm565, %v440, %v587
        %589 = vst [vmem:[%s563 + $0x24] sm:$0xf] %v588
        %590 = vst [vmem:[%s563 + $0x28] sm:$0xf] %v449
        %v591 = vld [vmem:[%s563 + $0x2c] sm:$0x1]
        %v592 = vsel %vm293, %v450, %v591
        %593 = vst [vmem:[%s563 + $0x2c] sm:$0x1] %v592
        %v594 = vld [vmem:[%s563 + $0x30] sm:$0xf]
        %v595 = vsel %vm565, %v457, %v594
        %596 = vst [vmem:[%s563 + $0x30] sm:$0xf] %v595
        %597 = vst [vmem:[%s563 + $0x34] sm:$0xf] %v466
        %v598 = vld [vmem:[%s563 + $0x38] sm:$0x1]
        %v599 = vsel %vm293, %v467, %v598
        %600 = vst [vmem:[%s563 + $0x38] sm:$0x1] %v599
        %v601 = vld [vmem:[%s563 + $0x3c] sm:$0xf]
        %v602 = vsel %vm565, %v474, %v601
        %603 = vst [vmem:[%s563 + $0x3c] sm:$0xf] %v602
        %604 = vst [vmem:[%s563 + $0x40] sm:$0xf] %v483
        %v605 = vld [vmem:[%s563 + $0x44] sm:$0x1]
        %v606 = vsel %vm293, %v484, %v605
        %607 = vst [vmem:[%s563 + $0x44] sm:$0x1] %v606
        %v608 = vld [vmem:[%s563 + $0x48] sm:$0xf]
        %v609 = vsel %vm565, %v491, %v608
        %610 = vst [vmem:[%s563 + $0x48] sm:$0xf] %v609
        %611 = vst [vmem:[%s563 + $0x4c] sm:$0xf] %v500
        %v612 = vld [vmem:[%s563 + $0x50] sm:$0x1]
        %v613 = vsel %vm293, %v501, %v612
        %614 = vst [vmem:[%s563 + $0x50] sm:$0x1] %v613
        %v615 = vld [vmem:[%s563 + $0x54] sm:$0xf]
        %v616 = vsel %vm565, %v508, %v615
        %617 = vst [vmem:[%s563 + $0x54] sm:$0xf] %v616
        %618 = vst [vmem:[%s563 + $0x58] sm:$0xf] %v517
        %v619 = vld [vmem:[%s563 + $0x5c] sm:$0x1]
        %v620 = vsel %vm293, %v518, %v619
        %621 = vst [vmem:[%s563 + $0x5c] sm:$0x1] %v620
        %v622 = vld [vmem:[%s563 + $0x60] sm:$0xf]
        %v623 = vsel %vm565, %v525, %v622
        %624 = vst [vmem:[%s563 + $0x60] sm:$0xf] %v623
        %625 = vst [vmem:[%s563 + $0x64] sm:$0xf] %v534
        %v626 = vld [vmem:[%s563 + $0x68] sm:$0x1]
        %v627 = vsel %vm293, %v535, %v626
        %628 = vst [vmem:[%s563 + $0x68] sm:$0x1] %v627
      $region44: #{forward.5} parent=39 // pred_fallthru
        _
      %p629 = scmp.eq.s32.totalorder %s21, 1
      // Predicated region
      $region45: #{forward.5} parent=39 // pred_check
        %p630 = pneg %p629
      $region46: #{forward.5} parent=39 // pred_check_branch
        %632 = sbr.rel (%p630) target = $region48
      $region47: #{forward.5} parent=39 // pred_region
        %s633 = scalar_lea.vmem [#allocation2], 108
        %634 = vst [vmem:[%s633] sm:$0xf] 0
        %635 = vst [vmem:[%s633 + $0x4] sm:$0xf] 0
        %636 = vst [vmem:[%s633 + $0x8] sm:$0x1] 0
        %s637 = ssub.s32 %s290, 1
        %s638 = smul.u32 %s637, 2
        %s639 = smul.addr %s638, 4
        %s640 = scalar_lea.vmem %s266, %s639
        %v641 = vld [vmem:[%s640] sm:$0xf]
        %v642 = vld [vmem:[%s640 + $0x4] sm:$0xf]
        %v643 = vld [vmem:[%s640 + $0x8] sm:$0xf]
        %v644 = vld [vmem:[%s640 + $0xc] sm:$0xf]
        %v645 = vld [vmem:[%s640 + $0x10] sm:$0xf]
        %v646 = vld [vmem:[%s640 + $0x14] sm:$0xf]
        %v647 = vld [vmem:[%s640 + $0x18] sm:$0xf]
        %v648 = vld [vmem:[%s640 + $0x1c] sm:$0xf]
        %v649 = vld [vmem:[%s640 + $0x20] sm:$0xf]
        %v650 = vld [vmem:[%s640 + $0x24] sm:$0xf]
        %v651 = vld [vmem:[%s640 + $0x28] sm:$0xf]
        %v652 = vld [vmem:[%s640 + $0x2c] sm:$0xf]
        %v653 = vld [vmem:[%s640 + $0x30] sm:$0xf]
        %v654 = vld [vmem:[%s640 + $0x34] sm:$0xf]
        %v655 = vld [vmem:[%s640 + $0x38] sm:$0xf]
        %v656 = vld [vmem:[%s640 + $0x3c] sm:$0xf]
        %v657 = vld [vmem:[%s640 + $0x40] sm:$0xf]
        %v658 = vld [vmem:[%s640 + $0x44] sm:$0xf]
        %vm659 = vsmask.f32 4368
        %vm660 = vmor %vm292, %vm659
        %v662 = vshrl.u32 %v641, 16
        %v664 = vrot.slane %v662, 7
        %v665 = vshll.u32 %v641, 16
        %v667 = vor.u32 %v664, %v665
        %v668 = vrot.slane %v664, 4
        %v670 = vshrl.u32 %v642, 16
        %v672 = vrot.slane %v670, 7
        %v673 = vshll.u32 %v642, 16
        %v675 = vor.u32 %v672, %v673
        %v676 = vsel %vm660, %v668, %v675
        %v677 = vrot.slane %v672, 4
        %v679 = vshrl.u32 %v643, 16
        %v681 = vrot.slane %v679, 7
        %v682 = vshll.u32 %v643, 16
        %v684 = vor.u32 %v681, %v682
        %v685 = vrot.slane %v681, 4
        %v687 = vshrl.u32 %v644, 16
        %v689 = vrot.slane %v687, 7
        %v690 = vshll.u32 %v644, 16
        %v692 = vor.u32 %v689, %v690
        %v693 = vsel %vm660, %v685, %v692
        %v694 = vrot.slane %v689, 4
        %v696 = vshrl.u32 %v645, 16
        %v698 = vrot.slane %v696, 7
        %v699 = vshll.u32 %v645, 16
        %v701 = vor.u32 %v698, %v699
        %v702 = vrot.slane %v698, 4
        %v704 = vshrl.u32 %v646, 16
        %v706 = vrot.slane %v704, 7
        %v707 = vshll.u32 %v646, 16
        %v709 = vor.u32 %v706, %v707
        %v710 = vsel %vm660, %v702, %v709
        %v711 = vrot.slane %v706, 4
        %v713 = vshrl.u32 %v647, 16
        %v715 = vrot.slane %v713, 7
        %v716 = vshll.u32 %v647, 16
        %v718 = vor.u32 %v715, %v716
        %v719 = vrot.slane %v715, 4
        %v721 = vshrl.u32 %v648, 16
        %v723 = vrot.slane %v721, 7
        %v724 = vshll.u32 %v648, 16
        %v726 = vor.u32 %v723, %v724
        %v727 = vsel %vm660, %v719, %v726
        %v728 = vrot.slane %v723, 4
        %v730 = vshrl.u32 %v649, 16
        %v732 = vrot.slane %v730, 7
        %v733 = vshll.u32 %v649, 16
        %v735 = vor.u32 %v732, %v733
        %v736 = vrot.slane %v732, 4
        %v738 = vshrl.u32 %v650, 16
        %v740 = vrot.slane %v738, 7
        %v741 = vshll.u32 %v650, 16
        %v743 = vor.u32 %v740, %v741
        %v744 = vsel %vm660, %v736, %v743
        %v745 = vrot.slane %v740, 4
        %v747 = vshrl.u32 %v651, 16
        %v749 = vrot.slane %v747, 7
        %v750 = vshll.u32 %v651, 16
        %v752 = vor.u32 %v749, %v750
        %v753 = vrot.slane %v749, 4
        %v755 = vshrl.u32 %v652, 16
        %v757 = vrot.slane %v755, 7
        %v758 = vshll.u32 %v652, 16
        %v760 = vor.u32 %v757, %v758
        %v761 = vsel %vm660, %v753, %v760
        %v762 = vrot.slane %v757, 4
        %v764 = vshrl.u32 %v653, 16
        %v766 = vrot.slane %v764, 7
        %v767 = vshll.u32 %v653, 16
        %v769 = vor.u32 %v766, %v767
        %v770 = vrot.slane %v766, 4
        %v772 = vshrl.u32 %v654, 16
        %v774 = vrot.slane %v772, 7
        %v775 = vshll.u32 %v654, 16
        %v777 = vor.u32 %v774, %v775
        %v778 = vsel %vm660, %v770, %v777
        %v779 = vrot.slane %v774, 4
        %v781 = vshrl.u32 %v655, 16
        %v783 = vrot.slane %v781, 7
        %v784 = vshll.u32 %v655, 16
        %v786 = vor.u32 %v783, %v784
        %v787 = vrot.slane %v783, 4
        %v789 = vshrl.u32 %v656, 16
        %v791 = vrot.slane %v789, 7
        %v792 = vshll.u32 %v656, 16
        %v794 = vor.u32 %v791, %v792
        %v795 = vsel %vm660, %v787, %v794
        %v796 = vrot.slane %v791, 4
        %v798 = vshrl.u32 %v657, 16
        %v800 = vrot.slane %v798, 7
        %v801 = vshll.u32 %v657, 16
        %v803 = vor.u32 %v800, %v801
        %v804 = vrot.slane %v800, 4
        %v806 = vshrl.u32 %v658, 16
        %v808 = vrot.slane %v806, 7
        %v809 = vshll.u32 %v658, 16
        %v811 = vor.u32 %v808, %v809
        %v812 = vsel %vm660, %v804, %v811
        %v813 = vrot.slane %v808, 4
        %vm841 = vcmask 1043456
        %vm842 = vmand %vm841, %vm324
        %v843 = vld [vmem:[#allocation2] sm:$0xf]
        %v844 = vsel %vm842, %v667, %v843
        %845 = vst [vmem:[#allocation2] sm:$0xf] %v844
        %846 = vst [vmem:[#allocation2 + $0x4] sm:$0xf] %v676
        %v847 = vld [vmem:[#allocation2 + $0x8] sm:$0x1]
        %v848 = vsel %vm293, %v677, %v847
        %849 = vst [vmem:[#allocation2 + $0x8] sm:$0x1] %v848
        %v850 = vld [vmem:[#allocation2 + $0xc] sm:$0xf]
        %v851 = vsel %vm842, %v684, %v850
        %852 = vst [vmem:[#allocation2 + $0xc] sm:$0xf] %v851
        %853 = vst [vmem:[#allocation2 + $0x10] sm:$0xf] %v693
        %v854 = vld [vmem:[#allocation2 + $0x14] sm:$0x1]
        %v855 = vsel %vm293, %v694, %v854
        %856 = vst [vmem:[#allocation2 + $0x14] sm:$0x1] %v855
        %v857 = vld [vmem:[#allocation2 + $0x18] sm:$0xf]
        %v858 = vsel %vm842, %v701, %v857
        %859 = vst [vmem:[#allocation2 + $0x18] sm:$0xf] %v858
        %860 = vst [vmem:[#allocation2 + $0x1c] sm:$0xf] %v710
        %v861 = vld [vmem:[#allocation2 + $0x20] sm:$0x1]
        %v862 = vsel %vm293, %v711, %v861
        %863 = vst [vmem:[#allocation2 + $0x20] sm:$0x1] %v862
        %v864 = vld [vmem:[#allocation2 + $0x24] sm:$0xf]
        %v865 = vsel %vm842, %v718, %v864
        %866 = vst [vmem:[#allocation2 + $0x24] sm:$0xf] %v865
        %867 = vst [vmem:[#allocation2 + $0x28] sm:$0xf] %v727
        %v868 = vld [vmem:[#allocation2 + $0x2c] sm:$0x1]
        %v869 = vsel %vm293, %v728, %v868
        %870 = vst [vmem:[#allocation2 + $0x2c] sm:$0x1] %v869
        %v871 = vld [vmem:[#allocation2 + $0x30] sm:$0xf]
        %v872 = vsel %vm842, %v735, %v871
        %873 = vst [vmem:[#allocation2 + $0x30] sm:$0xf] %v872
        %874 = vst [vmem:[#allocation2 + $0x34] sm:$0xf] %v744
        %v875 = vld [vmem:[#allocation2 + $0x38] sm:$0x1]
        %v876 = vsel %vm293, %v745, %v875
        %877 = vst [vmem:[#allocation2 + $0x38] sm:$0x1] %v876
        %v878 = vld [vmem:[#allocation2 + $0x3c] sm:$0xf]
        %v879 = vsel %vm842, %v752, %v878
        %880 = vst [vmem:[#allocation2 + $0x3c] sm:$0xf] %v879
        %881 = vst [vmem:[#allocation2 + $0x40] sm:$0xf] %v761
        %v882 = vld [vmem:[#allocation2 + $0x44] sm:$0x1]
        %v883 = vsel %vm293, %v762, %v882
        %884 = vst [vmem:[#allocation2 + $0x44] sm:$0x1] %v883
        %v885 = vld [vmem:[#allocation2 + $0x48] sm:$0xf]
        %v886 = vsel %vm842, %v769, %v885
        %887 = vst [vmem:[#allocation2 + $0x48] sm:$0xf] %v886
        %888 = vst [vmem:[#allocation2 + $0x4c] sm:$0xf] %v778
        %v889 = vld [vmem:[#allocation2 + $0x50] sm:$0x1]
        %v890 = vsel %vm293, %v779, %v889
        %891 = vst [vmem:[#allocation2 + $0x50] sm:$0x1] %v890
        %v892 = vld [vmem:[#allocation2 + $0x54] sm:$0xf]
        %v893 = vsel %vm842, %v786, %v892
        %894 = vst [vmem:[#allocation2 + $0x54] sm:$0xf] %v893
        %895 = vst [vmem:[#allocation2 + $0x58] sm:$0xf] %v795
        %v896 = vld [vmem:[#allocation2 + $0x5c] sm:$0x1]
        %v897 = vsel %vm293, %v796, %v896
        %898 = vst [vmem:[#allocation2 + $0x5c] sm:$0x1] %v897
        %v899 = vld [vmem:[#allocation2 + $0x60] sm:$0xf]
        %v900 = vsel %vm842, %v803, %v899
        %901 = vst [vmem:[#allocation2 + $0x60] sm:$0xf] %v900
        %902 = vst [vmem:[#allocation2 + $0x64] sm:$0xf] %v812
        %v903 = vld [vmem:[#allocation2 + $0x68] sm:$0x1]
        %v904 = vsel %vm293, %v813, %v903
        %905 = vst [vmem:[#allocation2 + $0x68] sm:$0x1] %v904
      $region48: #{forward.5} parent=39 // pred_fallthru
        _
      %v906 = vld [vmem:[#allocation2] sm:$0xf]
      %v907 = vld [vmem:[#allocation2 + $0x4] sm:$0xf]
      %v908 = vld [vmem:[#allocation2 + $0xc] sm:$0xf]
      %v909 = vld [vmem:[#allocation2 + $0x10] sm:$0xf]
      %v910 = vld [vmem:[#allocation2 + $0x18] sm:$0xf]
      %v911 = vld [vmem:[#allocation2 + $0x1c] sm:$0xf]
      %v912 = vld [vmem:[#allocation2 + $0x24] sm:$0xf]
      %v913 = vld [vmem:[#allocation2 + $0x28] sm:$0xf]
      %v914 = vld [vmem:[#allocation2 + $0x30] sm:$0xf]
      %v915 = vld [vmem:[#allocation2 + $0x34] sm:$0xf]
      %v916 = vld [vmem:[#allocation2 + $0x3c] sm:$0xf]
      %v917 = vld [vmem:[#allocation2 + $0x40] sm:$0xf]
      %v918 = vld [vmem:[#allocation2 + $0x48] sm:$0xf]
      %v919 = vld [vmem:[#allocation2 + $0x4c] sm:$0xf]
      %v920 = vld [vmem:[#allocation2 + $0x54] sm:$0xf]
      %v921 = vld [vmem:[#allocation2 + $0x58] sm:$0xf]
      %v922 = vld [vmem:[#allocation2 + $0x8] sm:$0x1]
      %v923 = vld [vmem:[#allocation2 + $0x14] sm:$0x1]
      %v924 = vld [vmem:[#allocation2 + $0x20] sm:$0x1]
      %v925 = vld [vmem:[#allocation2 + $0x2c] sm:$0x1]
      %v926 = vld [vmem:[#allocation2 + $0x38] sm:$0x1]
      %v927 = vld [vmem:[#allocation2 + $0x44] sm:$0x1]
      %v928 = vld [vmem:[#allocation2 + $0x50] sm:$0x1]
      %v929 = vld [vmem:[#allocation2 + $0x5c] sm:$0x1]
      %v930 = vld [vmem:[#allocation2] sm:$0xe]
      %v931 = vld [vmem:[#allocation2 + $0xc] sm:$0xe]
      %v932 = vld [vmem:[#allocation2 + $0x18] sm:$0xe]
      %v933 = vld [vmem:[#allocation2 + $0x24] sm:$0xe]
      %v934 = vld [vmem:[#allocation2 + $0x30] sm:$0xe]
      %v935 = vld [vmem:[#allocation2 + $0x3c] sm:$0xe]
      %v936 = vld [vmem:[#allocation2 + $0x48] sm:$0xe]
      %v937 = vld [vmem:[#allocation2 + $0x54] sm:$0xe]
      %s938 = scalar_lea.vmem [#allocation2], 12
      %v939 = vld [vmem:[%s938] sm:$0xf]
      %v940 = vld [vmem:[%s938 + $0x4] sm:$0xf]
      %v941 = vld [vmem:[%s938 + $0xc] sm:$0xf]
      %v942 = vld [vmem:[%s938 + $0x10] sm:$0xf]
      %v943 = vld [vmem:[%s938 + $0x18] sm:$0xf]
      %v944 = vld [vmem:[%s938 + $0x1c] sm:$0xf]
      %v945 = vld [vmem:[%s938 + $0x24] sm:$0xf]
      %v946 = vld [vmem:[%s938 + $0x28] sm:$0xf]
      %v947 = vld [vmem:[%s938 + $0x30] sm:$0xf]
      %v948 = vld [vmem:[%s938 + $0x34] sm:$0xf]
      %v949 = vld [vmem:[%s938 + $0x3c] sm:$0xf]
      %v950 = vld [vmem:[%s938 + $0x40] sm:$0xf]
      %v951 = vld [vmem:[%s938 + $0x48] sm:$0xf]
      %v952 = vld [vmem:[%s938 + $0x4c] sm:$0xf]
      %v953 = vld [vmem:[%s938 + $0x54] sm:$0xf]
      %v954 = vld [vmem:[%s938 + $0x58] sm:$0xf]
      %v955 = vld [vmem:[%s938 + $0x8] sm:$0x1]
      %v956 = vld [vmem:[%s938 + $0x14] sm:$0x1]
      %v957 = vld [vmem:[%s938 + $0x20] sm:$0x1]
      %v958 = vld [vmem:[%s938 + $0x2c] sm:$0x1]
      %v959 = vld [vmem:[%s938 + $0x38] sm:$0x1]
      %v960 = vld [vmem:[%s938 + $0x44] sm:$0x1]
      %v961 = vld [vmem:[%s938 + $0x50] sm:$0x1]
      %v962 = vld [vmem:[%s938 + $0x5c] sm:$0x1]
      %v963 = vld [vmem:[%s938] sm:$0xe]
      %v964 = vld [vmem:[%s938 + $0xc] sm:$0xe]
      %v965 = vld [vmem:[%s938 + $0x18] sm:$0xe]
      %v966 = vld [vmem:[%s938 + $0x24] sm:$0xe]
      %v967 = vld [vmem:[%s938 + $0x30] sm:$0xe]
      %v968 = vld [vmem:[%s938 + $0x3c] sm:$0xe]
      %v969 = vld [vmem:[%s938 + $0x48] sm:$0xe]
      %v970 = vld [vmem:[%s938 + $0x54] sm:$0xe]
      %s971 = scalar_lea.vmem [#allocation2], 24
      %v972 = vld [vmem:[%s971] sm:$0xf]
      %v973 = vld [vmem:[%s971 + $0x4] sm:$0xf]
      %v974 = vld [vmem:[%s971 + $0xc] sm:$0xf]
      %v975 = vld [vmem:[%s971 + $0x10] sm:$0xf]
      %v976 = vld [vmem:[%s971 + $0x18] sm:$0xf]
      %v977 = vld [vmem:[%s971 + $0x1c] sm:$0xf]
      %v978 = vld [vmem:[%s971 + $0x24] sm:$0xf]
      %v979 = vld [vmem:[%s971 + $0x28] sm:$0xf]
      %v980 = vld [vmem:[%s971 + $0x30] sm:$0xf]
      %v981 = vld [vmem:[%s971 + $0x34] sm:$0xf]
      %v982 = vld [vmem:[%s971 + $0x3c] sm:$0xf]
      %v983 = vld [vmem:[%s971 + $0x40] sm:$0xf]
      %v984 = vld [vmem:[%s971 + $0x48] sm:$0xf]
      %v985 = vld [vmem:[%s971 + $0x4c] sm:$0xf]
      %v986 = vld [vmem:[%s971 + $0x54] sm:$0xf]
      %v987 = vld [vmem:[%s971 + $0x58] sm:$0xf]
      %v988 = vld [vmem:[%s971 + $0x8] sm:$0x1]
      %v989 = vld [vmem:[%s971 + $0x14] sm:$0x1]
      %v990 = vld [vmem:[%s971 + $0x20] sm:$0x1]
      %v991 = vld [vmem:[%s971 + $0x2c] sm:$0x1]
      %v992 = vld [vmem:[%s971 + $0x38] sm:$0x1]
      %v993 = vld [vmem:[%s971 + $0x44] sm:$0x1]
      %v994 = vld [vmem:[%s971 + $0x50] sm:$0x1]
      %v995 = vld [vmem:[%s971 + $0x5c] sm:$0x1]
      %v996 = vld [vmem:[%s971] sm:$0xe]
      %v997 = vld [vmem:[%s971 + $0xc] sm:$0xe]
      %v998 = vld [vmem:[%s971 + $0x18] sm:$0xe]
      %v999 = vld [vmem:[%s971 + $0x24] sm:$0xe]
      %v1000 = vld [vmem:[%s971 + $0x30] sm:$0xe]
      %v1001 = vld [vmem:[%s971 + $0x3c] sm:$0xe]
      %v1002 = vld [vmem:[%s971 + $0x48] sm:$0xe]
      %v1003 = vld [vmem:[%s971 + $0x54] sm:$0xe]
      %v1020 = vunpack.c.l.b16 %v906
      %v1021 = vunpack.c.l.b16 %v907
      %v1022 = vunpack.c.l.b16 %v908
      %v1023 = vunpack.c.l.b16 %v909
      %v1024 = vunpack.c.l.b16 %v910
      %v1025 = vunpack.c.l.b16 %v911
      %v1026 = vunpack.c.l.b16 %v912
      %v1027 = vunpack.c.l.b16 %v913
      %v1028 = vunpack.c.l.b16 %v914
      %v1029 = vunpack.c.l.b16 %v915
      %v1030 = vunpack.c.l.b16 %v916
      %v1031 = vunpack.c.l.b16 %v917
      %v1032 = vunpack.c.l.b16 %v918
      %v1033 = vunpack.c.l.b16 %v919
      %v1034 = vunpack.c.l.b16 %v920
      %v1035 = vunpack.c.l.b16 %v921
      %v1036 = vpack.c.b16 %v1021, %v1020
      %v1037 = vpack.c.b16 %v1023, %v1022
      %v1038 = vpack.c.b16 %v1025, %v1024
      %v1039 = vpack.c.b16 %v1027, %v1026
      %v1040 = vpack.c.b16 %v1029, %v1028
      %v1041 = vpack.c.b16 %v1031, %v1030
      %v1042 = vpack.c.b16 %v1033, %v1032
      %v1043 = vpack.c.b16 %v1035, %v1034
      %v1060 = vunpack.c.l.b16 %v922
      %v1061 = vunpack.c.l.b16 %v923
      %v1062 = vunpack.c.l.b16 %v924
      %v1063 = vunpack.c.l.b16 %v925
      %v1064 = vunpack.c.l.b16 %v926
      %v1065 = vunpack.c.l.b16 %v927
      %v1066 = vunpack.c.l.b16 %v928
      %v1067 = vunpack.c.l.b16 %v929
      %v1068 = vpack.c.b16 %v1060, %v1060
      %v1069 = vpack.c.b16 %v1061, %v1061
      %v1070 = vpack.c.b16 %v1062, %v1062
      %v1071 = vpack.c.b16 %v1063, %v1063
      %v1072 = vpack.c.b16 %v1064, %v1064
      %v1073 = vpack.c.b16 %v1065, %v1065
      %v1074 = vpack.c.b16 %v1066, %v1066
      %v1075 = vpack.c.b16 %v1067, %v1067
      %vm1076 = vsmask.f32 7424
      %v1078 = vshrl.u32 %v1036, 16
      %v1080 = vshll.u32 %v1036, 16
      %v1082 = vrot.slane %v1080, 1
      %v1083 = vor.u32 %v1078, %v1082
      %v1085 = vshll.u32 %v1068, 16
      %v1087 = vrot.slane %v1085, 1
      %v1088 = vsel %vm1076, %v1083, %v1087
      %v1090 = vshrl.u32 %v1037, 16
      %v1092 = vshll.u32 %v1037, 16
      %v1094 = vrot.slane %v1092, 1
      %v1095 = vor.u32 %v1090, %v1094
      %v1097 = vshll.u32 %v1069, 16
      %v1099 = vrot.slane %v1097, 1
      %v1100 = vsel %vm1076, %v1095, %v1099
      %v1102 = vshrl.u32 %v1038, 16
      %v1104 = vshll.u32 %v1038, 16
      %v1106 = vrot.slane %v1104, 1
      %v1107 = vor.u32 %v1102, %v1106
      %v1109 = vshll.u32 %v1070, 16
      %v1111 = vrot.slane %v1109, 1
      %v1112 = vsel %vm1076, %v1107, %v1111
      %v1114 = vshrl.u32 %v1039, 16
      %v1116 = vshll.u32 %v1039, 16
      %v1118 = vrot.slane %v1116, 1
      %v1119 = vor.u32 %v1114, %v1118
      %v1121 = vshll.u32 %v1071, 16
      %v1123 = vrot.slane %v1121, 1
      %v1124 = vsel %vm1076, %v1119, %v1123
      %v1126 = vshrl.u32 %v1040, 16
      %v1128 = vshll.u32 %v1040, 16
      %v1130 = vrot.slane %v1128, 1
      %v1131 = vor.u32 %v1126, %v1130
      %v1133 = vshll.u32 %v1072, 16
      %v1135 = vrot.slane %v1133, 1
      %v1136 = vsel %vm1076, %v1131, %v1135
      %v1138 = vshrl.u32 %v1041, 16
      %v1140 = vshll.u32 %v1041, 16
      %v1142 = vrot.slane %v1140, 1
      %v1143 = vor.u32 %v1138, %v1142
      %v1145 = vshll.u32 %v1073, 16
      %v1147 = vrot.slane %v1145, 1
      %v1148 = vsel %vm1076, %v1143, %v1147
      %v1150 = vshrl.u32 %v1042, 16
      %v1152 = vshll.u32 %v1042, 16
      %v1154 = vrot.slane %v1152, 1
      %v1155 = vor.u32 %v1150, %v1154
      %v1157 = vshll.u32 %v1074, 16
      %v1159 = vrot.slane %v1157, 1
      %v1160 = vsel %vm1076, %v1155, %v1159
      %v1162 = vshrl.u32 %v1043, 16
      %v1164 = vshll.u32 %v1043, 16
      %v1166 = vrot.slane %v1164, 1
      %v1167 = vor.u32 %v1162, %v1166
      %v1169 = vshll.u32 %v1075, 16
      %v1171 = vrot.slane %v1169, 1
      %v1172 = vsel %vm1076, %v1167, %v1171
      %v1189 = vunpack.c.l.b16 %v930
      %v1190 = vunpack.c.l.b16 %v931
      %v1191 = vunpack.c.l.b16 %v932
      %v1192 = vunpack.c.l.b16 %v933
      %v1193 = vunpack.c.l.b16 %v934
      %v1194 = vunpack.c.l.b16 %v935
      %v1195 = vunpack.c.l.b16 %v936
      %v1196 = vunpack.c.l.b16 %v937
      %v1197 = vpack.c.b16 %v1021, %v1189
      %v1198 = vpack.c.b16 %v1023, %v1190
      %v1199 = vpack.c.b16 %v1025, %v1191
      %v1200 = vpack.c.b16 %v1027, %v1192
      %v1201 = vpack.c.b16 %v1029, %v1193
      %v1202 = vpack.c.b16 %v1031, %v1194
      %v1203 = vpack.c.b16 %v1033, %v1195
      %v1204 = vpack.c.b16 %v1035, %v1196
      %vm1205 = vcmask 1046528
      %v1206 = vrot.slane %v1197, 1
      %v1207 = vrot.slane %v1068, 1
      %v1208 = vsel %vm1205, %v1206, %v1207
      %v1209 = vrot.slane %v1198, 1
      %v1210 = vrot.slane %v1069, 1
      %v1211 = vsel %vm1205, %v1209, %v1210
      %v1212 = vrot.slane %v1199, 1
      %v1213 = vrot.slane %v1070, 1
      %v1214 = vsel %vm1205, %v1212, %v1213
      %v1215 = vrot.slane %v1200, 1
      %v1216 = vrot.slane %v1071, 1
      %v1217 = vsel %vm1205, %v1215, %v1216
      %v1218 = vrot.slane %v1201, 1
      %v1219 = vrot.slane %v1072, 1
      %v1220 = vsel %vm1205, %v1218, %v1219
      %v1221 = vrot.slane %v1202, 1
      %v1222 = vrot.slane %v1073, 1
      %v1223 = vsel %vm1205, %v1221, %v1222
      %v1224 = vrot.slane %v1203, 1
      %v1225 = vrot.slane %v1074, 1
      %v1226 = vsel %vm1205, %v1224, %v1225
      %v1227 = vrot.slane %v1204, 1
      %v1228 = vrot.slane %v1075, 1
      %v1229 = vsel %vm1205, %v1227, %v1228
      %v1254 = vunpack.c.l.b16 %v939
      %v1255 = vunpack.c.l.b16 %v940
      %v1256 = vunpack.c.l.b16 %v941
      %v1257 = vunpack.c.l.b16 %v942
      %v1258 = vunpack.c.l.b16 %v943
      %v1259 = vunpack.c.l.b16 %v944
      %v1260 = vunpack.c.l.b16 %v945
      %v1261 = vunpack.c.l.b16 %v946
      %v1262 = vunpack.c.l.b16 %v947
      %v1263 = vunpack.c.l.b16 %v948
      %v1264 = vunpack.c.l.b16 %v949
      %v1265 = vunpack.c.l.b16 %v950
      %v1266 = vunpack.c.l.b16 %v951
      %v1267 = vunpack.c.l.b16 %v952
      %v1268 = vunpack.c.l.b16 %v953
      %v1269 = vunpack.c.l.b16 %v954
      %v1270 = vpack.c.b16 %v1255, %v1254
      %v1271 = vpack.c.b16 %v1257, %v1256
      %v1272 = vpack.c.b16 %v1259, %v1258
      %v1273 = vpack.c.b16 %v1261, %v1260
      %v1274 = vpack.c.b16 %v1263, %v1262
      %v1275 = vpack.c.b16 %v1265, %v1264
      %v1276 = vpack.c.b16 %v1267, %v1266
      %v1277 = vpack.c.b16 %v1269, %v1268
      %v1294 = vunpack.c.l.b16 %v955
      %v1295 = vunpack.c.l.b16 %v956
      %v1296 = vunpack.c.l.b16 %v957
      %v1297 = vunpack.c.l.b16 %v958
      %v1298 = vunpack.c.l.b16 %v959
      %v1299 = vunpack.c.l.b16 %v960
      %v1300 = vunpack.c.l.b16 %v961
      %v1301 = vunpack.c.l.b16 %v962
      %v1302 = vpack.c.b16 %v1294, %v1294
      %v1303 = vpack.c.b16 %v1295, %v1295
      %v1304 = vpack.c.b16 %v1296, %v1296
      %v1305 = vpack.c.b16 %v1297, %v1297
      %v1306 = vpack.c.b16 %v1298, %v1298
      %v1307 = vpack.c.b16 %v1299, %v1299
      %v1308 = vpack.c.b16 %v1300, %v1300
      %v1309 = vpack.c.b16 %v1301, %v1301
      %v1311 = vshrl.u32 %v1270, 16
      %v1313 = vshll.u32 %v1270, 16
      %v1315 = vrot.slane %v1313, 1
      %v1316 = vor.u32 %v1311, %v1315
      %v1318 = vshll.u32 %v1302, 16
      %v1320 = vrot.slane %v1318, 1
      %v1321 = vsel %vm1076, %v1316, %v1320
      %v1323 = vshrl.u32 %v1271, 16
      %v1325 = vshll.u32 %v1271, 16
      %v1327 = vrot.slane %v1325, 1
      %v1328 = vor.u32 %v1323, %v1327
      %v1330 = vshll.u32 %v1303, 16
      %v1332 = vrot.slane %v1330, 1
      %v1333 = vsel %vm1076, %v1328, %v1332
      %v1335 = vshrl.u32 %v1272, 16
      %v1337 = vshll.u32 %v1272, 16
      %v1339 = vrot.slane %v1337, 1
      %v1340 = vor.u32 %v1335, %v1339
      %v1342 = vshll.u32 %v1304, 16
      %v1344 = vrot.slane %v1342, 1
      %v1345 = vsel %vm1076, %v1340, %v1344
      %v1347 = vshrl.u32 %v1273, 16
      %v1349 = vshll.u32 %v1273, 16
      %v1351 = vrot.slane %v1349, 1
      %v1352 = vor.u32 %v1347, %v1351
      %v1354 = vshll.u32 %v1305, 16
      %v1356 = vrot.slane %v1354, 1
      %v1357 = vsel %vm1076, %v1352, %v1356
      %v1359 = vshrl.u32 %v1274, 16
      %v1361 = vshll.u32 %v1274, 16
      %v1363 = vrot.slane %v1361, 1
      %v1364 = vor.u32 %v1359, %v1363
      %v1366 = vshll.u32 %v1306, 16
      %v1368 = vrot.slane %v1366, 1
      %v1369 = vsel %vm1076, %v1364, %v1368
      %v1371 = vshrl.u32 %v1275, 16
      %v1373 = vshll.u32 %v1275, 16
      %v1375 = vrot.slane %v1373, 1
      %v1376 = vor.u32 %v1371, %v1375
      %v1378 = vshll.u32 %v1307, 16
      %v1380 = vrot.slane %v1378, 1
      %v1381 = vsel %vm1076, %v1376, %v1380
      %v1383 = vshrl.u32 %v1276, 16
      %v1385 = vshll.u32 %v1276, 16
      %v1387 = vrot.slane %v1385, 1
      %v1388 = vor.u32 %v1383, %v1387
      %v1390 = vshll.u32 %v1308, 16
      %v1392 = vrot.slane %v1390, 1
      %v1393 = vsel %vm1076, %v1388, %v1392
      %v1395 = vshrl.u32 %v1277, 16
      %v1397 = vshll.u32 %v1277, 16
      %v1399 = vrot.slane %v1397, 1
      %v1400 = vor.u32 %v1395, %v1399
      %v1402 = vshll.u32 %v1309, 16
      %v1404 = vrot.slane %v1402, 1
      %v1405 = vsel %vm1076, %v1400, %v1404
      %v1422 = vunpack.c.l.b16 %v963
      %v1423 = vunpack.c.l.b16 %v964
      %v1424 = vunpack.c.l.b16 %v965
      %v1425 = vunpack.c.l.b16 %v966
      %v1426 = vunpack.c.l.b16 %v967
      %v1427 = vunpack.c.l.b16 %v968
      %v1428 = vunpack.c.l.b16 %v969
      %v1429 = vunpack.c.l.b16 %v970
      %v1430 = vpack.c.b16 %v1255, %v1422
      %v1431 = vpack.c.b16 %v1257, %v1423
      %v1432 = vpack.c.b16 %v1259, %v1424
      %v1433 = vpack.c.b16 %v1261, %v1425
      %v1434 = vpack.c.b16 %v1263, %v1426
      %v1435 = vpack.c.b16 %v1265, %v1427
      %v1436 = vpack.c.b16 %v1267, %v1428
      %v1437 = vpack.c.b16 %v1269, %v1429
      %v1438 = vrot.slane %v1430, 1
      %v1439 = vrot.slane %v1302, 1
      %v1440 = vsel %vm1205, %v1438, %v1439
      %v1441 = vrot.slane %v1431, 1
      %v1442 = vrot.slane %v1303, 1
      %v1443 = vsel %vm1205, %v1441, %v1442
      %v1444 = vrot.slane %v1432, 1
      %v1445 = vrot.slane %v1304, 1
      %v1446 = vsel %vm1205, %v1444, %v1445
      %v1447 = vrot.slane %v1433, 1
      %v1448 = vrot.slane %v1305, 1
      %v1449 = vsel %vm1205, %v1447, %v1448
      %v1450 = vrot.slane %v1434, 1
      %v1451 = vrot.slane %v1306, 1
      %v1452 = vsel %vm1205, %v1450, %v1451
      %v1453 = vrot.slane %v1435, 1
      %v1454 = vrot.slane %v1307, 1
      %v1455 = vsel %vm1205, %v1453, %v1454
      %v1456 = vrot.slane %v1436, 1
      %v1457 = vrot.slane %v1308, 1
      %v1458 = vsel %vm1205, %v1456, %v1457
      %v1459 = vrot.slane %v1437, 1
      %v1460 = vrot.slane %v1309, 1
      %v1461 = vsel %vm1205, %v1459, %v1460
      %v1486 = vunpack.c.l.b16 %v972
      %v1487 = vunpack.c.l.b16 %v973
      %v1488 = vunpack.c.l.b16 %v974
      %v1489 = vunpack.c.l.b16 %v975
      %v1490 = vunpack.c.l.b16 %v976
      %v1491 = vunpack.c.l.b16 %v977
      %v1492 = vunpack.c.l.b16 %v978
      %v1493 = vunpack.c.l.b16 %v979
      %v1494 = vunpack.c.l.b16 %v980
      %v1495 = vunpack.c.l.b16 %v981
      %v1496 = vunpack.c.l.b16 %v982
      %v1497 = vunpack.c.l.b16 %v983
      %v1498 = vunpack.c.l.b16 %v984
      %v1499 = vunpack.c.l.b16 %v985
      %v1500 = vunpack.c.l.b16 %v986
      %v1501 = vunpack.c.l.b16 %v987
      %v1502 = vpack.c.b16 %v1487, %v1486
      %v1503 = vpack.c.b16 %v1489, %v1488
      %v1504 = vpack.c.b16 %v1491, %v1490
      %v1505 = vpack.c.b16 %v1493, %v1492
      %v1506 = vpack.c.b16 %v1495, %v1494
      %v1507 = vpack.c.b16 %v1497, %v1496
      %v1508 = vpack.c.b16 %v1499, %v1498
      %v1509 = vpack.c.b16 %v1501, %v1500
      %v1526 = vunpack.c.l.b16 %v988
      %v1527 = vunpack.c.l.b16 %v989
      %v1528 = vunpack.c.l.b16 %v990
      %v1529 = vunpack.c.l.b16 %v991
      %v1530 = vunpack.c.l.b16 %v992
      %v1531 = vunpack.c.l.b16 %v993
      %v1532 = vunpack.c.l.b16 %v994
      %v1533 = vunpack.c.l.b16 %v995
      %v1534 = vpack.c.b16 %v1526, %v1526
      %v1535 = vpack.c.b16 %v1527, %v1527
      %v1536 = vpack.c.b16 %v1528, %v1528
      %v1537 = vpack.c.b16 %v1529, %v1529
      %v1538 = vpack.c.b16 %v1530, %v1530
      %v1539 = vpack.c.b16 %v1531, %v1531
      %v1540 = vpack.c.b16 %v1532, %v1532
      %v1541 = vpack.c.b16 %v1533, %v1533
      %v1543 = vshrl.u32 %v1502, 16
      %v1545 = vshll.u32 %v1502, 16
      %v1547 = vrot.slane %v1545, 1
      %v1548 = vor.u32 %v1543, %v1547
      %v1550 = vshll.u32 %v1534, 16
      %v1552 = vrot.slane %v1550, 1
      %v1553 = vsel %vm1076, %v1548, %v1552
      %v1555 = vshrl.u32 %v1503, 16
      %v1557 = vshll.u32 %v1503, 16
      %v1559 = vrot.slane %v1557, 1
      %v1560 = vor.u32 %v1555, %v1559
      %v1562 = vshll.u32 %v1535, 16
      %v1564 = vrot.slane %v1562, 1
      %v1565 = vsel %vm1076, %v1560, %v1564
      %v1567 = vshrl.u32 %v1504, 16
      %v1569 = vshll.u32 %v1504, 16
      %v1571 = vrot.slane %v1569, 1
      %v1572 = vor.u32 %v1567, %v1571
      %v1574 = vshll.u32 %v1536, 16
      %v1576 = vrot.slane %v1574, 1
      %v1577 = vsel %vm1076, %v1572, %v1576
      %v1579 = vshrl.u32 %v1505, 16
      %v1581 = vshll.u32 %v1505, 16
      %v1583 = vrot.slane %v1581, 1
      %v1584 = vor.u32 %v1579, %v1583
      %v1586 = vshll.u32 %v1537, 16
      %v1588 = vrot.slane %v1586, 1
      %v1589 = vsel %vm1076, %v1584, %v1588
      %v1591 = vshrl.u32 %v1506, 16
      %v1593 = vshll.u32 %v1506, 16
      %v1595 = vrot.slane %v1593, 1
      %v1596 = vor.u32 %v1591, %v1595
      %v1598 = vshll.u32 %v1538, 16
      %v1600 = vrot.slane %v1598, 1
      %v1601 = vsel %vm1076, %v1596, %v1600
      %v1603 = vshrl.u32 %v1507, 16
      %v1605 = vshll.u32 %v1507, 16
      %v1607 = vrot.slane %v1605, 1
      %v1608 = vor.u32 %v1603, %v1607
      %v1610 = vshll.u32 %v1539, 16
      %v1612 = vrot.slane %v1610, 1
      %v1613 = vsel %vm1076, %v1608, %v1612
      %v1615 = vshrl.u32 %v1508, 16
      %v1617 = vshll.u32 %v1508, 16
      %v1619 = vrot.slane %v1617, 1
      %v1620 = vor.u32 %v1615, %v1619
      %v1622 = vshll.u32 %v1540, 16
      %v1624 = vrot.slane %v1622, 1
      %v1625 = vsel %vm1076, %v1620, %v1624
      %v1627 = vshrl.u32 %v1509, 16
      %v1629 = vshll.u32 %v1509, 16
      %v1631 = vrot.slane %v1629, 1
      %v1632 = vor.u32 %v1627, %v1631
      %v1634 = vshll.u32 %v1541, 16
      %v1636 = vrot.slane %v1634, 1
      %v1637 = vsel %vm1076, %v1632, %v1636
      %v1654 = vunpack.c.l.b16 %v996
      %v1655 = vunpack.c.l.b16 %v997
      %v1656 = vunpack.c.l.b16 %v998
      %v1657 = vunpack.c.l.b16 %v999
      %v1658 = vunpack.c.l.b16 %v1000
      %v1659 = vunpack.c.l.b16 %v1001
      %v1660 = vunpack.c.l.b16 %v1002
      %v1661 = vunpack.c.l.b16 %v1003
      %v1662 = vpack.c.b16 %v1487, %v1654
      %v1663 = vpack.c.b16 %v1489, %v1655
      %v1664 = vpack.c.b16 %v1491, %v1656
      %v1665 = vpack.c.b16 %v1493, %v1657
      %v1666 = vpack.c.b16 %v1495, %v1658
      %v1667 = vpack.c.b16 %v1497, %v1659
      %v1668 = vpack.c.b16 %v1499, %v1660
      %v1669 = vpack.c.b16 %v1501, %v1661
      %v1670 = vrot.slane %v1662, 1
      %v1671 = vrot.slane %v1534, 1
      %v1672 = vsel %vm1205, %v1670, %v1671
      %v1673 = vrot.slane %v1663, 1
      %v1674 = vrot.slane %v1535, 1
      %v1675 = vsel %vm1205, %v1673, %v1674
      %v1676 = vrot.slane %v1664, 1
      %v1677 = vrot.slane %v1536, 1
      %v1678 = vsel %vm1205, %v1676, %v1677
      %v1679 = vrot.slane %v1665, 1
      %v1680 = vrot.slane %v1537, 1
      %v1681 = vsel %vm1205, %v1679, %v1680
      %v1682 = vrot.slane %v1666, 1
      %v1683 = vrot.slane %v1538, 1
      %v1684 = vsel %vm1205, %v1682, %v1683
      %v1685 = vrot.slane %v1667, 1
      %v1686 = vrot.slane %v1539, 1
      %v1687 = vsel %vm1205, %v1685, %v1686
      %v1688 = vrot.slane %v1668, 1
      %v1689 = vrot.slane %v1540, 1
      %v1690 = vsel %vm1205, %v1688, %v1689
      %v1691 = vrot.slane %v1669, 1
      %v1692 = vrot.slane %v1541, 1
      %v1693 = vsel %vm1205, %v1691, %v1692
      %v1702 = vld [vmem:[%s1] sm:$0xf]
      %v1703 = vld [vmem:[%s1 + $0x4] sm:$0xf]
      %v1704 = vld [vmem:[%s1 + $0x8] sm:$0xf]
      %v1705 = vld [vmem:[%s1 + $0xc] sm:$0xf]
      %v1706 = vld [vmem:[%s1 + $0x10] sm:$0xf]
      %v1707 = vld [vmem:[%s1 + $0x14] sm:$0xf]
      %v1708 = vld [vmem:[%s1 + $0x18] sm:$0xf]
      %v1709 = vld [vmem:[%s1 + $0x1c] sm:$0xf]
      %v1710 = vld [vmem:[%s1 + $0x20] sm:$0xf]
      %v1711 = vld [vmem:[%s1 + $0x24] sm:$0xf]
      %v1712 = vld [vmem:[%s1 + $0x28] sm:$0xf]
      %v1713 = vld [vmem:[%s1 + $0x2c] sm:$0xf]
      %v1714 = vld [vmem:[%s1 + $0x30] sm:$0xf]
      %v1715 = vld [vmem:[%s1 + $0x34] sm:$0xf]
      %v1716 = vld [vmem:[%s1 + $0x38] sm:$0xf]
      %v1717 = vld [vmem:[%s1 + $0x3c] sm:$0xf]
      %v1718 = vld [vmem:[%s1 + $0x40] sm:$0xf]
      %v1719 = vld [vmem:[%s1 + $0x44] sm:$0xf]
      %v1720 = vld [vmem:[%s1 + $0x48] sm:$0xf]
      %v1721 = vld [vmem:[%s1 + $0x4c] sm:$0xf]
      %v1722 = vld [vmem:[%s1 + $0x50] sm:$0xf]
      %v1723 = vld [vmem:[%s1 + $0x54] sm:$0xf]
      %v1724 = vld [vmem:[%s1 + $0x58] sm:$0xf]
      %v1725 = vld [vmem:[%s1 + $0x5c] sm:$0xf]
      %v1726 = vld [vmem:[%s1 + $0x60] sm:$0xf]
      %v1727 = vld [vmem:[%s1 + $0x64] sm:$0xf]
      %v1728 = vld [vmem:[%s1 + $0x68] sm:$0xf]
      %v1729 = vld [vmem:[%s1 + $0x6c] sm:$0xf]
      %v1730 = vld [vmem:[%s1 + $0x70] sm:$0xf]
      %v1731 = vld [vmem:[%s1 + $0x74] sm:$0xf]
      %v1732 = vld [vmem:[%s1 + $0x78] sm:$0xf]
      %v1733 = vld [vmem:[%s1 + $0x7c] sm:$0xf]
      %v1734 = vld [vmem:[%s1 + $0x80] sm:$0xf]
      %v1735 = vld [vmem:[%s1 + $0x84] sm:$0xf]
      %v1736 = vld [vmem:[%s1 + $0x88] sm:$0xf]
      %v1737 = vld [vmem:[%s1 + $0x8c] sm:$0xf]
      %v1738 = vld [vmem:[%s1 + $0x90] sm:$0xf]
      %v1739 = vld [vmem:[%s1 + $0x94] sm:$0xf]
      %v1740 = vld [vmem:[%s1 + $0x98] sm:$0xf]
      %v1741 = vld [vmem:[%s1 + $0x9c] sm:$0xf]
      %v1742 = vld [vmem:[%s1 + $0xa0] sm:$0xf]
      %v1743 = vld [vmem:[%s1 + $0xa4] sm:$0xf]
      %v1744 = vld [vmem:[%s1 + $0xa8] sm:$0xf]
      %v1745 = vld [vmem:[%s1 + $0xac] sm:$0xf]
      %v1746 = vld [vmem:[%s1 + $0xb0] sm:$0xf]
      %v1747 = vld [vmem:[%s1 + $0xb4] sm:$0xf]
      %v1748 = vld [vmem:[%s1 + $0xb8] sm:$0xf]
      %v1749 = vld [vmem:[%s1 + $0xbc] sm:$0xf]
      %v1750 = vld [vmem:[%s1 + $0xc0] sm:$0xf]
      %v1751 = vld [vmem:[%s1 + $0xc4] sm:$0xf]
      %v1752 = vld [vmem:[%s1 + $0xc8] sm:$0xf]
      %v1753 = vld [vmem:[%s1 + $0xcc] sm:$0xf]
      %v1754 = vld [vmem:[%s1 + $0xd0] sm:$0xf]
      %v1755 = vld [vmem:[%s1 + $0xd4] sm:$0xf]
      %v1756 = vld [vmem:[%s1 + $0xd8] sm:$0xf]
      %v1757 = vld [vmem:[%s1 + $0xdc] sm:$0xf]
      %v1758 = vld [vmem:[%s1 + $0xe0] sm:$0xf]
      %v1759 = vld [vmem:[%s1 + $0xe4] sm:$0xf]
      %v1760 = vld [vmem:[%s1 + $0xe8] sm:$0xf]
      %v1761 = vld [vmem:[%s1 + $0xec] sm:$0xf]
      %v1762 = vld [vmem:[%s1 + $0xf0] sm:$0xf]
      %v1763 = vld [vmem:[%s1 + $0xf4] sm:$0xf]
      %v1764 = vld [vmem:[%s1 + $0xf8] sm:$0xf]
      %v1765 = vld [vmem:[%s1 + $0xfc] sm:$0xf]
      %v1766 = vld [vmem:[%s1 + $0x100] sm:$0xf]
      %v1767 = vld [vmem:[%s1 + $0x104] sm:$0xf]
      %v1768 = vld [vmem:[%s1 + $0x108] sm:$0xf]
      %v1769 = vld [vmem:[%s1 + $0x10c] sm:$0xf]
      %v1770 = vld [vmem:[%s1 + $0x110] sm:$0xf]
      %v1771 = vld [vmem:[%s1 + $0x114] sm:$0xf]
      %v1772 = vld [vmem:[%s1 + $0x118] sm:$0xf]
      %v1773 = vld [vmem:[%s1 + $0x11c] sm:$0xf]
      %v1774 = vld [vmem:[%s1 + $0x120] sm:$0xf]
      %v1775 = vld [vmem:[%s1 + $0x124] sm:$0xf]
      %v1776 = vld [vmem:[%s1 + $0x128] sm:$0xf]
      %v1777 = vld [vmem:[%s1 + $0x12c] sm:$0xf]
      %v1778 = vld [vmem:[%s1 + $0x130] sm:$0xf]
      %v1779 = vld [vmem:[%s1 + $0x134] sm:$0xf]
      %v1780 = vld [vmem:[%s1 + $0x138] sm:$0xf]
      %v1781 = vld [vmem:[%s1 + $0x13c] sm:$0xf]
      %v1782 = vld [vmem:[%s1 + $0x140] sm:$0xf]
      %v1783 = vld [vmem:[%s1 + $0x144] sm:$0xf]
      %v1784 = vld [vmem:[%s1 + $0x148] sm:$0xf]
      %v1785 = vld [vmem:[%s1 + $0x14c] sm:$0xf]
      %v1786 = vld [vmem:[%s1 + $0x150] sm:$0xf]
      %v1787 = vld [vmem:[%s1 + $0x154] sm:$0xf]
      %v1788 = vld [vmem:[%s1 + $0x158] sm:$0xf]
      %v1789 = vld [vmem:[%s1 + $0x15c] sm:$0xf]
      %v1790 = vld [vmem:[%s1 + $0x160] sm:$0xf]
      %v1791 = vld [vmem:[%s1 + $0x164] sm:$0xf]
      %v1792 = vld [vmem:[%s1 + $0x168] sm:$0xf]
      %v1793 = vld [vmem:[%s1 + $0x16c] sm:$0xf]
      %v1794 = vld [vmem:[%s1 + $0x170] sm:$0xf]
      %v1795 = vld [vmem:[%s1 + $0x174] sm:$0xf]
      %v1796 = vld [vmem:[%s1 + $0x178] sm:$0xf]
      %v1797 = vld [vmem:[%s1 + $0x17c] sm:$0xf]
      %v1798 = vld [vmem:[%s1 + $0x180] sm:$0xf]
      %v1799 = vld [vmem:[%s1 + $0x184] sm:$0xf]
      %v1800 = vld [vmem:[%s1 + $0x188] sm:$0xf]
      %v1801 = vld [vmem:[%s1 + $0x18c] sm:$0xf]
      %v1802 = vld [vmem:[%s1 + $0x190] sm:$0xf]
      %v1803 = vld [vmem:[%s1 + $0x194] sm:$0xf]
      %v1804 = vld [vmem:[%s1 + $0x198] sm:$0xf]
      %v1805 = vld [vmem:[%s1 + $0x19c] sm:$0xf]
      %v1806 = vld [vmem:[%s1 + $0x1a0] sm:$0xf]
      %v1807 = vld [vmem:[%s1 + $0x1a4] sm:$0xf]
      %v1808 = vld [vmem:[%s1 + $0x1a8] sm:$0xf]
      %v1809 = vld [vmem:[%s1 + $0x1ac] sm:$0xf]
      %v1810 = vld [vmem:[%s1 + $0x1b0] sm:$0xf]
      %v1811 = vld [vmem:[%s1 + $0x1b4] sm:$0xf]
      %v1812 = vld [vmem:[%s1 + $0x1b8] sm:$0xf]
      %v1813 = vld [vmem:[%s1 + $0x1bc] sm:$0xf]
      %v1814 = vld [vmem:[%s1 + $0x1c0] sm:$0xf]
      %v1815 = vld [vmem:[%s1 + $0x1c4] sm:$0xf]
      %v1816 = vld [vmem:[%s1 + $0x1c8] sm:$0xf]
      %v1817 = vld [vmem:[%s1 + $0x1cc] sm:$0xf]
      %v1818 = vld [vmem:[%s1 + $0x1d0] sm:$0xf]
      %v1819 = vld [vmem:[%s1 + $0x1d4] sm:$0xf]
      %v1820 = vld [vmem:[%s1 + $0x1d8] sm:$0xf]
      %v1821 = vld [vmem:[%s1 + $0x1dc] sm:$0xf]
      %v1822 = vld [vmem:[%s1 + $0x1e0] sm:$0xf]
      %v1823 = vld [vmem:[%s1 + $0x1e4] sm:$0xf]
      %v1824 = vld [vmem:[%s1 + $0x1e8] sm:$0xf]
      %v1825 = vld [vmem:[%s1 + $0x1ec] sm:$0xf]
      %v1826 = vld [vmem:[%s1 + $0x1f0] sm:$0xf]
      %v1827 = vld [vmem:[%s1 + $0x1f4] sm:$0xf]
      %v1828 = vld [vmem:[%s1 + $0x1f8] sm:$0xf]
      %v1829 = vld [vmem:[%s1 + $0x1fc] sm:$0xf]
      %v1830 = vld [vmem:[%s1 + $0x200] sm:$0xf]
      %v1831 = vld [vmem:[%s1 + $0x204] sm:$0xf]
      %v1832 = vld [vmem:[%s1 + $0x208] sm:$0xf]
      %v1833 = vld [vmem:[%s1 + $0x20c] sm:$0xf]
      %v1834 = vld [vmem:[%s1 + $0x210] sm:$0xf]
      %v1835 = vld [vmem:[%s1 + $0x214] sm:$0xf]
      %v1836 = vld [vmem:[%s1 + $0x218] sm:$0xf]
      %v1837 = vld [vmem:[%s1 + $0x21c] sm:$0xf]
      %v1838 = vld [vmem:[%s1 + $0x220] sm:$0xf]
      %v1839 = vld [vmem:[%s1 + $0x224] sm:$0xf]
      %v1840 = vld [vmem:[%s1 + $0x228] sm:$0xf]
      %v1841 = vld [vmem:[%s1 + $0x22c] sm:$0xf]
      %v1842 = vld [vmem:[%s1 + $0x230] sm:$0xf]
      %v1843 = vld [vmem:[%s1 + $0x234] sm:$0xf]
      %v1844 = vld [vmem:[%s1 + $0x238] sm:$0xf]
      %v1845 = vld [vmem:[%s1 + $0x23c] sm:$0xf]
      %v1990 = vunpack.c.l.b16 %v1702
      %v1991 = vunpack.c.l.b16 %v1703
      %v1992 = vunpack.c.l.b16 %v1704
      %v1993 = vunpack.c.l.b16 %v1705
      %v1994 = vunpack.c.l.b16 %v1706
      %v1995 = vunpack.c.l.b16 %v1707
      %v1996 = vunpack.c.l.b16 %v1708
      %v1997 = vunpack.c.l.b16 %v1709
      %v1998 = vunpack.c.l.b16 %v1710
      %v1999 = vunpack.c.l.b16 %v1711
      %v2000 = vunpack.c.l.b16 %v1712
      %v2001 = vunpack.c.l.b16 %v1713
      %v2002 = vunpack.c.l.b16 %v1714
      %v2003 = vunpack.c.l.b16 %v1715
      %v2004 = vunpack.c.l.b16 %v1716
      %v2005 = vunpack.c.l.b16 %v1717
      %v2006 = vunpack.c.l.b16 %v1718
      %v2007 = vunpack.c.l.b16 %v1719
      %v2008 = vunpack.c.l.b16 %v1720
      %v2009 = vunpack.c.l.b16 %v1721
      %v2010 = vunpack.c.l.b16 %v1722
      %v2011 = vunpack.c.l.b16 %v1723
      %v2012 = vunpack.c.l.b16 %v1724
      %v2013 = vunpack.c.l.b16 %v1725
      %v2014 = vunpack.c.l.b16 %v1726
      %v2015 = vunpack.c.l.b16 %v1727
      %v2016 = vunpack.c.l.b16 %v1728
      %v2017 = vunpack.c.l.b16 %v1729
      %v2018 = vunpack.c.l.b16 %v1730
      %v2019 = vunpack.c.l.b16 %v1731
      %v2020 = vunpack.c.l.b16 %v1732
      %v2021 = vunpack.c.l.b16 %v1733
      %v2022 = vunpack.c.l.b16 %v1734
      %v2023 = vunpack.c.l.b16 %v1735
      %v2024 = vunpack.c.l.b16 %v1736
      %v2025 = vunpack.c.l.b16 %v1737
      %v2026 = vunpack.c.l.b16 %v1738
      %v2027 = vunpack.c.l.b16 %v1739
      %v2028 = vunpack.c.l.b16 %v1740
      %v2029 = vunpack.c.l.b16 %v1741
      %v2030 = vunpack.c.l.b16 %v1742
      %v2031 = vunpack.c.l.b16 %v1743
      %v2032 = vunpack.c.l.b16 %v1744
      %v2033 = vunpack.c.l.b16 %v1745
      %v2034 = vunpack.c.l.b16 %v1746
      %v2035 = vunpack.c.l.b16 %v1747
      %v2036 = vunpack.c.l.b16 %v1748
      %v2037 = vunpack.c.l.b16 %v1749
      %v2038 = vunpack.c.l.b16 %v1750
      %v2039 = vunpack.c.l.b16 %v1751
      %v2040 = vunpack.c.l.b16 %v1752
      %v2041 = vunpack.c.l.b16 %v1753
      %v2042 = vunpack.c.l.b16 %v1754
      %v2043 = vunpack.c.l.b16 %v1755
      %v2044 = vunpack.c.l.b16 %v1756
      %v2045 = vunpack.c.l.b16 %v1757
      %v2046 = vunpack.c.l.b16 %v1758
      %v2047 = vunpack.c.l.b16 %v1759
      %v2048 = vunpack.c.l.b16 %v1760
      %v2049 = vunpack.c.l.b16 %v1761
      %v2050 = vunpack.c.l.b16 %v1762
      %v2051 = vunpack.c.l.b16 %v1763
      %v2052 = vunpack.c.l.b16 %v1764
      %v2053 = vunpack.c.l.b16 %v1765
      %v2054 = vunpack.c.l.b16 %v1766
      %v2055 = vunpack.c.l.b16 %v1767
      %v2056 = vunpack.c.l.b16 %v1768
      %v2057 = vunpack.c.l.b16 %v1769
      %v2058 = vunpack.c.l.b16 %v1770
      %v2059 = vunpack.c.l.b16 %v1771
      %v2060 = vunpack.c.l.b16 %v1772
      %v2061 = vunpack.c.l.b16 %v1773
      %v2062 = vunpack.c.l.b16 %v1774
      %v2063 = vunpack.c.l.b16 %v1775
      %v2064 = vunpack.c.l.b16 %v1776
      %v2065 = vunpack.c.l.b16 %v1777
      %v2066 = vunpack.c.l.b16 %v1778
      %v2067 = vunpack.c.l.b16 %v1779
      %v2068 = vunpack.c.l.b16 %v1780
      %v2069 = vunpack.c.l.b16 %v1781
      %v2070 = vunpack.c.l.b16 %v1782
      %v2071 = vunpack.c.l.b16 %v1783
      %v2072 = vunpack.c.l.b16 %v1784
      %v2073 = vunpack.c.l.b16 %v1785
      %v2074 = vunpack.c.l.b16 %v1786
      %v2075 = vunpack.c.l.b16 %v1787
      %v2076 = vunpack.c.l.b16 %v1788
      %v2077 = vunpack.c.l.b16 %v1789
      %v2078 = vunpack.c.l.b16 %v1790
      %v2079 = vunpack.c.l.b16 %v1791
      %v2080 = vunpack.c.l.b16 %v1792
      %v2081 = vunpack.c.l.b16 %v1793
      %v2082 = vunpack.c.l.b16 %v1794
      %v2083 = vunpack.c.l.b16 %v1795
      %v2084 = vunpack.c.l.b16 %v1796
      %v2085 = vunpack.c.l.b16 %v1797
      %v2086 = vunpack.c.l.b16 %v1798
      %v2087 = vunpack.c.l.b16 %v1799
      %v2088 = vunpack.c.l.b16 %v1800
      %v2089 = vunpack.c.l.b16 %v1801
      %v2090 = vunpack.c.l.b16 %v1802
      %v2091 = vunpack.c.l.b16 %v1803
      %v2092 = vunpack.c.l.b16 %v1804
      %v2093 = vunpack.c.l.b16 %v1805
      %v2094 = vunpack.c.l.b16 %v1806
      %v2095 = vunpack.c.l.b16 %v1807
      %v2096 = vunpack.c.l.b16 %v1808
      %v2097 = vunpack.c.l.b16 %v1809
      %v2098 = vunpack.c.l.b16 %v1810
      %v2099 = vunpack.c.l.b16 %v1811
      %v2100 = vunpack.c.l.b16 %v1812
      %v2101 = vunpack.c.l.b16 %v1813
      %v2102 = vunpack.c.l.b16 %v1814
      %v2103 = vunpack.c.l.b16 %v1815
      %v2104 = vunpack.c.l.b16 %v1816
      %v2105 = vunpack.c.l.b16 %v1817
      %v2106 = vunpack.c.l.b16 %v1818
      %v2107 = vunpack.c.l.b16 %v1819
      %v2108 = vunpack.c.l.b16 %v1820
      %v2109 = vunpack.c.l.b16 %v1821
      %v2110 = vunpack.c.l.b16 %v1822
      %v2111 = vunpack.c.l.b16 %v1823
      %v2112 = vunpack.c.l.b16 %v1824
      %v2113 = vunpack.c.l.b16 %v1825
      %v2114 = vunpack.c.l.b16 %v1826
      %v2115 = vunpack.c.l.b16 %v1827
      %v2116 = vunpack.c.l.b16 %v1828
      %v2117 = vunpack.c.l.b16 %v1829
      %v2118 = vunpack.c.l.b16 %v1830
      %v2119 = vunpack.c.l.b16 %v1831
      %v2120 = vunpack.c.l.b16 %v1832
      %v2121 = vunpack.c.l.b16 %v1833
      %v2122 = vunpack.c.l.b16 %v1834
      %v2123 = vunpack.c.l.b16 %v1835
      %v2124 = vunpack.c.l.b16 %v1836
      %v2125 = vunpack.c.l.b16 %v1837
      %v2126 = vunpack.c.l.b16 %v1838
      %v2127 = vunpack.c.l.b16 %v1839
      %v2128 = vunpack.c.l.b16 %v1840
      %v2129 = vunpack.c.l.b16 %v1841
      %v2130 = vunpack.c.l.b16 %v1842
      %v2131 = vunpack.c.l.b16 %v1843
      %v2132 = vunpack.c.l.b16 %v1844
      %v2133 = vunpack.c.l.b16 %v1845
      %v2134 = vpack.c.b16 %v1991, %v1990
      %v2135 = vpack.c.b16 %v1993, %v1992
      %v2136 = vpack.c.b16 %v1995, %v1994
      %v2137 = vpack.c.b16 %v1997, %v1996
      %v2138 = vpack.c.b16 %v1999, %v1998
      %v2139 = vpack.c.b16 %v2001, %v2000
      %v2140 = vpack.c.b16 %v2003, %v2002
      %v2141 = vpack.c.b16 %v2005, %v2004
      %v2142 = vpack.c.b16 %v2007, %v2006
      %v2143 = vpack.c.b16 %v2009, %v2008
      %v2144 = vpack.c.b16 %v2011, %v2010
      %v2145 = vpack.c.b16 %v2013, %v2012
      %v2146 = vpack.c.b16 %v2015, %v2014
      %v2147 = vpack.c.b16 %v2017, %v2016
      %v2148 = vpack.c.b16 %v2019, %v2018
      %v2149 = vpack.c.b16 %v2021, %v2020
      %v2150 = vpack.c.b16 %v2023, %v2022
      %v2151 = vpack.c.b16 %v2025, %v2024
      %v2152 = vpack.c.b16 %v2027, %v2026
      %v2153 = vpack.c.b16 %v2029, %v2028
      %v2154 = vpack.c.b16 %v2031, %v2030
      %v2155 = vpack.c.b16 %v2033, %v2032
      %v2156 = vpack.c.b16 %v2035, %v2034
      %v2157 = vpack.c.b16 %v2037, %v2036
      %v2158 = vpack.c.b16 %v2039, %v2038
      %v2159 = vpack.c.b16 %v2041, %v2040
      %v2160 = vpack.c.b16 %v2043, %v2042
      %v2161 = vpack.c.b16 %v2045, %v2044
      %v2162 = vpack.c.b16 %v2047, %v2046
      %v2163 = vpack.c.b16 %v2049, %v2048
      %v2164 = vpack.c.b16 %v2051, %v2050
      %v2165 = vpack.c.b16 %v2053, %v2052
      %v2166 = vpack.c.b16 %v2055, %v2054
      %v2167 = vpack.c.b16 %v2057, %v2056
      %v2168 = vpack.c.b16 %v2059, %v2058
      %v2169 = vpack.c.b16 %v2061, %v2060
      %v2170 = vpack.c.b16 %v2063, %v2062
      %v2171 = vpack.c.b16 %v2065, %v2064
      %v2172 = vpack.c.b16 %v2067, %v2066
      %v2173 = vpack.c.b16 %v2069, %v2068
      %v2174 = vpack.c.b16 %v2071, %v2070
      %v2175 = vpack.c.b16 %v2073, %v2072
      %v2176 = vpack.c.b16 %v2075, %v2074
      %v2177 = vpack.c.b16 %v2077, %v2076
      %v2178 = vpack.c.b16 %v2079, %v2078
      %v2179 = vpack.c.b16 %v2081, %v2080
      %v2180 = vpack.c.b16 %v2083, %v2082
      %v2181 = vpack.c.b16 %v2085, %v2084
      %v2182 = vpack.c.b16 %v2087, %v2086
      %v2183 = vpack.c.b16 %v2089, %v2088
      %v2184 = vpack.c.b16 %v2091, %v2090
      %v2185 = vpack.c.b16 %v2093, %v2092
      %v2186 = vpack.c.b16 %v2095, %v2094
      %v2187 = vpack.c.b16 %v2097, %v2096
      %v2188 = vpack.c.b16 %v2099, %v2098
      %v2189 = vpack.c.b16 %v2101, %v2100
      %v2190 = vpack.c.b16 %v2103, %v2102
      %v2191 = vpack.c.b16 %v2105, %v2104
      %v2192 = vpack.c.b16 %v2107, %v2106
      %v2193 = vpack.c.b16 %v2109, %v2108
      %v2194 = vpack.c.b16 %v2111, %v2110
      %v2195 = vpack.c.b16 %v2113, %v2112
      %v2196 = vpack.c.b16 %v2115, %v2114
      %v2197 = vpack.c.b16 %v2117, %v2116
      %v2198 = vpack.c.b16 %v2119, %v2118
      %v2199 = vpack.c.b16 %v2121, %v2120
      %v2200 = vpack.c.b16 %v2123, %v2122
      %v2201 = vpack.c.b16 %v2125, %v2124
      %v2202 = vpack.c.b16 %v2127, %v2126
      %v2203 = vpack.c.b16 %v2129, %v2128
      %v2204 = vpack.c.b16 %v2131, %v2130
      %v2205 = vpack.c.b16 %v2133, %v2132
      %2278 = vmatprep.subr.bf16.mxu0 0
      %2279 = vmatpush1.bf16.msra.mxu0 %v2134
      %2280 = vmatprep.subr.bf16.mxu0 0
      %2281 = vmatpush1.bf16.msra.mxu0 %v2135
      %2282 = vmatprep.subr.bf16.mxu0 0
      %2283 = vmatpush1.bf16.msra.mxu0 %v2136
      %2284 = vmatprep.subr.bf16.mxu0 0
      %2285 = vmatpush1.bf16.msra.mxu0 %v2137
      %2286 = vmatprep.subr.bf16.mxu0 0
      %2287 = vmatpush1.bf16.msra.mxu0 %v2138
      %2288 = vmatprep.subr.bf16.mxu0 0
      %2289 = vmatpush1.bf16.msra.mxu0 %v2139
      %2290 = vmatprep.subr.bf16.mxu0 0
      %2291 = vmatpush1.bf16.msra.mxu0 %v2140
      %2292 = vmatprep.subr.bf16.mxu0 0
      %2293 = vmatpush1.bf16.msra.mxu0 %v2141
      %2294 = vmatprep.subr.bf16.mxu0 0
      %2295 = vmatpush1.bf16.msra.mxu0 %v2142
      %2296 = vmatprep.subr.bf16.mxu0 0
      %2297 = vmatpush1.bf16.msra.mxu0 %v2143
      %2298 = vmatprep.subr.bf16.mxu0 0
      %2299 = vmatpush1.bf16.msra.mxu0 %v2144
      %2300 = vmatprep.subr.bf16.mxu0 0
      %2301 = vmatpush1.bf16.msra.mxu0 %v2145
      %2302 = vmatprep.subr.bf16.mxu0 0
      %2303 = vmatpush1.bf16.msra.mxu0 %v2146
      %2304 = vmatprep.subr.bf16.mxu0 0
      %2305 = vmatpush1.bf16.msra.mxu0 %v2147
      %2306 = vmatprep.subr.bf16.mxu0 0
      %2307 = vmatpush1.bf16.msra.mxu0 %v2148
      %2308 = vmatprep.subr.bf16.mxu0 0
      %2309 = vmatpush1.bf16.msra.mxu0 %v2149
      %2310 = vmatprep.mubr.bf16.mxu0 %v1088
      %2311 = vmatmul.mubr.bf16.gmra.mrb[0].mxu0 %v1036
      %v2312 = vpop.f32.mrb[0].mxu0
      %v2313 = vadd.f32 0.0, %v2312
      %v2314 = vpop.f32.mrb[0].mxu0
      %v2315 = vpop.f32.mrb[0].mxu0
      %v2316 = vadd.f32 0.0, %v2315
      %v2317 = vpop.f32.mrb[0].mxu0
      %2318 = vmatprep.mubr.bf16.mxu0 %v1100
      %2319 = vmatmul.mubr.bf16.gmra.mrb[0].mxu0 %v1037
      %v2320 = vpop.f32.mrb[0].mxu0
      %v2321 = vadd.f32 0.0, %v2320
      %v2322 = vpop.f32.mrb[0].mxu0
      %v2323 = vpop.f32.mrb[0].mxu0
      %v2324 = vadd.f32 0.0, %v2323
      %v2325 = vpop.f32.mrb[0].mxu0
      %2326 = vmatprep.mubr.bf16.mxu0 %v1112
      %2327 = vmatmul.mubr.bf16.gmra.mrb[0].mxu0 %v1038
      %v2328 = vpop.f32.mrb[0].mxu0
      %v2329 = vadd.f32 0.0, %v2328
      %v2330 = vpop.f32.mrb[0].mxu0
      %v2331 = vpop.f32.mrb[0].mxu0
      %v2332 = vadd.f32 0.0, %v2331
      %v2333 = vpop.f32.mrb[0].mxu0
      %2334 = vmatprep.mubr.bf16.mxu0 %v1124
      %2335 = vmatmul.mubr.bf16.gmra.mrb[0].mxu0 %v1039
      %v2336 = vpop.f32.mrb[0].mxu0
      %v2337 = vadd.f32 0.0, %v2336
      %v2338 = vpop.f32.mrb[0].mxu0
      %v2339 = vpop.f32.mrb[0].mxu0
      %v2340 = vadd.f32 0.0, %v2339
      %v2341 = vpop.f32.mrb[0].mxu0
      %2342 = vmatprep.mubr.bf16.mxu0 %v1136
      %2343 = vmatmul.mubr.bf16.gmra.mrb[0].mxu0 %v1040
      %v2344 = vpop.f32.mrb[0].mxu0
      %v2345 = vadd.f32 0.0, %v2344
      %v2346 = vpop.f32.mrb[0].mxu0
      %v2347 = vpop.f32.mrb[0].mxu0
      %v2348 = vadd.f32 0.0, %v2347
      %v2349 = vpop.f32.mrb[0].mxu0
      %2350 = vmatprep.mubr.bf16.mxu0 %v1148
      %2351 = vmatmul.mubr.bf16.gmra.mrb[0].mxu0 %v1041
      %v2352 = vpop.f32.mrb[0].mxu0
      %v2353 = vadd.f32 0.0, %v2352
      %v2354 = vpop.f32.mrb[0].mxu0
      %v2355 = vpop.f32.mrb[0].mxu0
      %v2356 = vadd.f32 0.0, %v2355
      %v2357 = vpop.f32.mrb[0].mxu0
      %2358 = vmatprep.mubr.bf16.mxu0 %v1160
      %2359 = vmatmul.mubr.bf16.gmra.mrb[0].mxu0 %v1042
      %v2360 = vpop.f32.mrb[0].mxu0
      %v2361 = vadd.f32 0.0, %v2360
      %v2362 = vpop.f32.mrb[0].mxu0
      %v2363 = vpop.f32.mrb[0].mxu0
      %v2364 = vadd.f32 0.0, %v2363
      %v2365 = vpop.f32.mrb[0].mxu0
      %2366 = vmatprep.mubr.bf16.mxu0 %v1172
      %2367 = vmatmul.mubr.bf16.gmra.mrb[0].mxu0 %v1043
      %v2368 = vpop.f32.mrb[0].mxu0
      %v2369 = vadd.f32 0.0, %v2368
      %v2370 = vpop.f32.mrb[0].mxu0
      %v2371 = vpop.f32.mrb[0].mxu0
      %v2372 = vadd.f32 0.0, %v2371
      %v2373 = vpop.f32.mrb[0].mxu0
      %2374 = vdwg.mxu0
      %2375 = vmatprep.subr.bf16.mxu0 0
      %2376 = vmatpush1.bf16.msra.mxu0 %v2150
      %2377 = vmatprep.subr.bf16.mxu0 0
      %2378 = vmatpush1.bf16.msra.mxu0 %v2151
      %2379 = vmatprep.subr.bf16.mxu0 0
      %2380 = vmatpush1.bf16.msra.mxu0 %v2152
      %2381 = vmatprep.subr.bf16.mxu0 0
      %2382 = vmatpush1.bf16.msra.mxu0 %v2153
      %2383 = vmatprep.subr.bf16.mxu0 0
      %2384 = vmatpush1.bf16.msra.mxu0 %v2154
      %2385 = vmatprep.subr.bf16.mxu0 0
      %2386 = vmatpush1.bf16.msra.mxu0 %v2155
      %2387 = vmatprep.subr.bf16.mxu0 0
      %2388 = vmatpush1.bf16.msra.mxu0 %v2156
      %2389 = vmatprep.subr.bf16.mxu0 0
      %2390 = vmatpush1.bf16.msra.mxu0 %v2157
      %2391 = vmatprep.subr.bf16.mxu0 0
      %2392 = vmatpush1.bf16.msra.mxu0 %v2158
      %2393 = vmatprep.subr.bf16.mxu0 0
      %2394 = vmatpush1.bf16.msra.mxu0 %v2159
      %2395 = vmatprep.subr.bf16.mxu0 0
      %2396 = vmatpush1.bf16.msra.mxu0 %v2160
      %2397 = vmatprep.subr.bf16.mxu0 0
      %2398 = vmatpush1.bf16.msra.mxu0 %v2161
      %2399 = vmatprep.subr.bf16.mxu0 0
      %2400 = vmatpush1.bf16.msra.mxu0 %v2162
      %2401 = vmatprep.subr.bf16.mxu0 0
      %2402 = vmatpush1.bf16.msra.mxu0 %v2163
      %2403 = vmatprep.subr.bf16.mxu0 0
      %2404 = vmatpush1.bf16.msra.mxu0 %v2164
      %2405 = vmatprep.subr.bf16.mxu0 0
      %2406 = vmatpush1.bf16.msra.mxu0 %v2165
      %2407 = vmatprep.mubr.bf16.mxu0 %v1270
      %2408 = vmatmul.mubr.bf16.gmra.mrb[0].mxu0 %v1208
      %v2409 = vpop.f32.mrb[0].mxu0
      %v2410 = vadd.f32 %v2313, %v2409
      %v2411 = vpop.f32.mrb[0].mxu0
      %v2412 = vpop.f32.mrb[0].mxu0
      %v2413 = vadd.f32 %v2316, %v2412
      %v2414 = vpop.f32.mrb[0].mxu0
      %2415 = vmatprep.mubr.bf16.mxu0 %v1271
      %2416 = vmatmul.mubr.bf16.gmra.mrb[0].mxu0 %v1211
      %v2417 = vpop.f32.mrb[0].mxu0
      %v2418 = vadd.f32 %v2321, %v2417
      %v2419 = vpop.f32.mrb[0].mxu0
      %v2420 = vpop.f32.mrb[0].mxu0
      %v2421 = vadd.f32 %v2324, %v2420
      %v2422 = vpop.f32.mrb[0].mxu0
      %2423 = vmatprep.mubr.bf16.mxu0 %v1272
      %2424 = vmatmul.mubr.bf16.gmra.mrb[0].mxu0 %v1214
      %v2425 = vpop.f32.mrb[0].mxu0
      %v2426 = vadd.f32 %v2329, %v2425
      %v2427 = vpop.f32.mrb[0].mxu0
      %v2428 = vpop.f32.mrb[0].mxu0
      %v2429 = vadd.f32 %v2332, %v2428
      %v2430 = vpop.f32.mrb[0].mxu0
      %2431 = vmatprep.mubr.bf16.mxu0 %v1273
      %2432 = vmatmul.mubr.bf16.gmra.mrb[0].mxu0 %v1217
      %v2433 = vpop.f32.mrb[0].mxu0
      %v2434 = vadd.f32 %v2337, %v2433
      %v2435 = vpop.f32.mrb[0].mxu0
      %v2436 = vpop.f32.mrb[0].mxu0
      %v2437 = vadd.f32 %v2340, %v2436
      %v2438 = vpop.f32.mrb[0].mxu0
      %2439 = vmatprep.mubr.bf16.mxu0 %v1274
      %2440 = vmatmul.mubr.bf16.gmra.mrb[0].mxu0 %v1220
      %v2441 = vpop.f32.mrb[0].mxu0
      %v2442 = vadd.f32 %v2345, %v2441
      %v2443 = vpop.f32.mrb[0].mxu0
      %v2444 = vpop.f32.mrb[0].mxu0
      %v2445 = vadd.f32 %v2348, %v2444
      %v2446 = vpop.f32.mrb[0].mxu0
      %2447 = vmatprep.mubr.bf16.mxu0 %v1275
      %2448 = vmatmul.mubr.bf16.gmra.mrb[0].mxu0 %v1223
      %v2449 = vpop.f32.mrb[0].mxu0
      %v2450 = vadd.f32 %v2353, %v2449
      %v2451 = vpop.f32.mrb[0].mxu0
      %v2452 = vpop.f32.mrb[0].mxu0
      %v2453 = vadd.f32 %v2356, %v2452
      %v2454 = vpop.f32.mrb[0].mxu0
      %2455 = vmatprep.mubr.bf16.mxu0 %v1276
      %2456 = vmatmul.mubr.bf16.gmra.mrb[0].mxu0 %v1226
      %v2457 = vpop.f32.mrb[0].mxu0
      %v2458 = vadd.f32 %v2361, %v2457
      %v2459 = vpop.f32.mrb[0].mxu0
      %v2460 = vpop.f32.mrb[0].mxu0
      %v2461 = vadd.f32 %v2364, %v2460
      %v2462 = vpop.f32.mrb[0].mxu0
      %2463 = vmatprep.mubr.bf16.mxu0 %v1277
      %2464 = vmatmul.mubr.bf16.gmra.mrb[0].mxu0 %v1229
      %v2465 = vpop.f32.mrb[0].mxu0
      %v2466 = vadd.f32 %v2369, %v2465
      %v2467 = vpop.f32.mrb[0].mxu0
      %v2468 = vpop.f32.mrb[0].mxu0
      %v2469 = vadd.f32 %v2372, %v2468
      %v2470 = vpop.f32.mrb[0].mxu0
      %2471 = vdwg.mxu0
      %2472 = vmatprep.subr.bf16.mxu0 0
      %2473 = vmatpush1.bf16.msra.mxu0 %v2166
      %2474 = vmatprep.subr.bf16.mxu0 0
      %2475 = vmatpush1.bf16.msra.mxu0 %v2167
      %2476 = vmatprep.subr.bf16.mxu0 0
      %2477 = vmatpush1.bf16.msra.mxu0 %v2168
      %2478 = vmatprep.subr.bf16.mxu0 0
      %2479 = vmatpush1.bf16.msra.mxu0 %v2169
      %2480 = vmatprep.subr.bf16.mxu0 0
      %2481 = vmatpush1.bf16.msra.mxu0 %v2170
      %2482 = vmatprep.subr.bf16.mxu0 0
      %2483 = vmatpush1.bf16.msra.mxu0 %v2171
      %2484 = vmatprep.subr.bf16.mxu0 0
      %2485 = vmatpush1.bf16.msra.mxu0 %v2172
      %2486 = vmatprep.subr.bf16.mxu0 0
      %2487 = vmatpush1.bf16.msra.mxu0 %v2173
      %2488 = vmatprep.subr.bf16.mxu0 0
      %2489 = vmatpush1.bf16.msra.mxu0 %v2174
      %2490 = vmatprep.subr.bf16.mxu0 0
      %2491 = vmatpush1.bf16.msra.mxu0 %v2175
      %2492 = vmatprep.subr.bf16.mxu0 0
      %2493 = vmatpush1.bf16.msra.mxu0 %v2176
      %2494 = vmatprep.subr.bf16.mxu0 0
      %2495 = vmatpush1.bf16.msra.mxu0 %v2177
      %2496 = vmatprep.subr.bf16.mxu0 0
      %2497 = vmatpush1.bf16.msra.mxu0 %v2178
      %2498 = vmatprep.subr.bf16.mxu0 0
      %2499 = vmatpush1.bf16.msra.mxu0 %v2179
      %2500 = vmatprep.subr.bf16.mxu0 0
      %2501 = vmatpush1.bf16.msra.mxu0 %v2180
      %2502 = vmatprep.subr.bf16.mxu0 0
      %2503 = vmatpush1.bf16.msra.mxu0 %v2181
      %2504 = vmatprep.mubr.bf16.mxu0 %v1440
      %2505 = vmatmul.mubr.bf16.gmra.mrb[0].mxu0 %v1321
      %v2506 = vpop.f32.mrb[0].mxu0
      %v2507 = vadd.f32 %v2410, %v2506
      %v2508 = vpop.f32.mrb[0].mxu0
      %v2509 = vpop.f32.mrb[0].mxu0
      %v2510 = vadd.f32 %v2413, %v2509
      %v2511 = vpop.f32.mrb[0].mxu0
      %2512 = vmatprep.mubr.bf16.mxu0 %v1443
      %2513 = vmatmul.mubr.bf16.gmra.mrb[0].mxu0 %v1333
      %v2514 = vpop.f32.mrb[0].mxu0
      %v2515 = vadd.f32 %v2418, %v2514
      %v2516 = vpop.f32.mrb[0].mxu0
      %v2517 = vpop.f32.mrb[0].mxu0
      %v2518 = vadd.f32 %v2421, %v2517
      %v2519 = vpop.f32.mrb[0].mxu0
      %2520 = vmatprep.mubr.bf16.mxu0 %v1446
      %2521 = vmatmul.mubr.bf16.gmra.mrb[0].mxu0 %v1345
      %v2522 = vpop.f32.mrb[0].mxu0
      %v2523 = vadd.f32 %v2426, %v2522
      %v2524 = vpop.f32.mrb[0].mxu0
      %v2525 = vpop.f32.mrb[0].mxu0
      %v2526 = vadd.f32 %v2429, %v2525
      %v2527 = vpop.f32.mrb[0].mxu0
      %2528 = vmatprep.mubr.bf16.mxu0 %v1449
      %2529 = vmatmul.mubr.bf16.gmra.mrb[0].mxu0 %v1357
      %v2530 = vpop.f32.mrb[0].mxu0
      %v2531 = vadd.f32 %v2434, %v2530
      %v2532 = vpop.f32.mrb[0].mxu0
      %v2533 = vpop.f32.mrb[0].mxu0
      %v2534 = vadd.f32 %v2437, %v2533
      %v2535 = vpop.f32.mrb[0].mxu0
      %2536 = vmatprep.mubr.bf16.mxu0 %v1452
      %2537 = vmatmul.mubr.bf16.gmra.mrb[0].mxu0 %v1369
      %v2538 = vpop.f32.mrb[0].mxu0
      %v2539 = vadd.f32 %v2442, %v2538
      %v2540 = vpop.f32.mrb[0].mxu0
      %v2541 = vpop.f32.mrb[0].mxu0
      %v2542 = vadd.f32 %v2445, %v2541
      %v2543 = vpop.f32.mrb[0].mxu0
      %2544 = vmatprep.mubr.bf16.mxu0 %v1455
      %2545 = vmatmul.mubr.bf16.gmra.mrb[0].mxu0 %v1381
      %v2546 = vpop.f32.mrb[0].mxu0
      %v2547 = vadd.f32 %v2450, %v2546
      %v2548 = vpop.f32.mrb[0].mxu0
      %v2549 = vpop.f32.mrb[0].mxu0
      %v2550 = vadd.f32 %v2453, %v2549
      %v2551 = vpop.f32.mrb[0].mxu0
      %2552 = vmatprep.mubr.bf16.mxu0 %v1458
      %2553 = vmatmul.mubr.bf16.gmra.mrb[0].mxu0 %v1393
      %v2554 = vpop.f32.mrb[0].mxu0
      %v2555 = vadd.f32 %v2458, %v2554
      %v2556 = vpop.f32.mrb[0].mxu0
      %v2557 = vpop.f32.mrb[0].mxu0
      %v2558 = vadd.f32 %v2461, %v2557
      %v2559 = vpop.f32.mrb[0].mxu0
      %2560 = vmatprep.mubr.bf16.mxu0 %v1461
      %2561 = vmatmul.mubr.bf16.gmra.mrb[0].mxu0 %v1405
      %v2562 = vpop.f32.mrb[0].mxu0
      %v2563 = vadd.f32 %v2466, %v2562
      %v2564 = vpop.f32.mrb[0].mxu0
      %v2565 = vpop.f32.mrb[0].mxu0
      %v2566 = vadd.f32 %v2469, %v2565
      %v2567 = vpop.f32.mrb[0].mxu0
      %2568 = vdwg.mxu0
      %2569 = vmatprep.subr.bf16.mxu0 0
      %2570 = vmatpush1.bf16.msra.mxu0 %v2182
      %2571 = vmatprep.subr.bf16.mxu0 0
      %2572 = vmatpush1.bf16.msra.mxu0 %v2183
      %2573 = vmatprep.subr.bf16.mxu0 0
      %2574 = vmatpush1.bf16.msra.mxu0 %v2184
      %2575 = vmatprep.subr.bf16.mxu0 0
      %2576 = vmatpush1.bf16.msra.mxu0 %v2185
      %2577 = vmatprep.subr.bf16.mxu0 0
      %2578 = vmatpush1.bf16.msra.mxu0 %v2186
      %2579 = vmatprep.subr.bf16.mxu0 0
      %2580 = vmatpush1.bf16.msra.mxu0 %v2187
      %2581 = vmatprep.subr.bf16.mxu0 0
      %2582 = vmatpush1.bf16.msra.mxu0 %v2188
      %2583 = vmatprep.subr.bf16.mxu0 0
      %2584 = vmatpush1.bf16.msra.mxu0 %v2189
      %2585 = vmatprep.subr.bf16.mxu0 0
      %2586 = vmatpush1.bf16.msra.mxu0 %v2190
      %2587 = vmatprep.subr.bf16.mxu0 0
      %2588 = vmatpush1.bf16.msra.mxu0 %v2191
      %2589 = vmatprep.subr.bf16.mxu0 0
      %2590 = vmatpush1.bf16.msra.mxu0 %v2192
      %2591 = vmatprep.subr.bf16.mxu0 0
      %2592 = vmatpush1.bf16.msra.mxu0 %v2193
      %2593 = vmatprep.subr.bf16.mxu0 0
      %2594 = vmatpush1.bf16.msra.mxu0 %v2194
      %2595 = vmatprep.subr.bf16.mxu0 0
      %2596 = vmatpush1.bf16.msra.mxu0 %v2195
      %2597 = vmatprep.subr.bf16.mxu0 0
      %2598 = vmatpush1.bf16.msra.mxu0 %v2196
      %2599 = vmatprep.subr.bf16.mxu0 0
      %2600 = vmatpush1.bf16.msra.mxu0 %v2197
      %2601 = vmatprep.mubr.bf16.mxu0 %v1553
      %2602 = vmatmul.mubr.bf16.gmra.mrb[0].mxu0 %v1502
      %v2603 = vpop.f32.mrb[0].mxu0
      %v2604 = vadd.f32 %v2507, %v2603
      %v2605 = vpop.f32.mrb[0].mxu0
      %v2606 = vpop.f32.mrb[0].mxu0
      %v2607 = vadd.f32 %v2510, %v2606
      %v2608 = vpop.f32.mrb[0].mxu0
      %2609 = vmatprep.mubr.bf16.mxu0 %v1565
      %2610 = vmatmul.mubr.bf16.gmra.mrb[0].mxu0 %v1503
      %v2611 = vpop.f32.mrb[0].mxu0
      %v2612 = vadd.f32 %v2515, %v2611
      %v2613 = vpop.f32.mrb[0].mxu0
      %v2614 = vpop.f32.mrb[0].mxu0
      %v2615 = vadd.f32 %v2518, %v2614
      %v2616 = vpop.f32.mrb[0].mxu0
      %2617 = vmatprep.mubr.bf16.mxu0 %v1577
      %2618 = vmatmul.mubr.bf16.gmra.mrb[0].mxu0 %v1504
      %v2619 = vpop.f32.mrb[0].mxu0
      %v2620 = vadd.f32 %v2523, %v2619
      %v2621 = vpop.f32.mrb[0].mxu0
      %v2622 = vpop.f32.mrb[0].mxu0
      %v2623 = vadd.f32 %v2526, %v2622
      %v2624 = vpop.f32.mrb[0].mxu0
      %2625 = vmatprep.mubr.bf16.mxu0 %v1589
      %2626 = vmatmul.mubr.bf16.gmra.mrb[0].mxu0 %v1505
      %v2627 = vpop.f32.mrb[0].mxu0
      %v2628 = vadd.f32 %v2531, %v2627
      %v2629 = vpop.f32.mrb[0].mxu0
      %v2630 = vpop.f32.mrb[0].mxu0
      %v2631 = vadd.f32 %v2534, %v2630
      %v2632 = vpop.f32.mrb[0].mxu0
      %2633 = vmatprep.mubr.bf16.mxu0 %v1601
      %2634 = vmatmul.mubr.bf16.gmra.mrb[0].mxu0 %v1506
      %v2635 = vpop.f32.mrb[0].mxu0
      %v2636 = vadd.f32 %v2539, %v2635
      %v2637 = vpop.f32.mrb[0].mxu0
      %v2638 = vpop.f32.mrb[0].mxu0
      %v2639 = vadd.f32 %v2542, %v2638
      %v2640 = vpop.f32.mrb[0].mxu0
      %2641 = vmatprep.mubr.bf16.mxu0 %v1613
      %2642 = vmatmul.mubr.bf16.gmra.mrb[0].mxu0 %v1507
      %v2643 = vpop.f32.mrb[0].mxu0
      %v2644 = vadd.f32 %v2547, %v2643
      %v2645 = vpop.f32.mrb[0].mxu0
      %v2646 = vpop.f32.mrb[0].mxu0
      %v2647 = vadd.f32 %v2550, %v2646
      %v2648 = vpop.f32.mrb[0].mxu0
      %2649 = vmatprep.mubr.bf16.mxu0 %v1625
      %2650 = vmatmul.mubr.bf16.gmra.mrb[0].mxu0 %v1508
      %v2651 = vpop.f32.mrb[0].mxu0
      %v2652 = vadd.f32 %v2555, %v2651
      %v2653 = vpop.f32.mrb[0].mxu0
      %v2654 = vpop.f32.mrb[0].mxu0
      %v2655 = vadd.f32 %v2558, %v2654
      %v2656 = vpop.f32.mrb[0].mxu0
      %2657 = vmatprep.mubr.bf16.mxu0 %v1637
      %2658 = vmatmul.mubr.bf16.gmra.mrb[0].mxu0 %v1509
      %v2659 = vpop.f32.mrb[0].mxu0
      %v2660 = vadd.f32 %v2563, %v2659
      %v2661 = vpop.f32.mrb[0].mxu0
      %v2662 = vpop.f32.mrb[0].mxu0
      %v2663 = vadd.f32 %v2566, %v2662
      %v2664 = vpop.f32.mrb[0].mxu0
      %2665 = vdwg.mxu0
      %2666 = vmatprep.subr.bf16.mxu0 0
      %2667 = vmatpush1.bf16.msra.mxu0 %v2198
      %2668 = vmatprep.subr.bf16.mxu0 0
      %2669 = vmatpush1.bf16.msra.mxu0 %v2199
      %2670 = vmatprep.subr.bf16.mxu0 0
      %2671 = vmatpush1.bf16.msra.mxu0 %v2200
      %2672 = vmatprep.subr.bf16.mxu0 0
      %2673 = vmatpush1.bf16.msra.mxu0 %v2201
      %2674 = vmatprep.subr.bf16.mxu0 0
      %2675 = vmatpush1.bf16.msra.mxu0 %v2202
      %2676 = vmatprep.subr.bf16.mxu0 0
      %2677 = vmatpush1.bf16.msra.mxu0 %v2203
      %2678 = vmatprep.subr.bf16.mxu0 0
      %2679 = vmatpush1.bf16.msra.mxu0 %v2204
      %2680 = vmatprep.subr.bf16.mxu0 0
      %2681 = vmatpush1.bf16.msra.mxu0 %v2205
      %2682 = vmatprep.subr.bf16.mxu0 0
      %2683 = vmatpush1.bf16.msra.mxu0 0
      %2684 = vmatprep.subr.bf16.mxu0 0
      %2685 = vmatpush1.bf16.msra.mxu0 0
      %2686 = vmatprep.subr.bf16.mxu0 0
      %2687 = vmatpush1.bf16.msra.mxu0 0
      %2688 = vmatprep.subr.bf16.mxu0 0
      %2689 = vmatpush1.bf16.msra.mxu0 0
      %2690 = vmatprep.subr.bf16.mxu0 0
      %2691 = vmatpush1.bf16.msra.mxu0 0
      %2692 = vmatprep.subr.bf16.mxu0 0
      %2693 = vmatpush1.bf16.msra.mxu0 0
      %2694 = vmatprep.subr.bf16.mxu0 0
      %2695 = vmatpush1.bf16.msra.mxu0 0
      %2696 = vmatprep.subr.bf16.mxu0 0
      %2697 = vmatpush1.bf16.msra.mxu0 0
      %2698 = vmatprep.mubr.bf16.mxu0 0
      %2699 = vmatmul.mubr.bf16.gmra.mrb[0].mxu0 %v1672
      %v2700 = vpop.f32.mrb[0].mxu0
      %v2701 = vadd.f32 %v2604, %v2700
      %v2702 = vpop.f32.mrb[0].mxu0
      %v2703 = vpop.f32.mrb[0].mxu0
      %v2704 = vadd.f32 %v2607, %v2703
      %v2705 = vpop.f32.mrb[0].mxu0
      %2706 = vmatprep.mubr.bf16.mxu0 0
      %2707 = vmatmul.mubr.bf16.gmra.mrb[0].mxu0 %v1675
      %v2708 = vpop.f32.mrb[0].mxu0
      %v2709 = vadd.f32 %v2612, %v2708
      %v2710 = vpop.f32.mrb[0].mxu0
      %v2711 = vpop.f32.mrb[0].mxu0
      %v2712 = vadd.f32 %v2615, %v2711
      %v2713 = vpop.f32.mrb[0].mxu0
      %2714 = vmatprep.mubr.bf16.mxu0 0
      %2715 = vmatmul.mubr.bf16.gmra.mrb[0].mxu0 %v1678
      %v2716 = vpop.f32.mrb[0].mxu0
      %v2717 = vadd.f32 %v2620, %v2716
      %v2718 = vpop.f32.mrb[0].mxu0
      %v2719 = vpop.f32.mrb[0].mxu0
      %v2720 = vadd.f32 %v2623, %v2719
      %v2721 = vpop.f32.mrb[0].mxu0
      %2722 = vmatprep.mubr.bf16.mxu0 0
      %2723 = vmatmul.mubr.bf16.gmra.mrb[0].mxu0 %v1681
      %v2724 = vpop.f32.mrb[0].mxu0
      %v2725 = vadd.f32 %v2628, %v2724
      %v2726 = vpop.f32.mrb[0].mxu0
      %v2727 = vpop.f32.mrb[0].mxu0
      %v2728 = vadd.f32 %v2631, %v2727
      %v2729 = vpop.f32.mrb[0].mxu0
      %2730 = vmatprep.mubr.bf16.mxu0 0
      %2731 = vmatmul.mubr.bf16.gmra.mrb[0].mxu0 %v1684
      %v2732 = vpop.f32.mrb[0].mxu0
      %v2733 = vadd.f32 %v2636, %v2732
      %v2734 = vpop.f32.mrb[0].mxu0
      %v2735 = vpop.f32.mrb[0].mxu0
      %v2736 = vadd.f32 %v2639, %v2735
      %v2737 = vpop.f32.mrb[0].mxu0
      %2738 = vmatprep.mubr.bf16.mxu0 0
      %2739 = vmatmul.mubr.bf16.gmra.mrb[0].mxu0 %v1687
      %v2740 = vpop.f32.mrb[0].mxu0
      %v2741 = vadd.f32 %v2644, %v2740
      %v2742 = vpop.f32.mrb[0].mxu0
      %v2743 = vpop.f32.mrb[0].mxu0
      %v2744 = vadd.f32 %v2647, %v2743
      %v2745 = vpop.f32.mrb[0].mxu0
      %2746 = vmatprep.mubr.bf16.mxu0 0
      %2747 = vmatmul.mubr.bf16.gmra.mrb[0].mxu0 %v1690
      %v2748 = vpop.f32.mrb[0].mxu0
      %v2749 = vadd.f32 %v2652, %v2748
      %v2750 = vpop.f32.mrb[0].mxu0
      %v2751 = vpop.f32.mrb[0].mxu0
      %v2752 = vadd.f32 %v2655, %v2751
      %v2753 = vpop.f32.mrb[0].mxu0
      %2754 = vmatprep.mubr.bf16.mxu0 0
      %2755 = vmatmul.mubr.bf16.gmra.mrb[0].mxu0 %v1693
      %v2756 = vpop.f32.mrb[0].mxu0
      %v2757 = vadd.f32 %v2660, %v2756
      %v2758 = vpop.f32.mrb[0].mxu0
      %v2759 = vpop.f32.mrb[0].mxu0
      %v2760 = vadd.f32 %v2663, %v2759
      %v2761 = vpop.f32.mrb[0].mxu0
      %2762 = vdwg.mxu0
      %v2763 = vld [vmem:[%s2] sm:$0x1]
      %v2765 = vlaneseq
      %v2766 = vshrl.u32 %v2765, 7
      %v2767 = vsub.s32 0, %v2766
      %v2768 = vrot.slane %v2763, %v2767
      %v2770 = vmul.f32 %v2701, %v2768
      %v2771 = vmul.f32 %v2704, %v2768
      %v2772 = vmul.f32 %v2709, %v2768
      %v2773 = vmul.f32 %v2712, %v2768
      %v2774 = vmul.f32 %v2717, %v2768
      %v2775 = vmul.f32 %v2720, %v2768
      %v2776 = vmul.f32 %v2725, %v2768
      %v2777 = vmul.f32 %v2728, %v2768
      %v2778 = vmul.f32 %v2733, %v2768
      %v2779 = vmul.f32 %v2736, %v2768
      %v2780 = vmul.f32 %v2741, %v2768
      %v2781 = vmul.f32 %v2744, %v2768
      %v2782 = vmul.f32 %v2749, %v2768
      %v2783 = vmul.f32 %v2752, %v2768
      %v2784 = vmul.f32 %v2757, %v2768
      %v2785 = vmul.f32 %v2760, %v2768
      %v2786 = vld [vmem:[%s3] sm:$0x1]
      %v2788 = vlaneseq
      %v2789 = vshrl.u32 %v2788, 7
      %v2790 = vsub.s32 0, %v2789
      %v2791 = vrot.slane %v2786, %v2790
      %v2793 = vadd.f32 %v2770, %v2791
      %v2794 = vadd.f32 %v2771, %v2791
      %v2795 = vadd.f32 %v2772, %v2791
      %v2796 = vadd.f32 %v2773, %v2791
      %v2797 = vadd.f32 %v2774, %v2791
      %v2798 = vadd.f32 %v2775, %v2791
      %v2799 = vadd.f32 %v2776, %v2791
      %v2800 = vadd.f32 %v2777, %v2791
      %v2801 = vadd.f32 %v2778, %v2791
      %v2802 = vadd.f32 %v2779, %v2791
      %v2803 = vadd.f32 %v2780, %v2791
      %v2804 = vadd.f32 %v2781, %v2791
      %v2805 = vadd.f32 %v2782, %v2791
      %v2806 = vadd.f32 %v2783, %v2791
      %v2807 = vadd.f32 %v2784, %v2791
      %v2808 = vadd.f32 %v2785, %v2791
      %v2809 = vld [vmem:[%s276] sm:$0xf]
      %v2810 = vld [vmem:[%s276 + $0x4] sm:$0xf]
      %v2811 = vld [vmem:[%s276 + $0x8] sm:$0xf]
      %v2812 = vld [vmem:[%s276 + $0xc] sm:$0xf]
      %v2813 = vld [vmem:[%s276 + $0x10] sm:$0xf]
      %v2814 = vld [vmem:[%s276 + $0x14] sm:$0xf]
      %v2815 = vld [vmem:[%s276 + $0x18] sm:$0xf]
      %v2816 = vld [vmem:[%s276 + $0x1c] sm:$0xf]
      %v2817 = vld [vmem:[%s276 + $0x20] sm:$0xf]
      %v2818 = vld [vmem:[%s276 + $0x24] sm:$0xf]
      %v2819 = vld [vmem:[%s276 + $0x28] sm:$0xf]
      %v2820 = vld [vmem:[%s276 + $0x2c] sm:$0xf]
      %v2821 = vld [vmem:[%s276 + $0x30] sm:$0xf]
      %v2822 = vld [vmem:[%s276 + $0x34] sm:$0xf]
      %v2823 = vld [vmem:[%s276 + $0x38] sm:$0xf]
      %v2824 = vld [vmem:[%s276 + $0x3c] sm:$0xf]
      %v2825 = vunpack.c.l.bf16 %v2809
      %v2826 = vunpack.c.l.bf16 %v2810
      %v2827 = vunpack.c.l.bf16 %v2811
      %v2828 = vunpack.c.l.bf16 %v2812
      %v2829 = vunpack.c.l.bf16 %v2813
      %v2830 = vunpack.c.l.bf16 %v2814
      %v2831 = vunpack.c.l.bf16 %v2815
      %v2832 = vunpack.c.l.bf16 %v2816
      %v2833 = vunpack.c.l.bf16 %v2817
      %v2834 = vunpack.c.l.bf16 %v2818
      %v2835 = vunpack.c.l.bf16 %v2819
      %v2836 = vunpack.c.l.bf16 %v2820
      %v2837 = vunpack.c.l.bf16 %v2821
      %v2838 = vunpack.c.l.bf16 %v2822
      %v2839 = vunpack.c.l.bf16 %v2823
      %v2840 = vunpack.c.l.bf16 %v2824
      %v2841 = vadd.f32 %v2793, %v2825
      %v2842 = vadd.f32 %v2794, %v2826
      %v2843 = vadd.f32 %v2795, %v2827
      %v2844 = vadd.f32 %v2796, %v2828
      %v2845 = vadd.f32 %v2797, %v2829
      %v2846 = vadd.f32 %v2798, %v2830
      %v2847 = vadd.f32 %v2799, %v2831
      %v2848 = vadd.f32 %v2800, %v2832
      %v2849 = vadd.f32 %v2801, %v2833
      %v2850 = vadd.f32 %v2802, %v2834
      %v2851 = vadd.f32 %v2803, %v2835
      %v2852 = vadd.f32 %v2804, %v2836
      %v2853 = vadd.f32 %v2805, %v2837
      %v2854 = vadd.f32 %v2806, %v2838
      %v2855 = vadd.f32 %v2807, %v2839
      %v2856 = vadd.f32 %v2808, %v2840
      %v2857 = vmax.f32 %v2841, 0.0
      %v2858 = vmax.f32 %v2842, 0.0
      %v2859 = vmax.f32 %v2843, 0.0
      %v2860 = vmax.f32 %v2844, 0.0
      %v2861 = vmax.f32 %v2845, 0.0
      %v2862 = vmax.f32 %v2846, 0.0
      %v2863 = vmax.f32 %v2847, 0.0
      %v2864 = vmax.f32 %v2848, 0.0
      %v2865 = vmax.f32 %v2849, 0.0
      %v2866 = vmax.f32 %v2850, 0.0
      %v2867 = vmax.f32 %v2851, 0.0
      %v2868 = vmax.f32 %v2852, 0.0
      %v2869 = vmax.f32 %v2853, 0.0
      %v2870 = vmax.f32 %v2854, 0.0
      %v2871 = vmax.f32 %v2855, 0.0
      %v2872 = vmax.f32 %v2856, 0.0
      %v2873 = vpack.c.bf16 %v2858, %v2857
      %v2874 = vpack.c.bf16 %v2860, %v2859
      %v2875 = vpack.c.bf16 %v2862, %v2861
      %v2876 = vpack.c.bf16 %v2864, %v2863
      %v2877 = vpack.c.bf16 %v2866, %v2865
      %v2878 = vpack.c.bf16 %v2868, %v2867
      %v2879 = vpack.c.bf16 %v2870, %v2869
      %v2880 = vpack.c.bf16 %v2872, %v2871
      %v2889 = vunpack.c.l.b16 %v2873
      %v2890 = vunpack.c.h.b16 %v2873
      %v2891 = vunpack.c.l.b16 %v2874
      %v2892 = vunpack.c.h.b16 %v2874
      %v2893 = vunpack.c.l.b16 %v2875
      %v2894 = vunpack.c.h.b16 %v2875
      %v2895 = vunpack.c.l.b16 %v2876
      %v2896 = vunpack.c.h.b16 %v2876
      %v2897 = vunpack.c.l.b16 %v2877
      %v2898 = vunpack.c.h.b16 %v2877
      %v2899 = vunpack.c.l.b16 %v2878
      %v2900 = vunpack.c.h.b16 %v2878
      %v2901 = vunpack.c.l.b16 %v2879
      %v2902 = vunpack.c.h.b16 %v2879
      %v2903 = vunpack.c.l.b16 %v2880
      %v2904 = vunpack.c.h.b16 %v2880
      %v2905 = vpack.c.b16 %v2889, %v2889
      %v2906 = vpack.c.b16 %v2890, %v2890
      %v2907 = vpack.c.b16 %v2891, %v2891
      %v2908 = vpack.c.b16 %v2892, %v2892
      %v2909 = vpack.c.b16 %v2893, %v2893
      %v2910 = vpack.c.b16 %v2894, %v2894
      %v2911 = vpack.c.b16 %v2895, %v2895
      %v2912 = vpack.c.b16 %v2896, %v2896
      %v2913 = vpack.c.b16 %v2897, %v2897
      %v2914 = vpack.c.b16 %v2898, %v2898
      %v2915 = vpack.c.b16 %v2899, %v2899
      %v2916 = vpack.c.b16 %v2900, %v2900
      %v2917 = vpack.c.b16 %v2901, %v2901
      %v2918 = vpack.c.b16 %v2902, %v2902
      %v2919 = vpack.c.b16 %v2903, %v2903
      %v2920 = vpack.c.b16 %v2904, %v2904
      %2937 = vst [vmem:[%s287] sm:$0xf] %v2905
      %2938 = vst [vmem:[%s287 + $0x4] sm:$0xf] %v2906
      %2939 = vst [vmem:[%s287 + $0x8] sm:$0xf] %v2907
      %2940 = vst [vmem:[%s287 + $0xc] sm:$0xf] %v2908
      %2941 = vst [vmem:[%s287 + $0x10] sm:$0xf] %v2909
      %2942 = vst [vmem:[%s287 + $0x14] sm:$0xf] %v2910
      %2943 = vst [vmem:[%s287 + $0x18] sm:$0xf] %v2911
      %2944 = vst [vmem:[%s287 + $0x1c] sm:$0xf] %v2912
      %2945 = vst [vmem:[%s287 + $0x20] sm:$0xf] %v2913
      %2946 = vst [vmem:[%s287 + $0x24] sm:$0xf] %v2914
      %2947 = vst [vmem:[%s287 + $0x28] sm:$0xf] %v2915
      %2948 = vst [vmem:[%s287 + $0x2c] sm:$0xf] %v2916
      %2949 = vst [vmem:[%s287 + $0x30] sm:$0xf] %v2917
      %2950 = vst [vmem:[%s287 + $0x34] sm:$0xf] %v2918
      %2951 = vst [vmem:[%s287 + $0x38] sm:$0xf] %v2919
      %2952 = vst [vmem:[%s287 + $0x3c] sm:$0xf] %v2920
      %s2953 = smul.u32 8, %s21
      %p2954 = scmp.lt.s32.totalorder %s20, 1
      %s2955 = scalar_select %p2954, %s20, 1
      %p2956 = scmp.lt.s32.totalorder %s2953, 15
      %s2957 = scalar_select %p2956, %s2953, 15
      %s2958 = smul.addr %s2957, 2
      %s2959 = smul.addr %s2955, 32
      %s2960 = sadd.s32 %s2958, %s2959
      %s2961 = smul.addr %s2960, 4
      %s2962 = scalar_lea.vmem %s5, %s2961
      // Predicated region
      $region49: #{forward.5} parent=39 // pred_check
        %p2963 = pneg %p165
      $region50: #{forward.5} parent=39 // pred_check_branch
        %2965 = sbr.rel (%p2963) target = $region52
      $region51: #{forward.5} parent=39 // pred_region
        %s2966 = smul.u32 8, %s21
      $region52: #{forward.5} parent=39 // pred_fallthru
        _
    $region40: #{forward.5} parent=5 // pred_fallthru
      _
    %p2967 = scmp.le.s32.totalorder 2, %s11
    // Predicated region
    $region53: #{forward.5} parent=5 // pred_check
      %p2968 = pneg %p2967
    $region54: #{forward.5} parent=5 // pred_check_branch
      %2970 = sbr.rel (%p2968) target = $region56
    $region55: #{forward.5} parent=5 // pred_region
      %s2971 = ssub.s32 %s11, 2
      // Predicated region
      $region57: #{forward.5} parent=55 // pred_check
        %p2972 = pneg %p171
      $region58: #{forward.5} parent=55 // pred_check_branch
        %2974 = sbr.rel (%p2972) target = $region60
      $region59: #{forward.5} parent=55 // pred_region
        %s2975 = smul.u32 8, %s23
        %p2976 = scmp.lt.s32.totalorder %s22, 1
        %s2977 = scalar_select %p2976, %s22, 1
        %p2978 = scmp.lt.s32.totalorder %s2975, 15
        %s2979 = scalar_select %p2978, %s2975, 15
        %s2980 = smul.addr %s2979, 2
        %s2981 = smul.addr %s2977, 32
        %s2982 = sadd.s32 %s2980, %s2981
        %s2983 = smul.addr %s2982, 4
        %s2984 = scalar_lea.vmem %s5, %s2983
      $region60: #{forward.5} parent=55 // pred_fallthru
        _
    $region56: #{forward.5} parent=5 // pred_fallthru
      _
  $region6: #{forward.5} parent=0 // loop_footer
    %s15 = sadd.s32 1, %s11
  $region7: #{forward.5} parent=0 // loop_footer_branch
    %10 = sbr.rel target = $region3
  $region8: #{forward.5} parent=0 // loop_exit
    _

// kernel: forward.4
$region0: #{forward.4}
  #allocation0 [shape = 'u32[]', space=smem, size = 0x4, offset = 0x4, fixed_abs, tag = 'smem constant byte address 0x4 - core index']
  #allocation1 [shape = 'u32[144,128]{1,0:T(1,128)}', space=vmem, size = 0x12000, scoped, tag = 'internal scratch']
  #allocation2 [shape = 'bf16[8,17,128]{2,1,0:T(8,128)(2,1)}', space=vmem, size = 0xc000, scoped, tag = 'scratch operand']
  #allocation3 [shape = 'bf16[9,17,128]{2,1,0:T(8,128)(2,1)}', space=vmem, size = 0xd800, scoped, tag = 'scratch operand']
  %s0 = inlined_call_operand.vmem [shape: f32[2,16,2,16,128], index: 0, kind: input, shape index: {}]
  %s1 = inlined_call_operand.vmem [shape: bf16[576,128], index: 1, kind: input, shape index: {}]
  %s2 = inlined_call_operand.vmem [shape: f32[1,128], index: 2, kind: input, shape index: {}]
  %s3 = inlined_call_operand.vmem [shape: f32[1,128], index: 3, kind: input, shape index: {}]
  %s4 = inlined_call_operand.vmem [shape: bf16[64,128], index: 4, kind: input, shape index: {}]
  %s5 = inlined_call_operand.vmem [shape: f32[1,128], index: 5, kind: input, shape index: {}]
  %s6 = inlined_call_operand.vmem [shape: f32[1,128], index: 6, kind: input, shape index: {}]
  %s7 = inlined_call_operand.vmem [shape: bf16[2,16,16,128], index: 7, kind: output, shape index: {0}]
  %s8 = inlined_call_operand.vmem [shape: bf16[2,16,16,128], index: 8, kind: output, shape index: {1}]
  %9 = xla_tuple %s7, %s8
  %s10 = sld [smem:[#allocation0]]
  $region77: #{forward.4} parent=0
    _
  %s12 = ssub.s32 1, %s10
  %s13 = scalar_select 0, %s12, %s10
  loop: start=0, step=1, limit=6
  $region2: #{forward.4} parent=0 // loop_pre_header
    _
  $region3: #{forward.4} parent=0 // loop_header
    %s15 = sphi 0, %s19
    %p16 = scmp.ge.s32.totalorder %s15, 6
    %s22 = sphi 0, %s34
    %s23 = sphi 0, %s30
    %s24 = sphi 0, %s22
    %s25 = sphi 0, %s23
    %s26 = sphi 0, %s24
    %s27 = sphi 0, %s25
    %s37 = sphi 0, %s39
    %s40 = sphi 0, %s37
    %s41 = sphi 0, %s40
    %s57 = sphi 0, %s41
    %s61 = sphi 0, %s61
    %s63 = sphi 0, %s61
    %s64 = sphi 0, %s63
    %s78 = sphi 0, %s64
    %s82 = sphi 0, %s82
    %s84 = sphi 0, %s82
    %s85 = sphi 0, %s84
    %s99 = sphi 0, %s85
    %s103 = sphi 0, %s103
    %s105 = sphi 0, %s103
    %s106 = sphi 0, %s105
    %s120 = sphi 0, %s106
    %s124 = sphi 0, %s124
    %s126 = sphi 0, %s124
    %s127 = sphi 0, %s126
    %s141 = sphi 0, %s127
    %s145 = sphi 0, %s145
    %s147 = sphi 0, %s145
    %s148 = sphi 0, %s147
    %s162 = sphi 0, %s148
    %s166 = sphi 0, %s166
    %s168 = sphi 0, %s166
    %s169 = sphi 0, %s168
    %s183 = sphi 0, %s169
    %s191 = sphi 0, %s193
    %s194 = sphi 0, %s191
    %s195 = sphi 0, %s194
    %s211 = sphi 0, %s195
    %s219 = sphi 0, %s221
    %s222 = sphi 0, %s219
    %s223 = sphi 0, %s222
    %s239 = sphi 0, %s223
  $region4: #{forward.4} parent=0 // loop_header_branch
    %18 = sbr.rel (%p16) target = $region8
  $region5: #{forward.4} parent=0 // loop_body
    %s20 = ssub.s32 %s15, 1
    %s21 = ssub.s32 %s15, 2
    %s28 = sadd.s32 1, %s23
    %p29 = scmp.ge.s32.totalorder %s28, 2
    %s30 = scalar_select %p29, 0, %s28
    %s31 = sadd.s32 1, %s22
    %s32 = scalar_select %p29, %s31, %s22
    %p33 = scmp.ge.s32.totalorder %s32, 2
    %s34 = scalar_select %p33, 0, %s32
    %s35 = ssub.s32 %s22, %s34
    %p36 = scmp.eq.s32.totalorder %s35, 0
    %s38 = sadd.s32 %s37, 1
    %s39 = scalar_select %p36, %s37, %s38
    %p42 = pneg %p36
    %p43 = scmp.eq.s32.totalorder %s15, 3
    %p44 = por %p42, %p43
    %p45 = scmp.ne.s32.totalorder %s37, %s40
    %p46 = scmp.eq.s32.totalorder %s15, 0
    %p47 = por %p45, %p46
    %p48 = scmp.ne.s32.totalorder %s37, %s40
    %p49 = scmp.eq.s32.totalorder %s20, 3
    %p50 = por %p48, %p49
    %p51 = scmp.ne.s32.totalorder %s40, %s41
    %p52 = scmp.eq.s32.totalorder %s20, 0
    %p53 = por %p51, %p52
    %p54 = scmp.ne.s32.totalorder %s40, %s41
    %p55 = scmp.eq.s32.totalorder %s21, 3
    %p56 = por %p54, %p55
    %p58 = scmp.ne.s32.totalorder %s41, %s57
    %p59 = scmp.eq.s32.totalorder %s21, 0
    %p60 = por %p58, %p59
    %s62 = sadd.s32 %s61, 1
    %p65 = scmp.eq.s32.totalorder %s15, 3
    %p66 = scmp.ne.s32.totalorder %s61, %s63
    %p67 = scmp.eq.s32.totalorder %s15, 0
    %p68 = por %p66, %p67
    %p69 = scmp.ne.s32.totalorder %s61, %s63
    %p70 = scmp.eq.s32.totalorder %s20, 3
    %p71 = por %p69, %p70
    %p72 = scmp.ne.s32.totalorder %s63, %s64
    %p73 = scmp.eq.s32.totalorder %s20, 0
    %p74 = por %p72, %p73
    %p75 = scmp.ne.s32.totalorder %s63, %s64
    %p76 = scmp.eq.s32.totalorder %s21, 3
    %p77 = por %p75, %p76
    %p79 = scmp.ne.s32.totalorder %s64, %s78
    %p80 = scmp.eq.s32.totalorder %s21, 0
    %p81 = por %p79, %p80
    %s83 = sadd.s32 %s82, 1
    %p86 = scmp.eq.s32.totalorder %s15, 3
    %p87 = scmp.ne.s32.totalorder %s82, %s84
    %p88 = scmp.eq.s32.totalorder %s15, 0
    %p89 = por %p87, %p88
    %p90 = scmp.ne.s32.totalorder %s82, %s84
    %p91 = scmp.eq.s32.totalorder %s20, 3
    %p92 = por %p90, %p91
    %p93 = scmp.ne.s32.totalorder %s84, %s85
    %p94 = scmp.eq.s32.totalorder %s20, 0
    %p95 = por %p93, %p94
    %p96 = scmp.ne.s32.totalorder %s84, %s85
    %p97 = scmp.eq.s32.totalorder %s21, 3
    %p98 = por %p96, %p97
    %p100 = scmp.ne.s32.totalorder %s85, %s99
    %p101 = scmp.eq.s32.totalorder %s21, 0
    %p102 = por %p100, %p101
    %s104 = sadd.s32 %s103, 1
    %p107 = scmp.eq.s32.totalorder %s15, 3
    %p108 = scmp.ne.s32.totalorder %s103, %s105
    %p109 = scmp.eq.s32.totalorder %s15, 0
    %p110 = por %p108, %p109
    %p111 = scmp.ne.s32.totalorder %s103, %s105
    %p112 = scmp.eq.s32.totalorder %s20, 3
    %p113 = por %p111, %p112
    %p114 = scmp.ne.s32.totalorder %s105, %s106
    %p115 = scmp.eq.s32.totalorder %s20, 0
    %p116 = por %p114, %p115
    %p117 = scmp.ne.s32.totalorder %s105, %s106
    %p118 = scmp.eq.s32.totalorder %s21, 3
    %p119 = por %p117, %p118
    %p121 = scmp.ne.s32.totalorder %s106, %s120
    %p122 = scmp.eq.s32.totalorder %s21, 0
    %p123 = por %p121, %p122
    %s125 = sadd.s32 %s124, 1
    %p128 = scmp.eq.s32.totalorder %s15, 3
    %p129 = scmp.ne.s32.totalorder %s124, %s126
    %p130 = scmp.eq.s32.totalorder %s15, 0
    %p131 = por %p129, %p130
    %p132 = scmp.ne.s32.totalorder %s124, %s126
    %p133 = scmp.eq.s32.totalorder %s20, 3
    %p134 = por %p132, %p133
    %p135 = scmp.ne.s32.totalorder %s126, %s127
    %p136 = scmp.eq.s32.totalorder %s20, 0
    %p137 = por %p135, %p136
    %p138 = scmp.ne.s32.totalorder %s126, %s127
    %p139 = scmp.eq.s32.totalorder %s21, 3
    %p140 = por %p138, %p139
    %p142 = scmp.ne.s32.totalorder %s127, %s141
    %p143 = scmp.eq.s32.totalorder %s21, 0
    %p144 = por %p142, %p143
    %s146 = sadd.s32 %s145, 1
    %p149 = scmp.eq.s32.totalorder %s15, 3
    %p150 = scmp.ne.s32.totalorder %s145, %s147
    %p151 = scmp.eq.s32.totalorder %s15, 0
    %p152 = por %p150, %p151
    %p153 = scmp.ne.s32.totalorder %s145, %s147
    %p154 = scmp.eq.s32.totalorder %s20, 3
    %p155 = por %p153, %p154
    %p156 = scmp.ne.s32.totalorder %s147, %s148
    %p157 = scmp.eq.s32.totalorder %s20, 0
    %p158 = por %p156, %p157
    %p159 = scmp.ne.s32.totalorder %s147, %s148
    %p160 = scmp.eq.s32.totalorder %s21, 3
    %p161 = por %p159, %p160
    %p163 = scmp.ne.s32.totalorder %s148, %s162
    %p164 = scmp.eq.s32.totalorder %s21, 0
    %p165 = por %p163, %p164
    %s167 = sadd.s32 %s166, 1
    %p170 = scmp.eq.s32.totalorder %s15, 3
    %p171 = scmp.ne.s32.totalorder %s166, %s168
    %p172 = scmp.eq.s32.totalorder %s15, 0
    %p173 = por %p171, %p172
    %p174 = scmp.ne.s32.totalorder %s166, %s168
    %p175 = scmp.eq.s32.totalorder %s20, 3
    %p176 = por %p174, %p175
    %p177 = scmp.ne.s32.totalorder %s168, %s169
    %p178 = scmp.eq.s32.totalorder %s20, 0
    %p179 = por %p177, %p178
    %p180 = scmp.ne.s32.totalorder %s168, %s169
    %p181 = scmp.eq.s32.totalorder %s21, 3
    %p182 = por %p180, %p181
    %p184 = scmp.ne.s32.totalorder %s169, %s183
    %p185 = scmp.eq.s32.totalorder %s21, 0
    %p186 = por %p184, %p185
    %s187 = ssub.s32 %s22, %s34
    %s188 = ssub.s32 %s23, %s30
    %s189 = sor.u32 %s187, %s188
    %p190 = scmp.eq.s32.totalorder %s189, 0
    %s192 = sadd.s32 %s191, 1
    %s193 = scalar_select %p190, %s191, %s192
    %p196 = pneg %p190
    %p197 = scmp.eq.s32.totalorder %s15, 3
    %p198 = por %p196, %p197
    %p199 = scmp.ne.s32.totalorder %s191, %s194
    %p200 = scmp.eq.s32.totalorder %s15, 0
    %p201 = por %p199, %p200
    %p202 = scmp.ne.s32.totalorder %s191, %s194
    %p203 = scmp.eq.s32.totalorder %s20, 3
    %p204 = por %p202, %p203
    %p205 = scmp.ne.s32.totalorder %s194, %s195
    %p206 = scmp.eq.s32.totalorder %s20, 0
    %p207 = por %p205, %p206
    %p208 = scmp.ne.s32.totalorder %s194, %s195
    %p209 = scmp.eq.s32.totalorder %s21, 3
    %p210 = por %p208, %p209
    %p212 = scmp.ne.s32.totalorder %s195, %s211
    %p213 = scmp.eq.s32.totalorder %s21, 0
    %p214 = por %p212, %p213
    %s215 = ssub.s32 %s22, %s34
    %s216 = ssub.s32 %s23, %s30
    %s217 = sor.u32 %s215, %s216
    %p218 = scmp.eq.s32.totalorder %s217, 0
    %s220 = sadd.s32 %s219, 1
    %s221 = scalar_select %p218, %s219, %s220
    %p224 = pneg %p218
    %p225 = scmp.eq.s32.totalorder %s15, 3
    %p226 = por %p224, %p225
    %p227 = scmp.ne.s32.totalorder %s219, %s222
    %p228 = scmp.eq.s32.totalorder %s15, 0
    %p229 = por %p227, %p228
    %p230 = scmp.ne.s32.totalorder %s219, %s222
    %p231 = scmp.eq.s32.totalorder %s20, 3
    %p232 = por %p230, %p231
    %p233 = scmp.ne.s32.totalorder %s222, %s223
    %p234 = scmp.eq.s32.totalorder %s20, 0
    %p235 = por %p233, %p234
    %p236 = scmp.ne.s32.totalorder %s222, %s223
    %p237 = scmp.eq.s32.totalorder %s21, 3
    %p238 = por %p236, %p237
    %p240 = scmp.ne.s32.totalorder %s223, %s239
    %p241 = scmp.eq.s32.totalorder %s21, 0
    %p242 = por %p240, %p241
    %p243 = scmp.le.s32.totalorder 1, %s15
    %p244 = scmp.lt.s32.totalorder %s15, 5
    %p245 = pnand %p243, %p244
    %p246 = pneg %p245
    // Predicated region
    $region9: #{forward.4} parent=5 // pred_check
      _
    $region10: #{forward.4} parent=5 // pred_check_branch
      %248 = sbr.rel (%p245) target = $region12
    $region11: #{forward.4} parent=5 // pred_region
      %s249 = ssub.s32 %s15, 1
      // Predicated region
      $region13: #{forward.4} parent=11 // pred_check
        %p250 = pneg %p74
      $region14: #{forward.4} parent=11 // pred_check_branch
        %252 = sbr.rel (%p250) target = $region16
      $region15: #{forward.4} parent=11 // pred_region
        _
      $region16: #{forward.4} parent=11 // pred_fallthru
        _
      // Predicated region
      $region17: #{forward.4} parent=11 // pred_check
        %p253 = pneg %p95
      $region18: #{forward.4} parent=11 // pred_check_branch
        %255 = sbr.rel (%p253) target = $region20
      $region19: #{forward.4} parent=11 // pred_region
        _
      $region20: #{forward.4} parent=11 // pred_fallthru
        _
      // Predicated region
      $region21: #{forward.4} parent=11 // pred_check
        %p256 = pneg %p116
      $region22: #{forward.4} parent=11 // pred_check_branch
        %258 = sbr.rel (%p256) target = $region24
      $region23: #{forward.4} parent=11 // pred_region
        _
      $region24: #{forward.4} parent=11 // pred_fallthru
        _
      // Predicated region
      $region25: #{forward.4} parent=11 // pred_check
        %p259 = pneg %p137
      $region26: #{forward.4} parent=11 // pred_check_branch
        %261 = sbr.rel (%p259) target = $region28
      $region27: #{forward.4} parent=11 // pred_region
        _
      $region28: #{forward.4} parent=11 // pred_fallthru
        _
      // Predicated region
      $region29: #{forward.4} parent=11 // pred_check
        %p262 = pneg %p158
      $region30: #{forward.4} parent=11 // pred_check_branch
        %264 = sbr.rel (%p262) target = $region32
      $region31: #{forward.4} parent=11 // pred_region
        _
      $region32: #{forward.4} parent=11 // pred_fallthru
        _
      // Predicated region
      $region33: #{forward.4} parent=11 // pred_check
        %p265 = pneg %p179
      $region34: #{forward.4} parent=11 // pred_check_branch
        %267 = sbr.rel (%p265) target = $region36
      $region35: #{forward.4} parent=11 // pred_region
        _
      $region36: #{forward.4} parent=11 // pred_fallthru
        _
    $region12: #{forward.4} parent=5 // pred_fallthru
      _
    %p268 = scmp.lt.s32.totalorder %s15, 4
    // Predicated region
    $region37: #{forward.4} parent=5 // pred_check
      %p269 = pneg %p268
    $region38: #{forward.4} parent=5 // pred_check_branch
      %271 = sbr.rel (%p269) target = $region40
    $region39: #{forward.4} parent=5 // pred_region
      // Predicated region
      $region41: #{forward.4} parent=39 // pred_check
        %p272 = pneg %p47
      $region42: #{forward.4} parent=39 // pred_check_branch
        %274 = sbr.rel (%p272) target = $region44
      $region43: #{forward.4} parent=39 // pred_region
        %p275 = scmp.lt.s32.totalorder %s22, 1
        %s276 = scalar_select %p275, %s22, 1
        %s277 = smul.addr %s276, 64
        %s278 = smul.addr %s277, 8
        %s279 = scalar_lea.vmem %s0, %s278
      $region44: #{forward.4} parent=39 // pred_fallthru
        _
    $region40: #{forward.4} parent=5 // pred_fallthru
      _
    %p280 = scmp.le.s32.totalorder 1, %s15
    %p281 = scmp.lt.s32.totalorder %s15, 5
    %p282 = pnand %p280, %p281
    %p283 = pneg %p282
    // Predicated region
    $region45: #{forward.4} parent=5 // pred_check
      _
    $region46: #{forward.4} parent=5 // pred_check_branch
      %285 = sbr.rel (%p282) target = $region48
    $region47: #{forward.4} parent=5 // pred_region
      %s286 = ssub.s32 %s15, 1
      %p287 = scmp.lt.s32.totalorder %s24, 1
      %s288 = scalar_select %p287, %s24, 1
      %s289 = smul.addr %s288, 64
      %s290 = smul.addr %s289, 8
      %s291 = scalar_lea.vmem %s0, %s290
      %p292 = pneg %p53
      %p293 = pneg %p50
      %p294 = pneg %p74
      %p295 = pneg %p71
      %p296 = pneg %p95
      %p297 = pneg %p92
      %p298 = pneg %p116
      %p299 = pneg %p113
      %p300 = pneg %p137
      %p301 = pneg %p134
      %p302 = pneg %p158
      %p303 = pneg %p155
      %p304 = pneg %p179
      %p305 = pneg %p176
      %p306 = pneg %p207
      %p307 = pneg %p204
      %s308 = smul.u32 8, %s25
      %p309 = scmp.lt.s32.totalorder %s24, 1
      %s310 = scalar_select %p309, %s24, 1
      %p311 = scmp.lt.s32.totalorder %s308, 15
      %s312 = scalar_select %p311, %s308, 15
      %s313 = smul.addr %s312, 2
      %s314 = smul.addr %s310, 32
      %s315 = sadd.s32 %s313, %s314
      %s316 = smul.addr %s315, 4
      %s317 = scalar_lea.vmem %s7, %s316
      %p318 = pneg %p235
      %p319 = pneg %p232
      %s320 = smul.u32 8, %s25
      %p321 = scmp.lt.s32.totalorder %s24, 1
      %s322 = scalar_select %p321, %s24, 1
      %p323 = scmp.lt.s32.totalorder %s320, 15
      %s324 = scalar_select %p323, %s320, 15
      %s325 = smul.addr %s324, 2
      %s326 = smul.addr %s322, 32
      %s327 = sadd.s32 %s325, %s326
      %s328 = smul.addr %s327, 4
      %s329 = scalar_lea.vmem %s8, %s328
      %p330 = scmp.lt.s32.totalorder %s24, 1
      %s331 = scalar_select %p330, %s24, 1
      %s332 = smul.addr %s331, 64
      %s333 = smul.addr %s332, 8
      %s334 = scalar_lea.vmem %s0, %s333
      %s335 = smul.u32 8, %s25
      %p336 = scmp.lt.s32.totalorder %s24, 1
      %s337 = scalar_select %p336, %s24, 1
      %p338 = scmp.lt.s32.totalorder %s335, 15
      %s339 = scalar_select %p338, %s335, 15
      %s340 = smul.addr %s339, 2
      %s341 = smul.addr %s337, 32
      %s342 = sadd.s32 %s340, %s341
      %s343 = smul.addr %s342, 4
      %s344 = scalar_lea.vmem %s7, %s343
      %s345 = smul.u32 8, %s25
      %s346 = smul.u32 8, %s25
      %p347 = scmp.lt.s32.totalorder %s24, 1
      %s348 = scalar_select %p347, %s24, 1
      %p349 = scmp.lt.s32.totalorder %s346, 15
      %s350 = scalar_select %p349, %s346, 15
      %s351 = smul.addr %s350, 2
      %s352 = smul.addr %s348, 32
      %s353 = sadd.s32 %s351, %s352
      %s354 = smul.addr %s353, 4
      %s355 = scalar_lea.vmem %s8, %s354
      %s356 = smul.u32 8, %s25
      %s358 = smul.u32 %s25, 8
      %vm359 = vcmask 1040384
      %vm360 = vsmask.f32 256
      %vm361 = vmand %vm359, %vm360
      %v362 = vld [vmem:[#allocation2] sm:$0x1]
      %v363 = vsel %vm361, 0, %v362
      %364 = vst [vmem:[#allocation2] sm:$0x1] %v363
      %v365 = vld [vmem:[#allocation2 + $0xc] sm:$0x1]
      %v366 = vsel %vm361, 0, %v365
      %367 = vst [vmem:[#allocation2 + $0xc] sm:$0x1] %v366
      %v368 = vld [vmem:[#allocation2 + $0x18] sm:$0x1]
      %v369 = vsel %vm361, 0, %v368
      %370 = vst [vmem:[#allocation2 + $0x18] sm:$0x1] %v369
      %v371 = vld [vmem:[#allocation2 + $0x24] sm:$0x1]
      %v372 = vsel %vm361, 0, %v371
      %373 = vst [vmem:[#allocation2 + $0x24] sm:$0x1] %v372
      %v374 = vld [vmem:[#allocation2 + $0x30] sm:$0x1]
      %v375 = vsel %vm361, 0, %v374
      %376 = vst [vmem:[#allocation2 + $0x30] sm:$0x1] %v375
      %v377 = vld [vmem:[#allocation2 + $0x3c] sm:$0x1]
      %v378 = vsel %vm361, 0, %v377
      %379 = vst [vmem:[#allocation2 + $0x3c] sm:$0x1] %v378
      %v380 = vld [vmem:[#allocation2 + $0x48] sm:$0x1]
      %v381 = vsel %vm361, 0, %v380
      %382 = vst [vmem:[#allocation2 + $0x48] sm:$0x1] %v381
      %v383 = vld [vmem:[#allocation2 + $0x54] sm:$0x1]
      %v384 = vsel %vm361, 0, %v383
      %385 = vst [vmem:[#allocation2 + $0x54] sm:$0x1] %v384
      %s386 = smul.u32 %s358, 32
      %s387 = scalar_lea.vmem %s334, %s386
      %v388 = vld [vmem:[%s387] sm:$0xff]
      %v389 = vld [vmem:[%s387 + $0x8] sm:$0xff]
      %v390 = vld [vmem:[%s387 + $0x20] sm:$0xff]
      %v391 = vld [vmem:[%s387 + $0x28] sm:$0xff]
      %v392 = vld [vmem:[%s387 + $0x40] sm:$0xff]
      %v393 = vld [vmem:[%s387 + $0x48] sm:$0xff]
      %v394 = vld [vmem:[%s387 + $0x60] sm:$0xff]
      %v395 = vld [vmem:[%s387 + $0x68] sm:$0xff]
      %v396 = vld [vmem:[%s387 + $0x80] sm:$0xff]
      %v397 = vld [vmem:[%s387 + $0x88] sm:$0xff]
      %v398 = vld [vmem:[%s387 + $0xa0] sm:$0xff]
      %v399 = vld [vmem:[%s387 + $0xa8] sm:$0xff]
      %v400 = vld [vmem:[%s387 + $0xc0] sm:$0xff]
      %v401 = vld [vmem:[%s387 + $0xc8] sm:$0xff]
      %v402 = vld [vmem:[%s387 + $0xe0] sm:$0xff]
      %v403 = vld [vmem:[%s387 + $0xe8] sm:$0xff]
      %v404 = vpack.c.bf16 %v389, %v388
      %v405 = vpack.c.bf16 %v391, %v390
      %v406 = vpack.c.bf16 %v393, %v392
      %v407 = vpack.c.bf16 %v395, %v394
      %v408 = vpack.c.bf16 %v397, %v396
      %v409 = vpack.c.bf16 %v399, %v398
      %v410 = vpack.c.bf16 %v401, %v400
      %v411 = vpack.c.bf16 %v403, %v402
      %v420 = vunpack.c.l.b16 %v404
      %v421 = vunpack.c.h.b16 %v404
      %v422 = vunpack.c.l.b16 %v405
      %v423 = vunpack.c.h.b16 %v405
      %v424 = vunpack.c.l.b16 %v406
      %v425 = vunpack.c.h.b16 %v406
      %v426 = vunpack.c.l.b16 %v407
      %v427 = vunpack.c.h.b16 %v407
      %v428 = vunpack.c.l.b16 %v408
      %v429 = vunpack.c.h.b16 %v408
      %v430 = vunpack.c.l.b16 %v409
      %v431 = vunpack.c.h.b16 %v409
      %v432 = vunpack.c.l.b16 %v410
      %v433 = vunpack.c.h.b16 %v410
      %v434 = vunpack.c.l.b16 %v411
      %v435 = vunpack.c.h.b16 %v411
      %v436 = vpack.c.b16 %v420, %v420
      %v437 = vpack.c.b16 %v421, %v421
      %v438 = vpack.c.b16 %v422, %v422
      %v439 = vpack.c.b16 %v423, %v423
      %v440 = vpack.c.b16 %v424, %v424
      %v441 = vpack.c.b16 %v425, %v425
      %v442 = vpack.c.b16 %v426, %v426
      %v443 = vpack.c.b16 %v427, %v427
      %v444 = vpack.c.b16 %v428, %v428
      %v445 = vpack.c.b16 %v429, %v429
      %v446 = vpack.c.b16 %v430, %v430
      %v447 = vpack.c.b16 %v431, %v431
      %v448 = vpack.c.b16 %v432, %v432
      %v449 = vpack.c.b16 %v433, %v433
      %v450 = vpack.c.b16 %v434, %v434
      %v451 = vpack.c.b16 %v435, %v435
      %vm452 = vsmask.f32 4368
      %vm453 = vmor %vm360, %vm452
      %v455 = vshrl.u32 %v436, 16
      %v457 = vrot.slane %v455, 7
      %v458 = vshll.u32 %v436, 16
      %v460 = vor.u32 %v457, %v458
      %v461 = vrot.slane %v457, 4
      %v463 = vshrl.u32 %v437, 16
      %v465 = vrot.slane %v463, 7
      %v466 = vshll.u32 %v437, 16
      %v468 = vor.u32 %v465, %v466
      %v469 = vsel %vm453, %v461, %v468
      %v470 = vrot.slane %v465, 4
      %v472 = vshrl.u32 %v438, 16
      %v474 = vrot.slane %v472, 7
      %v475 = vshll.u32 %v438, 16
      %v477 = vor.u32 %v474, %v475
      %v478 = vrot.slane %v474, 4
      %v480 = vshrl.u32 %v439, 16
      %v482 = vrot.slane %v480, 7
      %v483 = vshll.u32 %v439, 16
      %v485 = vor.u32 %v482, %v483
      %v486 = vsel %vm453, %v478, %v485
      %v487 = vrot.slane %v482, 4
      %v489 = vshrl.u32 %v440, 16
      %v491 = vrot.slane %v489, 7
      %v492 = vshll.u32 %v440, 16
      %v494 = vor.u32 %v491, %v492
      %v495 = vrot.slane %v491, 4
      %v497 = vshrl.u32 %v441, 16
      %v499 = vrot.slane %v497, 7
      %v500 = vshll.u32 %v441, 16
      %v502 = vor.u32 %v499, %v500
      %v503 = vsel %vm453, %v495, %v502
      %v504 = vrot.slane %v499, 4
      %v506 = vshrl.u32 %v442, 16
      %v508 = vrot.slane %v506, 7
      %v509 = vshll.u32 %v442, 16
      %v511 = vor.u32 %v508, %v509
      %v512 = vrot.slane %v508, 4
      %v514 = vshrl.u32 %v443, 16
      %v516 = vrot.slane %v514, 7
      %v517 = vshll.u32 %v443, 16
      %v519 = vor.u32 %v516, %v517
      %v520 = vsel %vm453, %v512, %v519
      %v521 = vrot.slane %v516, 4
      %v523 = vshrl.u32 %v444, 16
      %v525 = vrot.slane %v523, 7
      %v526 = vshll.u32 %v444, 16
      %v528 = vor.u32 %v525, %v526
      %v529 = vrot.slane %v525, 4
      %v531 = vshrl.u32 %v445, 16
      %v533 = vrot.slane %v531, 7
      %v534 = vshll.u32 %v445, 16
      %v536 = vor.u32 %v533, %v534
      %v537 = vsel %vm453, %v529, %v536
      %v538 = vrot.slane %v533, 4
      %v540 = vshrl.u32 %v446, 16
      %v542 = vrot.slane %v540, 7
      %v543 = vshll.u32 %v446, 16
      %v545 = vor.u32 %v542, %v543
      %v546 = vrot.slane %v542, 4
      %v548 = vshrl.u32 %v447, 16
      %v550 = vrot.slane %v548, 7
      %v551 = vshll.u32 %v447, 16
      %v553 = vor.u32 %v550, %v551
      %v554 = vsel %vm453, %v546, %v553
      %v555 = vrot.slane %v550, 4
      %v557 = vshrl.u32 %v448, 16
      %v559 = vrot.slane %v557, 7
      %v560 = vshll.u32 %v448, 16
      %v562 = vor.u32 %v559, %v560
      %v563 = vrot.slane %v559, 4
      %v565 = vshrl.u32 %v449, 16
      %v567 = vrot.slane %v565, 7
      %v568 = vshll.u32 %v449, 16
      %v570 = vor.u32 %v567, %v568
      %v571 = vsel %vm453, %v563, %v570
      %v572 = vrot.slane %v567, 4
      %v574 = vshrl.u32 %v450, 16
      %v576 = vrot.slane %v574, 7
      %v577 = vshll.u32 %v450, 16
      %v579 = vor.u32 %v576, %v577
      %v580 = vrot.slane %v576, 4
      %v582 = vshrl.u32 %v451, 16
      %v584 = vrot.slane %v582, 7
      %v585 = vshll.u32 %v451, 16
      %v587 = vor.u32 %v584, %v585
      %v588 = vsel %vm453, %v580, %v587
      %v589 = vrot.slane %v584, 4
      %vm614 = vcmask 1043456
      %vm615 = vsmask.f32 7938
      %vm616 = vmand %vm614, %vm615
      %v617 = vld [vmem:[#allocation2] sm:$0xf]
      %v618 = vsel %vm616, %v460, %v617
      %619 = vst [vmem:[#allocation2] sm:$0xf] %v618
      %620 = vst [vmem:[#allocation2 + $0x4] sm:$0xf] %v469
      %v621 = vld [vmem:[#allocation2 + $0x8] sm:$0x1]
      %v622 = vsel %vm361, %v470, %v621
      %623 = vst [vmem:[#allocation2 + $0x8] sm:$0x1] %v622
      %v624 = vld [vmem:[#allocation2 + $0xc] sm:$0xf]
      %v625 = vsel %vm616, %v477, %v624
      %626 = vst [vmem:[#allocation2 + $0xc] sm:$0xf] %v625
      %627 = vst [vmem:[#allocation2 + $0x10] sm:$0xf] %v486
      %v628 = vld [vmem:[#allocation2 + $0x14] sm:$0x1]
      %v629 = vsel %vm361, %v487, %v628
      %630 = vst [vmem:[#allocation2 + $0x14] sm:$0x1] %v629
      %v631 = vld [vmem:[#allocation2 + $0x18] sm:$0xf]
      %v632 = vsel %vm616, %v494, %v631
      %633 = vst [vmem:[#allocation2 + $0x18] sm:$0xf] %v632
      %634 = vst [vmem:[#allocation2 + $0x1c] sm:$0xf] %v503
      %v635 = vld [vmem:[#allocation2 + $0x20] sm:$0x1]
      %v636 = vsel %vm361, %v504, %v635
      %637 = vst [vmem:[#allocation2 + $0x20] sm:$0x1] %v636
      %v638 = vld [vmem:[#allocation2 + $0x24] sm:$0xf]
      %v639 = vsel %vm616, %v511, %v638
      %640 = vst [vmem:[#allocation2 + $0x24] sm:$0xf] %v639
      %641 = vst [vmem:[#allocation2 + $0x28] sm:$0xf] %v520
      %v642 = vld [vmem:[#allocation2 + $0x2c] sm:$0x1]
      %v643 = vsel %vm361, %v521, %v642
      %644 = vst [vmem:[#allocation2 + $0x2c] sm:$0x1] %v643
      %v645 = vld [vmem:[#allocation2 + $0x30] sm:$0xf]
      %v646 = vsel %vm616, %v528, %v645
      %647 = vst [vmem:[#allocation2 + $0x30] sm:$0xf] %v646
      %648 = vst [vmem:[#allocation2 + $0x34] sm:$0xf] %v537
      %v649 = vld [vmem:[#allocation2 + $0x38] sm:$0x1]
      %v650 = vsel %vm361, %v538, %v649
      %651 = vst [vmem:[#allocation2 + $0x38] sm:$0x1] %v650
      %v652 = vld [vmem:[#allocation2 + $0x3c] sm:$0xf]
      %v653 = vsel %vm616, %v545, %v652
      %654 = vst [vmem:[#allocation2 + $0x3c] sm:$0xf] %v653
      %655 = vst [vmem:[#allocation2 + $0x40] sm:$0xf] %v554
      %v656 = vld [vmem:[#allocation2 + $0x44] sm:$0x1]
      %v657 = vsel %vm361, %v555, %v656
      %658 = vst [vmem:[#allocation2 + $0x44] sm:$0x1] %v657
      %v659 = vld [vmem:[#allocation2 + $0x48] sm:$0xf]
      %v660 = vsel %vm616, %v562, %v659
      %661 = vst [vmem:[#allocation2 + $0x48] sm:$0xf] %v660
      %662 = vst [vmem:[#allocation2 + $0x4c] sm:$0xf] %v571
      %v663 = vld [vmem:[#allocation2 + $0x50] sm:$0x1]
      %v664 = vsel %vm361, %v572, %v663
      %665 = vst [vmem:[#allocation2 + $0x50] sm:$0x1] %v664
      %v666 = vld [vmem:[#allocation2 + $0x54] sm:$0xf]
      %v667 = vsel %vm616, %v579, %v666
      %668 = vst [vmem:[#allocation2 + $0x54] sm:$0xf] %v667
      %669 = vst [vmem:[#allocation2 + $0x58] sm:$0xf] %v588
      %v670 = vld [vmem:[#allocation2 + $0x5c] sm:$0x1]
      %v671 = vsel %vm361, %v589, %v670
      %672 = vst [vmem:[#allocation2 + $0x5c] sm:$0x1] %v671
      %v673 = vld [vmem:[#allocation3] sm:$0x1]
      %v674 = vsel %vm361, 0, %v673
      %675 = vst [vmem:[#allocation3] sm:$0x1] %v674
      %v676 = vld [vmem:[#allocation3 + $0xc] sm:$0x1]
      %v677 = vsel %vm361, 0, %v676
      %678 = vst [vmem:[#allocation3 + $0xc] sm:$0x1] %v677
      %v679 = vld [vmem:[#allocation3 + $0x18] sm:$0x1]
      %v680 = vsel %vm361, 0, %v679
      %681 = vst [vmem:[#allocation3 + $0x18] sm:$0x1] %v680
      %v682 = vld [vmem:[#allocation3 + $0x24] sm:$0x1]
      %v683 = vsel %vm361, 0, %v682
      %684 = vst [vmem:[#allocation3 + $0x24] sm:$0x1] %v683
      %v685 = vld [vmem:[#allocation3 + $0x30] sm:$0x1]
      %v686 = vsel %vm361, 0, %v685
      %687 = vst [vmem:[#allocation3 + $0x30] sm:$0x1] %v686
      %v688 = vld [vmem:[#allocation3 + $0x3c] sm:$0x1]
      %v689 = vsel %vm361, 0, %v688
      %690 = vst [vmem:[#allocation3 + $0x3c] sm:$0x1] %v689
      %v691 = vld [vmem:[#allocation3 + $0x48] sm:$0x1]
      %v692 = vsel %vm361, 0, %v691
      %693 = vst [vmem:[#allocation3 + $0x48] sm:$0x1] %v692
      %v694 = vld [vmem:[#allocation3 + $0x54] sm:$0x1]
      %v695 = vsel %vm361, 0, %v694
      %696 = vst [vmem:[#allocation3 + $0x54] sm:$0x1] %v695
      %v697 = vld [vmem:[#allocation3 + $0x60] sm:$0x1]
      %v698 = vsel %vm361, 0, %v697
      %699 = vst [vmem:[#allocation3 + $0x60] sm:$0x1] %v698
      %p700 = scmp.eq.s32.totalorder %s25, 0
      // Predicated region
      $region49: #{forward.4} parent=47 // pred_check
        %p701 = pneg %p700
      $region50: #{forward.4} parent=47 // pred_check_branch
        %703 = sbr.rel (%p701) target = $region52
      $region51: #{forward.4} parent=47 // pred_region
        %v704 = vld [vmem:[#allocation3] sm:$0xf]
        %v705 = vsel %vm616, 0, %v704
        %706 = vst [vmem:[#allocation3] sm:$0xf] %v705
        %707 = vst [vmem:[#allocation3 + $0x4] sm:$0xf] 0
        %v708 = vld [vmem:[#allocation3 + $0x8] sm:$0x1]
        %v709 = vsel %vm361, 0, %v708
        %710 = vst [vmem:[#allocation3 + $0x8] sm:$0x1] %v709
        %s711 = scalar_lea.vmem %s334, 16
        %v712 = vld [vmem:[%s711] sm:$0xff]
        %v713 = vld [vmem:[%s711 + $0x8] sm:$0xff]
        %v714 = vld [vmem:[%s711 + $0x20] sm:$0xff]
        %v715 = vld [vmem:[%s711 + $0x28] sm:$0xff]
        %v716 = vld [vmem:[%s711 + $0x40] sm:$0xff]
        %v717 = vld [vmem:[%s711 + $0x48] sm:$0xff]
        %v718 = vld [vmem:[%s711 + $0x60] sm:$0xff]
        %v719 = vld [vmem:[%s711 + $0x68] sm:$0xff]
        %v720 = vld [vmem:[%s711 + $0x80] sm:$0xff]
        %v721 = vld [vmem:[%s711 + $0x88] sm:$0xff]
        %v722 = vld [vmem:[%s711 + $0xa0] sm:$0xff]
        %v723 = vld [vmem:[%s711 + $0xa8] sm:$0xff]
        %v724 = vld [vmem:[%s711 + $0xc0] sm:$0xff]
        %v725 = vld [vmem:[%s711 + $0xc8] sm:$0xff]
        %v726 = vld [vmem:[%s711 + $0xe0] sm:$0xff]
        %v727 = vld [vmem:[%s711 + $0xe8] sm:$0xff]
        %v728 = vpack.c.bf16 %v713, %v712
        %v729 = vpack.c.bf16 %v715, %v714
        %v730 = vpack.c.bf16 %v717, %v716
        %v731 = vpack.c.bf16 %v719, %v718
        %v732 = vpack.c.bf16 %v721, %v720
        %v733 = vpack.c.bf16 %v723, %v722
        %v734 = vpack.c.bf16 %v725, %v724
        %v735 = vpack.c.bf16 %v727, %v726
        %v744 = vunpack.c.l.b16 %v728
        %v745 = vunpack.c.h.b16 %v728
        %v746 = vunpack.c.l.b16 %v729
        %v747 = vunpack.c.h.b16 %v729
        %v748 = vunpack.c.l.b16 %v730
        %v749 = vunpack.c.h.b16 %v730
        %v750 = vunpack.c.l.b16 %v731
        %v751 = vunpack.c.h.b16 %v731
        %v752 = vunpack.c.l.b16 %v732
        %v753 = vunpack.c.h.b16 %v732
        %v754 = vunpack.c.l.b16 %v733
        %v755 = vunpack.c.h.b16 %v733
        %v756 = vunpack.c.l.b16 %v734
        %v757 = vunpack.c.h.b16 %v734
        %v758 = vunpack.c.l.b16 %v735
        %v759 = vunpack.c.h.b16 %v735
        %v760 = vpack.c.b16 %v744, %v744
        %v761 = vpack.c.b16 %v745, %v745
        %v762 = vpack.c.b16 %v746, %v746
        %v763 = vpack.c.b16 %v747, %v747
        %v764 = vpack.c.b16 %v748, %v748
        %v765 = vpack.c.b16 %v749, %v749
        %v766 = vpack.c.b16 %v750, %v750
        %v767 = vpack.c.b16 %v751, %v751
        %v768 = vpack.c.b16 %v752, %v752
        %v769 = vpack.c.b16 %v753, %v753
        %v770 = vpack.c.b16 %v754, %v754
        %v771 = vpack.c.b16 %v755, %v755
        %v772 = vpack.c.b16 %v756, %v756
        %v773 = vpack.c.b16 %v757, %v757
        %v774 = vpack.c.b16 %v758, %v758
        %v775 = vpack.c.b16 %v759, %v759
        %v777 = vshrl.u32 %v760, 16
        %v779 = vrot.slane %v777, 7
        %v780 = vshll.u32 %v760, 16
        %v782 = vor.u32 %v779, %v780
        %v783 = vrot.slane %v779, 4
        %v785 = vshrl.u32 %v761, 16
        %v787 = vrot.slane %v785, 7
        %v788 = vshll.u32 %v761, 16
        %v790 = vor.u32 %v787, %v788
        %v791 = vsel %vm453, %v783, %v790
        %v792 = vrot.slane %v787, 4
        %v794 = vshrl.u32 %v762, 16
        %v796 = vrot.slane %v794, 7
        %v797 = vshll.u32 %v762, 16
        %v799 = vor.u32 %v796, %v797
        %v800 = vrot.slane %v796, 4
        %v802 = vshrl.u32 %v763, 16
        %v804 = vrot.slane %v802, 7
        %v805 = vshll.u32 %v763, 16
        %v807 = vor.u32 %v804, %v805
        %v808 = vsel %vm453, %v800, %v807
        %v809 = vrot.slane %v804, 4
        %v811 = vshrl.u32 %v764, 16
        %v813 = vrot.slane %v811, 7
        %v814 = vshll.u32 %v764, 16
        %v816 = vor.u32 %v813, %v814
        %v817 = vrot.slane %v813, 4
        %v819 = vshrl.u32 %v765, 16
        %v821 = vrot.slane %v819, 7
        %v822 = vshll.u32 %v765, 16
        %v824 = vor.u32 %v821, %v822
        %v825 = vsel %vm453, %v817, %v824
        %v826 = vrot.slane %v821, 4
        %v828 = vshrl.u32 %v766, 16
        %v830 = vrot.slane %v828, 7
        %v831 = vshll.u32 %v766, 16
        %v833 = vor.u32 %v830, %v831
        %v834 = vrot.slane %v830, 4
        %v836 = vshrl.u32 %v767, 16
        %v838 = vrot.slane %v836, 7
        %v839 = vshll.u32 %v767, 16
        %v841 = vor.u32 %v838, %v839
        %v842 = vsel %vm453, %v834, %v841
        %v843 = vrot.slane %v838, 4
        %v845 = vshrl.u32 %v768, 16
        %v847 = vrot.slane %v845, 7
        %v848 = vshll.u32 %v768, 16
        %v850 = vor.u32 %v847, %v848
        %v851 = vrot.slane %v847, 4
        %v853 = vshrl.u32 %v769, 16
        %v855 = vrot.slane %v853, 7
        %v856 = vshll.u32 %v769, 16
        %v858 = vor.u32 %v855, %v856
        %v859 = vsel %vm453, %v851, %v858
        %v860 = vrot.slane %v855, 4
        %v862 = vshrl.u32 %v770, 16
        %v864 = vrot.slane %v862, 7
        %v865 = vshll.u32 %v770, 16
        %v867 = vor.u32 %v864, %v865
        %v868 = vrot.slane %v864, 4
        %v870 = vshrl.u32 %v771, 16
        %v872 = vrot.slane %v870, 7
        %v873 = vshll.u32 %v771, 16
        %v875 = vor.u32 %v872, %v873
        %v876 = vsel %vm453, %v868, %v875
        %v877 = vrot.slane %v872, 4
        %v879 = vshrl.u32 %v772, 16
        %v881 = vrot.slane %v879, 7
        %v882 = vshll.u32 %v772, 16
        %v884 = vor.u32 %v881, %v882
        %v885 = vrot.slane %v881, 4
        %v887 = vshrl.u32 %v773, 16
        %v889 = vrot.slane %v887, 7
        %v890 = vshll.u32 %v773, 16
        %v892 = vor.u32 %v889, %v890
        %v893 = vsel %vm453, %v885, %v892
        %v894 = vrot.slane %v889, 4
        %v896 = vshrl.u32 %v774, 16
        %v898 = vrot.slane %v896, 7
        %v899 = vshll.u32 %v774, 16
        %v901 = vor.u32 %v898, %v899
        %v902 = vrot.slane %v898, 4
        %v904 = vshrl.u32 %v775, 16
        %v906 = vrot.slane %v904, 7
        %v907 = vshll.u32 %v775, 16
        %v909 = vor.u32 %v906, %v907
        %v910 = vsel %vm453, %v902, %v909
        %v911 = vrot.slane %v906, 4
        %s936 = scalar_lea.vmem [#allocation3], 12
        %v937 = vld [vmem:[%s936] sm:$0xf]
        %v938 = vsel %vm616, %v782, %v937
        %939 = vst [vmem:[%s936] sm:$0xf] %v938
        %940 = vst [vmem:[%s936 + $0x4] sm:$0xf] %v791
        %v941 = vld [vmem:[%s936 + $0x8] sm:$0x1]
        %v942 = vsel %vm361, %v792, %v941
        %943 = vst [vmem:[%s936 + $0x8] sm:$0x1] %v942
        %v944 = vld [vmem:[%s936 + $0xc] sm:$0xf]
        %v945 = vsel %vm616, %v799, %v944
        %946 = vst [vmem:[%s936 + $0xc] sm:$0xf] %v945
        %947 = vst [vmem:[%s936 + $0x10] sm:$0xf] %v808
        %v948 = vld [vmem:[%s936 + $0x14] sm:$0x1]
        %v949 = vsel %vm361, %v809, %v948
        %950 = vst [vmem:[%s936 + $0x14] sm:$0x1] %v949
        %v951 = vld [vmem:[%s936 + $0x18] sm:$0xf]
        %v952 = vsel %vm616, %v816, %v951
        %953 = vst [vmem:[%s936 + $0x18] sm:$0xf] %v952
        %954 = vst [vmem:[%s936 + $0x1c] sm:$0xf] %v825
        %v955 = vld [vmem:[%s936 + $0x20] sm:$0x1]
        %v956 = vsel %vm361, %v826, %v955
        %957 = vst [vmem:[%s936 + $0x20] sm:$0x1] %v956
        %v958 = vld [vmem:[%s936 + $0x24] sm:$0xf]
        %v959 = vsel %vm616, %v833, %v958
        %960 = vst [vmem:[%s936 + $0x24] sm:$0xf] %v959
        %961 = vst [vmem:[%s936 + $0x28] sm:$0xf] %v842
        %v962 = vld [vmem:[%s936 + $0x2c] sm:$0x1]
        %v963 = vsel %vm361, %v843, %v962
        %964 = vst [vmem:[%s936 + $0x2c] sm:$0x1] %v963
        %v965 = vld [vmem:[%s936 + $0x30] sm:$0xf]
        %v966 = vsel %vm616, %v850, %v965
        %967 = vst [vmem:[%s936 + $0x30] sm:$0xf] %v966
        %968 = vst [vmem:[%s936 + $0x34] sm:$0xf] %v859
        %v969 = vld [vmem:[%s936 + $0x38] sm:$0x1]
        %v970 = vsel %vm361, %v860, %v969
        %971 = vst [vmem:[%s936 + $0x38] sm:$0x1] %v970
        %v972 = vld [vmem:[%s936 + $0x3c] sm:$0xf]
        %v973 = vsel %vm616, %v867, %v972
        %974 = vst [vmem:[%s936 + $0x3c] sm:$0xf] %v973
        %975 = vst [vmem:[%s936 + $0x40] sm:$0xf] %v876
        %v976 = vld [vmem:[%s936 + $0x44] sm:$0x1]
        %v977 = vsel %vm361, %v877, %v976
        %978 = vst [vmem:[%s936 + $0x44] sm:$0x1] %v977
        %v979 = vld [vmem:[%s936 + $0x48] sm:$0xf]
        %v980 = vsel %vm616, %v884, %v979
        %981 = vst [vmem:[%s936 + $0x48] sm:$0xf] %v980
        %982 = vst [vmem:[%s936 + $0x4c] sm:$0xf] %v893
        %v983 = vld [vmem:[%s936 + $0x50] sm:$0x1]
        %v984 = vsel %vm361, %v894, %v983
        %985 = vst [vmem:[%s936 + $0x50] sm:$0x1] %v984
        %v986 = vld [vmem:[%s936 + $0x54] sm:$0xf]
        %v987 = vsel %vm616, %v901, %v986
        %988 = vst [vmem:[%s936 + $0x54] sm:$0xf] %v987
        %989 = vst [vmem:[%s936 + $0x58] sm:$0xf] %v910
        %v990 = vld [vmem:[%s936 + $0x5c] sm:$0x1]
        %v991 = vsel %vm361, %v911, %v990
        %992 = vst [vmem:[%s936 + $0x5c] sm:$0x1] %v991
      $region52: #{forward.4} parent=47 // pred_fallthru
        _
      %p993 = scmp.gt.s32.totalorder %s25, 0
      // Predicated region
      $region53: #{forward.4} parent=47 // pred_check
        %p994 = pneg %p993
      $region54: #{forward.4} parent=47 // pred_check_branch
        %996 = sbr.rel (%p994) target = $region56
      $region55: #{forward.4} parent=47 // pred_region
        %s997 = ssub.s32 %s358, 1
        %s998 = smul.u32 %s997, 32
        %s999 = sadd.s32 16, %s998
        %s1000 = scalar_lea.vmem %s334, %s999
        %v1001 = vld [vmem:[%s1000] sm:$0xff]
        %v1002 = vld [vmem:[%s1000 + $0x8] sm:$0xff]
        %v1003 = vld [vmem:[%s1000 + $0x20] sm:$0xff]
        %v1004 = vld [vmem:[%s1000 + $0x28] sm:$0xff]
        %v1005 = vld [vmem:[%s1000 + $0x40] sm:$0xff]
        %v1006 = vld [vmem:[%s1000 + $0x48] sm:$0xff]
        %v1007 = vld [vmem:[%s1000 + $0x60] sm:$0xff]
        %v1008 = vld [vmem:[%s1000 + $0x68] sm:$0xff]
        %v1009 = vld [vmem:[%s1000 + $0x80] sm:$0xff]
        %v1010 = vld [vmem:[%s1000 + $0x88] sm:$0xff]
        %v1011 = vld [vmem:[%s1000 + $0xa0] sm:$0xff]
        %v1012 = vld [vmem:[%s1000 + $0xa8] sm:$0xff]
        %v1013 = vld [vmem:[%s1000 + $0xc0] sm:$0xff]
        %v1014 = vld [vmem:[%s1000 + $0xc8] sm:$0xff]
        %v1015 = vld [vmem:[%s1000 + $0xe0] sm:$0xff]
        %v1016 = vld [vmem:[%s1000 + $0xe8] sm:$0xff]
        %v1017 = vld [vmem:[%s1000 + $0x100] sm:$0xff]
        %v1018 = vld [vmem:[%s1000 + $0x108] sm:$0xff]
        %v1019 = vpack.c.bf16 %v1002, %v1001
        %v1020 = vpack.c.bf16 %v1004, %v1003
        %v1021 = vpack.c.bf16 %v1006, %v1005
        %v1022 = vpack.c.bf16 %v1008, %v1007
        %v1023 = vpack.c.bf16 %v1010, %v1009
        %v1024 = vpack.c.bf16 %v1012, %v1011
        %v1025 = vpack.c.bf16 %v1014, %v1013
        %v1026 = vpack.c.bf16 %v1016, %v1015
        %v1027 = vpack.c.bf16 %v1018, %v1017
        %v1037 = vunpack.c.l.b16 %v1019
        %v1038 = vunpack.c.h.b16 %v1019
        %v1039 = vunpack.c.l.b16 %v1020
        %v1040 = vunpack.c.h.b16 %v1020
        %v1041 = vunpack.c.l.b16 %v1021
        %v1042 = vunpack.c.h.b16 %v1021
        %v1043 = vunpack.c.l.b16 %v1022
        %v1044 = vunpack.c.h.b16 %v1022
        %v1045 = vunpack.c.l.b16 %v1023
        %v1046 = vunpack.c.h.b16 %v1023
        %v1047 = vunpack.c.l.b16 %v1024
        %v1048 = vunpack.c.h.b16 %v1024
        %v1049 = vunpack.c.l.b16 %v1025
        %v1050 = vunpack.c.h.b16 %v1025
        %v1051 = vunpack.c.l.b16 %v1026
        %v1052 = vunpack.c.h.b16 %v1026
        %v1053 = vunpack.c.l.b16 %v1027
        %v1054 = vunpack.c.h.b16 %v1027
        %v1055 = vpack.c.b16 %v1037, %v1037
        %v1056 = vpack.c.b16 %v1038, %v1038
        %v1057 = vpack.c.b16 %v1039, %v1039
        %v1058 = vpack.c.b16 %v1040, %v1040
        %v1059 = vpack.c.b16 %v1041, %v1041
        %v1060 = vpack.c.b16 %v1042, %v1042
        %v1061 = vpack.c.b16 %v1043, %v1043
        %v1062 = vpack.c.b16 %v1044, %v1044
        %v1063 = vpack.c.b16 %v1045, %v1045
        %v1064 = vpack.c.b16 %v1046, %v1046
        %v1065 = vpack.c.b16 %v1047, %v1047
        %v1066 = vpack.c.b16 %v1048, %v1048
        %v1067 = vpack.c.b16 %v1049, %v1049
        %v1068 = vpack.c.b16 %v1050, %v1050
        %v1069 = vpack.c.b16 %v1051, %v1051
        %v1070 = vpack.c.b16 %v1052, %v1052
        %v1071 = vpack.c.b16 %v1053, %v1053
        %v1072 = vpack.c.b16 %v1054, %v1054
        %v1074 = vshrl.u32 %v1055, 16
        %v1076 = vrot.slane %v1074, 7
        %v1077 = vshll.u32 %v1055, 16
        %v1079 = vor.u32 %v1076, %v1077
        %v1080 = vrot.slane %v1076, 4
        %v1082 = vshrl.u32 %v1056, 16
        %v1084 = vrot.slane %v1082, 7
        %v1085 = vshll.u32 %v1056, 16
        %v1087 = vor.u32 %v1084, %v1085
        %v1088 = vsel %vm453, %v1080, %v1087
        %v1089 = vrot.slane %v1084, 4
        %v1091 = vshrl.u32 %v1057, 16
        %v1093 = vrot.slane %v1091, 7
        %v1094 = vshll.u32 %v1057, 16
        %v1096 = vor.u32 %v1093, %v1094
        %v1097 = vrot.slane %v1093, 4
        %v1099 = vshrl.u32 %v1058, 16
        %v1101 = vrot.slane %v1099, 7
        %v1102 = vshll.u32 %v1058, 16
        %v1104 = vor.u32 %v1101, %v1102
        %v1105 = vsel %vm453, %v1097, %v1104
        %v1106 = vrot.slane %v1101, 4
        %v1108 = vshrl.u32 %v1059, 16
        %v1110 = vrot.slane %v1108, 7
        %v1111 = vshll.u32 %v1059, 16
        %v1113 = vor.u32 %v1110, %v1111
        %v1114 = vrot.slane %v1110, 4
        %v1116 = vshrl.u32 %v1060, 16
        %v1118 = vrot.slane %v1116, 7
        %v1119 = vshll.u32 %v1060, 16
        %v1121 = vor.u32 %v1118, %v1119
        %v1122 = vsel %vm453, %v1114, %v1121
        %v1123 = vrot.slane %v1118, 4
        %v1125 = vshrl.u32 %v1061, 16
        %v1127 = vrot.slane %v1125, 7
        %v1128 = vshll.u32 %v1061, 16
        %v1130 = vor.u32 %v1127, %v1128
        %v1131 = vrot.slane %v1127, 4
        %v1133 = vshrl.u32 %v1062, 16
        %v1135 = vrot.slane %v1133, 7
        %v1136 = vshll.u32 %v1062, 16
        %v1138 = vor.u32 %v1135, %v1136
        %v1139 = vsel %vm453, %v1131, %v1138
        %v1140 = vrot.slane %v1135, 4
        %v1142 = vshrl.u32 %v1063, 16
        %v1144 = vrot.slane %v1142, 7
        %v1145 = vshll.u32 %v1063, 16
        %v1147 = vor.u32 %v1144, %v1145
        %v1148 = vrot.slane %v1144, 4
        %v1150 = vshrl.u32 %v1064, 16
        %v1152 = vrot.slane %v1150, 7
        %v1153 = vshll.u32 %v1064, 16
        %v1155 = vor.u32 %v1152, %v1153
        %v1156 = vsel %vm453, %v1148, %v1155
        %v1157 = vrot.slane %v1152, 4
        %v1159 = vshrl.u32 %v1065, 16
        %v1161 = vrot.slane %v1159, 7
        %v1162 = vshll.u32 %v1065, 16
        %v1164 = vor.u32 %v1161, %v1162
        %v1165 = vrot.slane %v1161, 4
        %v1167 = vshrl.u32 %v1066, 16
        %v1169 = vrot.slane %v1167, 7
        %v1170 = vshll.u32 %v1066, 16
        %v1172 = vor.u32 %v1169, %v1170
        %v1173 = vsel %vm453, %v1165, %v1172
        %v1174 = vrot.slane %v1169, 4
        %v1176 = vshrl.u32 %v1067, 16
        %v1178 = vrot.slane %v1176, 7
        %v1179 = vshll.u32 %v1067, 16
        %v1181 = vor.u32 %v1178, %v1179
        %v1182 = vrot.slane %v1178, 4
        %v1184 = vshrl.u32 %v1068, 16
        %v1186 = vrot.slane %v1184, 7
        %v1187 = vshll.u32 %v1068, 16
        %v1189 = vor.u32 %v1186, %v1187
        %v1190 = vsel %vm453, %v1182, %v1189
        %v1191 = vrot.slane %v1186, 4
        %v1193 = vshrl.u32 %v1069, 16
        %v1195 = vrot.slane %v1193, 7
        %v1196 = vshll.u32 %v1069, 16
        %v1198 = vor.u32 %v1195, %v1196
        %v1199 = vrot.slane %v1195, 4
        %v1201 = vshrl.u32 %v1070, 16
        %v1203 = vrot.slane %v1201, 7
        %v1204 = vshll.u32 %v1070, 16
        %v1206 = vor.u32 %v1203, %v1204
        %v1207 = vsel %vm453, %v1199, %v1206
        %v1208 = vrot.slane %v1203, 4
        %v1210 = vshrl.u32 %v1071, 16
        %v1212 = vrot.slane %v1210, 7
        %v1213 = vshll.u32 %v1071, 16
        %v1215 = vor.u32 %v1212, %v1213
        %v1216 = vrot.slane %v1212, 4
        %v1218 = vshrl.u32 %v1072, 16
        %v1220 = vrot.slane %v1218, 7
        %v1221 = vshll.u32 %v1072, 16
        %v1223 = vor.u32 %v1220, %v1221
        %v1224 = vsel %vm453, %v1216, %v1223
        %v1225 = vrot.slane %v1220, 4
        %v1253 = vld [vmem:[#allocation3] sm:$0xf]
        %v1254 = vsel %vm616, %v1079, %v1253
        %1255 = vst [vmem:[#allocation3] sm:$0xf] %v1254
        %1256 = vst [vmem:[#allocation3 + $0x4] sm:$0xf] %v1088
        %v1257 = vld [vmem:[#allocation3 + $0x8] sm:$0x1]
        %v1258 = vsel %vm361, %v1089, %v1257
        %1259 = vst [vmem:[#allocation3 + $0x8] sm:$0x1] %v1258
        %v1260 = vld [vmem:[#allocation3 + $0xc] sm:$0xf]
        %v1261 = vsel %vm616, %v1096, %v1260
        %1262 = vst [vmem:[#allocation3 + $0xc] sm:$0xf] %v1261
        %1263 = vst [vmem:[#allocation3 + $0x10] sm:$0xf] %v1105
        %v1264 = vld [vmem:[#allocation3 + $0x14] sm:$0x1]
        %v1265 = vsel %vm361, %v1106, %v1264
        %1266 = vst [vmem:[#allocation3 + $0x14] sm:$0x1] %v1265
        %v1267 = vld [vmem:[#allocation3 + $0x18] sm:$0xf]
        %v1268 = vsel %vm616, %v1113, %v1267
        %1269 = vst [vmem:[#allocation3 + $0x18] sm:$0xf] %v1268
        %1270 = vst [vmem:[#allocation3 + $0x1c] sm:$0xf] %v1122
        %v1271 = vld [vmem:[#allocation3 + $0x20] sm:$0x1]
        %v1272 = vsel %vm361, %v1123, %v1271
        %1273 = vst [vmem:[#allocation3 + $0x20] sm:$0x1] %v1272
        %v1274 = vld [vmem:[#allocation3 + $0x24] sm:$0xf]
        %v1275 = vsel %vm616, %v1130, %v1274
        %1276 = vst [vmem:[#allocation3 + $0x24] sm:$0xf] %v1275
        %1277 = vst [vmem:[#allocation3 + $0x28] sm:$0xf] %v1139
        %v1278 = vld [vmem:[#allocation3 + $0x2c] sm:$0x1]
        %v1279 = vsel %vm361, %v1140, %v1278
        %1280 = vst [vmem:[#allocation3 + $0x2c] sm:$0x1] %v1279
        %v1281 = vld [vmem:[#allocation3 + $0x30] sm:$0xf]
        %v1282 = vsel %vm616, %v1147, %v1281
        %1283 = vst [vmem:[#allocation3 + $0x30] sm:$0xf] %v1282
        %1284 = vst [vmem:[#allocation3 + $0x34] sm:$0xf] %v1156
        %v1285 = vld [vmem:[#allocation3 + $0x38] sm:$0x1]
        %v1286 = vsel %vm361, %v1157, %v1285
        %1287 = vst [vmem:[#allocation3 + $0x38] sm:$0x1] %v1286
        %v1288 = vld [vmem:[#allocation3 + $0x3c] sm:$0xf]
        %v1289 = vsel %vm616, %v1164, %v1288
        %1290 = vst [vmem:[#allocation3 + $0x3c] sm:$0xf] %v1289
        %1291 = vst [vmem:[#allocation3 + $0x40] sm:$0xf] %v1173
        %v1292 = vld [vmem:[#allocation3 + $0x44] sm:$0x1]
        %v1293 = vsel %vm361, %v1174, %v1292
        %1294 = vst [vmem:[#allocation3 + $0x44] sm:$0x1] %v1293
        %v1295 = vld [vmem:[#allocation3 + $0x48] sm:$0xf]
        %v1296 = vsel %vm616, %v1181, %v1295
        %1297 = vst [vmem:[#allocation3 + $0x48] sm:$0xf] %v1296
        %1298 = vst [vmem:[#allocation3 + $0x4c] sm:$0xf] %v1190
        %v1299 = vld [vmem:[#allocation3 + $0x50] sm:$0x1]
        %v1300 = vsel %vm361, %v1191, %v1299
        %1301 = vst [vmem:[#allocation3 + $0x50] sm:$0x1] %v1300
        %v1302 = vld [vmem:[#allocation3 + $0x54] sm:$0xf]
        %v1303 = vsel %vm616, %v1198, %v1302
        %1304 = vst [vmem:[#allocation3 + $0x54] sm:$0xf] %v1303
        %1305 = vst [vmem:[#allocation3 + $0x58] sm:$0xf] %v1207
        %v1306 = vld [vmem:[#allocation3 + $0x5c] sm:$0x1]
        %v1307 = vsel %vm361, %v1208, %v1306
        %1308 = vst [vmem:[#allocation3 + $0x5c] sm:$0x1] %v1307
        %v1309 = vld [vmem:[#allocation3 + $0x60] sm:$0xf]
        %v1310 = vsel %vm616, %v1215, %v1309
        %1311 = vst [vmem:[#allocation3 + $0x60] sm:$0xf] %v1310
        %1312 = vst [vmem:[#allocation3 + $0x64] sm:$0xf] %v1224
        %v1313 = vld [vmem:[#allocation3 + $0x68] sm:$0x1]
        %v1314 = vsel %vm361, %v1225, %v1313
        %1315 = vst [vmem:[#allocation3 + $0x68] sm:$0x1] %v1314
      $region56: #{forward.4} parent=47 // pred_fallthru
        _
      %v1316 = vld [vmem:[#allocation3] sm:$0xf]
      %v1317 = vld [vmem:[#allocation3 + $0x4] sm:$0xf]
      %v1318 = vld [vmem:[#allocation3 + $0xc] sm:$0xf]
      %v1319 = vld [vmem:[#allocation3 + $0x10] sm:$0xf]
      %v1320 = vld [vmem:[#allocation3 + $0x18] sm:$0xf]
      %v1321 = vld [vmem:[#allocation3 + $0x1c] sm:$0xf]
      %v1322 = vld [vmem:[#allocation3 + $0x24] sm:$0xf]
      %v1323 = vld [vmem:[#allocation3 + $0x28] sm:$0xf]
      %v1324 = vld [vmem:[#allocation3 + $0x30] sm:$0xf]
      %v1325 = vld [vmem:[#allocation3 + $0x34] sm:$0xf]
      %v1326 = vld [vmem:[#allocation3 + $0x3c] sm:$0xf]
      %v1327 = vld [vmem:[#allocation3 + $0x40] sm:$0xf]
      %v1328 = vld [vmem:[#allocation3 + $0x48] sm:$0xf]
      %v1329 = vld [vmem:[#allocation3 + $0x4c] sm:$0xf]
      %v1330 = vld [vmem:[#allocation3 + $0x54] sm:$0xf]
      %v1331 = vld [vmem:[#allocation3 + $0x58] sm:$0xf]
      %v1332 = vld [vmem:[#allocation3 + $0x8] sm:$0x1]
      %v1333 = vld [vmem:[#allocation3 + $0x14] sm:$0x1]
      %v1334 = vld [vmem:[#allocation3 + $0x20] sm:$0x1]
      %v1335 = vld [vmem:[#allocation3 + $0x2c] sm:$0x1]
      %v1336 = vld [vmem:[#allocation3 + $0x38] sm:$0x1]
      %v1337 = vld [vmem:[#allocation3 + $0x44] sm:$0x1]
      %v1338 = vld [vmem:[#allocation3 + $0x50] sm:$0x1]
      %v1339 = vld [vmem:[#allocation3 + $0x5c] sm:$0x1]
      %v1340 = vld [vmem:[#allocation2] sm:$0xf]
      %v1341 = vld [vmem:[#allocation2 + $0x4] sm:$0xf]
      %v1342 = vld [vmem:[#allocation2 + $0xc] sm:$0xf]
      %v1343 = vld [vmem:[#allocation2 + $0x10] sm:$0xf]
      %v1344 = vld [vmem:[#allocation2 + $0x18] sm:$0xf]
      %v1345 = vld [vmem:[#allocation2 + $0x1c] sm:$0xf]
      %v1346 = vld [vmem:[#allocation2 + $0x24] sm:$0xf]
      %v1347 = vld [vmem:[#allocation2 + $0x28] sm:$0xf]
      %v1348 = vld [vmem:[#allocation2 + $0x30] sm:$0xf]
      %v1349 = vld [vmem:[#allocation2 + $0x34] sm:$0xf]
      %v1350 = vld [vmem:[#allocation2 + $0x3c] sm:$0xf]
      %v1351 = vld [vmem:[#allocation2 + $0x40] sm:$0xf]
      %v1352 = vld [vmem:[#allocation2 + $0x48] sm:$0xf]
      %v1353 = vld [vmem:[#allocation2 + $0x4c] sm:$0xf]
      %v1354 = vld [vmem:[#allocation2 + $0x54] sm:$0xf]
      %v1355 = vld [vmem:[#allocation2 + $0x58] sm:$0xf]
      %v1356 = vld [vmem:[#allocation2 + $0x8] sm:$0x1]
      %v1357 = vld [vmem:[#allocation2 + $0x14] sm:$0x1]
      %v1358 = vld [vmem:[#allocation2 + $0x20] sm:$0x1]
      %v1359 = vld [vmem:[#allocation2 + $0x2c] sm:$0x1]
      %v1360 = vld [vmem:[#allocation2 + $0x38] sm:$0x1]
      %v1361 = vld [vmem:[#allocation2 + $0x44] sm:$0x1]
      %v1362 = vld [vmem:[#allocation2 + $0x50] sm:$0x1]
      %v1363 = vld [vmem:[#allocation2 + $0x5c] sm:$0x1]
      %s1364 = scalar_lea.vmem [#allocation3], 12
      %v1365 = vld [vmem:[%s1364] sm:$0xf]
      %v1366 = vld [vmem:[%s1364 + $0x4] sm:$0xf]
      %v1367 = vld [vmem:[%s1364 + $0xc] sm:$0xf]
      %v1368 = vld [vmem:[%s1364 + $0x10] sm:$0xf]
      %v1369 = vld [vmem:[%s1364 + $0x18] sm:$0xf]
      %v1370 = vld [vmem:[%s1364 + $0x1c] sm:$0xf]
      %v1371 = vld [vmem:[%s1364 + $0x24] sm:$0xf]
      %v1372 = vld [vmem:[%s1364 + $0x28] sm:$0xf]
      %v1373 = vld [vmem:[%s1364 + $0x30] sm:$0xf]
      %v1374 = vld [vmem:[%s1364 + $0x34] sm:$0xf]
      %v1375 = vld [vmem:[%s1364 + $0x3c] sm:$0xf]
      %v1376 = vld [vmem:[%s1364 + $0x40] sm:$0xf]
      %v1377 = vld [vmem:[%s1364 + $0x48] sm:$0xf]
      %v1378 = vld [vmem:[%s1364 + $0x4c] sm:$0xf]
      %v1379 = vld [vmem:[%s1364 + $0x54] sm:$0xf]
      %v1380 = vld [vmem:[%s1364 + $0x58] sm:$0xf]
      %v1381 = vld [vmem:[%s1364 + $0x8] sm:$0x1]
      %v1382 = vld [vmem:[%s1364 + $0x14] sm:$0x1]
      %v1383 = vld [vmem:[%s1364 + $0x20] sm:$0x1]
      %v1384 = vld [vmem:[%s1364 + $0x2c] sm:$0x1]
      %v1385 = vld [vmem:[%s1364 + $0x38] sm:$0x1]
      %v1386 = vld [vmem:[%s1364 + $0x44] sm:$0x1]
      %v1387 = vld [vmem:[%s1364 + $0x50] sm:$0x1]
      %v1388 = vld [vmem:[%s1364 + $0x5c] sm:$0x1]
      %v1405 = vunpack.c.l.b16 %v1316
      %v1406 = vunpack.c.l.b16 %v1317
      %v1407 = vunpack.c.l.b16 %v1318
      %v1408 = vunpack.c.l.b16 %v1319
      %v1409 = vunpack.c.l.b16 %v1320
      %v1410 = vunpack.c.l.b16 %v1321
      %v1411 = vunpack.c.l.b16 %v1322
      %v1412 = vunpack.c.l.b16 %v1323
      %v1413 = vunpack.c.l.b16 %v1324
      %v1414 = vunpack.c.l.b16 %v1325
      %v1415 = vunpack.c.l.b16 %v1326
      %v1416 = vunpack.c.l.b16 %v1327
      %v1417 = vunpack.c.l.b16 %v1328
      %v1418 = vunpack.c.l.b16 %v1329
      %v1419 = vunpack.c.l.b16 %v1330
      %v1420 = vunpack.c.l.b16 %v1331
      %v1421 = vpack.c.b16 %v1406, %v1405
      %v1422 = vpack.c.b16 %v1408, %v1407
      %v1423 = vpack.c.b16 %v1410, %v1409
      %v1424 = vpack.c.b16 %v1412, %v1411
      %v1425 = vpack.c.b16 %v1414, %v1413
      %v1426 = vpack.c.b16 %v1416, %v1415
      %v1427 = vpack.c.b16 %v1418, %v1417
      %v1428 = vpack.c.b16 %v1420, %v1419
      %1429 = vrot.lane.b32.xlu0 %v1421, 64
      %v1430 = vpop.permute.xlu0 %1429
      %1431 = vrot.lane.b32.xlu0 %v1422, 64
      %v1432 = vpop.permute.xlu0 %1431
      %1433 = vrot.lane.b32.xlu0 %v1423, 64
      %v1434 = vpop.permute.xlu0 %1433
      %1435 = vrot.lane.b32.xlu0 %v1424, 64
      %v1436 = vpop.permute.xlu0 %1435
      %1437 = vrot.lane.b32.xlu0 %v1425, 64
      %v1438 = vpop.permute.xlu0 %1437
      %1439 = vrot.lane.b32.xlu0 %v1426, 64
      %v1440 = vpop.permute.xlu0 %1439
      %1441 = vrot.lane.b32.xlu0 %v1427, 64
      %v1442 = vpop.permute.xlu0 %1441
      %1443 = vrot.lane.b32.xlu0 %v1428, 64
      %v1444 = vpop.permute.xlu0 %1443
      %v1453 = vunpack.c.l.b16 %v1332
      %v1454 = vunpack.c.l.b16 %v1333
      %v1455 = vunpack.c.l.b16 %v1334
      %v1456 = vunpack.c.l.b16 %v1335
      %v1457 = vunpack.c.l.b16 %v1336
      %v1458 = vunpack.c.l.b16 %v1337
      %v1459 = vunpack.c.l.b16 %v1338
      %v1460 = vunpack.c.l.b16 %v1339
      %v1461 = vpack.c.b16 %v1453, %v1453
      %v1462 = vpack.c.b16 %v1454, %v1454
      %v1463 = vpack.c.b16 %v1455, %v1455
      %v1464 = vpack.c.b16 %v1456, %v1456
      %v1465 = vpack.c.b16 %v1457, %v1457
      %v1466 = vpack.c.b16 %v1458, %v1458
      %v1467 = vpack.c.b16 %v1459, %v1459
      %v1468 = vpack.c.b16 %v1460, %v1460
      %vm1469 = vsmask.f32 7424
      %v1471 = vshrl.u32 %v1421, 16
      %v1473 = vshll.u32 %v1421, 16
      %v1475 = vrot.slane %v1473, 1
      %v1476 = vor.u32 %v1471, %v1475
      %v1478 = vshll.u32 %v1461, 16
      %v1480 = vrot.slane %v1478, 1
      %v1481 = vsel %vm1469, %v1476, %v1480
      %v1483 = vshrl.u32 %v1422, 16
      %v1485 = vshll.u32 %v1422, 16
      %v1487 = vrot.slane %v1485, 1
      %v1488 = vor.u32 %v1483, %v1487
      %v1490 = vshll.u32 %v1462, 16
      %v1492 = vrot.slane %v1490, 1
      %v1493 = vsel %vm1469, %v1488, %v1492
      %v1495 = vshrl.u32 %v1423, 16
      %v1497 = vshll.u32 %v1423, 16
      %v1499 = vrot.slane %v1497, 1
      %v1500 = vor.u32 %v1495, %v1499
      %v1502 = vshll.u32 %v1463, 16
      %v1504 = vrot.slane %v1502, 1
      %v1505 = vsel %vm1469, %v1500, %v1504
      %v1507 = vshrl.u32 %v1424, 16
      %v1509 = vshll.u32 %v1424, 16
      %v1511 = vrot.slane %v1509, 1
      %v1512 = vor.u32 %v1507, %v1511
      %v1514 = vshll.u32 %v1464, 16
      %v1516 = vrot.slane %v1514, 1
      %v1517 = vsel %vm1469, %v1512, %v1516
      %v1519 = vshrl.u32 %v1425, 16
      %v1521 = vshll.u32 %v1425, 16
      %v1523 = vrot.slane %v1521, 1
      %v1524 = vor.u32 %v1519, %v1523
      %v1526 = vshll.u32 %v1465, 16
      %v1528 = vrot.slane %v1526, 1
      %v1529 = vsel %vm1469, %v1524, %v1528
      %v1531 = vshrl.u32 %v1426, 16
      %v1533 = vshll.u32 %v1426, 16
      %v1535 = vrot.slane %v1533, 1
      %v1536 = vor.u32 %v1531, %v1535
      %v1538 = vshll.u32 %v1466, 16
      %v1540 = vrot.slane %v1538, 1
      %v1541 = vsel %vm1469, %v1536, %v1540
      %v1543 = vshrl.u32 %v1427, 16
      %v1545 = vshll.u32 %v1427, 16
      %v1547 = vrot.slane %v1545, 1
      %v1548 = vor.u32 %v1543, %v1547
      %v1550 = vshll.u32 %v1467, 16
      %v1552 = vrot.slane %v1550, 1
      %v1553 = vsel %vm1469, %v1548, %v1552
      %v1555 = vshrl.u32 %v1428, 16
      %v1557 = vshll.u32 %v1428, 16
      %v1559 = vrot.slane %v1557, 1
      %v1560 = vor.u32 %v1555, %v1559
      %v1562 = vshll.u32 %v1468, 16
      %v1564 = vrot.slane %v1562, 1
      %v1565 = vsel %vm1469, %v1560, %v1564
      %1566 = vrot.lane.b32.xlu0 %v1481, 64
      %v1567 = vpop.permute.xlu0 %1566
      %1568 = vrot.lane.b32.xlu0 %v1493, 64
      %v1569 = vpop.permute.xlu0 %1568
      %1570 = vrot.lane.b32.xlu0 %v1505, 64
      %v1571 = vpop.permute.xlu0 %1570
      %1572 = vrot.lane.b32.xlu0 %v1517, 64
      %v1573 = vpop.permute.xlu0 %1572
      %1574 = vrot.lane.b32.xlu0 %v1529, 64
      %v1575 = vpop.permute.xlu0 %1574
      %1576 = vrot.lane.b32.xlu0 %v1541, 64
      %v1577 = vpop.permute.xlu0 %1576
      %1578 = vrot.lane.b32.xlu0 %v1553, 64
      %v1579 = vpop.permute.xlu0 %1578
      %1580 = vrot.lane.b32.xlu0 %v1565, 64
      %v1581 = vpop.permute.xlu0 %1580
      %v1598 = vunpack.c.l.b16 %v1340
      %v1599 = vunpack.c.l.b16 %v1341
      %v1600 = vunpack.c.l.b16 %v1342
      %v1601 = vunpack.c.l.b16 %v1343
      %v1602 = vunpack.c.l.b16 %v1344
      %v1603 = vunpack.c.l.b16 %v1345
      %v1604 = vunpack.c.l.b16 %v1346
      %v1605 = vunpack.c.l.b16 %v1347
      %v1606 = vunpack.c.l.b16 %v1348
      %v1607 = vunpack.c.l.b16 %v1349
      %v1608 = vunpack.c.l.b16 %v1350
      %v1609 = vunpack.c.l.b16 %v1351
      %v1610 = vunpack.c.l.b16 %v1352
      %v1611 = vunpack.c.l.b16 %v1353
      %v1612 = vunpack.c.l.b16 %v1354
      %v1613 = vunpack.c.l.b16 %v1355
      %v1614 = vpack.c.b16 %v1599, %v1598
      %v1615 = vpack.c.b16 %v1601, %v1600
      %v1616 = vpack.c.b16 %v1603, %v1602
      %v1617 = vpack.c.b16 %v1605, %v1604
      %v1618 = vpack.c.b16 %v1607, %v1606
      %v1619 = vpack.c.b16 %v1609, %v1608
      %v1620 = vpack.c.b16 %v1611, %v1610
      %v1621 = vpack.c.b16 %v1613, %v1612
      %v1630 = vunpack.c.l.b16 %v1356
      %v1631 = vunpack.c.l.b16 %v1357
      %v1632 = vunpack.c.l.b16 %v1358
      %v1633 = vunpack.c.l.b16 %v1359
      %v1634 = vunpack.c.l.b16 %v1360
      %v1635 = vunpack.c.l.b16 %v1361
      %v1636 = vunpack.c.l.b16 %v1362
      %v1637 = vunpack.c.l.b16 %v1363
      %v1638 = vpack.c.b16 %v1630, %v1630
      %v1639 = vpack.c.b16 %v1631, %v1631
      %v1640 = vpack.c.b16 %v1632, %v1632
      %v1641 = vpack.c.b16 %v1633, %v1633
      %v1642 = vpack.c.b16 %v1634, %v1634
      %v1643 = vpack.c.b16 %v1635, %v1635
      %v1644 = vpack.c.b16 %v1636, %v1636
      %v1645 = vpack.c.b16 %v1637, %v1637
      %v1647 = vshrl.u32 %v1614, 16
      %v1649 = vshll.u32 %v1614, 16
      %v1651 = vrot.slane %v1649, 1
      %v1652 = vor.u32 %v1647, %v1651
      %v1654 = vshll.u32 %v1638, 16
      %v1656 = vrot.slane %v1654, 1
      %v1657 = vsel %vm1469, %v1652, %v1656
      %v1659 = vshrl.u32 %v1615, 16
      %v1661 = vshll.u32 %v1615, 16
      %v1663 = vrot.slane %v1661, 1
      %v1664 = vor.u32 %v1659, %v1663
      %v1666 = vshll.u32 %v1639, 16
      %v1668 = vrot.slane %v1666, 1
      %v1669 = vsel %vm1469, %v1664, %v1668
      %v1671 = vshrl.u32 %v1616, 16
      %v1673 = vshll.u32 %v1616, 16
      %v1675 = vrot.slane %v1673, 1
      %v1676 = vor.u32 %v1671, %v1675
      %v1678 = vshll.u32 %v1640, 16
      %v1680 = vrot.slane %v1678, 1
      %v1681 = vsel %vm1469, %v1676, %v1680
      %v1683 = vshrl.u32 %v1617, 16
      %v1685 = vshll.u32 %v1617, 16
      %v1687 = vrot.slane %v1685, 1
      %v1688 = vor.u32 %v1683, %v1687
      %v1690 = vshll.u32 %v1641, 16
      %v1692 = vrot.slane %v1690, 1
      %v1693 = vsel %vm1469, %v1688, %v1692
      %v1695 = vshrl.u32 %v1618, 16
      %v1697 = vshll.u32 %v1618, 16
      %v1699 = vrot.slane %v1697, 1
      %v1700 = vor.u32 %v1695, %v1699
      %v1702 = vshll.u32 %v1642, 16
      %v1704 = vrot.slane %v1702, 1
      %v1705 = vsel %vm1469, %v1700, %v1704
      %v1707 = vshrl.u32 %v1619, 16
      %v1709 = vshll.u32 %v1619, 16
      %v1711 = vrot.slane %v1709, 1
      %v1712 = vor.u32 %v1707, %v1711
      %v1714 = vshll.u32 %v1643, 16
      %v1716 = vrot.slane %v1714, 1
      %v1717 = vsel %vm1469, %v1712, %v1716
      %v1719 = vshrl.u32 %v1620, 16
      %v1721 = vshll.u32 %v1620, 16
      %v1723 = vrot.slane %v1721, 1
      %v1724 = vor.u32 %v1719, %v1723
      %v1726 = vshll.u32 %v1644, 16
      %v1728 = vrot.slane %v1726, 1
      %v1729 = vsel %vm1469, %v1724, %v1728
      %v1731 = vshrl.u32 %v1621, 16
      %v1733 = vshll.u32 %v1621, 16
      %v1735 = vrot.slane %v1733, 1
      %v1736 = vor.u32 %v1731, %v1735
      %v1738 = vshll.u32 %v1645, 16
      %v1740 = vrot.slane %v1738, 1
      %v1741 = vsel %vm1469, %v1736, %v1740
      %v1758 = vunpack.c.l.b16 %v1365
      %v1759 = vunpack.c.l.b16 %v1366
      %v1760 = vunpack.c.l.b16 %v1367
      %v1761 = vunpack.c.l.b16 %v1368
      %v1762 = vunpack.c.l.b16 %v1369
      %v1763 = vunpack.c.l.b16 %v1370
      %v1764 = vunpack.c.l.b16 %v1371
      %v1765 = vunpack.c.l.b16 %v1372
      %v1766 = vunpack.c.l.b16 %v1373
      %v1767 = vunpack.c.l.b16 %v1374
      %v1768 = vunpack.c.l.b16 %v1375
      %v1769 = vunpack.c.l.b16 %v1376
      %v1770 = vunpack.c.l.b16 %v1377
      %v1771 = vunpack.c.l.b16 %v1378
      %v1772 = vunpack.c.l.b16 %v1379
      %v1773 = vunpack.c.l.b16 %v1380
      %v1774 = vpack.c.b16 %v1759, %v1758
      %v1775 = vpack.c.b16 %v1761, %v1760
      %v1776 = vpack.c.b16 %v1763, %v1762
      %v1777 = vpack.c.b16 %v1765, %v1764
      %v1778 = vpack.c.b16 %v1767, %v1766
      %v1779 = vpack.c.b16 %v1769, %v1768
      %v1780 = vpack.c.b16 %v1771, %v1770
      %v1781 = vpack.c.b16 %v1773, %v1772
      %1782 = vrot.lane.b32.xlu0 %v1774, 64
      %v1783 = vpop.permute.xlu0 %1782
      %1784 = vrot.lane.b32.xlu0 %v1775, 64
      %v1785 = vpop.permute.xlu0 %1784
      %1786 = vrot.lane.b32.xlu0 %v1776, 64
      %v1787 = vpop.permute.xlu0 %1786
      %1788 = vrot.lane.b32.xlu0 %v1777, 64
      %v1789 = vpop.permute.xlu0 %1788
      %1790 = vrot.lane.b32.xlu0 %v1778, 64
      %v1791 = vpop.permute.xlu0 %1790
      %1792 = vrot.lane.b32.xlu0 %v1779, 64
      %v1793 = vpop.permute.xlu0 %1792
      %1794 = vrot.lane.b32.xlu0 %v1780, 64
      %v1795 = vpop.permute.xlu0 %1794
      %1796 = vrot.lane.b32.xlu0 %v1781, 64
      %v1797 = vpop.permute.xlu0 %1796
      %v1806 = vunpack.c.l.b16 %v1381
      %v1807 = vunpack.c.l.b16 %v1382
      %v1808 = vunpack.c.l.b16 %v1383
      %v1809 = vunpack.c.l.b16 %v1384
      %v1810 = vunpack.c.l.b16 %v1385
      %v1811 = vunpack.c.l.b16 %v1386
      %v1812 = vunpack.c.l.b16 %v1387
      %v1813 = vunpack.c.l.b16 %v1388
      %v1814 = vpack.c.b16 %v1806, %v1806
      %v1815 = vpack.c.b16 %v1807, %v1807
      %v1816 = vpack.c.b16 %v1808, %v1808
      %v1817 = vpack.c.b16 %v1809, %v1809
      %v1818 = vpack.c.b16 %v1810, %v1810
      %v1819 = vpack.c.b16 %v1811, %v1811
      %v1820 = vpack.c.b16 %v1812, %v1812
      %v1821 = vpack.c.b16 %v1813, %v1813
      %v1823 = vshrl.u32 %v1774, 16
      %v1825 = vshll.u32 %v1774, 16
      %v1827 = vrot.slane %v1825, 1
      %v1828 = vor.u32 %v1823, %v1827
      %v1830 = vshll.u32 %v1814, 16
      %v1832 = vrot.slane %v1830, 1
      %v1833 = vsel %vm1469, %v1828, %v1832
      %v1835 = vshrl.u32 %v1775, 16
      %v1837 = vshll.u32 %v1775, 16
      %v1839 = vrot.slane %v1837, 1
      %v1840 = vor.u32 %v1835, %v1839
      %v1842 = vshll.u32 %v1815, 16
      %v1844 = vrot.slane %v1842, 1
      %v1845 = vsel %vm1469, %v1840, %v1844
      %v1847 = vshrl.u32 %v1776, 16
      %v1849 = vshll.u32 %v1776, 16
      %v1851 = vrot.slane %v1849, 1
      %v1852 = vor.u32 %v1847, %v1851
      %v1854 = vshll.u32 %v1816, 16
      %v1856 = vrot.slane %v1854, 1
      %v1857 = vsel %vm1469, %v1852, %v1856
      %v1859 = vshrl.u32 %v1777, 16
      %v1861 = vshll.u32 %v1777, 16
      %v1863 = vrot.slane %v1861, 1
      %v1864 = vor.u32 %v1859, %v1863
      %v1866 = vshll.u32 %v1817, 16
      %v1868 = vrot.slane %v1866, 1
      %v1869 = vsel %vm1469, %v1864, %v1868
      %v1871 = vshrl.u32 %v1778, 16
      %v1873 = vshll.u32 %v1778, 16
      %v1875 = vrot.slane %v1873, 1
      %v1876 = vor.u32 %v1871, %v1875
      %v1878 = vshll.u32 %v1818, 16
      %v1880 = vrot.slane %v1878, 1
      %v1881 = vsel %vm1469, %v1876, %v1880
      %v1883 = vshrl.u32 %v1779, 16
      %v1885 = vshll.u32 %v1779, 16
      %v1887 = vrot.slane %v1885, 1
      %v1888 = vor.u32 %v1883, %v1887
      %v1890 = vshll.u32 %v1819, 16
      %v1892 = vrot.slane %v1890, 1
      %v1893 = vsel %vm1469, %v1888, %v1892
      %v1895 = vshrl.u32 %v1780, 16
      %v1897 = vshll.u32 %v1780, 16
      %v1899 = vrot.slane %v1897, 1
      %v1900 = vor.u32 %v1895, %v1899
      %v1902 = vshll.u32 %v1820, 16
      %v1904 = vrot.slane %v1902, 1
      %v1905 = vsel %vm1469, %v1900, %v1904
      %v1907 = vshrl.u32 %v1781, 16
      %v1909 = vshll.u32 %v1781, 16
      %v1911 = vrot.slane %v1909, 1
      %v1912 = vor.u32 %v1907, %v1911
      %v1914 = vshll.u32 %v1821, 16
      %v1916 = vrot.slane %v1914, 1
      %v1917 = vsel %vm1469, %v1912, %v1916
      %1918 = vrot.lane.b32.xlu0 %v1833, 64
      %v1919 = vpop.permute.xlu0 %1918
      %1920 = vrot.lane.b32.xlu0 %v1845, 64
      %v1921 = vpop.permute.xlu0 %1920
      %1922 = vrot.lane.b32.xlu0 %v1857, 64
      %v1923 = vpop.permute.xlu0 %1922
      %1924 = vrot.lane.b32.xlu0 %v1869, 64
      %v1925 = vpop.permute.xlu0 %1924
      %1926 = vrot.lane.b32.xlu0 %v1881, 64
      %v1927 = vpop.permute.xlu0 %1926
      %1928 = vrot.lane.b32.xlu0 %v1893, 64
      %v1929 = vpop.permute.xlu0 %1928
      %1930 = vrot.lane.b32.xlu0 %v1905, 64
      %v1931 = vpop.permute.xlu0 %1930
      %1932 = vrot.lane.b32.xlu0 %v1917, 64
      %v1933 = vpop.permute.xlu0 %1932
      %vm1934 = vcmask 523264
      %v1937 = vsel %vm1934, %v1430, %v1567
      %v1941 = vsel %vm1934, %v1432, %v1569
      %v1945 = vsel %vm1934, %v1434, %v1571
      %v1949 = vsel %vm1934, %v1436, %v1573
      %v1953 = vsel %vm1934, %v1438, %v1575
      %v1957 = vsel %vm1934, %v1440, %v1577
      %v1961 = vsel %vm1934, %v1442, %v1579
      %v1965 = vsel %vm1934, %v1444, %v1581
      %v1967 = vsel %vm1934, %v1567, %v1614
      %v1969 = vsel %vm1934, %v1569, %v1615
      %v1971 = vsel %vm1934, %v1571, %v1616
      %v1973 = vsel %vm1934, %v1573, %v1617
      %v1975 = vsel %vm1934, %v1575, %v1618
      %v1977 = vsel %vm1934, %v1577, %v1619
      %v1979 = vsel %vm1934, %v1579, %v1620
      %v1981 = vsel %vm1934, %v1581, %v1621
      %v2001 = vsel %vm1934, %v1783, %v1919
      %v2005 = vsel %vm1934, %v1785, %v1921
      %v2009 = vsel %vm1934, %v1787, %v1923
      %v2013 = vsel %vm1934, %v1789, %v1925
      %v2017 = vsel %vm1934, %v1791, %v1927
      %v2021 = vsel %vm1934, %v1793, %v1929
      %v2025 = vsel %vm1934, %v1795, %v1931
      %v2029 = vsel %vm1934, %v1797, %v1933
      %v2031 = vld [vmem:[%s1] sm:$0xf]
      %v2032 = vld [vmem:[%s1 + $0x4] sm:$0xf]
      %v2033 = vld [vmem:[%s1 + $0x8] sm:$0xf]
      %v2034 = vld [vmem:[%s1 + $0xc] sm:$0xf]
      %v2035 = vld [vmem:[%s1 + $0x10] sm:$0xf]
      %v2036 = vld [vmem:[%s1 + $0x14] sm:$0xf]
      %v2037 = vld [vmem:[%s1 + $0x18] sm:$0xf]
      %v2038 = vld [vmem:[%s1 + $0x1c] sm:$0xf]
      %v2039 = vld [vmem:[%s1 + $0x20] sm:$0xf]
      %v2040 = vld [vmem:[%s1 + $0x24] sm:$0xf]
      %v2041 = vld [vmem:[%s1 + $0x28] sm:$0xf]
      %v2042 = vld [vmem:[%s1 + $0x2c] sm:$0xf]
      %v2043 = vld [vmem:[%s1 + $0x30] sm:$0xf]
      %v2044 = vld [vmem:[%s1 + $0x34] sm:$0xf]
      %v2045 = vld [vmem:[%s1 + $0x38] sm:$0xf]
      %v2046 = vld [vmem:[%s1 + $0x3c] sm:$0xf]
      %v2047 = vld [vmem:[%s1 + $0x40] sm:$0xf]
      %v2048 = vld [vmem:[%s1 + $0x44] sm:$0xf]
      %v2049 = vld [vmem:[%s1 + $0x48] sm:$0xf]
      %v2050 = vld [vmem:[%s1 + $0x4c] sm:$0xf]
      %v2051 = vld [vmem:[%s1 + $0x50] sm:$0xf]
      %v2052 = vld [vmem:[%s1 + $0x54] sm:$0xf]
      %v2053 = vld [vmem:[%s1 + $0x58] sm:$0xf]
      %v2054 = vld [vmem:[%s1 + $0x5c] sm:$0xf]
      %v2055 = vld [vmem:[%s1 + $0x60] sm:$0xf]
      %v2056 = vld [vmem:[%s1 + $0x64] sm:$0xf]
      %v2057 = vld [vmem:[%s1 + $0x68] sm:$0xf]
      %v2058 = vld [vmem:[%s1 + $0x6c] sm:$0xf]
      %v2059 = vld [vmem:[%s1 + $0x70] sm:$0xf]
      %v2060 = vld [vmem:[%s1 + $0x74] sm:$0xf]
      %v2061 = vld [vmem:[%s1 + $0x78] sm:$0xf]
      %v2062 = vld [vmem:[%s1 + $0x7c] sm:$0xf]
      %v2063 = vld [vmem:[%s1 + $0x80] sm:$0xf]
      %v2064 = vld [vmem:[%s1 + $0x84] sm:$0xf]
      %v2065 = vld [vmem:[%s1 + $0x88] sm:$0xf]
      %v2066 = vld [vmem:[%s1 + $0x8c] sm:$0xf]
      %v2067 = vld [vmem:[%s1 + $0x90] sm:$0xf]
      %v2068 = vld [vmem:[%s1 + $0x94] sm:$0xf]
      %v2069 = vld [vmem:[%s1 + $0x98] sm:$0xf]
      %v2070 = vld [vmem:[%s1 + $0x9c] sm:$0xf]
      %v2071 = vld [vmem:[%s1 + $0xa0] sm:$0xf]
      %v2072 = vld [vmem:[%s1 + $0xa4] sm:$0xf]
      %v2073 = vld [vmem:[%s1 + $0xa8] sm:$0xf]
      %v2074 = vld [vmem:[%s1 + $0xac] sm:$0xf]
      %v2075 = vld [vmem:[%s1 + $0xb0] sm:$0xf]
      %v2076 = vld [vmem:[%s1 + $0xb4] sm:$0xf]
      %v2077 = vld [vmem:[%s1 + $0xb8] sm:$0xf]
      %v2078 = vld [vmem:[%s1 + $0xbc] sm:$0xf]
      %v2079 = vld [vmem:[%s1 + $0xc0] sm:$0xf]
      %v2080 = vld [vmem:[%s1 + $0xc4] sm:$0xf]
      %v2081 = vld [vmem:[%s1 + $0xc8] sm:$0xf]
      %v2082 = vld [vmem:[%s1 + $0xcc] sm:$0xf]
      %v2083 = vld [vmem:[%s1 + $0xd0] sm:$0xf]
      %v2084 = vld [vmem:[%s1 + $0xd4] sm:$0xf]
      %v2085 = vld [vmem:[%s1 + $0xd8] sm:$0xf]
      %v2086 = vld [vmem:[%s1 + $0xdc] sm:$0xf]
      %v2087 = vld [vmem:[%s1 + $0xe0] sm:$0xf]
      %v2088 = vld [vmem:[%s1 + $0xe4] sm:$0xf]
      %v2089 = vld [vmem:[%s1 + $0xe8] sm:$0xf]
      %v2090 = vld [vmem:[%s1 + $0xec] sm:$0xf]
      %v2091 = vld [vmem:[%s1 + $0xf0] sm:$0xf]
      %v2092 = vld [vmem:[%s1 + $0xf4] sm:$0xf]
      %v2093 = vld [vmem:[%s1 + $0xf8] sm:$0xf]
      %v2094 = vld [vmem:[%s1 + $0xfc] sm:$0xf]
      %v2095 = vld [vmem:[%s1 + $0x100] sm:$0xf]
      %v2096 = vld [vmem:[%s1 + $0x104] sm:$0xf]
      %v2097 = vld [vmem:[%s1 + $0x108] sm:$0xf]
      %v2098 = vld [vmem:[%s1 + $0x10c] sm:$0xf]
      %v2099 = vld [vmem:[%s1 + $0x110] sm:$0xf]
      %v2100 = vld [vmem:[%s1 + $0x114] sm:$0xf]
      %v2101 = vld [vmem:[%s1 + $0x118] sm:$0xf]
      %v2102 = vld [vmem:[%s1 + $0x11c] sm:$0xf]
      %v2175 = vunpack.c.l.b16 %v2031
      %v2176 = vunpack.c.l.b16 %v2032
      %v2177 = vunpack.c.l.b16 %v2033
      %v2178 = vunpack.c.l.b16 %v2034
      %v2179 = vunpack.c.l.b16 %v2035
      %v2180 = vunpack.c.l.b16 %v2036
      %v2181 = vunpack.c.l.b16 %v2037
      %v2182 = vunpack.c.l.b16 %v2038
      %v2183 = vunpack.c.l.b16 %v2039
      %v2184 = vunpack.c.l.b16 %v2040
      %v2185 = vunpack.c.l.b16 %v2041
      %v2186 = vunpack.c.l.b16 %v2042
      %v2187 = vunpack.c.l.b16 %v2043
      %v2188 = vunpack.c.l.b16 %v2044
      %v2189 = vunpack.c.l.b16 %v2045
      %v2190 = vunpack.c.l.b16 %v2046
      %v2191 = vunpack.c.l.b16 %v2047
      %v2192 = vunpack.c.l.b16 %v2048
      %v2193 = vunpack.c.l.b16 %v2049
      %v2194 = vunpack.c.l.b16 %v2050
      %v2195 = vunpack.c.l.b16 %v2051
      %v2196 = vunpack.c.l.b16 %v2052
      %v2197 = vunpack.c.l.b16 %v2053
      %v2198 = vunpack.c.l.b16 %v2054
      %v2199 = vunpack.c.l.b16 %v2055
      %v2200 = vunpack.c.l.b16 %v2056
      %v2201 = vunpack.c.l.b16 %v2057
      %v2202 = vunpack.c.l.b16 %v2058
      %v2203 = vunpack.c.l.b16 %v2059
      %v2204 = vunpack.c.l.b16 %v2060
      %v2205 = vunpack.c.l.b16 %v2061
      %v2206 = vunpack.c.l.b16 %v2062
      %v2207 = vunpack.c.l.b16 %v2063
      %v2208 = vunpack.c.l.b16 %v2064
      %v2209 = vunpack.c.l.b16 %v2065
      %v2210 = vunpack.c.l.b16 %v2066
      %v2211 = vunpack.c.l.b16 %v2067
      %v2212 = vunpack.c.l.b16 %v2068
      %v2213 = vunpack.c.l.b16 %v2069
      %v2214 = vunpack.c.l.b16 %v2070
      %v2215 = vunpack.c.l.b16 %v2071
      %v2216 = vunpack.c.l.b16 %v2072
      %v2217 = vunpack.c.l.b16 %v2073
      %v2218 = vunpack.c.l.b16 %v2074
      %v2219 = vunpack.c.l.b16 %v2075
      %v2220 = vunpack.c.l.b16 %v2076
      %v2221 = vunpack.c.l.b16 %v2077
      %v2222 = vunpack.c.l.b16 %v2078
      %v2223 = vunpack.c.l.b16 %v2079
      %v2224 = vunpack.c.l.b16 %v2080
      %v2225 = vunpack.c.l.b16 %v2081
      %v2226 = vunpack.c.l.b16 %v2082
      %v2227 = vunpack.c.l.b16 %v2083
      %v2228 = vunpack.c.l.b16 %v2084
      %v2229 = vunpack.c.l.b16 %v2085
      %v2230 = vunpack.c.l.b16 %v2086
      %v2231 = vunpack.c.l.b16 %v2087
      %v2232 = vunpack.c.l.b16 %v2088
      %v2233 = vunpack.c.l.b16 %v2089
      %v2234 = vunpack.c.l.b16 %v2090
      %v2235 = vunpack.c.l.b16 %v2091
      %v2236 = vunpack.c.l.b16 %v2092
      %v2237 = vunpack.c.l.b16 %v2093
      %v2238 = vunpack.c.l.b16 %v2094
      %v2239 = vunpack.c.l.b16 %v2095
      %v2240 = vunpack.c.l.b16 %v2096
      %v2241 = vunpack.c.l.b16 %v2097
      %v2242 = vunpack.c.l.b16 %v2098
      %v2243 = vunpack.c.l.b16 %v2099
      %v2244 = vunpack.c.l.b16 %v2100
      %v2245 = vunpack.c.l.b16 %v2101
      %v2246 = vunpack.c.l.b16 %v2102
      %v2247 = vpack.c.b16 %v2176, %v2175
      %v2248 = vpack.c.b16 %v2178, %v2177
      %v2249 = vpack.c.b16 %v2180, %v2179
      %v2250 = vpack.c.b16 %v2182, %v2181
      %v2251 = vpack.c.b16 %v2184, %v2183
      %v2252 = vpack.c.b16 %v2186, %v2185
      %v2253 = vpack.c.b16 %v2188, %v2187
      %v2254 = vpack.c.b16 %v2190, %v2189
      %v2255 = vpack.c.b16 %v2192, %v2191
      %v2256 = vpack.c.b16 %v2194, %v2193
      %v2257 = vpack.c.b16 %v2196, %v2195
      %v2258 = vpack.c.b16 %v2198, %v2197
      %v2259 = vpack.c.b16 %v2200, %v2199
      %v2260 = vpack.c.b16 %v2202, %v2201
      %v2261 = vpack.c.b16 %v2204, %v2203
      %v2262 = vpack.c.b16 %v2206, %v2205
      %v2263 = vpack.c.b16 %v2208, %v2207
      %v2264 = vpack.c.b16 %v2210, %v2209
      %v2265 = vpack.c.b16 %v2212, %v2211
      %v2266 = vpack.c.b16 %v2214, %v2213
      %v2267 = vpack.c.b16 %v2216, %v2215
      %v2268 = vpack.c.b16 %v2218, %v2217
      %v2269 = vpack.c.b16 %v2220, %v2219
      %v2270 = vpack.c.b16 %v2222, %v2221
      %v2271 = vpack.c.b16 %v2224, %v2223
      %v2272 = vpack.c.b16 %v2226, %v2225
      %v2273 = vpack.c.b16 %v2228, %v2227
      %v2274 = vpack.c.b16 %v2230, %v2229
      %v2275 = vpack.c.b16 %v2232, %v2231
      %v2276 = vpack.c.b16 %v2234, %v2233
      %v2277 = vpack.c.b16 %v2236, %v2235
      %v2278 = vpack.c.b16 %v2238, %v2237
      %v2279 = vpack.c.b16 %v2240, %v2239
      %v2280 = vpack.c.b16 %v2242, %v2241
      %v2281 = vpack.c.b16 %v2244, %v2243
      %v2282 = vpack.c.b16 %v2246, %v2245
      %v2319 = vsel %vm1934, %v1919, 0
      %v2321 = vsel %vm1934, %v1921, 0
      %v2323 = vsel %vm1934, %v1923, 0
      %v2325 = vsel %vm1934, %v1925, 0
      %v2327 = vsel %vm1934, %v1927, 0
      %v2329 = vsel %vm1934, %v1929, 0
      %v2331 = vsel %vm1934, %v1931, 0
      %v2333 = vsel %vm1934, %v1933, 0
      %2335 = vmatprep.subr.bf16.mxu0 0
      %2336 = vmatpush1.bf16.msra.mxu0 %v2247
      %2337 = vmatprep.subr.bf16.mxu0 0
      %2338 = vmatpush1.bf16.msra.mxu0 %v2248
      %2339 = vmatprep.subr.bf16.mxu0 0
      %2340 = vmatpush1.bf16.msra.mxu0 %v2249
      %2341 = vmatprep.subr.bf16.mxu0 0
      %2342 = vmatpush1.bf16.msra.mxu0 %v2250
      %2343 = vmatprep.subr.bf16.mxu0 0
      %2344 = vmatpush1.bf16.msra.mxu0 %v2251
      %2345 = vmatprep.subr.bf16.mxu0 0
      %2346 = vmatpush1.bf16.msra.mxu0 %v2252
      %2347 = vmatprep.subr.bf16.mxu0 0
      %2348 = vmatpush1.bf16.msra.mxu0 %v2253
      %2349 = vmatprep.subr.bf16.mxu0 0
      %2350 = vmatpush1.bf16.msra.mxu0 %v2254
      %2351 = vmatprep.subr.bf16.mxu0 0
      %2352 = vmatpush1.bf16.msra.mxu0 %v2255
      %2353 = vmatprep.subr.bf16.mxu0 0
      %2354 = vmatpush1.bf16.msra.mxu0 %v2256
      %2355 = vmatprep.subr.bf16.mxu0 0
      %2356 = vmatpush1.bf16.msra.mxu0 %v2257
      %2357 = vmatprep.subr.bf16.mxu0 0
      %2358 = vmatpush1.bf16.msra.mxu0 %v2258
      %2359 = vmatprep.subr.bf16.mxu0 0
      %2360 = vmatpush1.bf16.msra.mxu0 %v2259
      %2361 = vmatprep.subr.bf16.mxu0 0
      %2362 = vmatpush1.bf16.msra.mxu0 %v2260
      %2363 = vmatprep.subr.bf16.mxu0 0
      %2364 = vmatpush1.bf16.msra.mxu0 %v2261
      %2365 = vmatprep.subr.bf16.mxu0 0
      %2366 = vmatpush1.bf16.msra.mxu0 %v2262
      %2367 = vmatprep.mubr.bf16.mxu0 %v1967
      %2368 = vmatmul.mubr.bf16.gmra.mrb[0].mxu0 %v1937
      %v2369 = vpop.f32.mrb[0].mxu0
      %v2370 = vadd.f32 0.0, %v2369
      %v2371 = vpop.f32.mrb[0].mxu0
      %v2372 = vpop.f32.mrb[0].mxu0
      %v2373 = vadd.f32 0.0, %v2372
      %v2374 = vpop.f32.mrb[0].mxu0
      %2375 = vmatprep.mubr.bf16.mxu0 %v1969
      %2376 = vmatmul.mubr.bf16.gmra.mrb[0].mxu0 %v1941
      %v2377 = vpop.f32.mrb[0].mxu0
      %v2378 = vadd.f32 0.0, %v2377
      %v2379 = vpop.f32.mrb[0].mxu0
      %v2380 = vpop.f32.mrb[0].mxu0
      %v2381 = vadd.f32 0.0, %v2380
      %v2382 = vpop.f32.mrb[0].mxu0
      %2383 = vmatprep.mubr.bf16.mxu0 %v1971
      %2384 = vmatmul.mubr.bf16.gmra.mrb[0].mxu0 %v1945
      %v2385 = vpop.f32.mrb[0].mxu0
      %v2386 = vadd.f32 0.0, %v2385
      %v2387 = vpop.f32.mrb[0].mxu0
      %v2388 = vpop.f32.mrb[0].mxu0
      %v2389 = vadd.f32 0.0, %v2388
      %v2390 = vpop.f32.mrb[0].mxu0
      %2391 = vmatprep.mubr.bf16.mxu0 %v1973
      %2392 = vmatmul.mubr.bf16.gmra.mrb[0].mxu0 %v1949
      %v2393 = vpop.f32.mrb[0].mxu0
      %v2394 = vadd.f32 0.0, %v2393
      %v2395 = vpop.f32.mrb[0].mxu0
      %v2396 = vpop.f32.mrb[0].mxu0
      %v2397 = vadd.f32 0.0, %v2396
      %v2398 = vpop.f32.mrb[0].mxu0
      %2399 = vmatprep.mubr.bf16.mxu0 %v1975
      %2400 = vmatmul.mubr.bf16.gmra.mrb[0].mxu0 %v1953
      %v2401 = vpop.f32.mrb[0].mxu0
      %v2402 = vadd.f32 0.0, %v2401
      %v2403 = vpop.f32.mrb[0].mxu0
      %v2404 = vpop.f32.mrb[0].mxu0
      %v2405 = vadd.f32 0.0, %v2404
      %v2406 = vpop.f32.mrb[0].mxu0
      %2407 = vmatprep.mubr.bf16.mxu0 %v1977
      %2408 = vmatmul.mubr.bf16.gmra.mrb[0].mxu0 %v1957
      %v2409 = vpop.f32.mrb[0].mxu0
      %v2410 = vadd.f32 0.0, %v2409
      %v2411 = vpop.f32.mrb[0].mxu0
      %v2412 = vpop.f32.mrb[0].mxu0
      %v2413 = vadd.f32 0.0, %v2412
      %v2414 = vpop.f32.mrb[0].mxu0
      %2415 = vmatprep.mubr.bf16.mxu0 %v1979
      %2416 = vmatmul.mubr.bf16.gmra.mrb[0].mxu0 %v1961
      %v2417 = vpop.f32.mrb[0].mxu0
      %v2418 = vadd.f32 0.0, %v2417
      %v2419 = vpop.f32.mrb[0].mxu0
      %v2420 = vpop.f32.mrb[0].mxu0
      %v2421 = vadd.f32 0.0, %v2420
      %v2422 = vpop.f32.mrb[0].mxu0
      %2423 = vmatprep.mubr.bf16.mxu0 %v1981
      %2424 = vmatmul.mubr.bf16.gmra.mrb[0].mxu0 %v1965
      %v2425 = vpop.f32.mrb[0].mxu0
      %v2426 = vadd.f32 0.0, %v2425
      %v2427 = vpop.f32.mrb[0].mxu0
      %v2428 = vpop.f32.mrb[0].mxu0
      %v2429 = vadd.f32 0.0, %v2428
      %v2430 = vpop.f32.mrb[0].mxu0
      %2431 = vdwg.mxu0
      %2432 = vmatprep.subr.bf16.mxu0 0
      %2433 = vmatpush1.bf16.msra.mxu0 %v2263
      %2434 = vmatprep.subr.bf16.mxu0 0
      %2435 = vmatpush1.bf16.msra.mxu0 %v2264
      %2436 = vmatprep.subr.bf16.mxu0 0
      %2437 = vmatpush1.bf16.msra.mxu0 %v2265
      %2438 = vmatprep.subr.bf16.mxu0 0
      %2439 = vmatpush1.bf16.msra.mxu0 %v2266
      %2440 = vmatprep.subr.bf16.mxu0 0
      %2441 = vmatpush1.bf16.msra.mxu0 %v2267
      %2442 = vmatprep.subr.bf16.mxu0 0
      %2443 = vmatpush1.bf16.msra.mxu0 %v2268
      %2444 = vmatprep.subr.bf16.mxu0 0
      %2445 = vmatpush1.bf16.msra.mxu0 %v2269
      %2446 = vmatprep.subr.bf16.mxu0 0
      %2447 = vmatpush1.bf16.msra.mxu0 %v2270
      %2448 = vmatprep.subr.bf16.mxu0 0
      %2449 = vmatpush1.bf16.msra.mxu0 %v2271
      %2450 = vmatprep.subr.bf16.mxu0 0
      %2451 = vmatpush1.bf16.msra.mxu0 %v2272
      %2452 = vmatprep.subr.bf16.mxu0 0
      %2453 = vmatpush1.bf16.msra.mxu0 %v2273
      %2454 = vmatprep.subr.bf16.mxu0 0
      %2455 = vmatpush1.bf16.msra.mxu0 %v2274
      %2456 = vmatprep.subr.bf16.mxu0 0
      %2457 = vmatpush1.bf16.msra.mxu0 %v2275
      %2458 = vmatprep.subr.bf16.mxu0 0
      %2459 = vmatpush1.bf16.msra.mxu0 %v2276
      %2460 = vmatprep.subr.bf16.mxu0 0
      %2461 = vmatpush1.bf16.msra.mxu0 %v2277
      %2462 = vmatprep.subr.bf16.mxu0 0
      %2463 = vmatpush1.bf16.msra.mxu0 %v2278
      %2464 = vmatprep.mubr.bf16.mxu0 %v2001
      %2465 = vmatmul.mubr.bf16.gmra.mrb[0].mxu0 %v1657
      %v2466 = vpop.f32.mrb[0].mxu0
      %v2467 = vadd.f32 %v2370, %v2466
      %v2468 = vpop.f32.mrb[0].mxu0
      %v2469 = vpop.f32.mrb[0].mxu0
      %v2470 = vadd.f32 %v2373, %v2469
      %v2471 = vpop.f32.mrb[0].mxu0
      %2472 = vmatprep.mubr.bf16.mxu0 %v2005
      %2473 = vmatmul.mubr.bf16.gmra.mrb[0].mxu0 %v1669
      %v2474 = vpop.f32.mrb[0].mxu0
      %v2475 = vadd.f32 %v2378, %v2474
      %v2476 = vpop.f32.mrb[0].mxu0
      %v2477 = vpop.f32.mrb[0].mxu0
      %v2478 = vadd.f32 %v2381, %v2477
      %v2479 = vpop.f32.mrb[0].mxu0
      %2480 = vmatprep.mubr.bf16.mxu0 %v2009
      %2481 = vmatmul.mubr.bf16.gmra.mrb[0].mxu0 %v1681
      %v2482 = vpop.f32.mrb[0].mxu0
      %v2483 = vadd.f32 %v2386, %v2482
      %v2484 = vpop.f32.mrb[0].mxu0
      %v2485 = vpop.f32.mrb[0].mxu0
      %v2486 = vadd.f32 %v2389, %v2485
      %v2487 = vpop.f32.mrb[0].mxu0
      %2488 = vmatprep.mubr.bf16.mxu0 %v2013
      %2489 = vmatmul.mubr.bf16.gmra.mrb[0].mxu0 %v1693
      %v2490 = vpop.f32.mrb[0].mxu0
      %v2491 = vadd.f32 %v2394, %v2490
      %v2492 = vpop.f32.mrb[0].mxu0
      %v2493 = vpop.f32.mrb[0].mxu0
      %v2494 = vadd.f32 %v2397, %v2493
      %v2495 = vpop.f32.mrb[0].mxu0
      %2496 = vmatprep.mubr.bf16.mxu0 %v2017
      %2497 = vmatmul.mubr.bf16.gmra.mrb[0].mxu0 %v1705
      %v2498 = vpop.f32.mrb[0].mxu0
      %v2499 = vadd.f32 %v2402, %v2498
      %v2500 = vpop.f32.mrb[0].mxu0
      %v2501 = vpop.f32.mrb[0].mxu0
      %v2502 = vadd.f32 %v2405, %v2501
      %v2503 = vpop.f32.mrb[0].mxu0
      %2504 = vmatprep.mubr.bf16.mxu0 %v2021
      %2505 = vmatmul.mubr.bf16.gmra.mrb[0].mxu0 %v1717
      %v2506 = vpop.f32.mrb[0].mxu0
      %v2507 = vadd.f32 %v2410, %v2506
      %v2508 = vpop.f32.mrb[0].mxu0
      %v2509 = vpop.f32.mrb[0].mxu0
      %v2510 = vadd.f32 %v2413, %v2509
      %v2511 = vpop.f32.mrb[0].mxu0
      %2512 = vmatprep.mubr.bf16.mxu0 %v2025
      %2513 = vmatmul.mubr.bf16.gmra.mrb[0].mxu0 %v1729
      %v2514 = vpop.f32.mrb[0].mxu0
      %v2515 = vadd.f32 %v2418, %v2514
      %v2516 = vpop.f32.mrb[0].mxu0
      %v2517 = vpop.f32.mrb[0].mxu0
      %v2518 = vadd.f32 %v2421, %v2517
      %v2519 = vpop.f32.mrb[0].mxu0
      %2520 = vmatprep.mubr.bf16.mxu0 %v2029
      %2521 = vmatmul.mubr.bf16.gmra.mrb[0].mxu0 %v1741
      %v2522 = vpop.f32.mrb[0].mxu0
      %v2523 = vadd.f32 %v2426, %v2522
      %v2524 = vpop.f32.mrb[0].mxu0
      %v2525 = vpop.f32.mrb[0].mxu0
      %v2526 = vadd.f32 %v2429, %v2525
      %v2527 = vpop.f32.mrb[0].mxu0
      %2528 = vdwg.mxu0
      %2529 = vmatprep.subr.bf16.mxu0 0
      %2530 = vmatpush1.bf16.msra.mxu0 %v2279
      %2531 = vmatprep.subr.bf16.mxu0 0
      %2532 = vmatpush1.bf16.msra.mxu0 %v2280
      %2533 = vmatprep.subr.bf16.mxu0 0
      %2534 = vmatpush1.bf16.msra.mxu0 %v2281
      %2535 = vmatprep.subr.bf16.mxu0 0
      %2536 = vmatpush1.bf16.msra.mxu0 %v2282
      %2537 = vmatprep.subr.bf16.mxu0 0
      %2538 = vmatpush1.bf16.msra.mxu0 0
      %2539 = vmatprep.subr.bf16.mxu0 0
      %2540 = vmatpush1.bf16.msra.mxu0 0
      %2541 = vmatprep.subr.bf16.mxu0 0
      %2542 = vmatpush1.bf16.msra.mxu0 0
      %2543 = vmatprep.subr.bf16.mxu0 0
      %2544 = vmatpush1.bf16.msra.mxu0 0
      %2545 = vmatprep.subr.bf16.mxu0 0
      %2546 = vmatpush1.bf16.msra.mxu0 0
      %2547 = vmatprep.subr.bf16.mxu0 0
      %2548 = vmatpush1.bf16.msra.mxu0 0
      %2549 = vmatprep.subr.bf16.mxu0 0
      %2550 = vmatpush1.bf16.msra.mxu0 0
      %2551 = vmatprep.subr.bf16.mxu0 0
      %2552 = vmatpush1.bf16.msra.mxu0 0
      %2553 = vmatprep.subr.bf16.mxu0 0
      %2554 = vmatpush1.bf16.msra.mxu0 0
      %2555 = vmatprep.subr.bf16.mxu0 0
      %2556 = vmatpush1.bf16.msra.mxu0 0
      %2557 = vmatprep.subr.bf16.mxu0 0
      %2558 = vmatpush1.bf16.msra.mxu0 0
      %2559 = vmatprep.subr.bf16.mxu0 0
      %2560 = vmatpush1.bf16.msra.mxu0 0
      %2561 = vmatprep.mubr.bf16.mxu0 0
      %2562 = vmatmul.mubr.bf16.gmra.mrb[0].mxu0 %v2319
      %v2563 = vpop.f32.mrb[0].mxu0
      %v2564 = vadd.f32 %v2467, %v2563
      %v2565 = vpop.f32.mrb[0].mxu0
      %v2566 = vpop.f32.mrb[0].mxu0
      %v2567 = vadd.f32 %v2470, %v2566
      %v2568 = vpop.f32.mrb[0].mxu0
      %2569 = vmatprep.mubr.bf16.mxu0 0
      %2570 = vmatmul.mubr.bf16.gmra.mrb[0].mxu0 %v2321
      %v2571 = vpop.f32.mrb[0].mxu0
      %v2572 = vadd.f32 %v2475, %v2571
      %v2573 = vpop.f32.mrb[0].mxu0
      %v2574 = vpop.f32.mrb[0].mxu0
      %v2575 = vadd.f32 %v2478, %v2574
      %v2576 = vpop.f32.mrb[0].mxu0
      %2577 = vmatprep.mubr.bf16.mxu0 0
      %2578 = vmatmul.mubr.bf16.gmra.mrb[0].mxu0 %v2323
      %v2579 = vpop.f32.mrb[0].mxu0
      %v2580 = vadd.f32 %v2483, %v2579
      %v2581 = vpop.f32.mrb[0].mxu0
      %v2582 = vpop.f32.mrb[0].mxu0
      %v2583 = vadd.f32 %v2486, %v2582
      %v2584 = vpop.f32.mrb[0].mxu0
      %2585 = vmatprep.mubr.bf16.mxu0 0
      %2586 = vmatmul.mubr.bf16.gmra.mrb[0].mxu0 %v2325
      %v2587 = vpop.f32.mrb[0].mxu0
      %v2588 = vadd.f32 %v2491, %v2587
      %v2589 = vpop.f32.mrb[0].mxu0
      %v2590 = vpop.f32.mrb[0].mxu0
      %v2591 = vadd.f32 %v2494, %v2590
      %v2592 = vpop.f32.mrb[0].mxu0
      %2593 = vmatprep.mubr.bf16.mxu0 0
      %2594 = vmatmul.mubr.bf16.gmra.mrb[0].mxu0 %v2327
      %v2595 = vpop.f32.mrb[0].mxu0
      %v2596 = vadd.f32 %v2499, %v2595
      %v2597 = vpop.f32.mrb[0].mxu0
      %v2598 = vpop.f32.mrb[0].mxu0
      %v2599 = vadd.f32 %v2502, %v2598
      %v2600 = vpop.f32.mrb[0].mxu0
      %2601 = vmatprep.mubr.bf16.mxu0 0
      %2602 = vmatmul.mubr.bf16.gmra.mrb[0].mxu0 %v2329
      %v2603 = vpop.f32.mrb[0].mxu0
      %v2604 = vadd.f32 %v2507, %v2603
      %v2605 = vpop.f32.mrb[0].mxu0
      %v2606 = vpop.f32.mrb[0].mxu0
      %v2607 = vadd.f32 %v2510, %v2606
      %v2608 = vpop.f32.mrb[0].mxu0
      %2609 = vmatprep.mubr.bf16.mxu0 0
      %2610 = vmatmul.mubr.bf16.gmra.mrb[0].mxu0 %v2331
      %v2611 = vpop.f32.mrb[0].mxu0
      %v2612 = vadd.f32 %v2515, %v2611
      %v2613 = vpop.f32.mrb[0].mxu0
      %v2614 = vpop.f32.mrb[0].mxu0
      %v2615 = vadd.f32 %v2518, %v2614
      %v2616 = vpop.f32.mrb[0].mxu0
      %2617 = vmatprep.mubr.bf16.mxu0 0
      %2618 = vmatmul.mubr.bf16.gmra.mrb[0].mxu0 %v2333
      %v2619 = vpop.f32.mrb[0].mxu0
      %v2620 = vadd.f32 %v2523, %v2619
      %v2621 = vpop.f32.mrb[0].mxu0
      %v2622 = vpop.f32.mrb[0].mxu0
      %v2623 = vadd.f32 %v2526, %v2622
      %v2624 = vpop.f32.mrb[0].mxu0
      %2625 = vdwg.mxu0
      %v2626 = vld [vmem:[%s2] sm:$0x1]
      %v2628 = vlaneseq
      %v2629 = vshrl.u32 %v2628, 7
      %v2630 = vsub.s32 0, %v2629
      %v2631 = vrot.slane %v2626, %v2630
      %v2633 = vmul.f32 %v2564, %v2631
      %v2634 = vmul.f32 %v2567, %v2631
      %v2635 = vmul.f32 %v2572, %v2631
      %v2636 = vmul.f32 %v2575, %v2631
      %v2637 = vmul.f32 %v2580, %v2631
      %v2638 = vmul.f32 %v2583, %v2631
      %v2639 = vmul.f32 %v2588, %v2631
      %v2640 = vmul.f32 %v2591, %v2631
      %v2641 = vmul.f32 %v2596, %v2631
      %v2642 = vmul.f32 %v2599, %v2631
      %v2643 = vmul.f32 %v2604, %v2631
      %v2644 = vmul.f32 %v2607, %v2631
      %v2645 = vmul.f32 %v2612, %v2631
      %v2646 = vmul.f32 %v2615, %v2631
      %v2647 = vmul.f32 %v2620, %v2631
      %v2648 = vmul.f32 %v2623, %v2631
      %v2649 = vld [vmem:[%s3] sm:$0x1]
      %v2651 = vlaneseq
      %v2652 = vshrl.u32 %v2651, 7
      %v2653 = vsub.s32 0, %v2652
      %v2654 = vrot.slane %v2649, %v2653
      %v2656 = vadd.f32 %v2633, %v2654
      %v2657 = vadd.f32 %v2634, %v2654
      %v2658 = vadd.f32 %v2635, %v2654
      %v2659 = vadd.f32 %v2636, %v2654
      %v2660 = vadd.f32 %v2637, %v2654
      %v2661 = vadd.f32 %v2638, %v2654
      %v2662 = vadd.f32 %v2639, %v2654
      %v2663 = vadd.f32 %v2640, %v2654
      %v2664 = vadd.f32 %v2641, %v2654
      %v2665 = vadd.f32 %v2642, %v2654
      %v2666 = vadd.f32 %v2643, %v2654
      %v2667 = vadd.f32 %v2644, %v2654
      %v2668 = vadd.f32 %v2645, %v2654
      %v2669 = vadd.f32 %v2646, %v2654
      %v2670 = vadd.f32 %v2647, %v2654
      %v2671 = vadd.f32 %v2648, %v2654
      %v2672 = vmax.f32 %v2656, 0.0
      %v2673 = vmax.f32 %v2657, 0.0
      %v2674 = vmax.f32 %v2658, 0.0
      %v2675 = vmax.f32 %v2659, 0.0
      %v2676 = vmax.f32 %v2660, 0.0
      %v2677 = vmax.f32 %v2661, 0.0
      %v2678 = vmax.f32 %v2662, 0.0
      %v2679 = vmax.f32 %v2663, 0.0
      %v2680 = vmax.f32 %v2664, 0.0
      %v2681 = vmax.f32 %v2665, 0.0
      %v2682 = vmax.f32 %v2666, 0.0
      %v2683 = vmax.f32 %v2667, 0.0
      %v2684 = vmax.f32 %v2668, 0.0
      %v2685 = vmax.f32 %v2669, 0.0
      %v2686 = vmax.f32 %v2670, 0.0
      %v2687 = vmax.f32 %v2671, 0.0
      %v2688 = vpack.c.bf16 %v2673, %v2672
      %v2689 = vpack.c.bf16 %v2675, %v2674
      %v2690 = vpack.c.bf16 %v2677, %v2676
      %v2691 = vpack.c.bf16 %v2679, %v2678
      %v2692 = vpack.c.bf16 %v2681, %v2680
      %v2693 = vpack.c.bf16 %v2683, %v2682
      %v2694 = vpack.c.bf16 %v2685, %v2684
      %v2695 = vpack.c.bf16 %v2687, %v2686
      %v2704 = vunpack.c.l.b16 %v2688
      %v2705 = vunpack.c.h.b16 %v2688
      %v2706 = vunpack.c.l.b16 %v2689
      %v2707 = vunpack.c.h.b16 %v2689
      %v2708 = vunpack.c.l.b16 %v2690
      %v2709 = vunpack.c.h.b16 %v2690
      %v2710 = vunpack.c.l.b16 %v2691
      %v2711 = vunpack.c.h.b16 %v2691
      %v2712 = vunpack.c.l.b16 %v2692
      %v2713 = vunpack.c.h.b16 %v2692
      %v2714 = vunpack.c.l.b16 %v2693
      %v2715 = vunpack.c.h.b16 %v2693
      %v2716 = vunpack.c.l.b16 %v2694
      %v2717 = vunpack.c.h.b16 %v2694
      %v2718 = vunpack.c.l.b16 %v2695
      %v2719 = vunpack.c.h.b16 %v2695
      %v2720 = vpack.c.b16 %v2704, %v2704
      %v2721 = vpack.c.b16 %v2705, %v2705
      %v2722 = vpack.c.b16 %v2706, %v2706
      %v2723 = vpack.c.b16 %v2707, %v2707
      %v2724 = vpack.c.b16 %v2708, %v2708
      %v2725 = vpack.c.b16 %v2709, %v2709
      %v2726 = vpack.c.b16 %v2710, %v2710
      %v2727 = vpack.c.b16 %v2711, %v2711
      %v2728 = vpack.c.b16 %v2712, %v2712
      %v2729 = vpack.c.b16 %v2713, %v2713
      %v2730 = vpack.c.b16 %v2714, %v2714
      %v2731 = vpack.c.b16 %v2715, %v2715
      %v2732 = vpack.c.b16 %v2716, %v2716
      %v2733 = vpack.c.b16 %v2717, %v2717
      %v2734 = vpack.c.b16 %v2718, %v2718
      %v2735 = vpack.c.b16 %v2719, %v2719
      %2752 = vst [vmem:[%s344] sm:$0xf] %v2720
      %2753 = vst [vmem:[%s344 + $0x4] sm:$0xf] %v2721
      %2754 = vst [vmem:[%s344 + $0x8] sm:$0xf] %v2722
      %2755 = vst [vmem:[%s344 + $0xc] sm:$0xf] %v2723
      %2756 = vst [vmem:[%s344 + $0x10] sm:$0xf] %v2724
      %2757 = vst [vmem:[%s344 + $0x14] sm:$0xf] %v2725
      %2758 = vst [vmem:[%s344 + $0x18] sm:$0xf] %v2726
      %2759 = vst [vmem:[%s344 + $0x1c] sm:$0xf] %v2727
      %2760 = vst [vmem:[%s344 + $0x20] sm:$0xf] %v2728
      %2761 = vst [vmem:[%s344 + $0x24] sm:$0xf] %v2729
      %2762 = vst [vmem:[%s344 + $0x28] sm:$0xf] %v2730
      %2763 = vst [vmem:[%s344 + $0x2c] sm:$0xf] %v2731
      %2764 = vst [vmem:[%s344 + $0x30] sm:$0xf] %v2732
      %2765 = vst [vmem:[%s344 + $0x34] sm:$0xf] %v2733
      %2766 = vst [vmem:[%s344 + $0x38] sm:$0xf] %v2734
      %2767 = vst [vmem:[%s344 + $0x3c] sm:$0xf] %v2735
      %vm2768 = vsmask.f32 3328
      %vm2769 = vsmask.f32 7440
      %vm2770 = vmor %vm2768, %vm2769
      %v2772 = vshrl.u32 %v1340, 16
      %v2774 = vrot.slane %v2772, 4
      %v2775 = vshll.u32 %v1340, 16
      %v2777 = vrot.slane %v2775, 5
      %v2778 = vor.u32 %v2774, %v2777
      %v2779 = vrot.slane %v2778, 4
      %v2781 = vshll.u32 %v1341, 16
      %v2783 = vrot.slane %v2781, 5
      %v2784 = vsel %vm2770, %v2779, %v2783
      %v2785 = vshrl.u32 %v1341, 16
      %v2787 = vrot.slane %v2785, 4
      %v2788 = vor.u32 %v2787, %v2783
      %v2789 = vrot.slane %v2788, 4
      %v2791 = vshll.u32 %v1356, 16
      %v2793 = vrot.slane %v2791, 5
      %v2794 = vsel %vm2770, %v2789, %v2793
      %v2796 = vshrl.u32 %v1342, 16
      %v2798 = vrot.slane %v2796, 4
      %v2799 = vshll.u32 %v1342, 16
      %v2801 = vrot.slane %v2799, 5
      %v2802 = vor.u32 %v2798, %v2801
      %v2803 = vrot.slane %v2802, 4
      %v2805 = vshll.u32 %v1343, 16
      %v2807 = vrot.slane %v2805, 5
      %v2808 = vsel %vm2770, %v2803, %v2807
      %v2809 = vshrl.u32 %v1343, 16
      %v2811 = vrot.slane %v2809, 4
      %v2812 = vor.u32 %v2811, %v2807
      %v2813 = vrot.slane %v2812, 4
      %v2815 = vshll.u32 %v1357, 16
      %v2817 = vrot.slane %v2815, 5
      %v2818 = vsel %vm2770, %v2813, %v2817
      %v2820 = vshrl.u32 %v1344, 16
      %v2822 = vrot.slane %v2820, 4
      %v2823 = vshll.u32 %v1344, 16
      %v2825 = vrot.slane %v2823, 5
      %v2826 = vor.u32 %v2822, %v2825
      %v2827 = vrot.slane %v2826, 4
      %v2829 = vshll.u32 %v1345, 16
      %v2831 = vrot.slane %v2829, 5
      %v2832 = vsel %vm2770, %v2827, %v2831
      %v2833 = vshrl.u32 %v1345, 16
      %v2835 = vrot.slane %v2833, 4
      %v2836 = vor.u32 %v2835, %v2831
      %v2837 = vrot.slane %v2836, 4
      %v2839 = vshll.u32 %v1358, 16
      %v2841 = vrot.slane %v2839, 5
      %v2842 = vsel %vm2770, %v2837, %v2841
      %v2844 = vshrl.u32 %v1346, 16
      %v2846 = vrot.slane %v2844, 4
      %v2847 = vshll.u32 %v1346, 16
      %v2849 = vrot.slane %v2847, 5
      %v2850 = vor.u32 %v2846, %v2849
      %v2851 = vrot.slane %v2850, 4
      %v2853 = vshll.u32 %v1347, 16
      %v2855 = vrot.slane %v2853, 5
      %v2856 = vsel %vm2770, %v2851, %v2855
      %v2857 = vshrl.u32 %v1347, 16
      %v2859 = vrot.slane %v2857, 4
      %v2860 = vor.u32 %v2859, %v2855
      %v2861 = vrot.slane %v2860, 4
      %v2863 = vshll.u32 %v1359, 16
      %v2865 = vrot.slane %v2863, 5
      %v2866 = vsel %vm2770, %v2861, %v2865
      %v2868 = vshrl.u32 %v1348, 16
      %v2870 = vrot.slane %v2868, 4
      %v2871 = vshll.u32 %v1348, 16
      %v2873 = vrot.slane %v2871, 5
      %v2874 = vor.u32 %v2870, %v2873
      %v2875 = vrot.slane %v2874, 4
      %v2877 = vshll.u32 %v1349, 16
      %v2879 = vrot.slane %v2877, 5
      %v2880 = vsel %vm2770, %v2875, %v2879
      %v2881 = vshrl.u32 %v1349, 16
      %v2883 = vrot.slane %v2881, 4
      %v2884 = vor.u32 %v2883, %v2879
      %v2885 = vrot.slane %v2884, 4
      %v2887 = vshll.u32 %v1360, 16
      %v2889 = vrot.slane %v2887, 5
      %v2890 = vsel %vm2770, %v2885, %v2889
      %v2892 = vshrl.u32 %v1350, 16
      %v2894 = vrot.slane %v2892, 4
      %v2895 = vshll.u32 %v1350, 16
      %v2897 = vrot.slane %v2895, 5
      %v2898 = vor.u32 %v2894, %v2897
      %v2899 = vrot.slane %v2898, 4
      %v2901 = vshll.u32 %v1351, 16
      %v2903 = vrot.slane %v2901, 5
      %v2904 = vsel %vm2770, %v2899, %v2903
      %v2905 = vshrl.u32 %v1351, 16
      %v2907 = vrot.slane %v2905, 4
      %v2908 = vor.u32 %v2907, %v2903
      %v2909 = vrot.slane %v2908, 4
      %v2911 = vshll.u32 %v1361, 16
      %v2913 = vrot.slane %v2911, 5
      %v2914 = vsel %vm2770, %v2909, %v2913
      %v2916 = vshrl.u32 %v1352, 16
      %v2918 = vrot.slane %v2916, 4
      %v2919 = vshll.u32 %v1352, 16
      %v2921 = vrot.slane %v2919, 5
      %v2922 = vor.u32 %v2918, %v2921
      %v2923 = vrot.slane %v2922, 4
      %v2925 = vshll.u32 %v1353, 16
      %v2927 = vrot.slane %v2925, 5
      %v2928 = vsel %vm2770, %v2923, %v2927
      %v2929 = vshrl.u32 %v1353, 16
      %v2931 = vrot.slane %v2929, 4
      %v2932 = vor.u32 %v2931, %v2927
      %v2933 = vrot.slane %v2932, 4
      %v2935 = vshll.u32 %v1362, 16
      %v2937 = vrot.slane %v2935, 5
      %v2938 = vsel %vm2770, %v2933, %v2937
      %v2940 = vshrl.u32 %v1354, 16
      %v2942 = vrot.slane %v2940, 4
      %v2943 = vshll.u32 %v1354, 16
      %v2945 = vrot.slane %v2943, 5
      %v2946 = vor.u32 %v2942, %v2945
      %v2947 = vrot.slane %v2946, 4
      %v2949 = vshll.u32 %v1355, 16
      %v2951 = vrot.slane %v2949, 5
      %v2952 = vsel %vm2770, %v2947, %v2951
      %v2953 = vshrl.u32 %v1355, 16
      %v2955 = vrot.slane %v2953, 4
      %v2956 = vor.u32 %v2955, %v2951
      %v2957 = vrot.slane %v2956, 4
      %v2959 = vshll.u32 %v1363, 16
      %v2961 = vrot.slane %v2959, 5
      %v2962 = vsel %vm2770, %v2957, %v2961
      %v2963 = vld [vmem:[%s4] sm:$0xf]
      %v2964 = vld [vmem:[%s4 + $0x4] sm:$0xf]
      %v2965 = vld [vmem:[%s4 + $0x8] sm:$0xf]
      %v2966 = vld [vmem:[%s4 + $0xc] sm:$0xf]
      %v2967 = vld [vmem:[%s4 + $0x10] sm:$0xf]
      %v2968 = vld [vmem:[%s4 + $0x14] sm:$0xf]
      %v2969 = vld [vmem:[%s4 + $0x18] sm:$0xf]
      %v2970 = vld [vmem:[%s4 + $0x1c] sm:$0xf]
      %v2971 = vunpack.c.l.b16 %v2784
      %v2972 = vunpack.c.l.b16 %v2794
      %v2973 = vunpack.c.l.b16 %v2808
      %v2974 = vunpack.c.l.b16 %v2818
      %v2975 = vunpack.c.l.b16 %v2832
      %v2976 = vunpack.c.l.b16 %v2842
      %v2977 = vunpack.c.l.b16 %v2856
      %v2978 = vunpack.c.l.b16 %v2866
      %v2979 = vunpack.c.l.b16 %v2880
      %v2980 = vunpack.c.l.b16 %v2890
      %v2981 = vunpack.c.l.b16 %v2904
      %v2982 = vunpack.c.l.b16 %v2914
      %v2983 = vunpack.c.l.b16 %v2928
      %v2984 = vunpack.c.l.b16 %v2938
      %v2985 = vunpack.c.l.b16 %v2952
      %v2986 = vunpack.c.l.b16 %v2962
      %v2987 = vpack.c.b16 %v2972, %v2971
      %v2988 = vpack.c.b16 %v2974, %v2973
      %v2989 = vpack.c.b16 %v2976, %v2975
      %v2990 = vpack.c.b16 %v2978, %v2977
      %v2991 = vpack.c.b16 %v2980, %v2979
      %v2992 = vpack.c.b16 %v2982, %v2981
      %v2993 = vpack.c.b16 %v2984, %v2983
      %v2994 = vpack.c.b16 %v2986, %v2985
      %v3003 = vunpack.c.l.b16 %v2963
      %v3004 = vunpack.c.l.b16 %v2964
      %v3005 = vunpack.c.l.b16 %v2965
      %v3006 = vunpack.c.l.b16 %v2966
      %v3007 = vunpack.c.l.b16 %v2967
      %v3008 = vunpack.c.l.b16 %v2968
      %v3009 = vunpack.c.l.b16 %v2969
      %v3010 = vunpack.c.l.b16 %v2970
      %v3011 = vpack.c.b16 %v3004, %v3003
      %v3012 = vpack.c.b16 %v3006, %v3005
      %v3013 = vpack.c.b16 %v3008, %v3007
      %v3014 = vpack.c.b16 %v3010, %v3009
      %v3020 = vsel %vm1934, %v2987, 0
      %v3023 = vsel %vm1934, %v2988, 0
      %v3026 = vsel %vm1934, %v2989, 0
      %v3029 = vsel %vm1934, %v2990, 0
      %v3032 = vsel %vm1934, %v2991, 0
      %v3035 = vsel %vm1934, %v2992, 0
      %v3038 = vsel %vm1934, %v2993, 0
      %v3041 = vsel %vm1934, %v2994, 0
      %3043 = vmatprep.subr.bf16.mxu0 0
      %3044 = vmatpush1.bf16.msra.mxu0 %v3011
      %3045 = vmatprep.subr.bf16.mxu0 0
      %3046 = vmatpush1.bf16.msra.mxu0 %v3012
      %3047 = vmatprep.subr.bf16.mxu0 0
      %3048 = vmatpush1.bf16.msra.mxu0 %v3013
      %3049 = vmatprep.subr.bf16.mxu0 0
      %3050 = vmatpush1.bf16.msra.mxu0 %v3014
      %3051 = vmatprep.subr.bf16.mxu0 0
      %3052 = vmatpush1.bf16.msra.mxu0 0
      %3053 = vmatprep.subr.bf16.mxu0 0
      %3054 = vmatpush1.bf16.msra.mxu0 0
      %3055 = vmatprep.subr.bf16.mxu0 0
      %3056 = vmatpush1.bf16.msra.mxu0 0
      %3057 = vmatprep.subr.bf16.mxu0 0
      %3058 = vmatpush1.bf16.msra.mxu0 0
      %3059 = vmatprep.subr.bf16.mxu0 0
      %3060 = vmatpush1.bf16.msra.mxu0 0
      %3061 = vmatprep.subr.bf16.mxu0 0
      %3062 = vmatpush1.bf16.msra.mxu0 0
      %3063 = vmatprep.subr.bf16.mxu0 0
      %3064 = vmatpush1.bf16.msra.mxu0 0
      %3065 = vmatprep.subr.bf16.mxu0 0
      %3066 = vmatpush1.bf16.msra.mxu0 0
      %3067 = vmatprep.subr.bf16.mxu0 0
      %3068 = vmatpush1.bf16.msra.mxu0 0
      %3069 = vmatprep.subr.bf16.mxu0 0
      %3070 = vmatpush1.bf16.msra.mxu0 0
      %3071 = vmatprep.subr.bf16.mxu0 0
      %3072 = vmatpush1.bf16.msra.mxu0 0
      %3073 = vmatprep.subr.bf16.mxu0 0
      %3074 = vmatpush1.bf16.msra.mxu0 0
      %3075 = vmatprep.mubr.bf16.mxu0 0
      %3076 = vmatmul.mubr.bf16.gmra.mrb[0].mxu0 %v3020
      %v3077 = vpop.f32.mrb[0].mxu0
      %v3078 = vadd.f32 0.0, %v3077
      %v3079 = vpop.f32.mrb[0].mxu0
      %v3080 = vpop.f32.mrb[0].mxu0
      %v3081 = vadd.f32 0.0, %v3080
      %v3082 = vpop.f32.mrb[0].mxu0
      %3083 = vmatprep.mubr.bf16.mxu0 0
      %3084 = vmatmul.mubr.bf16.gmra.mrb[0].mxu0 %v3023
      %v3085 = vpop.f32.mrb[0].mxu0
      %v3086 = vadd.f32 0.0, %v3085
      %v3087 = vpop.f32.mrb[0].mxu0
      %v3088 = vpop.f32.mrb[0].mxu0
      %v3089 = vadd.f32 0.0, %v3088
      %v3090 = vpop.f32.mrb[0].mxu0
      %3091 = vmatprep.mubr.bf16.mxu0 0
      %3092 = vmatmul.mubr.bf16.gmra.mrb[0].mxu0 %v3026
      %v3093 = vpop.f32.mrb[0].mxu0
      %v3094 = vadd.f32 0.0, %v3093
      %v3095 = vpop.f32.mrb[0].mxu0
      %v3096 = vpop.f32.mrb[0].mxu0
      %v3097 = vadd.f32 0.0, %v3096
      %v3098 = vpop.f32.mrb[0].mxu0
      %3099 = vmatprep.mubr.bf16.mxu0 0
      %3100 = vmatmul.mubr.bf16.gmra.mrb[0].mxu0 %v3029
      %v3101 = vpop.f32.mrb[0].mxu0
      %v3102 = vadd.f32 0.0, %v3101
      %v3103 = vpop.f32.mrb[0].mxu0
      %v3104 = vpop.f32.mrb[0].mxu0
      %v3105 = vadd.f32 0.0, %v3104
      %v3106 = vpop.f32.mrb[0].mxu0
      %3107 = vmatprep.mubr.bf16.mxu0 0
      %3108 = vmatmul.mubr.bf16.gmra.mrb[0].mxu0 %v3032
      %v3109 = vpop.f32.mrb[0].mxu0
      %v3110 = vadd.f32 0.0, %v3109
      %v3111 = vpop.f32.mrb[0].mxu0
      %v3112 = vpop.f32.mrb[0].mxu0
      %v3113 = vadd.f32 0.0, %v3112
      %v3114 = vpop.f32.mrb[0].mxu0
      %3115 = vmatprep.mubr.bf16.mxu0 0
      %3116 = vmatmul.mubr.bf16.gmra.mrb[0].mxu0 %v3035
      %v3117 = vpop.f32.mrb[0].mxu0
      %v3118 = vadd.f32 0.0, %v3117
      %v3119 = vpop.f32.mrb[0].mxu0
      %v3120 = vpop.f32.mrb[0].mxu0
      %v3121 = vadd.f32 0.0, %v3120
      %v3122 = vpop.f32.mrb[0].mxu0
      %3123 = vmatprep.mubr.bf16.mxu0 0
      %3124 = vmatmul.mubr.bf16.gmra.mrb[0].mxu0 %v3038
      %v3125 = vpop.f32.mrb[0].mxu0
      %v3126 = vadd.f32 0.0, %v3125
      %v3127 = vpop.f32.mrb[0].mxu0
      %v3128 = vpop.f32.mrb[0].mxu0
      %v3129 = vadd.f32 0.0, %v3128
      %v3130 = vpop.f32.mrb[0].mxu0
      %3131 = vmatprep.mubr.bf16.mxu0 0
      %3132 = vmatmul.mubr.bf16.gmra.mrb[0].mxu0 %v3041
      %v3133 = vpop.f32.mrb[0].mxu0
      %v3134 = vadd.f32 0.0, %v3133
      %v3135 = vpop.f32.mrb[0].mxu0
      %v3136 = vpop.f32.mrb[0].mxu0
      %v3137 = vadd.f32 0.0, %v3136
      %v3138 = vpop.f32.mrb[0].mxu0
      %3139 = vdwg.mxu0
      %v3140 = vld [vmem:[%s5] sm:$0x1]
      %v3142 = vlaneseq
      %v3143 = vshrl.u32 %v3142, 7
      %v3144 = vsub.s32 0, %v3143
      %v3145 = vrot.slane %v3140, %v3144
      %v3147 = vmul.f32 %v3078, %v3145
      %v3148 = vmul.f32 %v3081, %v3145
      %v3149 = vmul.f32 %v3086, %v3145
      %v3150 = vmul.f32 %v3089, %v3145
      %v3151 = vmul.f32 %v3094, %v3145
      %v3152 = vmul.f32 %v3097, %v3145
      %v3153 = vmul.f32 %v3102, %v3145
      %v3154 = vmul.f32 %v3105, %v3145
      %v3155 = vmul.f32 %v3110, %v3145
      %v3156 = vmul.f32 %v3113, %v3145
      %v3157 = vmul.f32 %v3118, %v3145
      %v3158 = vmul.f32 %v3121, %v3145
      %v3159 = vmul.f32 %v3126, %v3145
      %v3160 = vmul.f32 %v3129, %v3145
      %v3161 = vmul.f32 %v3134, %v3145
      %v3162 = vmul.f32 %v3137, %v3145
      %v3163 = vld [vmem:[%s6] sm:$0x1]
      %v3165 = vlaneseq
      %v3166 = vshrl.u32 %v3165, 7
      %v3167 = vsub.s32 0, %v3166
      %v3168 = vrot.slane %v3163, %v3167
      %v3170 = vadd.f32 %v3147, %v3168
      %v3171 = vadd.f32 %v3148, %v3168
      %v3172 = vadd.f32 %v3149, %v3168
      %v3173 = vadd.f32 %v3150, %v3168
      %v3174 = vadd.f32 %v3151, %v3168
      %v3175 = vadd.f32 %v3152, %v3168
      %v3176 = vadd.f32 %v3153, %v3168
      %v3177 = vadd.f32 %v3154, %v3168
      %v3178 = vadd.f32 %v3155, %v3168
      %v3179 = vadd.f32 %v3156, %v3168
      %v3180 = vadd.f32 %v3157, %v3168
      %v3181 = vadd.f32 %v3158, %v3168
      %v3182 = vadd.f32 %v3159, %v3168
      %v3183 = vadd.f32 %v3160, %v3168
      %v3184 = vadd.f32 %v3161, %v3168
      %v3185 = vadd.f32 %v3162, %v3168
      %v3186 = vpack.c.bf16 %v3171, %v3170
      %v3187 = vpack.c.bf16 %v3173, %v3172
      %v3188 = vpack.c.bf16 %v3175, %v3174
      %v3189 = vpack.c.bf16 %v3177, %v3176
      %v3190 = vpack.c.bf16 %v3179, %v3178
      %v3191 = vpack.c.bf16 %v3181, %v3180
      %v3192 = vpack.c.bf16 %v3183, %v3182
      %v3193 = vpack.c.bf16 %v3185, %v3184
      %v3202 = vunpack.c.l.b16 %v3186
      %v3203 = vunpack.c.h.b16 %v3186
      %v3204 = vunpack.c.l.b16 %v3187
      %v3205 = vunpack.c.h.b16 %v3187
      %v3206 = vunpack.c.l.b16 %v3188
      %v3207 = vunpack.c.h.b16 %v3188
      %v3208 = vunpack.c.l.b16 %v3189
      %v3209 = vunpack.c.h.b16 %v3189
      %v3210 = vunpack.c.l.b16 %v3190
      %v3211 = vunpack.c.h.b16 %v3190
      %v3212 = vunpack.c.l.b16 %v3191
      %v3213 = vunpack.c.h.b16 %v3191
      %v3214 = vunpack.c.l.b16 %v3192
      %v3215 = vunpack.c.h.b16 %v3192
      %v3216 = vunpack.c.l.b16 %v3193
      %v3217 = vunpack.c.h.b16 %v3193
      %v3218 = vpack.c.b16 %v3202, %v3202
      %v3219 = vpack.c.b16 %v3203, %v3203
      %v3220 = vpack.c.b16 %v3204, %v3204
      %v3221 = vpack.c.b16 %v3205, %v3205
      %v3222 = vpack.c.b16 %v3206, %v3206
      %v3223 = vpack.c.b16 %v3207, %v3207
      %v3224 = vpack.c.b16 %v3208, %v3208
      %v3225 = vpack.c.b16 %v3209, %v3209
      %v3226 = vpack.c.b16 %v3210, %v3210
      %v3227 = vpack.c.b16 %v3211, %v3211
      %v3228 = vpack.c.b16 %v3212, %v3212
      %v3229 = vpack.c.b16 %v3213, %v3213
      %v3230 = vpack.c.b16 %v3214, %v3214
      %v3231 = vpack.c.b16 %v3215, %v3215
      %v3232 = vpack.c.b16 %v3216, %v3216
      %v3233 = vpack.c.b16 %v3217, %v3217
      %3250 = vst [vmem:[%s355] sm:$0xf] %v3218
      %3251 = vst [vmem:[%s355 + $0x4] sm:$0xf] %v3219
      %3252 = vst [vmem:[%s355 + $0x8] sm:$0xf] %v3220
      %3253 = vst [vmem:[%s355 + $0xc] sm:$0xf] %v3221
      %3254 = vst [vmem:[%s355 + $0x10] sm:$0xf] %v3222
      %3255 = vst [vmem:[%s355 + $0x14] sm:$0xf] %v3223
      %3256 = vst [vmem:[%s355 + $0x18] sm:$0xf] %v3224
      %3257 = vst [vmem:[%s355 + $0x1c] sm:$0xf] %v3225
      %3258 = vst [vmem:[%s355 + $0x20] sm:$0xf] %v3226
      %3259 = vst [vmem:[%s355 + $0x24] sm:$0xf] %v3227
      %3260 = vst [vmem:[%s355 + $0x28] sm:$0xf] %v3228
      %3261 = vst [vmem:[%s355 + $0x2c] sm:$0xf] %v3229
      %3262 = vst [vmem:[%s355 + $0x30] sm:$0xf] %v3230
      %3263 = vst [vmem:[%s355 + $0x34] sm:$0xf] %v3231
      %3264 = vst [vmem:[%s355 + $0x38] sm:$0xf] %v3232
      %3265 = vst [vmem:[%s355 + $0x3c] sm:$0xf] %v3233
      %s3266 = smul.u32 8, %s25
      %p3267 = scmp.lt.s32.totalorder %s24, 1
      %s3268 = scalar_select %p3267, %s24, 1
      %p3269 = scmp.lt.s32.totalorder %s3266, 15
      %s3270 = scalar_select %p3269, %s3266, 15
      %s3271 = smul.addr %s3270, 2
      %s3272 = smul.addr %s3268, 32
      %s3273 = sadd.s32 %s3271, %s3272
      %s3274 = smul.addr %s3273, 4
      %s3275 = scalar_lea.vmem %s7, %s3274
      %s3276 = smul.u32 8, %s25
      %p3277 = scmp.lt.s32.totalorder %s24, 1
      %s3278 = scalar_select %p3277, %s24, 1
      %p3279 = scmp.lt.s32.totalorder %s3276, 15
      %s3280 = scalar_select %p3279, %s3276, 15
      %s3281 = smul.addr %s3280, 2
      %s3282 = smul.addr %s3278, 32
      %s3283 = sadd.s32 %s3281, %s3282
      %s3284 = smul.addr %s3283, 4
      %s3285 = scalar_lea.vmem %s8, %s3284
      // Predicated region
      $region57: #{forward.4} parent=47 // pred_check
        %p3286 = pneg %p204
      $region58: #{forward.4} parent=47 // pred_check_branch
        %3288 = sbr.rel (%p3286) target = $region60
      $region59: #{forward.4} parent=47 // pred_region
        %s3289 = smul.u32 8, %s25
      $region60: #{forward.4} parent=47 // pred_fallthru
        _
      // Predicated region
      $region61: #{forward.4} parent=47 // pred_check
        %p3290 = pneg %p232
      $region62: #{forward.4} parent=47 // pred_check_branch
        %3292 = sbr.rel (%p3290) target = $region64
      $region63: #{forward.4} parent=47 // pred_region
        %s3293 = smul.u32 8, %s25
      $region64: #{forward.4} parent=47 // pred_fallthru
        _
    $region48: #{forward.4} parent=5 // pred_fallthru
      _
    %p3294 = scmp.le.s32.totalorder 2, %s15
    // Predicated region
    $region65: #{forward.4} parent=5 // pred_check
      %p3295 = pneg %p3294
    $region66: #{forward.4} parent=5 // pred_check_branch
      %3297 = sbr.rel (%p3295) target = $region68
    $region67: #{forward.4} parent=5 // pred_region
      %s3298 = ssub.s32 %s15, 2
      // Predicated region
      $region69: #{forward.4} parent=67 // pred_check
        %p3299 = pneg %p210
      $region70: #{forward.4} parent=67 // pred_check_branch
        %3301 = sbr.rel (%p3299) target = $region72
      $region71: #{forward.4} parent=67 // pred_region
        %s3302 = smul.u32 8, %s27
        %p3303 = scmp.lt.s32.totalorder %s26, 1
        %s3304 = scalar_select %p3303, %s26, 1
        %p3305 = scmp.lt.s32.totalorder %s3302, 15
        %s3306 = scalar_select %p3305, %s3302, 15
        %s3307 = smul.addr %s3306, 2
        %s3308 = smul.addr %s3304, 32
        %s3309 = sadd.s32 %s3307, %s3308
        %s3310 = smul.addr %s3309, 4
        %s3311 = scalar_lea.vmem %s7, %s3310
      $region72: #{forward.4} parent=67 // pred_fallthru
        _
      // Predicated region
      $region73: #{forward.4} parent=67 // pred_check
        %p3312 = pneg %p238
      $region74: #{forward.4} parent=67 // pred_check_branch
        %3314 = sbr.rel (%p3312) target = $region76
      $region75: #{forward.4} parent=67 // pred_region
        %s3315 = smul.u32 8, %s27
        %p3316 = scmp.lt.s32.totalorder %s26, 1
        %s3317 = scalar_select %p3316, %s26, 1
        %p3318 = scmp.lt.s32.totalorder %s3315, 15
        %s3319 = scalar_select %p3318, %s3315, 15
        %s3320 = smul.addr %s3319, 2
        %s3321 = smul.addr %s3317, 32
        %s3322 = sadd.s32 %s3320, %s3321
        %s3323 = smul.addr %s3322, 4
        %s3324 = scalar_lea.vmem %s8, %s3323
      $region76: #{forward.4} parent=67 // pred_fallthru
        _
    $region68: #{forward.4} parent=5 // pred_fallthru
      _
  $region6: #{forward.4} parent=0 // loop_footer
    %s19 = sadd.s32 1, %s15
  $region7: #{forward.4} parent=0 // loop_footer_branch
    %14 = sbr.rel target = $region3
  $region8: #{forward.4} parent=0 // loop_exit
    _

// kernel: forward.7
$region0: #{forward.7}
  #allocation0 [shape = 'u32[]', space=smem, size = 0x4, offset = 0x4, fixed_abs, tag = 'smem constant byte address 0x4 - core index']
  #allocation1 [shape = 'u32[144,128]{1,0:T(1,128)}', space=vmem, size = 0x12000, scoped, tag = 'internal scratch']
  #allocation2 [shape = 'bf16[10,18,128]{2,1,0:T(8,128)(2,1)}', space=vmem, size = 0xf000, scoped, tag = 'scratch operand']
  %s0 = inlined_call_operand.vmem [shape: bf16[2,16,16,128], index: 0, kind: input, shape index: {}]
  %s1 = inlined_call_operand.vmem [shape: bf16[1152,128], index: 1, kind: input, shape index: {}]
  %s2 = inlined_call_operand.vmem [shape: f32[1,128], index: 2, kind: input, shape index: {}]
  %s3 = inlined_call_operand.vmem [shape: f32[1,128], index: 3, kind: input, shape index: {}]
  %s4 = inlined_call_operand.vmem [shape: bf16[2,16,16,128], index: 4, kind: input, shape index: {}]
  %s5 = inlined_call_operand.hbm [shape: f32[2,16,16,128], index: 5, kind: output, shape index: {}]
  %s6 = sld [smem:[#allocation0]]
  $region61: #{forward.7} parent=0
    _
  %s8 = ssub.s32 1, %s6
  %s9 = scalar_select 0, %s8, %s6
  $region1: #{forward.7} parent=0
    #allocation3 [shape = 'u8[131072]{0}', space=vmem, size = 0x20000, scoped, tag = 'output window, operand 0']
    #allocation4 [shape = 's32[2]{0}', space=sflag, size = 0x8, scoped, tag = 'scoped memory for forward.7']
    %10 = vsyncpa [#allocation4], 0
    %s11 = scalar_lea.sflag [#allocation4], 1
    %12 = vsyncpa %s11, 0
    loop: start=0, step=1, limit=6
    $region2: #{forward.7} parent=1 // loop_pre_header
      _
    $region3: #{forward.7} parent=1 // loop_header
      %s14 = sphi 0, %s18
      %p15 = scmp.ge.s32.totalorder %s14, 6
      %s21 = sphi 0, %s33
      %s22 = sphi 0, %s29
      %s23 = sphi 0, %s21
      %s24 = sphi 0, %s22
      %s25 = sphi 0, %s23
      %s26 = sphi 0, %s24
      %s36 = sphi 0, %s38
      %s39 = sphi 0, %s36
      %s40 = sphi 0, %s39
      %s56 = sphi 0, %s40
      %s60 = sphi 0, %s60
      %s62 = sphi 0, %s60
      %s63 = sphi 0, %s62
      %s77 = sphi 0, %s63
      %s81 = sphi 0, %s81
      %s83 = sphi 0, %s81
      %s84 = sphi 0, %s83
      %s98 = sphi 0, %s84
      %s102 = sphi 0, %s102
      %s104 = sphi 0, %s102
      %s105 = sphi 0, %s104
      %s119 = sphi 0, %s105
      %s127 = sphi 0, %s129
      %s130 = sphi 0, %s127
      %s131 = sphi 0, %s130
      %s147 = sphi 0, %s131
      %s155 = sphi 0, %s157
      %s158 = sphi 0, %s155
      %s159 = sphi 0, %s158
      %s175 = sphi 0, %s159
    $region4: #{forward.7} parent=1 // loop_header_branch
      %17 = sbr.rel (%p15) target = $region8
    $region5: #{forward.7} parent=1 // loop_body
      %s19 = ssub.s32 %s14, 1
      %s20 = ssub.s32 %s14, 2
      %s27 = sadd.s32 1, %s22
      %p28 = scmp.ge.s32.totalorder %s27, 2
      %s29 = scalar_select %p28, 0, %s27
      %s30 = sadd.s32 1, %s21
      %s31 = scalar_select %p28, %s30, %s21
      %p32 = scmp.ge.s32.totalorder %s31, 2
      %s33 = scalar_select %p32, 0, %s31
      %s34 = ssub.s32 %s21, %s33
      %p35 = scmp.eq.s32.totalorder %s34, 0
      %s37 = sadd.s32 %s36, 1
      %s38 = scalar_select %p35, %s36, %s37
      %p41 = pneg %p35
      %p42 = scmp.eq.s32.totalorder %s14, 3
      %p43 = por %p41, %p42
      %p44 = scmp.ne.s32.totalorder %s36, %s39
      %p45 = scmp.eq.s32.totalorder %s14, 0
      %p46 = por %p44, %p45
      %p47 = scmp.ne.s32.totalorder %s36, %s39
      %p48 = scmp.eq.s32.totalorder %s19, 3
      %p49 = por %p47, %p48
      %p50 = scmp.ne.s32.totalorder %s39, %s40
      %p51 = scmp.eq.s32.totalorder %s19, 0
      %p52 = por %p50, %p51
      %p53 = scmp.ne.s32.totalorder %s39, %s40
      %p54 = scmp.eq.s32.totalorder %s20, 3
      %p55 = por %p53, %p54
      %p57 = scmp.ne.s32.totalorder %s40, %s56
      %p58 = scmp.eq.s32.totalorder %s20, 0
      %p59 = por %p57, %p58
      %s61 = sadd.s32 %s60, 1
      %p64 = scmp.eq.s32.totalorder %s14, 3
      %p65 = scmp.ne.s32.totalorder %s60, %s62
      %p66 = scmp.eq.s32.totalorder %s14, 0
      %p67 = por %p65, %p66
      %p68 = scmp.ne.s32.totalorder %s60, %s62
      %p69 = scmp.eq.s32.totalorder %s19, 3
      %p70 = por %p68, %p69
      %p71 = scmp.ne.s32.totalorder %s62, %s63
      %p72 = scmp.eq.s32.totalorder %s19, 0
      %p73 = por %p71, %p72
      %p74 = scmp.ne.s32.totalorder %s62, %s63
      %p75 = scmp.eq.s32.totalorder %s20, 3
      %p76 = por %p74, %p75
      %p78 = scmp.ne.s32.totalorder %s63, %s77
      %p79 = scmp.eq.s32.totalorder %s20, 0
      %p80 = por %p78, %p79
      %s82 = sadd.s32 %s81, 1
      %p85 = scmp.eq.s32.totalorder %s14, 3
      %p86 = scmp.ne.s32.totalorder %s81, %s83
      %p87 = scmp.eq.s32.totalorder %s14, 0
      %p88 = por %p86, %p87
      %p89 = scmp.ne.s32.totalorder %s81, %s83
      %p90 = scmp.eq.s32.totalorder %s19, 3
      %p91 = por %p89, %p90
      %p92 = scmp.ne.s32.totalorder %s83, %s84
      %p93 = scmp.eq.s32.totalorder %s19, 0
      %p94 = por %p92, %p93
      %p95 = scmp.ne.s32.totalorder %s83, %s84
      %p96 = scmp.eq.s32.totalorder %s20, 3
      %p97 = por %p95, %p96
      %p99 = scmp.ne.s32.totalorder %s84, %s98
      %p100 = scmp.eq.s32.totalorder %s20, 0
      %p101 = por %p99, %p100
      %s103 = sadd.s32 %s102, 1
      %p106 = scmp.eq.s32.totalorder %s14, 3
      %p107 = scmp.ne.s32.totalorder %s102, %s104
      %p108 = scmp.eq.s32.totalorder %s14, 0
      %p109 = por %p107, %p108
      %p110 = scmp.ne.s32.totalorder %s102, %s104
      %p111 = scmp.eq.s32.totalorder %s19, 3
      %p112 = por %p110, %p111
      %p113 = scmp.ne.s32.totalorder %s104, %s105
      %p114 = scmp.eq.s32.totalorder %s19, 0
      %p115 = por %p113, %p114
      %p116 = scmp.ne.s32.totalorder %s104, %s105
      %p117 = scmp.eq.s32.totalorder %s20, 3
      %p118 = por %p116, %p117
      %p120 = scmp.ne.s32.totalorder %s105, %s119
      %p121 = scmp.eq.s32.totalorder %s20, 0
      %p122 = por %p120, %p121
      %s123 = ssub.s32 %s21, %s33
      %s124 = ssub.s32 %s22, %s29
      %s125 = sor.u32 %s123, %s124
      %p126 = scmp.eq.s32.totalorder %s125, 0
      %s128 = sadd.s32 %s127, 1
      %s129 = scalar_select %p126, %s127, %s128
      %p132 = pneg %p126
      %p133 = scmp.eq.s32.totalorder %s14, 3
      %p134 = por %p132, %p133
      %p135 = scmp.ne.s32.totalorder %s127, %s130
      %p136 = scmp.eq.s32.totalorder %s14, 0
      %p137 = por %p135, %p136
      %p138 = scmp.ne.s32.totalorder %s127, %s130
      %p139 = scmp.eq.s32.totalorder %s19, 3
      %p140 = por %p138, %p139
      %p141 = scmp.ne.s32.totalorder %s130, %s131
      %p142 = scmp.eq.s32.totalorder %s19, 0
      %p143 = por %p141, %p142
      %p144 = scmp.ne.s32.totalorder %s130, %s131
      %p145 = scmp.eq.s32.totalorder %s20, 3
      %p146 = por %p144, %p145
      %p148 = scmp.ne.s32.totalorder %s131, %s147
      %p149 = scmp.eq.s32.totalorder %s20, 0
      %p150 = por %p148, %p149
      %s151 = ssub.s32 %s21, %s33
      %s152 = ssub.s32 %s22, %s29
      %s153 = sor.u32 %s151, %s152
      %p154 = scmp.eq.s32.totalorder %s153, 0
      %s156 = sadd.s32 %s155, 1
      %s157 = scalar_select %p154, %s155, %s156
      %p160 = pneg %p154
      %p161 = scmp.eq.s32.totalorder %s14, 3
      %p162 = por %p160, %p161
      %p163 = scmp.ne.s32.totalorder %s155, %s158
      %p164 = scmp.eq.s32.totalorder %s14, 0
      %p165 = por %p163, %p164
      %p166 = scmp.ne.s32.totalorder %s155, %s158
      %p167 = scmp.eq.s32.totalorder %s19, 3
      %p168 = por %p166, %p167
      %p169 = scmp.ne.s32.totalorder %s158, %s159
      %p170 = scmp.eq.s32.totalorder %s19, 0
      %p171 = por %p169, %p170
      %p172 = scmp.ne.s32.totalorder %s158, %s159
      %p173 = scmp.eq.s32.totalorder %s20, 3
      %p174 = por %p172, %p173
      %p176 = scmp.ne.s32.totalorder %s159, %s175
      %p177 = scmp.eq.s32.totalorder %s20, 0
      %p178 = por %p176, %p177
      %p179 = scmp.le.s32.totalorder 1, %s14
      %p180 = scmp.lt.s32.totalorder %s14, 5
      %p181 = pnand %p179, %p180
      %p182 = pneg %p181
      // Predicated region
      $region9: #{forward.7} parent=5 // pred_check
        _
      $region10: #{forward.7} parent=5 // pred_check_branch
        %184 = sbr.rel (%p181) target = $region12
      $region11: #{forward.7} parent=5 // pred_region
        %s185 = ssub.s32 %s14, 1
        // Predicated region
        $region13: #{forward.7} parent=11 // pred_check
          %p186 = pneg %p73
        $region14: #{forward.7} parent=11 // pred_check_branch
          %188 = sbr.rel (%p186) target = $region16
        $region15: #{forward.7} parent=11 // pred_region
          _
        $region16: #{forward.7} parent=11 // pred_fallthru
          _
        // Predicated region
        $region17: #{forward.7} parent=11 // pred_check
          %p189 = pneg %p94
        $region18: #{forward.7} parent=11 // pred_check_branch
          %191 = sbr.rel (%p189) target = $region20
        $region19: #{forward.7} parent=11 // pred_region
          _
        $region20: #{forward.7} parent=11 // pred_fallthru
          _
        // Predicated region
        $region21: #{forward.7} parent=11 // pred_check
          %p192 = pneg %p115
        $region22: #{forward.7} parent=11 // pred_check_branch
          %194 = sbr.rel (%p192) target = $region24
        $region23: #{forward.7} parent=11 // pred_region
          _
        $region24: #{forward.7} parent=11 // pred_fallthru
          _
      $region12: #{forward.7} parent=5 // pred_fallthru
        _
      %p195 = scmp.lt.s32.totalorder %s14, 4
      // Predicated region
      $region25: #{forward.7} parent=5 // pred_check
        %p196 = pneg %p195
      $region26: #{forward.7} parent=5 // pred_check_branch
        %198 = sbr.rel (%p196) target = $region28
      $region27: #{forward.7} parent=5 // pred_region
        // Predicated region
        $region29: #{forward.7} parent=27 // pred_check
          %p199 = pneg %p46
        $region30: #{forward.7} parent=27 // pred_check_branch
          %201 = sbr.rel (%p199) target = $region32
        $region31: #{forward.7} parent=27 // pred_region
          %p202 = scmp.lt.s32.totalorder %s21, 1
          %s203 = scalar_select %p202, %s21, 1
          %s204 = smul.addr %s203, 32
          %s205 = smul.addr %s204, 4
          %s206 = scalar_lea.vmem %s0, %s205
        $region32: #{forward.7} parent=27 // pred_fallthru
          _
        // Predicated region
        $region33: #{forward.7} parent=27 // pred_check
          %p207 = pneg %p137
        $region34: #{forward.7} parent=27 // pred_check_branch
          %209 = sbr.rel (%p207) target = $region36
        $region35: #{forward.7} parent=27 // pred_region
          %s210 = smul.u32 8, %s22
          %p211 = scmp.lt.s32.totalorder %s21, 1
          %s212 = scalar_select %p211, %s21, 1
          %p213 = scmp.lt.s32.totalorder %s210, 15
          %s214 = scalar_select %p213, %s210, 15
          %s215 = smul.addr %s214, 2
          %s216 = smul.addr %s212, 32
          %s217 = sadd.s32 %s215, %s216
          %s218 = smul.addr %s217, 4
          %s219 = scalar_lea.vmem %s4, %s218
          %s220 = smul.u32 8, %s22
        $region36: #{forward.7} parent=27 // pred_fallthru
          _
      $region28: #{forward.7} parent=5 // pred_fallthru
        _
      %p221 = scmp.le.s32.totalorder 1, %s14
      %p222 = scmp.lt.s32.totalorder %s14, 5
      %p223 = pnand %p221, %p222
      %p224 = pneg %p223
      // Predicated region
      $region37: #{forward.7} parent=5 // pred_check
        _
      $region38: #{forward.7} parent=5 // pred_check_branch
        %226 = sbr.rel (%p223) target = $region40
      $region39: #{forward.7} parent=5 // pred_region
        %s227 = ssub.s32 %s14, 1
        %p228 = scmp.lt.s32.totalorder %s23, 1
        %s229 = scalar_select %p228, %s23, 1
        %s230 = smul.addr %s229, 32
        %s231 = smul.addr %s230, 4
        %s232 = scalar_lea.vmem %s0, %s231
        %p233 = pneg %p52
        %p234 = pneg %p49
        %p235 = pneg %p73
        %p236 = pneg %p70
        %p237 = pneg %p94
        %p238 = pneg %p91
        %p239 = pneg %p115
        %p240 = pneg %p112
        %s241 = smul.u32 8, %s24
        %p242 = scmp.lt.s32.totalorder %s23, 1
        %s243 = scalar_select %p242, %s23, 1
        %p244 = scmp.lt.s32.totalorder %s241, 15
        %s245 = scalar_select %p244, %s241, 15
        %s246 = smul.addr %s245, 2
        %s247 = smul.addr %s243, 32
        %s248 = sadd.s32 %s246, %s247
        %s249 = smul.addr %s248, 4
        %s250 = scalar_lea.vmem %s4, %s249
        %p251 = pneg %p143
        %p252 = pneg %p140
        %p253 = pneg %p171
        %p254 = pneg %p168
        %s255 = sand.u32 %s158, 1
        %s256 = scalar_lea.sflag [#allocation4], %s255
        %s257 = sand.u32 %s158, 1
        %s258 = smul.addr %s257, 128
        %s259 = scalar_lea.vmem [#allocation3], %s258
        %p260 = scmp.lt.s32.totalorder %s23, 1
        %s261 = scalar_select %p260, %s23, 1
        %s262 = smul.addr %s261, 32
        %s263 = smul.addr %s262, 4
        %s264 = scalar_lea.vmem %s0, %s263
        %s265 = smul.u32 8, %s24
        %p266 = scmp.lt.s32.totalorder %s23, 1
        %s267 = scalar_select %p266, %s23, 1
        %p268 = scmp.lt.s32.totalorder %s265, 15
        %s269 = scalar_select %p268, %s265, 15
        %s270 = smul.addr %s269, 2
        %s271 = smul.addr %s267, 32
        %s272 = sadd.s32 %s270, %s271
        %s273 = smul.addr %s272, 4
        %s274 = scalar_lea.vmem %s4, %s273
        %s275 = smul.u32 8, %s24
        %s276 = smul.u32 8, %s24
        %s278 = smul.u32 %s24, 8
        %vm279 = vcmask 1040384
        %vm280 = vsmask.f32 256
        %vm281 = vmand %vm279, %vm280
        %v282 = vld [vmem:[#allocation2] sm:$0x1]
        %v283 = vsel %vm281, 0, %v282
        %284 = vst [vmem:[#allocation2] sm:$0x1] %v283
        %v285 = vld [vmem:[#allocation2 + $0xc] sm:$0x1]
        %v286 = vsel %vm281, 0, %v285
        %287 = vst [vmem:[#allocation2 + $0xc] sm:$0x1] %v286
        %v288 = vld [vmem:[#allocation2 + $0x18] sm:$0x1]
        %v289 = vsel %vm281, 0, %v288
        %290 = vst [vmem:[#allocation2 + $0x18] sm:$0x1] %v289
        %v291 = vld [vmem:[#allocation2 + $0x24] sm:$0x1]
        %v292 = vsel %vm281, 0, %v291
        %293 = vst [vmem:[#allocation2 + $0x24] sm:$0x1] %v292
        %v294 = vld [vmem:[#allocation2 + $0x30] sm:$0x1]
        %v295 = vsel %vm281, 0, %v294
        %296 = vst [vmem:[#allocation2 + $0x30] sm:$0x1] %v295
        %v297 = vld [vmem:[#allocation2 + $0x3c] sm:$0x1]
        %v298 = vsel %vm281, 0, %v297
        %299 = vst [vmem:[#allocation2 + $0x3c] sm:$0x1] %v298
        %v300 = vld [vmem:[#allocation2 + $0x48] sm:$0x1]
        %v301 = vsel %vm281, 0, %v300
        %302 = vst [vmem:[#allocation2 + $0x48] sm:$0x1] %v301
        %v303 = vld [vmem:[#allocation2 + $0x54] sm:$0x1]
        %v304 = vsel %vm281, 0, %v303
        %305 = vst [vmem:[#allocation2 + $0x54] sm:$0x1] %v304
        %v306 = vld [vmem:[#allocation2 + $0x60] sm:$0x1]
        %v307 = vsel %vm281, 0, %v306
        %308 = vst [vmem:[#allocation2 + $0x60] sm:$0x1] %v307
        %v309 = vld [vmem:[#allocation2 + $0x6c] sm:$0x1]
        %v310 = vsel %vm281, 0, %v309
        %311 = vst [vmem:[#allocation2 + $0x6c] sm:$0x1] %v310
        %vm312 = vsmask.f32 7938
        %vm313 = vmand %vm279, %vm312
        %v314 = vld [vmem:[#allocation2 + $0x8] sm:$0x1]
        %v315 = vsel %vm313, 0, %v314
        %316 = vst [vmem:[#allocation2 + $0x8] sm:$0x1] %v315
        %v317 = vld [vmem:[#allocation2 + $0x14] sm:$0x1]
        %v318 = vsel %vm313, 0, %v317
        %319 = vst [vmem:[#allocation2 + $0x14] sm:$0x1] %v318
        %v320 = vld [vmem:[#allocation2 + $0x20] sm:$0x1]
        %v321 = vsel %vm313, 0, %v320
        %322 = vst [vmem:[#allocation2 + $0x20] sm:$0x1] %v321
        %v323 = vld [vmem:[#allocation2 + $0x2c] sm:$0x1]
        %v324 = vsel %vm313, 0, %v323
        %325 = vst [vmem:[#allocation2 + $0x2c] sm:$0x1] %v324
        %v326 = vld [vmem:[#allocation2 + $0x38] sm:$0x1]
        %v327 = vsel %vm313, 0, %v326
        %328 = vst [vmem:[#allocation2 + $0x38] sm:$0x1] %v327
        %v329 = vld [vmem:[#allocation2 + $0x44] sm:$0x1]
        %v330 = vsel %vm313, 0, %v329
        %331 = vst [vmem:[#allocation2 + $0x44] sm:$0x1] %v330
        %v332 = vld [vmem:[#allocation2 + $0x50] sm:$0x1]
        %v333 = vsel %vm313, 0, %v332
        %334 = vst [vmem:[#allocation2 + $0x50] sm:$0x1] %v333
        %v335 = vld [vmem:[#allocation2 + $0x5c] sm:$0x1]
        %v336 = vsel %vm313, 0, %v335
        %337 = vst [vmem:[#allocation2 + $0x5c] sm:$0x1] %v336
        %v338 = vld [vmem:[#allocation2 + $0x68] sm:$0x1]
        %v339 = vsel %vm313, 0, %v338
        %340 = vst [vmem:[#allocation2 + $0x68] sm:$0x1] %v339
        %v341 = vld [vmem:[#allocation2 + $0x74] sm:$0x1]
        %v342 = vsel %vm313, 0, %v341
        %343 = vst [vmem:[#allocation2 + $0x74] sm:$0x1] %v342
        %p344 = scmp.eq.s32.totalorder %s24, 0
        // Predicated region
        $region41: #{forward.7} parent=39 // pred_check
          %p345 = pneg %p344
        $region42: #{forward.7} parent=39 // pred_check_branch
          %347 = sbr.rel (%p345) target = $region44
        $region43: #{forward.7} parent=39 // pred_region
          %348 = vst [vmem:[#allocation2] sm:$0xf] 0
          %349 = vst [vmem:[#allocation2 + $0x4] sm:$0xf] 0
          %350 = vst [vmem:[#allocation2 + $0x8] sm:$0x1] 0
          %v351 = vld [vmem:[%s264] sm:$0xf]
          %v352 = vld [vmem:[%s264 + $0x4] sm:$0xf]
          %v353 = vld [vmem:[%s264 + $0x8] sm:$0xf]
          %v354 = vld [vmem:[%s264 + $0xc] sm:$0xf]
          %v355 = vld [vmem:[%s264 + $0x10] sm:$0xf]
          %v356 = vld [vmem:[%s264 + $0x14] sm:$0xf]
          %v357 = vld [vmem:[%s264 + $0x18] sm:$0xf]
          %v358 = vld [vmem:[%s264 + $0x1c] sm:$0xf]
          %v359 = vld [vmem:[%s264 + $0x20] sm:$0xf]
          %v360 = vld [vmem:[%s264 + $0x24] sm:$0xf]
          %v361 = vld [vmem:[%s264 + $0x28] sm:$0xf]
          %v362 = vld [vmem:[%s264 + $0x2c] sm:$0xf]
          %v363 = vld [vmem:[%s264 + $0x30] sm:$0xf]
          %v364 = vld [vmem:[%s264 + $0x34] sm:$0xf]
          %v365 = vld [vmem:[%s264 + $0x38] sm:$0xf]
          %v366 = vld [vmem:[%s264 + $0x3c] sm:$0xf]
          %v367 = vld [vmem:[%s264 + $0x40] sm:$0xf]
          %v368 = vld [vmem:[%s264 + $0x44] sm:$0xf]
          %vm369 = vsmask.f32 4368
          %vm370 = vmor %vm280, %vm369
          %v372 = vshrl.u32 %v351, 16
          %v374 = vrot.slane %v372, 7
          %v375 = vshll.u32 %v351, 16
          %v377 = vor.u32 %v374, %v375
          %v378 = vrot.slane %v374, 4
          %v380 = vshrl.u32 %v352, 16
          %v382 = vrot.slane %v380, 7
          %v383 = vshll.u32 %v352, 16
          %v385 = vor.u32 %v382, %v383
          %v386 = vsel %vm370, %v378, %v385
          %v387 = vrot.slane %v382, 4
          %v389 = vshrl.u32 %v353, 16
          %v391 = vrot.slane %v389, 7
          %v392 = vshll.u32 %v353, 16
          %v394 = vor.u32 %v391, %v392
          %v395 = vrot.slane %v391, 4
          %v397 = vshrl.u32 %v354, 16
          %v399 = vrot.slane %v397, 7
          %v400 = vshll.u32 %v354, 16
          %v402 = vor.u32 %v399, %v400
          %v403 = vsel %vm370, %v395, %v402
          %v404 = vrot.slane %v399, 4
          %v406 = vshrl.u32 %v355, 16
          %v408 = vrot.slane %v406, 7
          %v409 = vshll.u32 %v355, 16
          %v411 = vor.u32 %v408, %v409
          %v412 = vrot.slane %v408, 4
          %v414 = vshrl.u32 %v356, 16
          %v416 = vrot.slane %v414, 7
          %v417 = vshll.u32 %v356, 16
          %v419 = vor.u32 %v416, %v417
          %v420 = vsel %vm370, %v412, %v419
          %v421 = vrot.slane %v416, 4
          %v423 = vshrl.u32 %v357, 16
          %v425 = vrot.slane %v423, 7
          %v426 = vshll.u32 %v357, 16
          %v428 = vor.u32 %v425, %v426
          %v429 = vrot.slane %v425, 4
          %v431 = vshrl.u32 %v358, 16
          %v433 = vrot.slane %v431, 7
          %v434 = vshll.u32 %v358, 16
          %v436 = vor.u32 %v433, %v434
          %v437 = vsel %vm370, %v429, %v436
          %v438 = vrot.slane %v433, 4
          %v440 = vshrl.u32 %v359, 16
          %v442 = vrot.slane %v440, 7
          %v443 = vshll.u32 %v359, 16
          %v445 = vor.u32 %v442, %v443
          %v446 = vrot.slane %v442, 4
          %v448 = vshrl.u32 %v360, 16
          %v450 = vrot.slane %v448, 7
          %v451 = vshll.u32 %v360, 16
          %v453 = vor.u32 %v450, %v451
          %v454 = vsel %vm370, %v446, %v453
          %v455 = vrot.slane %v450, 4
          %v457 = vshrl.u32 %v361, 16
          %v459 = vrot.slane %v457, 7
          %v460 = vshll.u32 %v361, 16
          %v462 = vor.u32 %v459, %v460
          %v463 = vrot.slane %v459, 4
          %v465 = vshrl.u32 %v362, 16
          %v467 = vrot.slane %v465, 7
          %v468 = vshll.u32 %v362, 16
          %v470 = vor.u32 %v467, %v468
          %v471 = vsel %vm370, %v463, %v470
          %v472 = vrot.slane %v467, 4
          %v474 = vshrl.u32 %v363, 16
          %v476 = vrot.slane %v474, 7
          %v477 = vshll.u32 %v363, 16
          %v479 = vor.u32 %v476, %v477
          %v480 = vrot.slane %v476, 4
          %v482 = vshrl.u32 %v364, 16
          %v484 = vrot.slane %v482, 7
          %v485 = vshll.u32 %v364, 16
          %v487 = vor.u32 %v484, %v485
          %v488 = vsel %vm370, %v480, %v487
          %v489 = vrot.slane %v484, 4
          %v491 = vshrl.u32 %v365, 16
          %v493 = vrot.slane %v491, 7
          %v494 = vshll.u32 %v365, 16
          %v496 = vor.u32 %v493, %v494
          %v497 = vrot.slane %v493, 4
          %v499 = vshrl.u32 %v366, 16
          %v501 = vrot.slane %v499, 7
          %v502 = vshll.u32 %v366, 16
          %v504 = vor.u32 %v501, %v502
          %v505 = vsel %vm370, %v497, %v504
          %v506 = vrot.slane %v501, 4
          %v508 = vshrl.u32 %v367, 16
          %v510 = vrot.slane %v508, 7
          %v511 = vshll.u32 %v367, 16
          %v513 = vor.u32 %v510, %v511
          %v514 = vrot.slane %v510, 4
          %v516 = vshrl.u32 %v368, 16
          %v518 = vrot.slane %v516, 7
          %v519 = vshll.u32 %v368, 16
          %v521 = vor.u32 %v518, %v519
          %v522 = vsel %vm370, %v514, %v521
          %v523 = vrot.slane %v518, 4
          %s551 = scalar_lea.vmem [#allocation2], 12
          %vm552 = vcmask 1043456
          %vm553 = vmand %vm552, %vm312
          %v554 = vld [vmem:[%s551] sm:$0xf]
          %v555 = vsel %vm553, %v377, %v554
          %556 = vst [vmem:[%s551] sm:$0xf] %v555
          %557 = vst [vmem:[%s551 + $0x4] sm:$0xf] %v386
          %v558 = vld [vmem:[%s551 + $0x8] sm:$0x1]
          %v559 = vsel %vm281, %v387, %v558
          %560 = vst [vmem:[%s551 + $0x8] sm:$0x1] %v559
          %v561 = vld [vmem:[%s551 + $0xc] sm:$0xf]
          %v562 = vsel %vm553, %v394, %v561
          %563 = vst [vmem:[%s551 + $0xc] sm:$0xf] %v562
          %564 = vst [vmem:[%s551 + $0x10] sm:$0xf] %v403
          %v565 = vld [vmem:[%s551 + $0x14] sm:$0x1]
          %v566 = vsel %vm281, %v404, %v565
          %567 = vst [vmem:[%s551 + $0x14] sm:$0x1] %v566
          %v568 = vld [vmem:[%s551 + $0x18] sm:$0xf]
          %v569 = vsel %vm553, %v411, %v568
          %570 = vst [vmem:[%s551 + $0x18] sm:$0xf] %v569
          %571 = vst [vmem:[%s551 + $0x1c] sm:$0xf] %v420
          %v572 = vld [vmem:[%s551 + $0x20] sm:$0x1]
          %v573 = vsel %vm281, %v421, %v572
          %574 = vst [vmem:[%s551 + $0x20] sm:$0x1] %v573
          %v575 = vld [vmem:[%s551 + $0x24] sm:$0xf]
          %v576 = vsel %vm553, %v428, %v575
          %577 = vst [vmem:[%s551 + $0x24] sm:$0xf] %v576
          %578 = vst [vmem:[%s551 + $0x28] sm:$0xf] %v437
          %v579 = vld [vmem:[%s551 + $0x2c] sm:$0x1]
          %v580 = vsel %vm281, %v438, %v579
          %581 = vst [vmem:[%s551 + $0x2c] sm:$0x1] %v580
          %v582 = vld [vmem:[%s551 + $0x30] sm:$0xf]
          %v583 = vsel %vm553, %v445, %v582
          %584 = vst [vmem:[%s551 + $0x30] sm:$0xf] %v583
          %585 = vst [vmem:[%s551 + $0x34] sm:$0xf] %v454
          %v586 = vld [vmem:[%s551 + $0x38] sm:$0x1]
          %v587 = vsel %vm281, %v455, %v586
          %588 = vst [vmem:[%s551 + $0x38] sm:$0x1] %v587
          %v589 = vld [vmem:[%s551 + $0x3c] sm:$0xf]
          %v590 = vsel %vm553, %v462, %v589
          %591 = vst [vmem:[%s551 + $0x3c] sm:$0xf] %v590
          %592 = vst [vmem:[%s551 + $0x40] sm:$0xf] %v471
          %v593 = vld [vmem:[%s551 + $0x44] sm:$0x1]
          %v594 = vsel %vm281, %v472, %v593
          %595 = vst [vmem:[%s551 + $0x44] sm:$0x1] %v594
          %v596 = vld [vmem:[%s551 + $0x48] sm:$0xf]
          %v597 = vsel %vm553, %v479, %v596
          %598 = vst [vmem:[%s551 + $0x48] sm:$0xf] %v597
          %599 = vst [vmem:[%s551 + $0x4c] sm:$0xf] %v488
          %v600 = vld [vmem:[%s551 + $0x50] sm:$0x1]
          %v601 = vsel %vm281, %v489, %v600
          %602 = vst [vmem:[%s551 + $0x50] sm:$0x1] %v601
          %v603 = vld [vmem:[%s551 + $0x54] sm:$0xf]
          %v604 = vsel %vm553, %v496, %v603
          %605 = vst [vmem:[%s551 + $0x54] sm:$0xf] %v604
          %606 = vst [vmem:[%s551 + $0x58] sm:$0xf] %v505
          %v607 = vld [vmem:[%s551 + $0x5c] sm:$0x1]
          %v608 = vsel %vm281, %v506, %v607
          %609 = vst [vmem:[%s551 + $0x5c] sm:$0x1] %v608
          %v610 = vld [vmem:[%s551 + $0x60] sm:$0xf]
          %v611 = vsel %vm553, %v513, %v610
          %612 = vst [vmem:[%s551 + $0x60] sm:$0xf] %v611
          %613 = vst [vmem:[%s551 + $0x64] sm:$0xf] %v522
          %v614 = vld [vmem:[%s551 + $0x68] sm:$0x1]
          %v615 = vsel %vm281, %v523, %v614
          %616 = vst [vmem:[%s551 + $0x68] sm:$0x1] %v615
        $region44: #{forward.7} parent=39 // pred_fallthru
          _
        %p617 = scmp.eq.s32.totalorder %s24, 1
        // Predicated region
        $region45: #{forward.7} parent=39 // pred_check
          %p618 = pneg %p617
        $region46: #{forward.7} parent=39 // pred_check_branch
          %620 = sbr.rel (%p618) target = $region48
        $region47: #{forward.7} parent=39 // pred_region
          %s621 = scalar_lea.vmem [#allocation2], 108
          %622 = vst [vmem:[%s621] sm:$0xf] 0
          %623 = vst [vmem:[%s621 + $0x4] sm:$0xf] 0
          %624 = vst [vmem:[%s621 + $0x8] sm:$0x1] 0
          %s625 = ssub.s32 %s278, 1
          %s626 = smul.u32 %s625, 2
          %s627 = smul.addr %s626, 4
          %s628 = scalar_lea.vmem %s264, %s627
          %v629 = vld [vmem:[%s628] sm:$0xf]
          %v630 = vld [vmem:[%s628 + $0x4] sm:$0xf]
          %v631 = vld [vmem:[%s628 + $0x8] sm:$0xf]
          %v632 = vld [vmem:[%s628 + $0xc] sm:$0xf]
          %v633 = vld [vmem:[%s628 + $0x10] sm:$0xf]
          %v634 = vld [vmem:[%s628 + $0x14] sm:$0xf]
          %v635 = vld [vmem:[%s628 + $0x18] sm:$0xf]
          %v636 = vld [vmem:[%s628 + $0x1c] sm:$0xf]
          %v637 = vld [vmem:[%s628 + $0x20] sm:$0xf]
          %v638 = vld [vmem:[%s628 + $0x24] sm:$0xf]
          %v639 = vld [vmem:[%s628 + $0x28] sm:$0xf]
          %v640 = vld [vmem:[%s628 + $0x2c] sm:$0xf]
          %v641 = vld [vmem:[%s628 + $0x30] sm:$0xf]
          %v642 = vld [vmem:[%s628 + $0x34] sm:$0xf]
          %v643 = vld [vmem:[%s628 + $0x38] sm:$0xf]
          %v644 = vld [vmem:[%s628 + $0x3c] sm:$0xf]
          %v645 = vld [vmem:[%s628 + $0x40] sm:$0xf]
          %v646 = vld [vmem:[%s628 + $0x44] sm:$0xf]
          %vm647 = vsmask.f32 4368
          %vm648 = vmor %vm280, %vm647
          %v650 = vshrl.u32 %v629, 16
          %v652 = vrot.slane %v650, 7
          %v653 = vshll.u32 %v629, 16
          %v655 = vor.u32 %v652, %v653
          %v656 = vrot.slane %v652, 4
          %v658 = vshrl.u32 %v630, 16
          %v660 = vrot.slane %v658, 7
          %v661 = vshll.u32 %v630, 16
          %v663 = vor.u32 %v660, %v661
          %v664 = vsel %vm648, %v656, %v663
          %v665 = vrot.slane %v660, 4
          %v667 = vshrl.u32 %v631, 16
          %v669 = vrot.slane %v667, 7
          %v670 = vshll.u32 %v631, 16
          %v672 = vor.u32 %v669, %v670
          %v673 = vrot.slane %v669, 4
          %v675 = vshrl.u32 %v632, 16
          %v677 = vrot.slane %v675, 7
          %v678 = vshll.u32 %v632, 16
          %v680 = vor.u32 %v677, %v678
          %v681 = vsel %vm648, %v673, %v680
          %v682 = vrot.slane %v677, 4
          %v684 = vshrl.u32 %v633, 16
          %v686 = vrot.slane %v684, 7
          %v687 = vshll.u32 %v633, 16
          %v689 = vor.u32 %v686, %v687
          %v690 = vrot.slane %v686, 4
          %v692 = vshrl.u32 %v634, 16
          %v694 = vrot.slane %v692, 7
          %v695 = vshll.u32 %v634, 16
          %v697 = vor.u32 %v694, %v695
          %v698 = vsel %vm648, %v690, %v697
          %v699 = vrot.slane %v694, 4
          %v701 = vshrl.u32 %v635, 16
          %v703 = vrot.slane %v701, 7
          %v704 = vshll.u32 %v635, 16
          %v706 = vor.u32 %v703, %v704
          %v707 = vrot.slane %v703, 4
          %v709 = vshrl.u32 %v636, 16
          %v711 = vrot.slane %v709, 7
          %v712 = vshll.u32 %v636, 16
          %v714 = vor.u32 %v711, %v712
          %v715 = vsel %vm648, %v707, %v714
          %v716 = vrot.slane %v711, 4
          %v718 = vshrl.u32 %v637, 16
          %v720 = vrot.slane %v718, 7
          %v721 = vshll.u32 %v637, 16
          %v723 = vor.u32 %v720, %v721
          %v724 = vrot.slane %v720, 4
          %v726 = vshrl.u32 %v638, 16
          %v728 = vrot.slane %v726, 7
          %v729 = vshll.u32 %v638, 16
          %v731 = vor.u32 %v728, %v729
          %v732 = vsel %vm648, %v724, %v731
          %v733 = vrot.slane %v728, 4
          %v735 = vshrl.u32 %v639, 16
          %v737 = vrot.slane %v735, 7
          %v738 = vshll.u32 %v639, 16
          %v740 = vor.u32 %v737, %v738
          %v741 = vrot.slane %v737, 4
          %v743 = vshrl.u32 %v640, 16
          %v745 = vrot.slane %v743, 7
          %v746 = vshll.u32 %v640, 16
          %v748 = vor.u32 %v745, %v746
          %v749 = vsel %vm648, %v741, %v748
          %v750 = vrot.slane %v745, 4
          %v752 = vshrl.u32 %v641, 16
          %v754 = vrot.slane %v752, 7
          %v755 = vshll.u32 %v641, 16
          %v757 = vor.u32 %v754, %v755
          %v758 = vrot.slane %v754, 4
          %v760 = vshrl.u32 %v642, 16
          %v762 = vrot.slane %v760, 7
          %v763 = vshll.u32 %v642, 16
          %v765 = vor.u32 %v762, %v763
          %v766 = vsel %vm648, %v758, %v765
          %v767 = vrot.slane %v762, 4
          %v769 = vshrl.u32 %v643, 16
          %v771 = vrot.slane %v769, 7
          %v772 = vshll.u32 %v643, 16
          %v774 = vor.u32 %v771, %v772
          %v775 = vrot.slane %v771, 4
          %v777 = vshrl.u32 %v644, 16
          %v779 = vrot.slane %v777, 7
          %v780 = vshll.u32 %v644, 16
          %v782 = vor.u32 %v779, %v780
          %v783 = vsel %vm648, %v775, %v782
          %v784 = vrot.slane %v779, 4
          %v786 = vshrl.u32 %v645, 16
          %v788 = vrot.slane %v786, 7
          %v789 = vshll.u32 %v645, 16
          %v791 = vor.u32 %v788, %v789
          %v792 = vrot.slane %v788, 4
          %v794 = vshrl.u32 %v646, 16
          %v796 = vrot.slane %v794, 7
          %v797 = vshll.u32 %v646, 16
          %v799 = vor.u32 %v796, %v797
          %v800 = vsel %vm648, %v792, %v799
          %v801 = vrot.slane %v796, 4
          %vm829 = vcmask 1043456
          %vm830 = vmand %vm829, %vm312
          %v831 = vld [vmem:[#allocation2] sm:$0xf]
          %v832 = vsel %vm830, %v655, %v831
          %833 = vst [vmem:[#allocation2] sm:$0xf] %v832
          %834 = vst [vmem:[#allocation2 + $0x4] sm:$0xf] %v664
          %v835 = vld [vmem:[#allocation2 + $0x8] sm:$0x1]
          %v836 = vsel %vm281, %v665, %v835
          %837 = vst [vmem:[#allocation2 + $0x8] sm:$0x1] %v836
          %v838 = vld [vmem:[#allocation2 + $0xc] sm:$0xf]
          %v839 = vsel %vm830, %v672, %v838
          %840 = vst [vmem:[#allocation2 + $0xc] sm:$0xf] %v839
          %841 = vst [vmem:[#allocation2 + $0x10] sm:$0xf] %v681
          %v842 = vld [vmem:[#allocation2 + $0x14] sm:$0x1]
          %v843 = vsel %vm281, %v682, %v842
          %844 = vst [vmem:[#allocation2 + $0x14] sm:$0x1] %v843
          %v845 = vld [vmem:[#allocation2 + $0x18] sm:$0xf]
          %v846 = vsel %vm830, %v689, %v845
          %847 = vst [vmem:[#allocation2 + $0x18] sm:$0xf] %v846
          %848 = vst [vmem:[#allocation2 + $0x1c] sm:$0xf] %v698
          %v849 = vld [vmem:[#allocation2 + $0x20] sm:$0x1]
          %v850 = vsel %vm281, %v699, %v849
          %851 = vst [vmem:[#allocation2 + $0x20] sm:$0x1] %v850
          %v852 = vld [vmem:[#allocation2 + $0x24] sm:$0xf]
          %v853 = vsel %vm830, %v706, %v852
          %854 = vst [vmem:[#allocation2 + $0x24] sm:$0xf] %v853
          %855 = vst [vmem:[#allocation2 + $0x28] sm:$0xf] %v715
          %v856 = vld [vmem:[#allocation2 + $0x2c] sm:$0x1]
          %v857 = vsel %vm281, %v716, %v856
          %858 = vst [vmem:[#allocation2 + $0x2c] sm:$0x1] %v857
          %v859 = vld [vmem:[#allocation2 + $0x30] sm:$0xf]
          %v860 = vsel %vm830, %v723, %v859
          %861 = vst [vmem:[#allocation2 + $0x30] sm:$0xf] %v860
          %862 = vst [vmem:[#allocation2 + $0x34] sm:$0xf] %v732
          %v863 = vld [vmem:[#allocation2 + $0x38] sm:$0x1]
          %v864 = vsel %vm281, %v733, %v863
          %865 = vst [vmem:[#allocation2 + $0x38] sm:$0x1] %v864
          %v866 = vld [vmem:[#allocation2 + $0x3c] sm:$0xf]
          %v867 = vsel %vm830, %v740, %v866
          %868 = vst [vmem:[#allocation2 + $0x3c] sm:$0xf] %v867
          %869 = vst [vmem:[#allocation2 + $0x40] sm:$0xf] %v749
          %v870 = vld [vmem:[#allocation2 + $0x44] sm:$0x1]
          %v871 = vsel %vm281, %v750, %v870
          %872 = vst [vmem:[#allocation2 + $0x44] sm:$0x1] %v871
          %v873 = vld [vmem:[#allocation2 + $0x48] sm:$0xf]
          %v874 = vsel %vm830, %v757, %v873
          %875 = vst [vmem:[#allocation2 + $0x48] sm:$0xf] %v874
          %876 = vst [vmem:[#allocation2 + $0x4c] sm:$0xf] %v766
          %v877 = vld [vmem:[#allocation2 + $0x50] sm:$0x1]
          %v878 = vsel %vm281, %v767, %v877
          %879 = vst [vmem:[#allocation2 + $0x50] sm:$0x1] %v878
          %v880 = vld [vmem:[#allocation2 + $0x54] sm:$0xf]
          %v881 = vsel %vm830, %v774, %v880
          %882 = vst [vmem:[#allocation2 + $0x54] sm:$0xf] %v881
          %883 = vst [vmem:[#allocation2 + $0x58] sm:$0xf] %v783
          %v884 = vld [vmem:[#allocation2 + $0x5c] sm:$0x1]
          %v885 = vsel %vm281, %v784, %v884
          %886 = vst [vmem:[#allocation2 + $0x5c] sm:$0x1] %v885
          %v887 = vld [vmem:[#allocation2 + $0x60] sm:$0xf]
          %v888 = vsel %vm830, %v791, %v887
          %889 = vst [vmem:[#allocation2 + $0x60] sm:$0xf] %v888
          %890 = vst [vmem:[#allocation2 + $0x64] sm:$0xf] %v800
          %v891 = vld [vmem:[#allocation2 + $0x68] sm:$0x1]
          %v892 = vsel %vm281, %v801, %v891
          %893 = vst [vmem:[#allocation2 + $0x68] sm:$0x1] %v892
        $region48: #{forward.7} parent=39 // pred_fallthru
          _
        %v894 = vld [vmem:[#allocation2] sm:$0xf]
        %v895 = vld [vmem:[#allocation2 + $0x4] sm:$0xf]
        %v896 = vld [vmem:[#allocation2 + $0xc] sm:$0xf]
        %v897 = vld [vmem:[#allocation2 + $0x10] sm:$0xf]
        %v898 = vld [vmem:[#allocation2 + $0x18] sm:$0xf]
        %v899 = vld [vmem:[#allocation2 + $0x1c] sm:$0xf]
        %v900 = vld [vmem:[#allocation2 + $0x24] sm:$0xf]
        %v901 = vld [vmem:[#allocation2 + $0x28] sm:$0xf]
        %v902 = vld [vmem:[#allocation2 + $0x30] sm:$0xf]
        %v903 = vld [vmem:[#allocation2 + $0x34] sm:$0xf]
        %v904 = vld [vmem:[#allocation2 + $0x3c] sm:$0xf]
        %v905 = vld [vmem:[#allocation2 + $0x40] sm:$0xf]
        %v906 = vld [vmem:[#allocation2 + $0x48] sm:$0xf]
        %v907 = vld [vmem:[#allocation2 + $0x4c] sm:$0xf]
        %v908 = vld [vmem:[#allocation2 + $0x54] sm:$0xf]
        %v909 = vld [vmem:[#allocation2 + $0x58] sm:$0xf]
        %v910 = vld [vmem:[#allocation2 + $0x8] sm:$0x1]
        %v911 = vld [vmem:[#allocation2 + $0x14] sm:$0x1]
        %v912 = vld [vmem:[#allocation2 + $0x20] sm:$0x1]
        %v913 = vld [vmem:[#allocation2 + $0x2c] sm:$0x1]
        %v914 = vld [vmem:[#allocation2 + $0x38] sm:$0x1]
        %v915 = vld [vmem:[#allocation2 + $0x44] sm:$0x1]
        %v916 = vld [vmem:[#allocation2 + $0x50] sm:$0x1]
        %v917 = vld [vmem:[#allocation2 + $0x5c] sm:$0x1]
        %v918 = vld [vmem:[#allocation2] sm:$0xe]
        %v919 = vld [vmem:[#allocation2 + $0xc] sm:$0xe]
        %v920 = vld [vmem:[#allocation2 + $0x18] sm:$0xe]
        %v921 = vld [vmem:[#allocation2 + $0x24] sm:$0xe]
        %v922 = vld [vmem:[#allocation2 + $0x30] sm:$0xe]
        %v923 = vld [vmem:[#allocation2 + $0x3c] sm:$0xe]
        %v924 = vld [vmem:[#allocation2 + $0x48] sm:$0xe]
        %v925 = vld [vmem:[#allocation2 + $0x54] sm:$0xe]
        %s926 = scalar_lea.vmem [#allocation2], 12
        %v927 = vld [vmem:[%s926] sm:$0xf]
        %v928 = vld [vmem:[%s926 + $0x4] sm:$0xf]
        %v929 = vld [vmem:[%s926 + $0xc] sm:$0xf]
        %v930 = vld [vmem:[%s926 + $0x10] sm:$0xf]
        %v931 = vld [vmem:[%s926 + $0x18] sm:$0xf]
        %v932 = vld [vmem:[%s926 + $0x1c] sm:$0xf]
        %v933 = vld [vmem:[%s926 + $0x24] sm:$0xf]
        %v934 = vld [vmem:[%s926 + $0x28] sm:$0xf]
        %v935 = vld [vmem:[%s926 + $0x30] sm:$0xf]
        %v936 = vld [vmem:[%s926 + $0x34] sm:$0xf]
        %v937 = vld [vmem:[%s926 + $0x3c] sm:$0xf]
        %v938 = vld [vmem:[%s926 + $0x40] sm:$0xf]
        %v939 = vld [vmem:[%s926 + $0x48] sm:$0xf]
        %v940 = vld [vmem:[%s926 + $0x4c] sm:$0xf]
        %v941 = vld [vmem:[%s926 + $0x54] sm:$0xf]
        %v942 = vld [vmem:[%s926 + $0x58] sm:$0xf]
        %v943 = vld [vmem:[%s926 + $0x8] sm:$0x1]
        %v944 = vld [vmem:[%s926 + $0x14] sm:$0x1]
        %v945 = vld [vmem:[%s926 + $0x20] sm:$0x1]
        %v946 = vld [vmem:[%s926 + $0x2c] sm:$0x1]
        %v947 = vld [vmem:[%s926 + $0x38] sm:$0x1]
        %v948 = vld [vmem:[%s926 + $0x44] sm:$0x1]
        %v949 = vld [vmem:[%s926 + $0x50] sm:$0x1]
        %v950 = vld [vmem:[%s926 + $0x5c] sm:$0x1]
        %v951 = vld [vmem:[%s926] sm:$0xe]
        %v952 = vld [vmem:[%s926 + $0xc] sm:$0xe]
        %v953 = vld [vmem:[%s926 + $0x18] sm:$0xe]
        %v954 = vld [vmem:[%s926 + $0x24] sm:$0xe]
        %v955 = vld [vmem:[%s926 + $0x30] sm:$0xe]
        %v956 = vld [vmem:[%s926 + $0x3c] sm:$0xe]
        %v957 = vld [vmem:[%s926 + $0x48] sm:$0xe]
        %v958 = vld [vmem:[%s926 + $0x54] sm:$0xe]
        %s959 = scalar_lea.vmem [#allocation2], 24
        %v960 = vld [vmem:[%s959] sm:$0xf]
        %v961 = vld [vmem:[%s959 + $0x4] sm:$0xf]
        %v962 = vld [vmem:[%s959 + $0xc] sm:$0xf]
        %v963 = vld [vmem:[%s959 + $0x10] sm:$0xf]
        %v964 = vld [vmem:[%s959 + $0x18] sm:$0xf]
        %v965 = vld [vmem:[%s959 + $0x1c] sm:$0xf]
        %v966 = vld [vmem:[%s959 + $0x24] sm:$0xf]
        %v967 = vld [vmem:[%s959 + $0x28] sm:$0xf]
        %v968 = vld [vmem:[%s959 + $0x30] sm:$0xf]
        %v969 = vld [vmem:[%s959 + $0x34] sm:$0xf]
        %v970 = vld [vmem:[%s959 + $0x3c] sm:$0xf]
        %v971 = vld [vmem:[%s959 + $0x40] sm:$0xf]
        %v972 = vld [vmem:[%s959 + $0x48] sm:$0xf]
        %v973 = vld [vmem:[%s959 + $0x4c] sm:$0xf]
        %v974 = vld [vmem:[%s959 + $0x54] sm:$0xf]
        %v975 = vld [vmem:[%s959 + $0x58] sm:$0xf]
        %v976 = vld [vmem:[%s959 + $0x8] sm:$0x1]
        %v977 = vld [vmem:[%s959 + $0x14] sm:$0x1]
        %v978 = vld [vmem:[%s959 + $0x20] sm:$0x1]
        %v979 = vld [vmem:[%s959 + $0x2c] sm:$0x1]
        %v980 = vld [vmem:[%s959 + $0x38] sm:$0x1]
        %v981 = vld [vmem:[%s959 + $0x44] sm:$0x1]
        %v982 = vld [vmem:[%s959 + $0x50] sm:$0x1]
        %v983 = vld [vmem:[%s959 + $0x5c] sm:$0x1]
        %v984 = vld [vmem:[%s959] sm:$0xe]
        %v985 = vld [vmem:[%s959 + $0xc] sm:$0xe]
        %v986 = vld [vmem:[%s959 + $0x18] sm:$0xe]
        %v987 = vld [vmem:[%s959 + $0x24] sm:$0xe]
        %v988 = vld [vmem:[%s959 + $0x30] sm:$0xe]
        %v989 = vld [vmem:[%s959 + $0x3c] sm:$0xe]
        %v990 = vld [vmem:[%s959 + $0x48] sm:$0xe]
        %v991 = vld [vmem:[%s959 + $0x54] sm:$0xe]
        %v1008 = vunpack.c.l.b16 %v894
        %v1009 = vunpack.c.l.b16 %v895
        %v1010 = vunpack.c.l.b16 %v896
        %v1011 = vunpack.c.l.b16 %v897
        %v1012 = vunpack.c.l.b16 %v898
        %v1013 = vunpack.c.l.b16 %v899
        %v1014 = vunpack.c.l.b16 %v900
        %v1015 = vunpack.c.l.b16 %v901
        %v1016 = vunpack.c.l.b16 %v902
        %v1017 = vunpack.c.l.b16 %v903
        %v1018 = vunpack.c.l.b16 %v904
        %v1019 = vunpack.c.l.b16 %v905
        %v1020 = vunpack.c.l.b16 %v906
        %v1021 = vunpack.c.l.b16 %v907
        %v1022 = vunpack.c.l.b16 %v908
        %v1023 = vunpack.c.l.b16 %v909
        %v1024 = vpack.c.b16 %v1009, %v1008
        %v1025 = vpack.c.b16 %v1011, %v1010
        %v1026 = vpack.c.b16 %v1013, %v1012
        %v1027 = vpack.c.b16 %v1015, %v1014
        %v1028 = vpack.c.b16 %v1017, %v1016
        %v1029 = vpack.c.b16 %v1019, %v1018
        %v1030 = vpack.c.b16 %v1021, %v1020
        %v1031 = vpack.c.b16 %v1023, %v1022
        %v1048 = vunpack.c.l.b16 %v910
        %v1049 = vunpack.c.l.b16 %v911
        %v1050 = vunpack.c.l.b16 %v912
        %v1051 = vunpack.c.l.b16 %v913
        %v1052 = vunpack.c.l.b16 %v914
        %v1053 = vunpack.c.l.b16 %v915
        %v1054 = vunpack.c.l.b16 %v916
        %v1055 = vunpack.c.l.b16 %v917
        %v1056 = vpack.c.b16 %v1048, %v1048
        %v1057 = vpack.c.b16 %v1049, %v1049
        %v1058 = vpack.c.b16 %v1050, %v1050
        %v1059 = vpack.c.b16 %v1051, %v1051
        %v1060 = vpack.c.b16 %v1052, %v1052
        %v1061 = vpack.c.b16 %v1053, %v1053
        %v1062 = vpack.c.b16 %v1054, %v1054
        %v1063 = vpack.c.b16 %v1055, %v1055
        %vm1064 = vsmask.f32 7424
        %v1066 = vshrl.u32 %v1024, 16
        %v1068 = vshll.u32 %v1024, 16
        %v1070 = vrot.slane %v1068, 1
        %v1071 = vor.u32 %v1066, %v1070
        %v1073 = vshll.u32 %v1056, 16
        %v1075 = vrot.slane %v1073, 1
        %v1076 = vsel %vm1064, %v1071, %v1075
        %v1078 = vshrl.u32 %v1025, 16
        %v1080 = vshll.u32 %v1025, 16
        %v1082 = vrot.slane %v1080, 1
        %v1083 = vor.u32 %v1078, %v1082
        %v1085 = vshll.u32 %v1057, 16
        %v1087 = vrot.slane %v1085, 1
        %v1088 = vsel %vm1064, %v1083, %v1087
        %v1090 = vshrl.u32 %v1026, 16
        %v1092 = vshll.u32 %v1026, 16
        %v1094 = vrot.slane %v1092, 1
        %v1095 = vor.u32 %v1090, %v1094
        %v1097 = vshll.u32 %v1058, 16
        %v1099 = vrot.slane %v1097, 1
        %v1100 = vsel %vm1064, %v1095, %v1099
        %v1102 = vshrl.u32 %v1027, 16
        %v1104 = vshll.u32 %v1027, 16
        %v1106 = vrot.slane %v1104, 1
        %v1107 = vor.u32 %v1102, %v1106
        %v1109 = vshll.u32 %v1059, 16
        %v1111 = vrot.slane %v1109, 1
        %v1112 = vsel %vm1064, %v1107, %v1111
        %v1114 = vshrl.u32 %v1028, 16
        %v1116 = vshll.u32 %v1028, 16
        %v1118 = vrot.slane %v1116, 1
        %v1119 = vor.u32 %v1114, %v1118
        %v1121 = vshll.u32 %v1060, 16
        %v1123 = vrot.slane %v1121, 1
        %v1124 = vsel %vm1064, %v1119, %v1123
        %v1126 = vshrl.u32 %v1029, 16
        %v1128 = vshll.u32 %v1029, 16
        %v1130 = vrot.slane %v1128, 1
        %v1131 = vor.u32 %v1126, %v1130
        %v1133 = vshll.u32 %v1061, 16
        %v1135 = vrot.slane %v1133, 1
        %v1136 = vsel %vm1064, %v1131, %v1135
        %v1138 = vshrl.u32 %v1030, 16
        %v1140 = vshll.u32 %v1030, 16
        %v1142 = vrot.slane %v1140, 1
        %v1143 = vor.u32 %v1138, %v1142
        %v1145 = vshll.u32 %v1062, 16
        %v1147 = vrot.slane %v1145, 1
        %v1148 = vsel %vm1064, %v1143, %v1147
        %v1150 = vshrl.u32 %v1031, 16
        %v1152 = vshll.u32 %v1031, 16
        %v1154 = vrot.slane %v1152, 1
        %v1155 = vor.u32 %v1150, %v1154
        %v1157 = vshll.u32 %v1063, 16
        %v1159 = vrot.slane %v1157, 1
        %v1160 = vsel %vm1064, %v1155, %v1159
        %v1177 = vunpack.c.l.b16 %v918
        %v1178 = vunpack.c.l.b16 %v919
        %v1179 = vunpack.c.l.b16 %v920
        %v1180 = vunpack.c.l.b16 %v921
        %v1181 = vunpack.c.l.b16 %v922
        %v1182 = vunpack.c.l.b16 %v923
        %v1183 = vunpack.c.l.b16 %v924
        %v1184 = vunpack.c.l.b16 %v925
        %v1185 = vpack.c.b16 %v1009, %v1177
        %v1186 = vpack.c.b16 %v1011, %v1178
        %v1187 = vpack.c.b16 %v1013, %v1179
        %v1188 = vpack.c.b16 %v1015, %v1180
        %v1189 = vpack.c.b16 %v1017, %v1181
        %v1190 = vpack.c.b16 %v1019, %v1182
        %v1191 = vpack.c.b16 %v1021, %v1183
        %v1192 = vpack.c.b16 %v1023, %v1184
        %vm1193 = vcmask 1046528
        %v1194 = vrot.slane %v1185, 1
        %v1195 = vrot.slane %v1056, 1
        %v1196 = vsel %vm1193, %v1194, %v1195
        %v1197 = vrot.slane %v1186, 1
        %v1198 = vrot.slane %v1057, 1
        %v1199 = vsel %vm1193, %v1197, %v1198
        %v1200 = vrot.slane %v1187, 1
        %v1201 = vrot.slane %v1058, 1
        %v1202 = vsel %vm1193, %v1200, %v1201
        %v1203 = vrot.slane %v1188, 1
        %v1204 = vrot.slane %v1059, 1
        %v1205 = vsel %vm1193, %v1203, %v1204
        %v1206 = vrot.slane %v1189, 1
        %v1207 = vrot.slane %v1060, 1
        %v1208 = vsel %vm1193, %v1206, %v1207
        %v1209 = vrot.slane %v1190, 1
        %v1210 = vrot.slane %v1061, 1
        %v1211 = vsel %vm1193, %v1209, %v1210
        %v1212 = vrot.slane %v1191, 1
        %v1213 = vrot.slane %v1062, 1
        %v1214 = vsel %vm1193, %v1212, %v1213
        %v1215 = vrot.slane %v1192, 1
        %v1216 = vrot.slane %v1063, 1
        %v1217 = vsel %vm1193, %v1215, %v1216
        %v1242 = vunpack.c.l.b16 %v927
        %v1243 = vunpack.c.l.b16 %v928
        %v1244 = vunpack.c.l.b16 %v929
        %v1245 = vunpack.c.l.b16 %v930
        %v1246 = vunpack.c.l.b16 %v931
        %v1247 = vunpack.c.l.b16 %v932
        %v1248 = vunpack.c.l.b16 %v933
        %v1249 = vunpack.c.l.b16 %v934
        %v1250 = vunpack.c.l.b16 %v935
        %v1251 = vunpack.c.l.b16 %v936
        %v1252 = vunpack.c.l.b16 %v937
        %v1253 = vunpack.c.l.b16 %v938
        %v1254 = vunpack.c.l.b16 %v939
        %v1255 = vunpack.c.l.b16 %v940
        %v1256 = vunpack.c.l.b16 %v941
        %v1257 = vunpack.c.l.b16 %v942
        %v1258 = vpack.c.b16 %v1243, %v1242
        %v1259 = vpack.c.b16 %v1245, %v1244
        %v1260 = vpack.c.b16 %v1247, %v1246
        %v1261 = vpack.c.b16 %v1249, %v1248
        %v1262 = vpack.c.b16 %v1251, %v1250
        %v1263 = vpack.c.b16 %v1253, %v1252
        %v1264 = vpack.c.b16 %v1255, %v1254
        %v1265 = vpack.c.b16 %v1257, %v1256
        %v1282 = vunpack.c.l.b16 %v943
        %v1283 = vunpack.c.l.b16 %v944
        %v1284 = vunpack.c.l.b16 %v945
        %v1285 = vunpack.c.l.b16 %v946
        %v1286 = vunpack.c.l.b16 %v947
        %v1287 = vunpack.c.l.b16 %v948
        %v1288 = vunpack.c.l.b16 %v949
        %v1289 = vunpack.c.l.b16 %v950
        %v1290 = vpack.c.b16 %v1282, %v1282
        %v1291 = vpack.c.b16 %v1283, %v1283
        %v1292 = vpack.c.b16 %v1284, %v1284
        %v1293 = vpack.c.b16 %v1285, %v1285
        %v1294 = vpack.c.b16 %v1286, %v1286
        %v1295 = vpack.c.b16 %v1287, %v1287
        %v1296 = vpack.c.b16 %v1288, %v1288
        %v1297 = vpack.c.b16 %v1289, %v1289
        %v1299 = vshrl.u32 %v1258, 16
        %v1301 = vshll.u32 %v1258, 16
        %v1303 = vrot.slane %v1301, 1
        %v1304 = vor.u32 %v1299, %v1303
        %v1306 = vshll.u32 %v1290, 16
        %v1308 = vrot.slane %v1306, 1
        %v1309 = vsel %vm1064, %v1304, %v1308
        %v1311 = vshrl.u32 %v1259, 16
        %v1313 = vshll.u32 %v1259, 16
        %v1315 = vrot.slane %v1313, 1
        %v1316 = vor.u32 %v1311, %v1315
        %v1318 = vshll.u32 %v1291, 16
        %v1320 = vrot.slane %v1318, 1
        %v1321 = vsel %vm1064, %v1316, %v1320
        %v1323 = vshrl.u32 %v1260, 16
        %v1325 = vshll.u32 %v1260, 16
        %v1327 = vrot.slane %v1325, 1
        %v1328 = vor.u32 %v1323, %v1327
        %v1330 = vshll.u32 %v1292, 16
        %v1332 = vrot.slane %v1330, 1
        %v1333 = vsel %vm1064, %v1328, %v1332
        %v1335 = vshrl.u32 %v1261, 16
        %v1337 = vshll.u32 %v1261, 16
        %v1339 = vrot.slane %v1337, 1
        %v1340 = vor.u32 %v1335, %v1339
        %v1342 = vshll.u32 %v1293, 16
        %v1344 = vrot.slane %v1342, 1
        %v1345 = vsel %vm1064, %v1340, %v1344
        %v1347 = vshrl.u32 %v1262, 16
        %v1349 = vshll.u32 %v1262, 16
        %v1351 = vrot.slane %v1349, 1
        %v1352 = vor.u32 %v1347, %v1351
        %v1354 = vshll.u32 %v1294, 16
        %v1356 = vrot.slane %v1354, 1
        %v1357 = vsel %vm1064, %v1352, %v1356
        %v1359 = vshrl.u32 %v1263, 16
        %v1361 = vshll.u32 %v1263, 16
        %v1363 = vrot.slane %v1361, 1
        %v1364 = vor.u32 %v1359, %v1363
        %v1366 = vshll.u32 %v1295, 16
        %v1368 = vrot.slane %v1366, 1
        %v1369 = vsel %vm1064, %v1364, %v1368
        %v1371 = vshrl.u32 %v1264, 16
        %v1373 = vshll.u32 %v1264, 16
        %v1375 = vrot.slane %v1373, 1
        %v1376 = vor.u32 %v1371, %v1375
        %v1378 = vshll.u32 %v1296, 16
        %v1380 = vrot.slane %v1378, 1
        %v1381 = vsel %vm1064, %v1376, %v1380
        %v1383 = vshrl.u32 %v1265, 16
        %v1385 = vshll.u32 %v1265, 16
        %v1387 = vrot.slane %v1385, 1
        %v1388 = vor.u32 %v1383, %v1387
        %v1390 = vshll.u32 %v1297, 16
        %v1392 = vrot.slane %v1390, 1
        %v1393 = vsel %vm1064, %v1388, %v1392
        %v1410 = vunpack.c.l.b16 %v951
        %v1411 = vunpack.c.l.b16 %v952
        %v1412 = vunpack.c.l.b16 %v953
        %v1413 = vunpack.c.l.b16 %v954
        %v1414 = vunpack.c.l.b16 %v955
        %v1415 = vunpack.c.l.b16 %v956
        %v1416 = vunpack.c.l.b16 %v957
        %v1417 = vunpack.c.l.b16 %v958
        %v1418 = vpack.c.b16 %v1243, %v1410
        %v1419 = vpack.c.b16 %v1245, %v1411
        %v1420 = vpack.c.b16 %v1247, %v1412
        %v1421 = vpack.c.b16 %v1249, %v1413
        %v1422 = vpack.c.b16 %v1251, %v1414
        %v1423 = vpack.c.b16 %v1253, %v1415
        %v1424 = vpack.c.b16 %v1255, %v1416
        %v1425 = vpack.c.b16 %v1257, %v1417
        %v1426 = vrot.slane %v1418, 1
        %v1427 = vrot.slane %v1290, 1
        %v1428 = vsel %vm1193, %v1426, %v1427
        %v1429 = vrot.slane %v1419, 1
        %v1430 = vrot.slane %v1291, 1
        %v1431 = vsel %vm1193, %v1429, %v1430
        %v1432 = vrot.slane %v1420, 1
        %v1433 = vrot.slane %v1292, 1
        %v1434 = vsel %vm1193, %v1432, %v1433
        %v1435 = vrot.slane %v1421, 1
        %v1436 = vrot.slane %v1293, 1
        %v1437 = vsel %vm1193, %v1435, %v1436
        %v1438 = vrot.slane %v1422, 1
        %v1439 = vrot.slane %v1294, 1
        %v1440 = vsel %vm1193, %v1438, %v1439
        %v1441 = vrot.slane %v1423, 1
        %v1442 = vrot.slane %v1295, 1
        %v1443 = vsel %vm1193, %v1441, %v1442
        %v1444 = vrot.slane %v1424, 1
        %v1445 = vrot.slane %v1296, 1
        %v1446 = vsel %vm1193, %v1444, %v1445
        %v1447 = vrot.slane %v1425, 1
        %v1448 = vrot.slane %v1297, 1
        %v1449 = vsel %vm1193, %v1447, %v1448
        %v1474 = vunpack.c.l.b16 %v960
        %v1475 = vunpack.c.l.b16 %v961
        %v1476 = vunpack.c.l.b16 %v962
        %v1477 = vunpack.c.l.b16 %v963
        %v1478 = vunpack.c.l.b16 %v964
        %v1479 = vunpack.c.l.b16 %v965
        %v1480 = vunpack.c.l.b16 %v966
        %v1481 = vunpack.c.l.b16 %v967
        %v1482 = vunpack.c.l.b16 %v968
        %v1483 = vunpack.c.l.b16 %v969
        %v1484 = vunpack.c.l.b16 %v970
        %v1485 = vunpack.c.l.b16 %v971
        %v1486 = vunpack.c.l.b16 %v972
        %v1487 = vunpack.c.l.b16 %v973
        %v1488 = vunpack.c.l.b16 %v974
        %v1489 = vunpack.c.l.b16 %v975
        %v1490 = vpack.c.b16 %v1475, %v1474
        %v1491 = vpack.c.b16 %v1477, %v1476
        %v1492 = vpack.c.b16 %v1479, %v1478
        %v1493 = vpack.c.b16 %v1481, %v1480
        %v1494 = vpack.c.b16 %v1483, %v1482
        %v1495 = vpack.c.b16 %v1485, %v1484
        %v1496 = vpack.c.b16 %v1487, %v1486
        %v1497 = vpack.c.b16 %v1489, %v1488
        %v1514 = vunpack.c.l.b16 %v976
        %v1515 = vunpack.c.l.b16 %v977
        %v1516 = vunpack.c.l.b16 %v978
        %v1517 = vunpack.c.l.b16 %v979
        %v1518 = vunpack.c.l.b16 %v980
        %v1519 = vunpack.c.l.b16 %v981
        %v1520 = vunpack.c.l.b16 %v982
        %v1521 = vunpack.c.l.b16 %v983
        %v1522 = vpack.c.b16 %v1514, %v1514
        %v1523 = vpack.c.b16 %v1515, %v1515
        %v1524 = vpack.c.b16 %v1516, %v1516
        %v1525 = vpack.c.b16 %v1517, %v1517
        %v1526 = vpack.c.b16 %v1518, %v1518
        %v1527 = vpack.c.b16 %v1519, %v1519
        %v1528 = vpack.c.b16 %v1520, %v1520
        %v1529 = vpack.c.b16 %v1521, %v1521
        %v1531 = vshrl.u32 %v1490, 16
        %v1533 = vshll.u32 %v1490, 16
        %v1535 = vrot.slane %v1533, 1
        %v1536 = vor.u32 %v1531, %v1535
        %v1538 = vshll.u32 %v1522, 16
        %v1540 = vrot.slane %v1538, 1
        %v1541 = vsel %vm1064, %v1536, %v1540
        %v1543 = vshrl.u32 %v1491, 16
        %v1545 = vshll.u32 %v1491, 16
        %v1547 = vrot.slane %v1545, 1
        %v1548 = vor.u32 %v1543, %v1547
        %v1550 = vshll.u32 %v1523, 16
        %v1552 = vrot.slane %v1550, 1
        %v1553 = vsel %vm1064, %v1548, %v1552
        %v1555 = vshrl.u32 %v1492, 16
        %v1557 = vshll.u32 %v1492, 16
        %v1559 = vrot.slane %v1557, 1
        %v1560 = vor.u32 %v1555, %v1559
        %v1562 = vshll.u32 %v1524, 16
        %v1564 = vrot.slane %v1562, 1
        %v1565 = vsel %vm1064, %v1560, %v1564
        %v1567 = vshrl.u32 %v1493, 16
        %v1569 = vshll.u32 %v1493, 16
        %v1571 = vrot.slane %v1569, 1
        %v1572 = vor.u32 %v1567, %v1571
        %v1574 = vshll.u32 %v1525, 16
        %v1576 = vrot.slane %v1574, 1
        %v1577 = vsel %vm1064, %v1572, %v1576
        %v1579 = vshrl.u32 %v1494, 16
        %v1581 = vshll.u32 %v1494, 16
        %v1583 = vrot.slane %v1581, 1
        %v1584 = vor.u32 %v1579, %v1583
        %v1586 = vshll.u32 %v1526, 16
        %v1588 = vrot.slane %v1586, 1
        %v1589 = vsel %vm1064, %v1584, %v1588
        %v1591 = vshrl.u32 %v1495, 16
        %v1593 = vshll.u32 %v1495, 16
        %v1595 = vrot.slane %v1593, 1
        %v1596 = vor.u32 %v1591, %v1595
        %v1598 = vshll.u32 %v1527, 16
        %v1600 = vrot.slane %v1598, 1
        %v1601 = vsel %vm1064, %v1596, %v1600
        %v1603 = vshrl.u32 %v1496, 16
        %v1605 = vshll.u32 %v1496, 16
        %v1607 = vrot.slane %v1605, 1
        %v1608 = vor.u32 %v1603, %v1607
        %v1610 = vshll.u32 %v1528, 16
        %v1612 = vrot.slane %v1610, 1
        %v1613 = vsel %vm1064, %v1608, %v1612
        %v1615 = vshrl.u32 %v1497, 16
        %v1617 = vshll.u32 %v1497, 16
        %v1619 = vrot.slane %v1617, 1
        %v1620 = vor.u32 %v1615, %v1619
        %v1622 = vshll.u32 %v1529, 16
        %v1624 = vrot.slane %v1622, 1
        %v1625 = vsel %vm1064, %v1620, %v1624
        %v1642 = vunpack.c.l.b16 %v984
        %v1643 = vunpack.c.l.b16 %v985
        %v1644 = vunpack.c.l.b16 %v986
        %v1645 = vunpack.c.l.b16 %v987
        %v1646 = vunpack.c.l.b16 %v988
        %v1647 = vunpack.c.l.b16 %v989
        %v1648 = vunpack.c.l.b16 %v990
        %v1649 = vunpack.c.l.b16 %v991
        %v1650 = vpack.c.b16 %v1475, %v1642
        %v1651 = vpack.c.b16 %v1477, %v1643
        %v1652 = vpack.c.b16 %v1479, %v1644
        %v1653 = vpack.c.b16 %v1481, %v1645
        %v1654 = vpack.c.b16 %v1483, %v1646
        %v1655 = vpack.c.b16 %v1485, %v1647
        %v1656 = vpack.c.b16 %v1487, %v1648
        %v1657 = vpack.c.b16 %v1489, %v1649
        %v1658 = vrot.slane %v1650, 1
        %v1659 = vrot.slane %v1522, 1
        %v1660 = vsel %vm1193, %v1658, %v1659
        %v1661 = vrot.slane %v1651, 1
        %v1662 = vrot.slane %v1523, 1
        %v1663 = vsel %vm1193, %v1661, %v1662
        %v1664 = vrot.slane %v1652, 1
        %v1665 = vrot.slane %v1524, 1
        %v1666 = vsel %vm1193, %v1664, %v1665
        %v1667 = vrot.slane %v1653, 1
        %v1668 = vrot.slane %v1525, 1
        %v1669 = vsel %vm1193, %v1667, %v1668
        %v1670 = vrot.slane %v1654, 1
        %v1671 = vrot.slane %v1526, 1
        %v1672 = vsel %vm1193, %v1670, %v1671
        %v1673 = vrot.slane %v1655, 1
        %v1674 = vrot.slane %v1527, 1
        %v1675 = vsel %vm1193, %v1673, %v1674
        %v1676 = vrot.slane %v1656, 1
        %v1677 = vrot.slane %v1528, 1
        %v1678 = vsel %vm1193, %v1676, %v1677
        %v1679 = vrot.slane %v1657, 1
        %v1680 = vrot.slane %v1529, 1
        %v1681 = vsel %vm1193, %v1679, %v1680
        %v1690 = vld [vmem:[%s1] sm:$0xf]
        %v1691 = vld [vmem:[%s1 + $0x4] sm:$0xf]
        %v1692 = vld [vmem:[%s1 + $0x8] sm:$0xf]
        %v1693 = vld [vmem:[%s1 + $0xc] sm:$0xf]
        %v1694 = vld [vmem:[%s1 + $0x10] sm:$0xf]
        %v1695 = vld [vmem:[%s1 + $0x14] sm:$0xf]
        %v1696 = vld [vmem:[%s1 + $0x18] sm:$0xf]
        %v1697 = vld [vmem:[%s1 + $0x1c] sm:$0xf]
        %v1698 = vld [vmem:[%s1 + $0x20] sm:$0xf]
        %v1699 = vld [vmem:[%s1 + $0x24] sm:$0xf]
        %v1700 = vld [vmem:[%s1 + $0x28] sm:$0xf]
        %v1701 = vld [vmem:[%s1 + $0x2c] sm:$0xf]
        %v1702 = vld [vmem:[%s1 + $0x30] sm:$0xf]
        %v1703 = vld [vmem:[%s1 + $0x34] sm:$0xf]
        %v1704 = vld [vmem:[%s1 + $0x38] sm:$0xf]
        %v1705 = vld [vmem:[%s1 + $0x3c] sm:$0xf]
        %v1706 = vld [vmem:[%s1 + $0x40] sm:$0xf]
        %v1707 = vld [vmem:[%s1 + $0x44] sm:$0xf]
        %v1708 = vld [vmem:[%s1 + $0x48] sm:$0xf]
        %v1709 = vld [vmem:[%s1 + $0x4c] sm:$0xf]
        %v1710 = vld [vmem:[%s1 + $0x50] sm:$0xf]
        %v1711 = vld [vmem:[%s1 + $0x54] sm:$0xf]
        %v1712 = vld [vmem:[%s1 + $0x58] sm:$0xf]
        %v1713 = vld [vmem:[%s1 + $0x5c] sm:$0xf]
        %v1714 = vld [vmem:[%s1 + $0x60] sm:$0xf]
        %v1715 = vld [vmem:[%s1 + $0x64] sm:$0xf]
        %v1716 = vld [vmem:[%s1 + $0x68] sm:$0xf]
        %v1717 = vld [vmem:[%s1 + $0x6c] sm:$0xf]
        %v1718 = vld [vmem:[%s1 + $0x70] sm:$0xf]
        %v1719 = vld [vmem:[%s1 + $0x74] sm:$0xf]
        %v1720 = vld [vmem:[%s1 + $0x78] sm:$0xf]
        %v1721 = vld [vmem:[%s1 + $0x7c] sm:$0xf]
        %v1722 = vld [vmem:[%s1 + $0x80] sm:$0xf]
        %v1723 = vld [vmem:[%s1 + $0x84] sm:$0xf]
        %v1724 = vld [vmem:[%s1 + $0x88] sm:$0xf]
        %v1725 = vld [vmem:[%s1 + $0x8c] sm:$0xf]
        %v1726 = vld [vmem:[%s1 + $0x90] sm:$0xf]
        %v1727 = vld [vmem:[%s1 + $0x94] sm:$0xf]
        %v1728 = vld [vmem:[%s1 + $0x98] sm:$0xf]
        %v1729 = vld [vmem:[%s1 + $0x9c] sm:$0xf]
        %v1730 = vld [vmem:[%s1 + $0xa0] sm:$0xf]
        %v1731 = vld [vmem:[%s1 + $0xa4] sm:$0xf]
        %v1732 = vld [vmem:[%s1 + $0xa8] sm:$0xf]
        %v1733 = vld [vmem:[%s1 + $0xac] sm:$0xf]
        %v1734 = vld [vmem:[%s1 + $0xb0] sm:$0xf]
        %v1735 = vld [vmem:[%s1 + $0xb4] sm:$0xf]
        %v1736 = vld [vmem:[%s1 + $0xb8] sm:$0xf]
        %v1737 = vld [vmem:[%s1 + $0xbc] sm:$0xf]
        %v1738 = vld [vmem:[%s1 + $0xc0] sm:$0xf]
        %v1739 = vld [vmem:[%s1 + $0xc4] sm:$0xf]
        %v1740 = vld [vmem:[%s1 + $0xc8] sm:$0xf]
        %v1741 = vld [vmem:[%s1 + $0xcc] sm:$0xf]
        %v1742 = vld [vmem:[%s1 + $0xd0] sm:$0xf]
        %v1743 = vld [vmem:[%s1 + $0xd4] sm:$0xf]
        %v1744 = vld [vmem:[%s1 + $0xd8] sm:$0xf]
        %v1745 = vld [vmem:[%s1 + $0xdc] sm:$0xf]
        %v1746 = vld [vmem:[%s1 + $0xe0] sm:$0xf]
        %v1747 = vld [vmem:[%s1 + $0xe4] sm:$0xf]
        %v1748 = vld [vmem:[%s1 + $0xe8] sm:$0xf]
        %v1749 = vld [vmem:[%s1 + $0xec] sm:$0xf]
        %v1750 = vld [vmem:[%s1 + $0xf0] sm:$0xf]
        %v1751 = vld [vmem:[%s1 + $0xf4] sm:$0xf]
        %v1752 = vld [vmem:[%s1 + $0xf8] sm:$0xf]
        %v1753 = vld [vmem:[%s1 + $0xfc] sm:$0xf]
        %v1754 = vld [vmem:[%s1 + $0x100] sm:$0xf]
        %v1755 = vld [vmem:[%s1 + $0x104] sm:$0xf]
        %v1756 = vld [vmem:[%s1 + $0x108] sm:$0xf]
        %v1757 = vld [vmem:[%s1 + $0x10c] sm:$0xf]
        %v1758 = vld [vmem:[%s1 + $0x110] sm:$0xf]
        %v1759 = vld [vmem:[%s1 + $0x114] sm:$0xf]
        %v1760 = vld [vmem:[%s1 + $0x118] sm:$0xf]
        %v1761 = vld [vmem:[%s1 + $0x11c] sm:$0xf]
        %v1762 = vld [vmem:[%s1 + $0x120] sm:$0xf]
        %v1763 = vld [vmem:[%s1 + $0x124] sm:$0xf]
        %v1764 = vld [vmem:[%s1 + $0x128] sm:$0xf]
        %v1765 = vld [vmem:[%s1 + $0x12c] sm:$0xf]
        %v1766 = vld [vmem:[%s1 + $0x130] sm:$0xf]
        %v1767 = vld [vmem:[%s1 + $0x134] sm:$0xf]
        %v1768 = vld [vmem:[%s1 + $0x138] sm:$0xf]
        %v1769 = vld [vmem:[%s1 + $0x13c] sm:$0xf]
        %v1770 = vld [vmem:[%s1 + $0x140] sm:$0xf]
        %v1771 = vld [vmem:[%s1 + $0x144] sm:$0xf]
        %v1772 = vld [vmem:[%s1 + $0x148] sm:$0xf]
        %v1773 = vld [vmem:[%s1 + $0x14c] sm:$0xf]
        %v1774 = vld [vmem:[%s1 + $0x150] sm:$0xf]
        %v1775 = vld [vmem:[%s1 + $0x154] sm:$0xf]
        %v1776 = vld [vmem:[%s1 + $0x158] sm:$0xf]
        %v1777 = vld [vmem:[%s1 + $0x15c] sm:$0xf]
        %v1778 = vld [vmem:[%s1 + $0x160] sm:$0xf]
        %v1779 = vld [vmem:[%s1 + $0x164] sm:$0xf]
        %v1780 = vld [vmem:[%s1 + $0x168] sm:$0xf]
        %v1781 = vld [vmem:[%s1 + $0x16c] sm:$0xf]
        %v1782 = vld [vmem:[%s1 + $0x170] sm:$0xf]
        %v1783 = vld [vmem:[%s1 + $0x174] sm:$0xf]
        %v1784 = vld [vmem:[%s1 + $0x178] sm:$0xf]
        %v1785 = vld [vmem:[%s1 + $0x17c] sm:$0xf]
        %v1786 = vld [vmem:[%s1 + $0x180] sm:$0xf]
        %v1787 = vld [vmem:[%s1 + $0x184] sm:$0xf]
        %v1788 = vld [vmem:[%s1 + $0x188] sm:$0xf]
        %v1789 = vld [vmem:[%s1 + $0x18c] sm:$0xf]
        %v1790 = vld [vmem:[%s1 + $0x190] sm:$0xf]
        %v1791 = vld [vmem:[%s1 + $0x194] sm:$0xf]
        %v1792 = vld [vmem:[%s1 + $0x198] sm:$0xf]
        %v1793 = vld [vmem:[%s1 + $0x19c] sm:$0xf]
        %v1794 = vld [vmem:[%s1 + $0x1a0] sm:$0xf]
        %v1795 = vld [vmem:[%s1 + $0x1a4] sm:$0xf]
        %v1796 = vld [vmem:[%s1 + $0x1a8] sm:$0xf]
        %v1797 = vld [vmem:[%s1 + $0x1ac] sm:$0xf]
        %v1798 = vld [vmem:[%s1 + $0x1b0] sm:$0xf]
        %v1799 = vld [vmem:[%s1 + $0x1b4] sm:$0xf]
        %v1800 = vld [vmem:[%s1 + $0x1b8] sm:$0xf]
        %v1801 = vld [vmem:[%s1 + $0x1bc] sm:$0xf]
        %v1802 = vld [vmem:[%s1 + $0x1c0] sm:$0xf]
        %v1803 = vld [vmem:[%s1 + $0x1c4] sm:$0xf]
        %v1804 = vld [vmem:[%s1 + $0x1c8] sm:$0xf]
        %v1805 = vld [vmem:[%s1 + $0x1cc] sm:$0xf]
        %v1806 = vld [vmem:[%s1 + $0x1d0] sm:$0xf]
        %v1807 = vld [vmem:[%s1 + $0x1d4] sm:$0xf]
        %v1808 = vld [vmem:[%s1 + $0x1d8] sm:$0xf]
        %v1809 = vld [vmem:[%s1 + $0x1dc] sm:$0xf]
        %v1810 = vld [vmem:[%s1 + $0x1e0] sm:$0xf]
        %v1811 = vld [vmem:[%s1 + $0x1e4] sm:$0xf]
        %v1812 = vld [vmem:[%s1 + $0x1e8] sm:$0xf]
        %v1813 = vld [vmem:[%s1 + $0x1ec] sm:$0xf]
        %v1814 = vld [vmem:[%s1 + $0x1f0] sm:$0xf]
        %v1815 = vld [vmem:[%s1 + $0x1f4] sm:$0xf]
        %v1816 = vld [vmem:[%s1 + $0x1f8] sm:$0xf]
        %v1817 = vld [vmem:[%s1 + $0x1fc] sm:$0xf]
        %v1818 = vld [vmem:[%s1 + $0x200] sm:$0xf]
        %v1819 = vld [vmem:[%s1 + $0x204] sm:$0xf]
        %v1820 = vld [vmem:[%s1 + $0x208] sm:$0xf]
        %v1821 = vld [vmem:[%s1 + $0x20c] sm:$0xf]
        %v1822 = vld [vmem:[%s1 + $0x210] sm:$0xf]
        %v1823 = vld [vmem:[%s1 + $0x214] sm:$0xf]
        %v1824 = vld [vmem:[%s1 + $0x218] sm:$0xf]
        %v1825 = vld [vmem:[%s1 + $0x21c] sm:$0xf]
        %v1826 = vld [vmem:[%s1 + $0x220] sm:$0xf]
        %v1827 = vld [vmem:[%s1 + $0x224] sm:$0xf]
        %v1828 = vld [vmem:[%s1 + $0x228] sm:$0xf]
        %v1829 = vld [vmem:[%s1 + $0x22c] sm:$0xf]
        %v1830 = vld [vmem:[%s1 + $0x230] sm:$0xf]
        %v1831 = vld [vmem:[%s1 + $0x234] sm:$0xf]
        %v1832 = vld [vmem:[%s1 + $0x238] sm:$0xf]
        %v1833 = vld [vmem:[%s1 + $0x23c] sm:$0xf]
        %v1978 = vunpack.c.l.b16 %v1690
        %v1979 = vunpack.c.l.b16 %v1691
        %v1980 = vunpack.c.l.b16 %v1692
        %v1981 = vunpack.c.l.b16 %v1693
        %v1982 = vunpack.c.l.b16 %v1694
        %v1983 = vunpack.c.l.b16 %v1695
        %v1984 = vunpack.c.l.b16 %v1696
        %v1985 = vunpack.c.l.b16 %v1697
        %v1986 = vunpack.c.l.b16 %v1698
        %v1987 = vunpack.c.l.b16 %v1699
        %v1988 = vunpack.c.l.b16 %v1700
        %v1989 = vunpack.c.l.b16 %v1701
        %v1990 = vunpack.c.l.b16 %v1702
        %v1991 = vunpack.c.l.b16 %v1703
        %v1992 = vunpack.c.l.b16 %v1704
        %v1993 = vunpack.c.l.b16 %v1705
        %v1994 = vunpack.c.l.b16 %v1706
        %v1995 = vunpack.c.l.b16 %v1707
        %v1996 = vunpack.c.l.b16 %v1708
        %v1997 = vunpack.c.l.b16 %v1709
        %v1998 = vunpack.c.l.b16 %v1710
        %v1999 = vunpack.c.l.b16 %v1711
        %v2000 = vunpack.c.l.b16 %v1712
        %v2001 = vunpack.c.l.b16 %v1713
        %v2002 = vunpack.c.l.b16 %v1714
        %v2003 = vunpack.c.l.b16 %v1715
        %v2004 = vunpack.c.l.b16 %v1716
        %v2005 = vunpack.c.l.b16 %v1717
        %v2006 = vunpack.c.l.b16 %v1718
        %v2007 = vunpack.c.l.b16 %v1719
        %v2008 = vunpack.c.l.b16 %v1720
        %v2009 = vunpack.c.l.b16 %v1721
        %v2010 = vunpack.c.l.b16 %v1722
        %v2011 = vunpack.c.l.b16 %v1723
        %v2012 = vunpack.c.l.b16 %v1724
        %v2013 = vunpack.c.l.b16 %v1725
        %v2014 = vunpack.c.l.b16 %v1726
        %v2015 = vunpack.c.l.b16 %v1727
        %v2016 = vunpack.c.l.b16 %v1728
        %v2017 = vunpack.c.l.b16 %v1729
        %v2018 = vunpack.c.l.b16 %v1730
        %v2019 = vunpack.c.l.b16 %v1731
        %v2020 = vunpack.c.l.b16 %v1732
        %v2021 = vunpack.c.l.b16 %v1733
        %v2022 = vunpack.c.l.b16 %v1734
        %v2023 = vunpack.c.l.b16 %v1735
        %v2024 = vunpack.c.l.b16 %v1736
        %v2025 = vunpack.c.l.b16 %v1737
        %v2026 = vunpack.c.l.b16 %v1738
        %v2027 = vunpack.c.l.b16 %v1739
        %v2028 = vunpack.c.l.b16 %v1740
        %v2029 = vunpack.c.l.b16 %v1741
        %v2030 = vunpack.c.l.b16 %v1742
        %v2031 = vunpack.c.l.b16 %v1743
        %v2032 = vunpack.c.l.b16 %v1744
        %v2033 = vunpack.c.l.b16 %v1745
        %v2034 = vunpack.c.l.b16 %v1746
        %v2035 = vunpack.c.l.b16 %v1747
        %v2036 = vunpack.c.l.b16 %v1748
        %v2037 = vunpack.c.l.b16 %v1749
        %v2038 = vunpack.c.l.b16 %v1750
        %v2039 = vunpack.c.l.b16 %v1751
        %v2040 = vunpack.c.l.b16 %v1752
        %v2041 = vunpack.c.l.b16 %v1753
        %v2042 = vunpack.c.l.b16 %v1754
        %v2043 = vunpack.c.l.b16 %v1755
        %v2044 = vunpack.c.l.b16 %v1756
        %v2045 = vunpack.c.l.b16 %v1757
        %v2046 = vunpack.c.l.b16 %v1758
        %v2047 = vunpack.c.l.b16 %v1759
        %v2048 = vunpack.c.l.b16 %v1760
        %v2049 = vunpack.c.l.b16 %v1761
        %v2050 = vunpack.c.l.b16 %v1762
        %v2051 = vunpack.c.l.b16 %v1763
        %v2052 = vunpack.c.l.b16 %v1764
        %v2053 = vunpack.c.l.b16 %v1765
        %v2054 = vunpack.c.l.b16 %v1766
        %v2055 = vunpack.c.l.b16 %v1767
        %v2056 = vunpack.c.l.b16 %v1768
        %v2057 = vunpack.c.l.b16 %v1769
        %v2058 = vunpack.c.l.b16 %v1770
        %v2059 = vunpack.c.l.b16 %v1771
        %v2060 = vunpack.c.l.b16 %v1772
        %v2061 = vunpack.c.l.b16 %v1773
        %v2062 = vunpack.c.l.b16 %v1774
        %v2063 = vunpack.c.l.b16 %v1775
        %v2064 = vunpack.c.l.b16 %v1776
        %v2065 = vunpack.c.l.b16 %v1777
        %v2066 = vunpack.c.l.b16 %v1778
        %v2067 = vunpack.c.l.b16 %v1779
        %v2068 = vunpack.c.l.b16 %v1780
        %v2069 = vunpack.c.l.b16 %v1781
        %v2070 = vunpack.c.l.b16 %v1782
        %v2071 = vunpack.c.l.b16 %v1783
        %v2072 = vunpack.c.l.b16 %v1784
        %v2073 = vunpack.c.l.b16 %v1785
        %v2074 = vunpack.c.l.b16 %v1786
        %v2075 = vunpack.c.l.b16 %v1787
        %v2076 = vunpack.c.l.b16 %v1788
        %v2077 = vunpack.c.l.b16 %v1789
        %v2078 = vunpack.c.l.b16 %v1790
        %v2079 = vunpack.c.l.b16 %v1791
        %v2080 = vunpack.c.l.b16 %v1792
        %v2081 = vunpack.c.l.b16 %v1793
        %v2082 = vunpack.c.l.b16 %v1794
        %v2083 = vunpack.c.l.b16 %v1795
        %v2084 = vunpack.c.l.b16 %v1796
        %v2085 = vunpack.c.l.b16 %v1797
        %v2086 = vunpack.c.l.b16 %v1798
        %v2087 = vunpack.c.l.b16 %v1799
        %v2088 = vunpack.c.l.b16 %v1800
        %v2089 = vunpack.c.l.b16 %v1801
        %v2090 = vunpack.c.l.b16 %v1802
        %v2091 = vunpack.c.l.b16 %v1803
        %v2092 = vunpack.c.l.b16 %v1804
        %v2093 = vunpack.c.l.b16 %v1805
        %v2094 = vunpack.c.l.b16 %v1806
        %v2095 = vunpack.c.l.b16 %v1807
        %v2096 = vunpack.c.l.b16 %v1808
        %v2097 = vunpack.c.l.b16 %v1809
        %v2098 = vunpack.c.l.b16 %v1810
        %v2099 = vunpack.c.l.b16 %v1811
        %v2100 = vunpack.c.l.b16 %v1812
        %v2101 = vunpack.c.l.b16 %v1813
        %v2102 = vunpack.c.l.b16 %v1814
        %v2103 = vunpack.c.l.b16 %v1815
        %v2104 = vunpack.c.l.b16 %v1816
        %v2105 = vunpack.c.l.b16 %v1817
        %v2106 = vunpack.c.l.b16 %v1818
        %v2107 = vunpack.c.l.b16 %v1819
        %v2108 = vunpack.c.l.b16 %v1820
        %v2109 = vunpack.c.l.b16 %v1821
        %v2110 = vunpack.c.l.b16 %v1822
        %v2111 = vunpack.c.l.b16 %v1823
        %v2112 = vunpack.c.l.b16 %v1824
        %v2113 = vunpack.c.l.b16 %v1825
        %v2114 = vunpack.c.l.b16 %v1826
        %v2115 = vunpack.c.l.b16 %v1827
        %v2116 = vunpack.c.l.b16 %v1828
        %v2117 = vunpack.c.l.b16 %v1829
        %v2118 = vunpack.c.l.b16 %v1830
        %v2119 = vunpack.c.l.b16 %v1831
        %v2120 = vunpack.c.l.b16 %v1832
        %v2121 = vunpack.c.l.b16 %v1833
        %v2122 = vpack.c.b16 %v1979, %v1978
        %v2123 = vpack.c.b16 %v1981, %v1980
        %v2124 = vpack.c.b16 %v1983, %v1982
        %v2125 = vpack.c.b16 %v1985, %v1984
        %v2126 = vpack.c.b16 %v1987, %v1986
        %v2127 = vpack.c.b16 %v1989, %v1988
        %v2128 = vpack.c.b16 %v1991, %v1990
        %v2129 = vpack.c.b16 %v1993, %v1992
        %v2130 = vpack.c.b16 %v1995, %v1994
        %v2131 = vpack.c.b16 %v1997, %v1996
        %v2132 = vpack.c.b16 %v1999, %v1998
        %v2133 = vpack.c.b16 %v2001, %v2000
        %v2134 = vpack.c.b16 %v2003, %v2002
        %v2135 = vpack.c.b16 %v2005, %v2004
        %v2136 = vpack.c.b16 %v2007, %v2006
        %v2137 = vpack.c.b16 %v2009, %v2008
        %v2138 = vpack.c.b16 %v2011, %v2010
        %v2139 = vpack.c.b16 %v2013, %v2012
        %v2140 = vpack.c.b16 %v2015, %v2014
        %v2141 = vpack.c.b16 %v2017, %v2016
        %v2142 = vpack.c.b16 %v2019, %v2018
        %v2143 = vpack.c.b16 %v2021, %v2020
        %v2144 = vpack.c.b16 %v2023, %v2022
        %v2145 = vpack.c.b16 %v2025, %v2024
        %v2146 = vpack.c.b16 %v2027, %v2026
        %v2147 = vpack.c.b16 %v2029, %v2028
        %v2148 = vpack.c.b16 %v2031, %v2030
        %v2149 = vpack.c.b16 %v2033, %v2032
        %v2150 = vpack.c.b16 %v2035, %v2034
        %v2151 = vpack.c.b16 %v2037, %v2036
        %v2152 = vpack.c.b16 %v2039, %v2038
        %v2153 = vpack.c.b16 %v2041, %v2040
        %v2154 = vpack.c.b16 %v2043, %v2042
        %v2155 = vpack.c.b16 %v2045, %v2044
        %v2156 = vpack.c.b16 %v2047, %v2046
        %v2157 = vpack.c.b16 %v2049, %v2048
        %v2158 = vpack.c.b16 %v2051, %v2050
        %v2159 = vpack.c.b16 %v2053, %v2052
        %v2160 = vpack.c.b16 %v2055, %v2054
        %v2161 = vpack.c.b16 %v2057, %v2056
        %v2162 = vpack.c.b16 %v2059, %v2058
        %v2163 = vpack.c.b16 %v2061, %v2060
        %v2164 = vpack.c.b16 %v2063, %v2062
        %v2165 = vpack.c.b16 %v2065, %v2064
        %v2166 = vpack.c.b16 %v2067, %v2066
        %v2167 = vpack.c.b16 %v2069, %v2068
        %v2168 = vpack.c.b16 %v2071, %v2070
        %v2169 = vpack.c.b16 %v2073, %v2072
        %v2170 = vpack.c.b16 %v2075, %v2074
        %v2171 = vpack.c.b16 %v2077, %v2076
        %v2172 = vpack.c.b16 %v2079, %v2078
        %v2173 = vpack.c.b16 %v2081, %v2080
        %v2174 = vpack.c.b16 %v2083, %v2082
        %v2175 = vpack.c.b16 %v2085, %v2084
        %v2176 = vpack.c.b16 %v2087, %v2086
        %v2177 = vpack.c.b16 %v2089, %v2088
        %v2178 = vpack.c.b16 %v2091, %v2090
        %v2179 = vpack.c.b16 %v2093, %v2092
        %v2180 = vpack.c.b16 %v2095, %v2094
        %v2181 = vpack.c.b16 %v2097, %v2096
        %v2182 = vpack.c.b16 %v2099, %v2098
        %v2183 = vpack.c.b16 %v2101, %v2100
        %v2184 = vpack.c.b16 %v2103, %v2102
        %v2185 = vpack.c.b16 %v2105, %v2104
        %v2186 = vpack.c.b16 %v2107, %v2106
        %v2187 = vpack.c.b16 %v2109, %v2108
        %v2188 = vpack.c.b16 %v2111, %v2110
        %v2189 = vpack.c.b16 %v2113, %v2112
        %v2190 = vpack.c.b16 %v2115, %v2114
        %v2191 = vpack.c.b16 %v2117, %v2116
        %v2192 = vpack.c.b16 %v2119, %v2118
        %v2193 = vpack.c.b16 %v2121, %v2120
        %2266 = vmatprep.subr.bf16.mxu0 0
        %2267 = vmatpush1.bf16.msra.mxu0 %v2122
        %2268 = vmatprep.subr.bf16.mxu0 0
        %2269 = vmatpush1.bf16.msra.mxu0 %v2123
        %2270 = vmatprep.subr.bf16.mxu0 0
        %2271 = vmatpush1.bf16.msra.mxu0 %v2124
        %2272 = vmatprep.subr.bf16.mxu0 0
        %2273 = vmatpush1.bf16.msra.mxu0 %v2125
        %2274 = vmatprep.subr.bf16.mxu0 0
        %2275 = vmatpush1.bf16.msra.mxu0 %v2126
        %2276 = vmatprep.subr.bf16.mxu0 0
        %2277 = vmatpush1.bf16.msra.mxu0 %v2127
        %2278 = vmatprep.subr.bf16.mxu0 0
        %2279 = vmatpush1.bf16.msra.mxu0 %v2128
        %2280 = vmatprep.subr.bf16.mxu0 0
        %2281 = vmatpush1.bf16.msra.mxu0 %v2129
        %2282 = vmatprep.subr.bf16.mxu0 0
        %2283 = vmatpush1.bf16.msra.mxu0 %v2130
        %2284 = vmatprep.subr.bf16.mxu0 0
        %2285 = vmatpush1.bf16.msra.mxu0 %v2131
        %2286 = vmatprep.subr.bf16.mxu0 0
        %2287 = vmatpush1.bf16.msra.mxu0 %v2132
        %2288 = vmatprep.subr.bf16.mxu0 0
        %2289 = vmatpush1.bf16.msra.mxu0 %v2133
        %2290 = vmatprep.subr.bf16.mxu0 0
        %2291 = vmatpush1.bf16.msra.mxu0 %v2134
        %2292 = vmatprep.subr.bf16.mxu0 0
        %2293 = vmatpush1.bf16.msra.mxu0 %v2135
        %2294 = vmatprep.subr.bf16.mxu0 0
        %2295 = vmatpush1.bf16.msra.mxu0 %v2136
        %2296 = vmatprep.subr.bf16.mxu0 0
        %2297 = vmatpush1.bf16.msra.mxu0 %v2137
        %2298 = vmatprep.mubr.bf16.mxu0 %v1076
        %2299 = vmatmul.mubr.bf16.gmra.mrb[0].mxu0 %v1024
        %v2300 = vpop.f32.mrb[0].mxu0
        %v2301 = vadd.f32 0.0, %v2300
        %v2302 = vpop.f32.mrb[0].mxu0
        %v2303 = vpop.f32.mrb[0].mxu0
        %v2304 = vadd.f32 0.0, %v2303
        %v2305 = vpop.f32.mrb[0].mxu0
        %2306 = vmatprep.mubr.bf16.mxu0 %v1088
        %2307 = vmatmul.mubr.bf16.gmra.mrb[0].mxu0 %v1025
        %v2308 = vpop.f32.mrb[0].mxu0
        %v2309 = vadd.f32 0.0, %v2308
        %v2310 = vpop.f32.mrb[0].mxu0
        %v2311 = vpop.f32.mrb[0].mxu0
        %v2312 = vadd.f32 0.0, %v2311
        %v2313 = vpop.f32.mrb[0].mxu0
        %2314 = vmatprep.mubr.bf16.mxu0 %v1100
        %2315 = vmatmul.mubr.bf16.gmra.mrb[0].mxu0 %v1026
        %v2316 = vpop.f32.mrb[0].mxu0
        %v2317 = vadd.f32 0.0, %v2316
        %v2318 = vpop.f32.mrb[0].mxu0
        %v2319 = vpop.f32.mrb[0].mxu0
        %v2320 = vadd.f32 0.0, %v2319
        %v2321 = vpop.f32.mrb[0].mxu0
        %2322 = vmatprep.mubr.bf16.mxu0 %v1112
        %2323 = vmatmul.mubr.bf16.gmra.mrb[0].mxu0 %v1027
        %v2324 = vpop.f32.mrb[0].mxu0
        %v2325 = vadd.f32 0.0, %v2324
        %v2326 = vpop.f32.mrb[0].mxu0
        %v2327 = vpop.f32.mrb[0].mxu0
        %v2328 = vadd.f32 0.0, %v2327
        %v2329 = vpop.f32.mrb[0].mxu0
        %2330 = vmatprep.mubr.bf16.mxu0 %v1124
        %2331 = vmatmul.mubr.bf16.gmra.mrb[0].mxu0 %v1028
        %v2332 = vpop.f32.mrb[0].mxu0
        %v2333 = vadd.f32 0.0, %v2332
        %v2334 = vpop.f32.mrb[0].mxu0
        %v2335 = vpop.f32.mrb[0].mxu0
        %v2336 = vadd.f32 0.0, %v2335
        %v2337 = vpop.f32.mrb[0].mxu0
        %2338 = vmatprep.mubr.bf16.mxu0 %v1136
        %2339 = vmatmul.mubr.bf16.gmra.mrb[0].mxu0 %v1029
        %v2340 = vpop.f32.mrb[0].mxu0
        %v2341 = vadd.f32 0.0, %v2340
        %v2342 = vpop.f32.mrb[0].mxu0
        %v2343 = vpop.f32.mrb[0].mxu0
        %v2344 = vadd.f32 0.0, %v2343
        %v2345 = vpop.f32.mrb[0].mxu0
        %2346 = vmatprep.mubr.bf16.mxu0 %v1148
        %2347 = vmatmul.mubr.bf16.gmra.mrb[0].mxu0 %v1030
        %v2348 = vpop.f32.mrb[0].mxu0
        %v2349 = vadd.f32 0.0, %v2348
        %v2350 = vpop.f32.mrb[0].mxu0
        %v2351 = vpop.f32.mrb[0].mxu0
        %v2352 = vadd.f32 0.0, %v2351
        %v2353 = vpop.f32.mrb[0].mxu0
        %2354 = vmatprep.mubr.bf16.mxu0 %v1160
        %2355 = vmatmul.mubr.bf16.gmra.mrb[0].mxu0 %v1031
        %v2356 = vpop.f32.mrb[0].mxu0
        %v2357 = vadd.f32 0.0, %v2356
        %v2358 = vpop.f32.mrb[0].mxu0
        %v2359 = vpop.f32.mrb[0].mxu0
        %v2360 = vadd.f32 0.0, %v2359
        %v2361 = vpop.f32.mrb[0].mxu0
        %2362 = vdwg.mxu0
        %2363 = vmatprep.subr.bf16.mxu0 0
        %2364 = vmatpush1.bf16.msra.mxu0 %v2138
        %2365 = vmatprep.subr.bf16.mxu0 0
        %2366 = vmatpush1.bf16.msra.mxu0 %v2139
        %2367 = vmatprep.subr.bf16.mxu0 0
        %2368 = vmatpush1.bf16.msra.mxu0 %v2140
        %2369 = vmatprep.subr.bf16.mxu0 0
        %2370 = vmatpush1.bf16.msra.mxu0 %v2141
        %2371 = vmatprep.subr.bf16.mxu0 0
        %2372 = vmatpush1.bf16.msra.mxu0 %v2142
        %2373 = vmatprep.subr.bf16.mxu0 0
        %2374 = vmatpush1.bf16.msra.mxu0 %v2143
        %2375 = vmatprep.subr.bf16.mxu0 0
        %2376 = vmatpush1.bf16.msra.mxu0 %v2144
        %2377 = vmatprep.subr.bf16.mxu0 0
        %2378 = vmatpush1.bf16.msra.mxu0 %v2145
        %2379 = vmatprep.subr.bf16.mxu0 0
        %2380 = vmatpush1.bf16.msra.mxu0 %v2146
        %2381 = vmatprep.subr.bf16.mxu0 0
        %2382 = vmatpush1.bf16.msra.mxu0 %v2147
        %2383 = vmatprep.subr.bf16.mxu0 0
        %2384 = vmatpush1.bf16.msra.mxu0 %v2148
        %2385 = vmatprep.subr.bf16.mxu0 0
        %2386 = vmatpush1.bf16.msra.mxu0 %v2149
        %2387 = vmatprep.subr.bf16.mxu0 0
        %2388 = vmatpush1.bf16.msra.mxu0 %v2150
        %2389 = vmatprep.subr.bf16.mxu0 0
        %2390 = vmatpush1.bf16.msra.mxu0 %v2151
        %2391 = vmatprep.subr.bf16.mxu0 0
        %2392 = vmatpush1.bf16.msra.mxu0 %v2152
        %2393 = vmatprep.subr.bf16.mxu0 0
        %2394 = vmatpush1.bf16.msra.mxu0 %v2153
        %2395 = vmatprep.mubr.bf16.mxu0 %v1258
        %2396 = vmatmul.mubr.bf16.gmra.mrb[0].mxu0 %v1196
        %v2397 = vpop.f32.mrb[0].mxu0
        %v2398 = vadd.f32 %v2301, %v2397
        %v2399 = vpop.f32.mrb[0].mxu0
        %v2400 = vpop.f32.mrb[0].mxu0
        %v2401 = vadd.f32 %v2304, %v2400
        %v2402 = vpop.f32.mrb[0].mxu0
        %2403 = vmatprep.mubr.bf16.mxu0 %v1259
        %2404 = vmatmul.mubr.bf16.gmra.mrb[0].mxu0 %v1199
        %v2405 = vpop.f32.mrb[0].mxu0
        %v2406 = vadd.f32 %v2309, %v2405
        %v2407 = vpop.f32.mrb[0].mxu0
        %v2408 = vpop.f32.mrb[0].mxu0
        %v2409 = vadd.f32 %v2312, %v2408
        %v2410 = vpop.f32.mrb[0].mxu0
        %2411 = vmatprep.mubr.bf16.mxu0 %v1260
        %2412 = vmatmul.mubr.bf16.gmra.mrb[0].mxu0 %v1202
        %v2413 = vpop.f32.mrb[0].mxu0
        %v2414 = vadd.f32 %v2317, %v2413
        %v2415 = vpop.f32.mrb[0].mxu0
        %v2416 = vpop.f32.mrb[0].mxu0
        %v2417 = vadd.f32 %v2320, %v2416
        %v2418 = vpop.f32.mrb[0].mxu0
        %2419 = vmatprep.mubr.bf16.mxu0 %v1261
        %2420 = vmatmul.mubr.bf16.gmra.mrb[0].mxu0 %v1205
        %v2421 = vpop.f32.mrb[0].mxu0
        %v2422 = vadd.f32 %v2325, %v2421
        %v2423 = vpop.f32.mrb[0].mxu0
        %v2424 = vpop.f32.mrb[0].mxu0
        %v2425 = vadd.f32 %v2328, %v2424
        %v2426 = vpop.f32.mrb[0].mxu0
        %2427 = vmatprep.mubr.bf16.mxu0 %v1262
        %2428 = vmatmul.mubr.bf16.gmra.mrb[0].mxu0 %v1208
        %v2429 = vpop.f32.mrb[0].mxu0
        %v2430 = vadd.f32 %v2333, %v2429
        %v2431 = vpop.f32.mrb[0].mxu0
        %v2432 = vpop.f32.mrb[0].mxu0
        %v2433 = vadd.f32 %v2336, %v2432
        %v2434 = vpop.f32.mrb[0].mxu0
        %2435 = vmatprep.mubr.bf16.mxu0 %v1263
        %2436 = vmatmul.mubr.bf16.gmra.mrb[0].mxu0 %v1211
        %v2437 = vpop.f32.mrb[0].mxu0
        %v2438 = vadd.f32 %v2341, %v2437
        %v2439 = vpop.f32.mrb[0].mxu0
        %v2440 = vpop.f32.mrb[0].mxu0
        %v2441 = vadd.f32 %v2344, %v2440
        %v2442 = vpop.f32.mrb[0].mxu0
        %2443 = vmatprep.mubr.bf16.mxu0 %v1264
        %2444 = vmatmul.mubr.bf16.gmra.mrb[0].mxu0 %v1214
        %v2445 = vpop.f32.mrb[0].mxu0
        %v2446 = vadd.f32 %v2349, %v2445
        %v2447 = vpop.f32.mrb[0].mxu0
        %v2448 = vpop.f32.mrb[0].mxu0
        %v2449 = vadd.f32 %v2352, %v2448
        %v2450 = vpop.f32.mrb[0].mxu0
        %2451 = vmatprep.mubr.bf16.mxu0 %v1265
        %2452 = vmatmul.mubr.bf16.gmra.mrb[0].mxu0 %v1217
        %v2453 = vpop.f32.mrb[0].mxu0
        %v2454 = vadd.f32 %v2357, %v2453
        %v2455 = vpop.f32.mrb[0].mxu0
        %v2456 = vpop.f32.mrb[0].mxu0
        %v2457 = vadd.f32 %v2360, %v2456
        %v2458 = vpop.f32.mrb[0].mxu0
        %2459 = vdwg.mxu0
        %2460 = vmatprep.subr.bf16.mxu0 0
        %2461 = vmatpush1.bf16.msra.mxu0 %v2154
        %2462 = vmatprep.subr.bf16.mxu0 0
        %2463 = vmatpush1.bf16.msra.mxu0 %v2155
        %2464 = vmatprep.subr.bf16.mxu0 0
        %2465 = vmatpush1.bf16.msra.mxu0 %v2156
        %2466 = vmatprep.subr.bf16.mxu0 0
        %2467 = vmatpush1.bf16.msra.mxu0 %v2157
        %2468 = vmatprep.subr.bf16.mxu0 0
        %2469 = vmatpush1.bf16.msra.mxu0 %v2158
        %2470 = vmatprep.subr.bf16.mxu0 0
        %2471 = vmatpush1.bf16.msra.mxu0 %v2159
        %2472 = vmatprep.subr.bf16.mxu0 0
        %2473 = vmatpush1.bf16.msra.mxu0 %v2160
        %2474 = vmatprep.subr.bf16.mxu0 0
        %2475 = vmatpush1.bf16.msra.mxu0 %v2161
        %2476 = vmatprep.subr.bf16.mxu0 0
        %2477 = vmatpush1.bf16.msra.mxu0 %v2162
        %2478 = vmatprep.subr.bf16.mxu0 0
        %2479 = vmatpush1.bf16.msra.mxu0 %v2163
        %2480 = vmatprep.subr.bf16.mxu0 0
        %2481 = vmatpush1.bf16.msra.mxu0 %v2164
        %2482 = vmatprep.subr.bf16.mxu0 0
        %2483 = vmatpush1.bf16.msra.mxu0 %v2165
        %2484 = vmatprep.subr.bf16.mxu0 0
        %2485 = vmatpush1.bf16.msra.mxu0 %v2166
        %2486 = vmatprep.subr.bf16.mxu0 0
        %2487 = vmatpush1.bf16.msra.mxu0 %v2167
        %2488 = vmatprep.subr.bf16.mxu0 0
        %2489 = vmatpush1.bf16.msra.mxu0 %v2168
        %2490 = vmatprep.subr.bf16.mxu0 0
        %2491 = vmatpush1.bf16.msra.mxu0 %v2169
        %2492 = vmatprep.mubr.bf16.mxu0 %v1428
        %2493 = vmatmul.mubr.bf16.gmra.mrb[0].mxu0 %v1309
        %v2494 = vpop.f32.mrb[0].mxu0
        %v2495 = vadd.f32 %v2398, %v2494
        %v2496 = vpop.f32.mrb[0].mxu0
        %v2497 = vpop.f32.mrb[0].mxu0
        %v2498 = vadd.f32 %v2401, %v2497
        %v2499 = vpop.f32.mrb[0].mxu0
        %2500 = vmatprep.mubr.bf16.mxu0 %v1431
        %2501 = vmatmul.mubr.bf16.gmra.mrb[0].mxu0 %v1321
        %v2502 = vpop.f32.mrb[0].mxu0
        %v2503 = vadd.f32 %v2406, %v2502
        %v2504 = vpop.f32.mrb[0].mxu0
        %v2505 = vpop.f32.mrb[0].mxu0
        %v2506 = vadd.f32 %v2409, %v2505
        %v2507 = vpop.f32.mrb[0].mxu0
        %2508 = vmatprep.mubr.bf16.mxu0 %v1434
        %2509 = vmatmul.mubr.bf16.gmra.mrb[0].mxu0 %v1333
        %v2510 = vpop.f32.mrb[0].mxu0
        %v2511 = vadd.f32 %v2414, %v2510
        %v2512 = vpop.f32.mrb[0].mxu0
        %v2513 = vpop.f32.mrb[0].mxu0
        %v2514 = vadd.f32 %v2417, %v2513
        %v2515 = vpop.f32.mrb[0].mxu0
        %2516 = vmatprep.mubr.bf16.mxu0 %v1437
        %2517 = vmatmul.mubr.bf16.gmra.mrb[0].mxu0 %v1345
        %v2518 = vpop.f32.mrb[0].mxu0
        %v2519 = vadd.f32 %v2422, %v2518
        %v2520 = vpop.f32.mrb[0].mxu0
        %v2521 = vpop.f32.mrb[0].mxu0
        %v2522 = vadd.f32 %v2425, %v2521
        %v2523 = vpop.f32.mrb[0].mxu0
        %2524 = vmatprep.mubr.bf16.mxu0 %v1440
        %2525 = vmatmul.mubr.bf16.gmra.mrb[0].mxu0 %v1357
        %v2526 = vpop.f32.mrb[0].mxu0
        %v2527 = vadd.f32 %v2430, %v2526
        %v2528 = vpop.f32.mrb[0].mxu0
        %v2529 = vpop.f32.mrb[0].mxu0
        %v2530 = vadd.f32 %v2433, %v2529
        %v2531 = vpop.f32.mrb[0].mxu0
        %2532 = vmatprep.mubr.bf16.mxu0 %v1443
        %2533 = vmatmul.mubr.bf16.gmra.mrb[0].mxu0 %v1369
        %v2534 = vpop.f32.mrb[0].mxu0
        %v2535 = vadd.f32 %v2438, %v2534
        %v2536 = vpop.f32.mrb[0].mxu0
        %v2537 = vpop.f32.mrb[0].mxu0
        %v2538 = vadd.f32 %v2441, %v2537
        %v2539 = vpop.f32.mrb[0].mxu0
        %2540 = vmatprep.mubr.bf16.mxu0 %v1446
        %2541 = vmatmul.mubr.bf16.gmra.mrb[0].mxu0 %v1381
        %v2542 = vpop.f32.mrb[0].mxu0
        %v2543 = vadd.f32 %v2446, %v2542
        %v2544 = vpop.f32.mrb[0].mxu0
        %v2545 = vpop.f32.mrb[0].mxu0
        %v2546 = vadd.f32 %v2449, %v2545
        %v2547 = vpop.f32.mrb[0].mxu0
        %2548 = vmatprep.mubr.bf16.mxu0 %v1449
        %2549 = vmatmul.mubr.bf16.gmra.mrb[0].mxu0 %v1393
        %v2550 = vpop.f32.mrb[0].mxu0
        %v2551 = vadd.f32 %v2454, %v2550
        %v2552 = vpop.f32.mrb[0].mxu0
        %v2553 = vpop.f32.mrb[0].mxu0
        %v2554 = vadd.f32 %v2457, %v2553
        %v2555 = vpop.f32.mrb[0].mxu0
        %2556 = vdwg.mxu0
        %2557 = vmatprep.subr.bf16.mxu0 0
        %2558 = vmatpush1.bf16.msra.mxu0 %v2170
        %2559 = vmatprep.subr.bf16.mxu0 0
        %2560 = vmatpush1.bf16.msra.mxu0 %v2171
        %2561 = vmatprep.subr.bf16.mxu0 0
        %2562 = vmatpush1.bf16.msra.mxu0 %v2172
        %2563 = vmatprep.subr.bf16.mxu0 0
        %2564 = vmatpush1.bf16.msra.mxu0 %v2173
        %2565 = vmatprep.subr.bf16.mxu0 0
        %2566 = vmatpush1.bf16.msra.mxu0 %v2174
        %2567 = vmatprep.subr.bf16.mxu0 0
        %2568 = vmatpush1.bf16.msra.mxu0 %v2175
        %2569 = vmatprep.subr.bf16.mxu0 0
        %2570 = vmatpush1.bf16.msra.mxu0 %v2176
        %2571 = vmatprep.subr.bf16.mxu0 0
        %2572 = vmatpush1.bf16.msra.mxu0 %v2177
        %2573 = vmatprep.subr.bf16.mxu0 0
        %2574 = vmatpush1.bf16.msra.mxu0 %v2178
        %2575 = vmatprep.subr.bf16.mxu0 0
        %2576 = vmatpush1.bf16.msra.mxu0 %v2179
        %2577 = vmatprep.subr.bf16.mxu0 0
        %2578 = vmatpush1.bf16.msra.mxu0 %v2180
        %2579 = vmatprep.subr.bf16.mxu0 0
        %2580 = vmatpush1.bf16.msra.mxu0 %v2181
        %2581 = vmatprep.subr.bf16.mxu0 0
        %2582 = vmatpush1.bf16.msra.mxu0 %v2182
        %2583 = vmatprep.subr.bf16.mxu0 0
        %2584 = vmatpush1.bf16.msra.mxu0 %v2183
        %2585 = vmatprep.subr.bf16.mxu0 0
        %2586 = vmatpush1.bf16.msra.mxu0 %v2184
        %2587 = vmatprep.subr.bf16.mxu0 0
        %2588 = vmatpush1.bf16.msra.mxu0 %v2185
        %2589 = vmatprep.mubr.bf16.mxu0 %v1541
        %2590 = vmatmul.mubr.bf16.gmra.mrb[0].mxu0 %v1490
        %v2591 = vpop.f32.mrb[0].mxu0
        %v2592 = vadd.f32 %v2495, %v2591
        %v2593 = vpop.f32.mrb[0].mxu0
        %v2594 = vpop.f32.mrb[0].mxu0
        %v2595 = vadd.f32 %v2498, %v2594
        %v2596 = vpop.f32.mrb[0].mxu0
        %2597 = vmatprep.mubr.bf16.mxu0 %v1553
        %2598 = vmatmul.mubr.bf16.gmra.mrb[0].mxu0 %v1491
        %v2599 = vpop.f32.mrb[0].mxu0
        %v2600 = vadd.f32 %v2503, %v2599
        %v2601 = vpop.f32.mrb[0].mxu0
        %v2602 = vpop.f32.mrb[0].mxu0
        %v2603 = vadd.f32 %v2506, %v2602
        %v2604 = vpop.f32.mrb[0].mxu0
        %2605 = vmatprep.mubr.bf16.mxu0 %v1565
        %2606 = vmatmul.mubr.bf16.gmra.mrb[0].mxu0 %v1492
        %v2607 = vpop.f32.mrb[0].mxu0
        %v2608 = vadd.f32 %v2511, %v2607
        %v2609 = vpop.f32.mrb[0].mxu0
        %v2610 = vpop.f32.mrb[0].mxu0
        %v2611 = vadd.f32 %v2514, %v2610
        %v2612 = vpop.f32.mrb[0].mxu0
        %2613 = vmatprep.mubr.bf16.mxu0 %v1577
        %2614 = vmatmul.mubr.bf16.gmra.mrb[0].mxu0 %v1493
        %v2615 = vpop.f32.mrb[0].mxu0
        %v2616 = vadd.f32 %v2519, %v2615
        %v2617 = vpop.f32.mrb[0].mxu0
        %v2618 = vpop.f32.mrb[0].mxu0
        %v2619 = vadd.f32 %v2522, %v2618
        %v2620 = vpop.f32.mrb[0].mxu0
        %2621 = vmatprep.mubr.bf16.mxu0 %v1589
        %2622 = vmatmul.mubr.bf16.gmra.mrb[0].mxu0 %v1494
        %v2623 = vpop.f32.mrb[0].mxu0
        %v2624 = vadd.f32 %v2527, %v2623
        %v2625 = vpop.f32.mrb[0].mxu0
        %v2626 = vpop.f32.mrb[0].mxu0
        %v2627 = vadd.f32 %v2530, %v2626
        %v2628 = vpop.f32.mrb[0].mxu0
        %2629 = vmatprep.mubr.bf16.mxu0 %v1601
        %2630 = vmatmul.mubr.bf16.gmra.mrb[0].mxu0 %v1495
        %v2631 = vpop.f32.mrb[0].mxu0
        %v2632 = vadd.f32 %v2535, %v2631
        %v2633 = vpop.f32.mrb[0].mxu0
        %v2634 = vpop.f32.mrb[0].mxu0
        %v2635 = vadd.f32 %v2538, %v2634
        %v2636 = vpop.f32.mrb[0].mxu0
        %2637 = vmatprep.mubr.bf16.mxu0 %v1613
        %2638 = vmatmul.mubr.bf16.gmra.mrb[0].mxu0 %v1496
        %v2639 = vpop.f32.mrb[0].mxu0
        %v2640 = vadd.f32 %v2543, %v2639
        %v2641 = vpop.f32.mrb[0].mxu0
        %v2642 = vpop.f32.mrb[0].mxu0
        %v2643 = vadd.f32 %v2546, %v2642
        %v2644 = vpop.f32.mrb[0].mxu0
        %2645 = vmatprep.mubr.bf16.mxu0 %v1625
        %2646 = vmatmul.mubr.bf16.gmra.mrb[0].mxu0 %v1497
        %v2647 = vpop.f32.mrb[0].mxu0
        %v2648 = vadd.f32 %v2551, %v2647
        %v2649 = vpop.f32.mrb[0].mxu0
        %v2650 = vpop.f32.mrb[0].mxu0
        %v2651 = vadd.f32 %v2554, %v2650
        %v2652 = vpop.f32.mrb[0].mxu0
        %2653 = vdwg.mxu0
        %2654 = vmatprep.subr.bf16.mxu0 0
        %2655 = vmatpush1.bf16.msra.mxu0 %v2186
        %2656 = vmatprep.subr.bf16.mxu0 0
        %2657 = vmatpush1.bf16.msra.mxu0 %v2187
        %2658 = vmatprep.subr.bf16.mxu0 0
        %2659 = vmatpush1.bf16.msra.mxu0 %v2188
        %2660 = vmatprep.subr.bf16.mxu0 0
        %2661 = vmatpush1.bf16.msra.mxu0 %v2189
        %2662 = vmatprep.subr.bf16.mxu0 0
        %2663 = vmatpush1.bf16.msra.mxu0 %v2190
        %2664 = vmatprep.subr.bf16.mxu0 0
        %2665 = vmatpush1.bf16.msra.mxu0 %v2191
        %2666 = vmatprep.subr.bf16.mxu0 0
        %2667 = vmatpush1.bf16.msra.mxu0 %v2192
        %2668 = vmatprep.subr.bf16.mxu0 0
        %2669 = vmatpush1.bf16.msra.mxu0 %v2193
        %2670 = vmatprep.subr.bf16.mxu0 0
        %2671 = vmatpush1.bf16.msra.mxu0 0
        %2672 = vmatprep.subr.bf16.mxu0 0
        %2673 = vmatpush1.bf16.msra.mxu0 0
        %2674 = vmatprep.subr.bf16.mxu0 0
        %2675 = vmatpush1.bf16.msra.mxu0 0
        %2676 = vmatprep.subr.bf16.mxu0 0
        %2677 = vmatpush1.bf16.msra.mxu0 0
        %2678 = vmatprep.subr.bf16.mxu0 0
        %2679 = vmatpush1.bf16.msra.mxu0 0
        %2680 = vmatprep.subr.bf16.mxu0 0
        %2681 = vmatpush1.bf16.msra.mxu0 0
        %2682 = vmatprep.subr.bf16.mxu0 0
        %2683 = vmatpush1.bf16.msra.mxu0 0
        %2684 = vmatprep.subr.bf16.mxu0 0
        %2685 = vmatpush1.bf16.msra.mxu0 0
        %2686 = vmatprep.mubr.bf16.mxu0 0
        %2687 = vmatmul.mubr.bf16.gmra.mrb[0].mxu0 %v1660
        %v2688 = vpop.f32.mrb[0].mxu0
        %v2689 = vadd.f32 %v2592, %v2688
        %v2690 = vpop.f32.mrb[0].mxu0
        %v2691 = vpop.f32.mrb[0].mxu0
        %v2692 = vadd.f32 %v2595, %v2691
        %v2693 = vpop.f32.mrb[0].mxu0
        %2694 = vmatprep.mubr.bf16.mxu0 0
        %2695 = vmatmul.mubr.bf16.gmra.mrb[0].mxu0 %v1663
        %v2696 = vpop.f32.mrb[0].mxu0
        %v2697 = vadd.f32 %v2600, %v2696
        %v2698 = vpop.f32.mrb[0].mxu0
        %v2699 = vpop.f32.mrb[0].mxu0
        %v2700 = vadd.f32 %v2603, %v2699
        %v2701 = vpop.f32.mrb[0].mxu0
        %2702 = vmatprep.mubr.bf16.mxu0 0
        %2703 = vmatmul.mubr.bf16.gmra.mrb[0].mxu0 %v1666
        %v2704 = vpop.f32.mrb[0].mxu0
        %v2705 = vadd.f32 %v2608, %v2704
        %v2706 = vpop.f32.mrb[0].mxu0
        %v2707 = vpop.f32.mrb[0].mxu0
        %v2708 = vadd.f32 %v2611, %v2707
        %v2709 = vpop.f32.mrb[0].mxu0
        %2710 = vmatprep.mubr.bf16.mxu0 0
        %2711 = vmatmul.mubr.bf16.gmra.mrb[0].mxu0 %v1669
        %v2712 = vpop.f32.mrb[0].mxu0
        %v2713 = vadd.f32 %v2616, %v2712
        %v2714 = vpop.f32.mrb[0].mxu0
        %v2715 = vpop.f32.mrb[0].mxu0
        %v2716 = vadd.f32 %v2619, %v2715
        %v2717 = vpop.f32.mrb[0].mxu0
        %2718 = vmatprep.mubr.bf16.mxu0 0
        %2719 = vmatmul.mubr.bf16.gmra.mrb[0].mxu0 %v1672
        %v2720 = vpop.f32.mrb[0].mxu0
        %v2721 = vadd.f32 %v2624, %v2720
        %v2722 = vpop.f32.mrb[0].mxu0
        %v2723 = vpop.f32.mrb[0].mxu0
        %v2724 = vadd.f32 %v2627, %v2723
        %v2725 = vpop.f32.mrb[0].mxu0
        %2726 = vmatprep.mubr.bf16.mxu0 0
        %2727 = vmatmul.mubr.bf16.gmra.mrb[0].mxu0 %v1675
        %v2728 = vpop.f32.mrb[0].mxu0
        %v2729 = vadd.f32 %v2632, %v2728
        %v2730 = vpop.f32.mrb[0].mxu0
        %v2731 = vpop.f32.mrb[0].mxu0
        %v2732 = vadd.f32 %v2635, %v2731
        %v2733 = vpop.f32.mrb[0].mxu0
        %2734 = vmatprep.mubr.bf16.mxu0 0
        %2735 = vmatmul.mubr.bf16.gmra.mrb[0].mxu0 %v1678
        %v2736 = vpop.f32.mrb[0].mxu0
        %v2737 = vadd.f32 %v2640, %v2736
        %v2738 = vpop.f32.mrb[0].mxu0
        %v2739 = vpop.f32.mrb[0].mxu0
        %v2740 = vadd.f32 %v2643, %v2739
        %v2741 = vpop.f32.mrb[0].mxu0
        %2742 = vmatprep.mubr.bf16.mxu0 0
        %2743 = vmatmul.mubr.bf16.gmra.mrb[0].mxu0 %v1681
        %v2744 = vpop.f32.mrb[0].mxu0
        %v2745 = vadd.f32 %v2648, %v2744
        %v2746 = vpop.f32.mrb[0].mxu0
        %v2747 = vpop.f32.mrb[0].mxu0
        %v2748 = vadd.f32 %v2651, %v2747
        %v2749 = vpop.f32.mrb[0].mxu0
        %2750 = vdwg.mxu0
        %v2751 = vld [vmem:[%s2] sm:$0x1]
        %v2753 = vlaneseq
        %v2754 = vshrl.u32 %v2753, 7
        %v2755 = vsub.s32 0, %v2754
        %v2756 = vrot.slane %v2751, %v2755
        %v2758 = vmul.f32 %v2689, %v2756
        %v2759 = vmul.f32 %v2692, %v2756
        %v2760 = vmul.f32 %v2697, %v2756
        %v2761 = vmul.f32 %v2700, %v2756
        %v2762 = vmul.f32 %v2705, %v2756
        %v2763 = vmul.f32 %v2708, %v2756
        %v2764 = vmul.f32 %v2713, %v2756
        %v2765 = vmul.f32 %v2716, %v2756
        %v2766 = vmul.f32 %v2721, %v2756
        %v2767 = vmul.f32 %v2724, %v2756
        %v2768 = vmul.f32 %v2729, %v2756
        %v2769 = vmul.f32 %v2732, %v2756
        %v2770 = vmul.f32 %v2737, %v2756
        %v2771 = vmul.f32 %v2740, %v2756
        %v2772 = vmul.f32 %v2745, %v2756
        %v2773 = vmul.f32 %v2748, %v2756
        %v2774 = vld [vmem:[%s3] sm:$0x1]
        %v2776 = vlaneseq
        %v2777 = vshrl.u32 %v2776, 7
        %v2778 = vsub.s32 0, %v2777
        %v2779 = vrot.slane %v2774, %v2778
        %v2781 = vadd.f32 %v2758, %v2779
        %v2782 = vadd.f32 %v2759, %v2779
        %v2783 = vadd.f32 %v2760, %v2779
        %v2784 = vadd.f32 %v2761, %v2779
        %v2785 = vadd.f32 %v2762, %v2779
        %v2786 = vadd.f32 %v2763, %v2779
        %v2787 = vadd.f32 %v2764, %v2779
        %v2788 = vadd.f32 %v2765, %v2779
        %v2789 = vadd.f32 %v2766, %v2779
        %v2790 = vadd.f32 %v2767, %v2779
        %v2791 = vadd.f32 %v2768, %v2779
        %v2792 = vadd.f32 %v2769, %v2779
        %v2793 = vadd.f32 %v2770, %v2779
        %v2794 = vadd.f32 %v2771, %v2779
        %v2795 = vadd.f32 %v2772, %v2779
        %v2796 = vadd.f32 %v2773, %v2779
        %v2797 = vld [vmem:[%s274] sm:$0xf]
        %v2798 = vld [vmem:[%s274 + $0x4] sm:$0xf]
        %v2799 = vld [vmem:[%s274 + $0x8] sm:$0xf]
        %v2800 = vld [vmem:[%s274 + $0xc] sm:$0xf]
        %v2801 = vld [vmem:[%s274 + $0x10] sm:$0xf]
        %v2802 = vld [vmem:[%s274 + $0x14] sm:$0xf]
        %v2803 = vld [vmem:[%s274 + $0x18] sm:$0xf]
        %v2804 = vld [vmem:[%s274 + $0x1c] sm:$0xf]
        %v2805 = vld [vmem:[%s274 + $0x20] sm:$0xf]
        %v2806 = vld [vmem:[%s274 + $0x24] sm:$0xf]
        %v2807 = vld [vmem:[%s274 + $0x28] sm:$0xf]
        %v2808 = vld [vmem:[%s274 + $0x2c] sm:$0xf]
        %v2809 = vld [vmem:[%s274 + $0x30] sm:$0xf]
        %v2810 = vld [vmem:[%s274 + $0x34] sm:$0xf]
        %v2811 = vld [vmem:[%s274 + $0x38] sm:$0xf]
        %v2812 = vld [vmem:[%s274 + $0x3c] sm:$0xf]
        %v2813 = vunpack.c.l.bf16 %v2797
        %v2814 = vunpack.c.l.bf16 %v2798
        %v2815 = vunpack.c.l.bf16 %v2799
        %v2816 = vunpack.c.l.bf16 %v2800
        %v2817 = vunpack.c.l.bf16 %v2801
        %v2818 = vunpack.c.l.bf16 %v2802
        %v2819 = vunpack.c.l.bf16 %v2803
        %v2820 = vunpack.c.l.bf16 %v2804
        %v2821 = vunpack.c.l.bf16 %v2805
        %v2822 = vunpack.c.l.bf16 %v2806
        %v2823 = vunpack.c.l.bf16 %v2807
        %v2824 = vunpack.c.l.bf16 %v2808
        %v2825 = vunpack.c.l.bf16 %v2809
        %v2826 = vunpack.c.l.bf16 %v2810
        %v2827 = vunpack.c.l.bf16 %v2811
        %v2828 = vunpack.c.l.bf16 %v2812
        %v2829 = vadd.f32 %v2781, %v2813
        %v2830 = vadd.f32 %v2782, %v2814
        %v2831 = vadd.f32 %v2783, %v2815
        %v2832 = vadd.f32 %v2784, %v2816
        %v2833 = vadd.f32 %v2785, %v2817
        %v2834 = vadd.f32 %v2786, %v2818
        %v2835 = vadd.f32 %v2787, %v2819
        %v2836 = vadd.f32 %v2788, %v2820
        %v2837 = vadd.f32 %v2789, %v2821
        %v2838 = vadd.f32 %v2790, %v2822
        %v2839 = vadd.f32 %v2791, %v2823
        %v2840 = vadd.f32 %v2792, %v2824
        %v2841 = vadd.f32 %v2793, %v2825
        %v2842 = vadd.f32 %v2794, %v2826
        %v2843 = vadd.f32 %v2795, %v2827
        %v2844 = vadd.f32 %v2796, %v2828
        %v2845 = vmax.f32 %v2829, 0.0
        %v2846 = vmax.f32 %v2830, 0.0
        %v2847 = vmax.f32 %v2831, 0.0
        %v2848 = vmax.f32 %v2832, 0.0
        %v2849 = vmax.f32 %v2833, 0.0
        %v2850 = vmax.f32 %v2834, 0.0
        %v2851 = vmax.f32 %v2835, 0.0
        %v2852 = vmax.f32 %v2836, 0.0
        %v2853 = vmax.f32 %v2837, 0.0
        %v2854 = vmax.f32 %v2838, 0.0
        %v2855 = vmax.f32 %v2839, 0.0
        %v2856 = vmax.f32 %v2840, 0.0
        %v2857 = vmax.f32 %v2841, 0.0
        %v2858 = vmax.f32 %v2842, 0.0
        %v2859 = vmax.f32 %v2843, 0.0
        %v2860 = vmax.f32 %v2844, 0.0
        %2861 = vst [vmem:[%s259] sm:$0xff] %v2845
        %2862 = vst [vmem:[%s259 + $0x8] sm:$0xff] %v2846
        %2863 = vst [vmem:[%s259 + $0x10] sm:$0xff] %v2847
        %2864 = vst [vmem:[%s259 + $0x18] sm:$0xff] %v2848
        %2865 = vst [vmem:[%s259 + $0x20] sm:$0xff] %v2849
        %2866 = vst [vmem:[%s259 + $0x28] sm:$0xff] %v2850
        %2867 = vst [vmem:[%s259 + $0x30] sm:$0xff] %v2851
        %2868 = vst [vmem:[%s259 + $0x38] sm:$0xff] %v2852
        %2869 = vst [vmem:[%s259 + $0x40] sm:$0xff] %v2853
        %2870 = vst [vmem:[%s259 + $0x48] sm:$0xff] %v2854
        %2871 = vst [vmem:[%s259 + $0x50] sm:$0xff] %v2855
        %2872 = vst [vmem:[%s259 + $0x58] sm:$0xff] %v2856
        %2873 = vst [vmem:[%s259 + $0x60] sm:$0xff] %v2857
        %2874 = vst [vmem:[%s259 + $0x68] sm:$0xff] %v2858
        %2875 = vst [vmem:[%s259 + $0x70] sm:$0xff] %v2859
        %2876 = vst [vmem:[%s259 + $0x78] sm:$0xff] %v2860
        %s2877 = sand.u32 %s158, 1
        %s2878 = scalar_lea.sflag [#allocation4], %s2877
        %s2879 = sand.u32 %s158, 1
        %s2880 = smul.addr %s2879, 128
        %s2881 = scalar_lea.vmem [#allocation3], %s2880
        // Predicated region
        $region49: #{forward.7} parent=39 // pred_check
          %p2882 = pneg %p168
        $region50: #{forward.7} parent=39 // pred_check_branch
          %2884 = sbr.rel (%p2882) target = $region52
        $region51: #{forward.7} parent=39 // pred_region
          %s2885 = smul.u32 8, %s24
          %s2887 = ssub.s32 2048, 2048
          %2888 = vsyncadd %s2878, %s2887
          %s2889 = smul.addr %s2885, 2
          %s2890 = smul.addr %s23, 32
          %s2891 = sadd.s32 %s2889, %s2890
          %s2892 = smul.addr %s2891, 128
          %s2893 = scalar_lea.hbm %s5, %s2892
          %s2894 = sshll.u32 %s2881, 4
          %s2895 = int_to_ptr.vmem [resolvable:$true] %s2894
          %2900 = dma.vmem_to_hbm [thread:$0]  %s2895, 2048, %s2893, %s2878, 128, 128, 8
        $region52: #{forward.7} parent=39 // pred_fallthru
          _
      $region40: #{forward.7} parent=5 // pred_fallthru
        _
      %p2901 = scmp.le.s32.totalorder 2, %s14
      // Predicated region
      $region53: #{forward.7} parent=5 // pred_check
        %p2902 = pneg %p2901
      $region54: #{forward.7} parent=5 // pred_check_branch
        %2904 = sbr.rel (%p2902) target = $region56
      $region55: #{forward.7} parent=5 // pred_region
        %s2905 = ssub.s32 %s14, 2
        // Predicated region
        $region57: #{forward.7} parent=55 // pred_check
          %p2906 = pneg %p174
        $region58: #{forward.7} parent=55 // pred_check_branch
          %2908 = sbr.rel (%p2906) target = $region60
        $region59: #{forward.7} parent=55 // pred_region
          %s2909 = sand.u32 %s159, 1
          %s2910 = scalar_lea.sflag [#allocation4], %s2909
          %s2911 = sand.u32 %s159, 1
          %s2912 = smul.addr %s2911, 128
          %s2913 = scalar_lea.vmem [#allocation3], %s2912
          %2914 = dma.done %s2910, 2048
        $region60: #{forward.7} parent=55 // pred_fallthru
          _
      $region56: #{forward.7} parent=5 // pred_fallthru
        _
    $region6: #{forward.7} parent=1 // loop_footer
      %s18 = sadd.s32 1, %s14
    $region7: #{forward.7} parent=1 // loop_footer_branch
      %13 = sbr.rel target = $region3
    $region8: #{forward.7} parent=1 // loop_exit
      _
    %2915 = vsyncpa [#allocation4], 1
    %s2916 = scalar_lea.sflag [#allocation4], 1
    %2917 = vsyncpa %s2916, 1

</llo_original>
